<compile_context>
chip_gen: v7x
topology: tpu7x:2x2x1
jax: 0.10.0
libtpu: 0.0.40
codegen_flags: <defaults>
</compile_context>

<pallas_src>
import numpy as np

import jax
import jax.numpy as jnp
from jax.experimental import pallas as pl
from jax.experimental.pallas import tpu as pltpu


# ---------------------------------------------------------------------------
# Host-side constant construction: per-tap selection matrices + folded weights
# ---------------------------------------------------------------------------
def _selection_matrices(hi, wi, k, stride, pad):
    """0/1 matrices S_t (taps, Ho*Wo, Hi*Wi): S_t @ X gathers the tap-t input pixel
    for every output pixel (zero rows encode zero padding)."""
    ho = (hi + 2 * pad - k) // stride + 1
    wo = (wi + 2 * pad - k) // stride + 1
    S = np.zeros((k * k, ho * wo, hi * wi), np.float32)
    for di in range(k):
        for dj in range(k):
            t = di * k + dj
            for oh in range(ho):
                ih = oh * stride + di - pad
                if not (0 <= ih < hi):
                    continue
                for ow in range(wo):
                    iw = ow * stride + dj - pad
                    if 0 <= iw < wi:
                        S[t, oh * wo + ow, ih * wi + iw] = 1.0
    return S, ho, wo


def build_plan(params, in_hw):
    """Flatten the backbone into an ordered list of fused conv ops for the kernel."""
    ops = []
    act_hw = [in_hw]  # spatial dims of activation index i (index 0 = network input)

    def add(cp, stride, relu, input_idx, residual_idx=None):
        kh, kw, cin, cout = cp["w"].shape
        h_in, w_in = act_hw[input_idx]
        S, ho, wo = _selection_matrices(h_in, w_in, kh, stride, kh // 2)
        w_folded = (cp["w"] * cp["scale"]).reshape(kh * kw, cin, cout)  # BN scale folded
        ops.append(dict(
            S=jnp.asarray(S, jnp.bfloat16),                 # exact 0/1 in bf16
            W=jnp.asarray(w_folded, jnp.bfloat16),
            b=jnp.asarray(cp["bias"], jnp.float32).reshape(1, cout),
            relu=relu, input=input_idx, residual=residual_idx))
        act_hw.append((ho, wo))
        return len(ops)  # activation index of this op's output

    cur = add(params["stem"], 2, True, 0)
    for i, stage in enumerate(params["stages"]):
        stage_stride = 1 if i == 0 else 2
        for j, blk in enumerate(stage):
            stride = stage_stride if j == 0 else 1
            identity = cur
            o1 = add(blk["conv1"], stride, True, cur)
            if blk["downsample"] is not None:
                identity = add(blk["downsample"], stride, False, cur)
            cur = add(blk["conv2"], 1, True, o1, residual_idx=identity)

    out_hw = act_hw[cur]
    out_c = ops[cur - 1]["W"].shape[2]
    return ops, cur, out_hw, out_c


# ---------------------------------------------------------------------------
# The single fused Pallas kernel (one grid step = one image)
# ---------------------------------------------------------------------------
def _make_backbone_kernel(plan, out_idx):
    def _conv(x_bf16, s_ref, w_ref, b_ref, relu, residual):
        taps, mo, _ = s_ref.shape
        cout = w_ref.shape[2]
        acc = jnp.zeros((mo, cout), jnp.float32)
        for t in range(taps):                       # 9 (or 1) tap accumulations on MXU
            xt = jnp.dot(s_ref[t], x_bf16, preferred_element_type=jnp.float32)
            acc = acc + jnp.dot(xt.astype(jnp.bfloat16), w_ref[t],
                                preferred_element_type=jnp.float32)
        y = acc + b_ref[...]                        # folded-BN bias
        if residual is not None:
            y = y + residual                        # residual add in f32
        if relu:
            y = jnp.maximum(y, 0.0)
        return y

    def kernel(*refs):
        x_ref = refs[0]
        o_ref = refs[-1]
        op_refs = refs[1:-1]
        x0 = x_ref[0]                               # (Hi*Wi, Cin) f32
        acts_f32 = [x0]                             # f32 activations (for residuals)
        acts_b16 = [x0.astype(jnp.bfloat16)]        # bf16 activations feeding the MXU
        for idx, op in enumerate(plan):
            s_ref, w_ref, b_ref = op_refs[3 * idx: 3 * idx + 3]
            res = acts_f32[op["residual"]] if op["residual"] is not None else None
            y = _conv(acts_b16[op["input"]], s_ref, w_ref, b_ref, op["relu"], res)
            acts_f32.append(y)
            acts_b16.append(y.astype(jnp.bfloat16))
        o_ref[0] = acts_f32[out_idx].astype(o_ref.dtype)   # lane-dense (Mo, 128) store

    return kernel


def _const_index_map(ndim):
    return lambda i: (0,) * ndim


def backbone_pallas_call(x_flat, plan, out_idx, out_hw, out_c):
    n, hw_in, cin = x_flat.shape
    mo_out = out_hw[0] * out_hw[1]

    in_specs = [pl.BlockSpec((1, hw_in, cin), lambda i: (i, 0, 0))]
    args = [x_flat]
    for op in plan:                                  # constant per-layer tensors
        for arr in (op["S"], op["W"], op["b"]):
            in_specs.append(pl.BlockSpec(arr.shape, _const_index_map(arr.ndim)))
            args.append(arr)

    return pl.pallas_call(
        _make_backbone_kernel(plan, out_idx),
        out_shape=jax.ShapeDtypeStruct((n, mo_out, out_c), jnp.float32),
        grid=(n,),                                   # >=2 parallel steps (batch axis)
        in_specs=in_specs,
        out_specs=pl.BlockSpec((1, mo_out, out_c), lambda i: (i, 0, 0)),
        compiler_params=pltpu.CompilerParams(dimension_semantics=("parallel",)),
    )(*args)


# ---------------------------------------------------------------------------
# Parameter construction (deterministic, synthetic) -- mirrors ResNetBackbone.__init__
# ---------------------------------------------------------------------------
def conv_bn_params(key, kh, kw, cin, cout, eps=1e-5):
    k1, k2, k3, k4, k5 = jax.random.split(key, 5)
    w = jax.random.normal(k1, (kh, kw, cin, cout), jnp.float32) * 0.05
    gamma = 1.0 + 0.1 * jax.random.normal(k2, (cout,), jnp.float32)
    beta = 0.1 * jax.random.normal(k3, (cout,), jnp.float32)
    mean = 0.1 * jax.random.normal(k4, (cout,), jnp.float32)
    var = jnp.abs(jax.random.normal(k5, (cout,), jnp.float32)) + 0.5
    scale = gamma / jnp.sqrt(var + eps)
    bias = beta - mean * scale
    return {"w": w, "scale": scale, "bias": bias}


def make_backbone_params(key, in_channels, layers, ch_nums=(64, 128, 256, 512)):
    kernel_size = 3 if len(layers) < 3 else 7
    keys = jax.random.split(key, 64)
    ki = iter(keys)
    params = {"stem": conv_bn_params(next(ki), kernel_size, kernel_size, in_channels, 64)}

    stages = []
    in_ch = 64
    for i, num_blocks in enumerate(layers):
        out_ch = ch_nums[i]
        stride = 1 if i == 0 else 2
        stage = []
        for b in range(num_blocks):
            blk_stride = stride if b == 0 else 1
            blk = {
                "conv1": conv_bn_params(next(ki), 3, 3, in_ch, out_ch),
                "conv2": conv_bn_params(next(ki), 3, 3, out_ch, out_ch),
                "downsample": None,
            }
            if blk_stride != 1 or in_ch != out_ch:
                blk["downsample"] = conv_bn_params(next(ki), 1, 1, in_ch, out_ch)
            stage.append(blk)
            in_ch = out_ch
        stages.append(stage)
    params["stages"] = stages
    return params


# ---------------------------------------------------------------------------
# Forward pass: NCHW -> flattened NHWC -> single fused kernel -> NCHW
# ---------------------------------------------------------------------------
def resnet_backbone_forward(x_nchw, params):
    n, c, h, w = x_nchw.shape
    plan, out_idx, out_hw, out_c = build_plan(params, (h, w))
    x_flat = jnp.transpose(x_nchw, (0, 2, 3, 1)).reshape(n, h * w, c)   # (N, H*W, C)
    out = backbone_pallas_call(x_flat, plan, out_idx, out_hw, out_c)    # (N, Ho*Wo, Cout)
    ho, wo = out_hw
    return jnp.transpose(out.reshape(n, ho, wo, out_c), (0, 3, 1, 2))   # NHWC -> NCHW


# ---------------------------------------------------------------------------
if __name__ == "__main__":
    key = jax.random.PRNGKey(0)
    kx, kp = jax.random.split(key)

    in_channels = 4
    layers = [1, 1]                                     # small BasicBlock config
    x = jax.random.normal(kx, (2, in_channels, 16, 16), jnp.float32)  # NCHW input

    params = make_backbone_params(kp, in_channels, layers)
    out = resnet_backbone_forward(x, params)
    out = jax.block_until_ready(out)

    # stem stride 2: 16->8 ; stage0 stride 1: 8 ; stage1 stride 2: 8->4 ; 128 channels
    assert out.shape == (2, 128, 4, 4), out.shape
    assert bool(jnp.all(jnp.isfinite(out)))
    print("KERNEL_OK")
</pallas_src>

<mosaic_0001>
module attributes {stable_mosaic.version = 11 : i64} {
  func.func @kernel(%arg0: i32, %arg1: memref<1x256x4xf32, #tpu.memory_space<vmem>>, %arg2: memref<9x64x256xbf16, #tpu.memory_space<vmem>>, %arg3: memref<9x4x64xbf16, #tpu.memory_space<vmem>>, %arg4: memref<1x64xf32, #tpu.memory_space<vmem>>, %arg5: memref<9x64x64xbf16, #tpu.memory_space<vmem>>, %arg6: memref<9x64x64xbf16, #tpu.memory_space<vmem>>, %arg7: memref<1x64xf32, #tpu.memory_space<vmem>>, %arg8: memref<9x64x64xbf16, #tpu.memory_space<vmem>>, %arg9: memref<9x64x64xbf16, #tpu.memory_space<vmem>>, %arg10: memref<1x64xf32, #tpu.memory_space<vmem>>, %arg11: memref<9x16x64xbf16, #tpu.memory_space<vmem>>, %arg12: memref<9x64x128xbf16, #tpu.memory_space<vmem>>, %arg13: memref<1x128xf32, #tpu.memory_space<vmem>>, %arg14: memref<1x16x64xbf16, #tpu.memory_space<vmem>>, %arg15: memref<1x64x128xbf16, #tpu.memory_space<vmem>>, %arg16: memref<1x128xf32, #tpu.memory_space<vmem>>, %arg17: memref<9x16x16xbf16, #tpu.memory_space<vmem>>, %arg18: memref<9x128x128xbf16, #tpu.memory_space<vmem>>, %arg19: memref<1x128xf32, #tpu.memory_space<vmem>>, %arg20: memref<1x16x128xf32, #tpu.memory_space<vmem>>) attributes {dimension_semantics = [#tpu.dimension_semantics<parallel>], iteration_bounds = array<i64: 2>, scalar_prefetch = 0 : i64, scratch_operands = 0 : i64, tpu.core_type = #tpu.core_type<tc>, window_params = [{transform_indices = @transform_0, window_bounds = array<i64: 1, 256, 4>}, {pipeline_mode = #tpu.pipeline_mode<synchronous>, transform_indices = @transform_1, window_bounds = array<i64: 9, 64, 256>}, {pipeline_mode = #tpu.pipeline_mode<synchronous>, transform_indices = @transform_2, window_bounds = array<i64: 9, 4, 64>}, {pipeline_mode = #tpu.pipeline_mode<synchronous>, transform_indices = @transform_3, window_bounds = array<i64: 1, 64>}, {pipeline_mode = #tpu.pipeline_mode<synchronous>, transform_indices = @transform_4, window_bounds = array<i64: 9, 64, 64>}, {pipeline_mode = #tpu.pipeline_mode<synchronous>, transform_indices = @transform_5, window_bounds = array<i64: 9, 64, 64>}, {pipeline_mode = #tpu.pipeline_mode<synchronous>, transform_indices = @transform_6, window_bounds = array<i64: 1, 64>}, {pipeline_mode = #tpu.pipeline_mode<synchronous>, transform_indices = @transform_7, window_bounds = array<i64: 9, 64, 64>}, {pipeline_mode = #tpu.pipeline_mode<synchronous>, transform_indices = @transform_8, window_bounds = array<i64: 9, 64, 64>}, {pipeline_mode = #tpu.pipeline_mode<synchronous>, transform_indices = @transform_9, window_bounds = array<i64: 1, 64>}, {pipeline_mode = #tpu.pipeline_mode<synchronous>, transform_indices = @transform_10, window_bounds = array<i64: 9, 16, 64>}, {pipeline_mode = #tpu.pipeline_mode<synchronous>, transform_indices = @transform_11, window_bounds = array<i64: 9, 64, 128>}, {pipeline_mode = #tpu.pipeline_mode<synchronous>, transform_indices = @transform_12, window_bounds = array<i64: 1, 128>}, {pipeline_mode = #tpu.pipeline_mode<synchronous>, transform_indices = @transform_13, window_bounds = array<i64: 1, 16, 64>}, {pipeline_mode = #tpu.pipeline_mode<synchronous>, transform_indices = @transform_14, window_bounds = array<i64: 1, 64, 128>}, {pipeline_mode = #tpu.pipeline_mode<synchronous>, transform_indices = @transform_15, window_bounds = array<i64: 1, 128>}, {pipeline_mode = #tpu.pipeline_mode<synchronous>, transform_indices = @transform_16, window_bounds = array<i64: 9, 16, 16>}, {pipeline_mode = #tpu.pipeline_mode<synchronous>, transform_indices = @transform_17, window_bounds = array<i64: 9, 128, 128>}, {pipeline_mode = #tpu.pipeline_mode<synchronous>, transform_indices = @transform_18, window_bounds = array<i64: 1, 128>}, {transform_indices = @transform_19, window_bounds = array<i64: 1, 16, 128>}]} {
    %c0 = arith.constant 0 : index
    %c0_0 = arith.constant 0 : index
    %c0_1 = arith.constant 0 : index
    %0 = vector.load %arg1[%c0, %c0_0, %c0_1] : memref<1x256x4xf32, #tpu.memory_space<vmem>>, vector<1x256x4xf32>
    %1 = vector.shape_cast %0 : vector<1x256x4xf32> to vector<256x4xf32>
    %2 = arith.truncf %1 : vector<256x4xf32> to vector<256x4xbf16>
    %cst = arith.constant 0.000000e+00 : f32
    %3 = vector.broadcast %cst : f32 to vector<64x64xf32>
    %c0_2 = arith.constant 0 : index
    %c0_3 = arith.constant 0 : index
    %c0_4 = arith.constant 0 : index
    %4 = vector.load %arg2[%c0_2, %c0_3, %c0_4] : memref<9x64x256xbf16, #tpu.memory_space<vmem>>, vector<1x64x256xbf16>
    %5 = vector.shape_cast %4 : vector<1x64x256xbf16> to vector<64x256xbf16>
    %cst_5 = arith.constant dense<0.000000e+00> : vector<64x4xf32>
    %6 = tpu.matmul %5, %2, %cst_5 {dimension_numbers = #tpu.dot_dimension_numbers<[1], [0], [0], [1], [0, 0, 1, 1], [], []>} : vector<64x256xbf16>, vector<256x4xbf16>, vector<64x4xf32> -> vector<64x4xf32>
    %7 = arith.truncf %6 : vector<64x4xf32> to vector<64x4xbf16>
    %c0_6 = arith.constant 0 : index
    %c0_7 = arith.constant 0 : index
    %c0_8 = arith.constant 0 : index
    %8 = vector.load %arg3[%c0_6, %c0_7, %c0_8] : memref<9x4x64xbf16, #tpu.memory_space<vmem>>, vector<1x4x64xbf16>
    %9 = vector.shape_cast %8 : vector<1x4x64xbf16> to vector<4x64xbf16>
    %cst_9 = arith.constant dense<0.000000e+00> : vector<64x64xf32>
    %10 = tpu.matmul %7, %9, %cst_9 {dimension_numbers = #tpu.dot_dimension_numbers<[1], [0], [0], [1], [0, 0, 1, 1], [], []>} : vector<64x4xbf16>, vector<4x64xbf16>, vector<64x64xf32> -> vector<64x64xf32>
    %11 = arith.addf %3, %10 : vector<64x64xf32>
    %c1 = arith.constant 1 : index
    %c0_10 = arith.constant 0 : index
    %c0_11 = arith.constant 0 : index
    %12 = vector.load %arg2[%c1, %c0_10, %c0_11] : memref<9x64x256xbf16, #tpu.memory_space<vmem>>, vector<1x64x256xbf16>
    %13 = vector.shape_cast %12 : vector<1x64x256xbf16> to vector<64x256xbf16>
    %cst_12 = arith.constant dense<0.000000e+00> : vector<64x4xf32>
    %14 = tpu.matmul %13, %2, %cst_12 {dimension_numbers = #tpu.dot_dimension_numbers<[1], [0], [0], [1], [0, 0, 1, 1], [], []>} : vector<64x256xbf16>, vector<256x4xbf16>, vector<64x4xf32> -> vector<64x4xf32>
    %15 = arith.truncf %14 : vector<64x4xf32> to vector<64x4xbf16>
    %c1_13 = arith.constant 1 : index
    %c0_14 = arith.constant 0 : index
    %c0_15 = arith.constant 0 : index
    %16 = vector.load %arg3[%c1_13, %c0_14, %c0_15] : memref<9x4x64xbf16, #tpu.memory_space<vmem>>, vector<1x4x64xbf16>
    %17 = vector.shape_cast %16 : vector<1x4x64xbf16> to vector<4x64xbf16>
    %cst_16 = arith.constant dense<0.000000e+00> : vector<64x64xf32>
    %18 = tpu.matmul %15, %17, %cst_16 {dimension_numbers = #tpu.dot_dimension_numbers<[1], [0], [0], [1], [0, 0, 1, 1], [], []>} : vector<64x4xbf16>, vector<4x64xbf16>, vector<64x64xf32> -> vector<64x64xf32>
    %19 = arith.addf %11, %18 : vector<64x64xf32>
    %c2 = arith.constant 2 : index
    %c0_17 = arith.constant 0 : index
    %c0_18 = arith.constant 0 : index
    %20 = vector.load %arg2[%c2, %c0_17, %c0_18] : memref<9x64x256xbf16, #tpu.memory_space<vmem>>, vector<1x64x256xbf16>
    %21 = vector.shape_cast %20 : vector<1x64x256xbf16> to vector<64x256xbf16>
    %cst_19 = arith.constant dense<0.000000e+00> : vector<64x4xf32>
    %22 = tpu.matmul %21, %2, %cst_19 {dimension_numbers = #tpu.dot_dimension_numbers<[1], [0], [0], [1], [0, 0, 1, 1], [], []>} : vector<64x256xbf16>, vector<256x4xbf16>, vector<64x4xf32> -> vector<64x4xf32>
    %23 = arith.truncf %22 : vector<64x4xf32> to vector<64x4xbf16>
    %c2_20 = arith.constant 2 : index
    %c0_21 = arith.constant 0 : index
    %c0_22 = arith.constant 0 : index
    %24 = vector.load %arg3[%c2_20, %c0_21, %c0_22] : memref<9x4x64xbf16, #tpu.memory_space<vmem>>, vector<1x4x64xbf16>
    %25 = vector.shape_cast %24 : vector<1x4x64xbf16> to vector<4x64xbf16>
    %cst_23 = arith.constant dense<0.000000e+00> : vector<64x64xf32>
    %26 = tpu.matmul %23, %25, %cst_23 {dimension_numbers = #tpu.dot_dimension_numbers<[1], [0], [0], [1], [0, 0, 1, 1], [], []>} : vector<64x4xbf16>, vector<4x64xbf16>, vector<64x64xf32> -> vector<64x64xf32>
    %27 = arith.addf %19, %26 : vector<64x64xf32>
    %c3 = arith.constant 3 : index
    %c0_24 = arith.constant 0 : index
    %c0_25 = arith.constant 0 : index
    %28 = vector.load %arg2[%c3, %c0_24, %c0_25] : memref<9x64x256xbf16, #tpu.memory_space<vmem>>, vector<1x64x256xbf16>
    %29 = vector.shape_cast %28 : vector<1x64x256xbf16> to vector<64x256xbf16>
    %cst_26 = arith.constant dense<0.000000e+00> : vector<64x4xf32>
    %30 = tpu.matmul %29, %2, %cst_26 {dimension_numbers = #tpu.dot_dimension_numbers<[1], [0], [0], [1], [0, 0, 1, 1], [], []>} : vector<64x256xbf16>, vector<256x4xbf16>, vector<64x4xf32> -> vector<64x4xf32>
    %31 = arith.truncf %30 : vector<64x4xf32> to vector<64x4xbf16>
    %c3_27 = arith.constant 3 : index
    %c0_28 = arith.constant 0 : index
    %c0_29 = arith.constant 0 : index
    %32 = vector.load %arg3[%c3_27, %c0_28, %c0_29] : memref<9x4x64xbf16, #tpu.memory_space<vmem>>, vector<1x4x64xbf16>
    %33 = vector.shape_cast %32 : vector<1x4x64xbf16> to vector<4x64xbf16>
    %cst_30 = arith.constant dense<0.000000e+00> : vector<64x64xf32>
    %34 = tpu.matmul %31, %33, %cst_30 {dimension_numbers = #tpu.dot_dimension_numbers<[1], [0], [0], [1], [0, 0, 1, 1], [], []>} : vector<64x4xbf16>, vector<4x64xbf16>, vector<64x64xf32> -> vector<64x64xf32>
    %35 = arith.addf %27, %34 : vector<64x64xf32>
    %c4 = arith.constant 4 : index
    %c0_31 = arith.constant 0 : index
    %c0_32 = arith.constant 0 : index
    %36 = vector.load %arg2[%c4, %c0_31, %c0_32] : memref<9x64x256xbf16, #tpu.memory_space<vmem>>, vector<1x64x256xbf16>
    %37 = vector.shape_cast %36 : vector<1x64x256xbf16> to vector<64x256xbf16>
    %cst_33 = arith.constant dense<0.000000e+00> : vector<64x4xf32>
    %38 = tpu.matmul %37, %2, %cst_33 {dimension_numbers = #tpu.dot_dimension_numbers<[1], [0], [0], [1], [0, 0, 1, 1], [], []>} : vector<64x256xbf16>, vector<256x4xbf16>, vector<64x4xf32> -> vector<64x4xf32>
    %39 = arith.truncf %38 : vector<64x4xf32> to vector<64x4xbf16>
    %c4_34 = arith.constant 4 : index
    %c0_35 = arith.constant 0 : index
    %c0_36 = arith.constant 0 : index
    %40 = vector.load %arg3[%c4_34, %c0_35, %c0_36] : memref<9x4x64xbf16, #tpu.memory_space<vmem>>, vector<1x4x64xbf16>
    %41 = vector.shape_cast %40 : vector<1x4x64xbf16> to vector<4x64xbf16>
    %cst_37 = arith.constant dense<0.000000e+00> : vector<64x64xf32>
    %42 = tpu.matmul %39, %41, %cst_37 {dimension_numbers = #tpu.dot_dimension_numbers<[1], [0], [0], [1], [0, 0, 1, 1], [], []>} : vector<64x4xbf16>, vector<4x64xbf16>, vector<64x64xf32> -> vector<64x64xf32>
    %43 = arith.addf %35, %42 : vector<64x64xf32>
    %c5 = arith.constant 5 : index
    %c0_38 = arith.constant 0 : index
    %c0_39 = arith.constant 0 : index
    %44 = vector.load %arg2[%c5, %c0_38, %c0_39] : memref<9x64x256xbf16, #tpu.memory_space<vmem>>, vector<1x64x256xbf16>
    %45 = vector.shape_cast %44 : vector<1x64x256xbf16> to vector<64x256xbf16>
    %cst_40 = arith.constant dense<0.000000e+00> : vector<64x4xf32>
    %46 = tpu.matmul %45, %2, %cst_40 {dimension_numbers = #tpu.dot_dimension_numbers<[1], [0], [0], [1], [0, 0, 1, 1], [], []>} : vector<64x256xbf16>, vector<256x4xbf16>, vector<64x4xf32> -> vector<64x4xf32>
    %47 = arith.truncf %46 : vector<64x4xf32> to vector<64x4xbf16>
    %c5_41 = arith.constant 5 : index
    %c0_42 = arith.constant 0 : index
    %c0_43 = arith.constant 0 : index
    %48 = vector.load %arg3[%c5_41, %c0_42, %c0_43] : memref<9x4x64xbf16, #tpu.memory_space<vmem>>, vector<1x4x64xbf16>
    %49 = vector.shape_cast %48 : vector<1x4x64xbf16> to vector<4x64xbf16>
    %cst_44 = arith.constant dense<0.000000e+00> : vector<64x64xf32>
    %50 = tpu.matmul %47, %49, %cst_44 {dimension_numbers = #tpu.dot_dimension_numbers<[1], [0], [0], [1], [0, 0, 1, 1], [], []>} : vector<64x4xbf16>, vector<4x64xbf16>, vector<64x64xf32> -> vector<64x64xf32>
    %51 = arith.addf %43, %50 : vector<64x64xf32>
    %c6 = arith.constant 6 : index
    %c0_45 = arith.constant 0 : index
    %c0_46 = arith.constant 0 : index
    %52 = vector.load %arg2[%c6, %c0_45, %c0_46] : memref<9x64x256xbf16, #tpu.memory_space<vmem>>, vector<1x64x256xbf16>
    %53 = vector.shape_cast %52 : vector<1x64x256xbf16> to vector<64x256xbf16>
    %cst_47 = arith.constant dense<0.000000e+00> : vector<64x4xf32>
    %54 = tpu.matmul %53, %2, %cst_47 {dimension_numbers = #tpu.dot_dimension_numbers<[1], [0], [0], [1], [0, 0, 1, 1], [], []>} : vector<64x256xbf16>, vector<256x4xbf16>, vector<64x4xf32> -> vector<64x4xf32>
    %55 = arith.truncf %54 : vector<64x4xf32> to vector<64x4xbf16>
    %c6_48 = arith.constant 6 : index
    %c0_49 = arith.constant 0 : index
    %c0_50 = arith.constant 0 : index
    %56 = vector.load %arg3[%c6_48, %c0_49, %c0_50] : memref<9x4x64xbf16, #tpu.memory_space<vmem>>, vector<1x4x64xbf16>
    %57 = vector.shape_cast %56 : vector<1x4x64xbf16> to vector<4x64xbf16>
    %cst_51 = arith.constant dense<0.000000e+00> : vector<64x64xf32>
    %58 = tpu.matmul %55, %57, %cst_51 {dimension_numbers = #tpu.dot_dimension_numbers<[1], [0], [0], [1], [0, 0, 1, 1], [], []>} : vector<64x4xbf16>, vector<4x64xbf16>, vector<64x64xf32> -> vector<64x64xf32>
    %59 = arith.addf %51, %58 : vector<64x64xf32>
    %c7 = arith.constant 7 : index
    %c0_52 = arith.constant 0 : index
    %c0_53 = arith.constant 0 : index
    %60 = vector.load %arg2[%c7, %c0_52, %c0_53] : memref<9x64x256xbf16, #tpu.memory_space<vmem>>, vector<1x64x256xbf16>
    %61 = vector.shape_cast %60 : vector<1x64x256xbf16> to vector<64x256xbf16>
    %cst_54 = arith.constant dense<0.000000e+00> : vector<64x4xf32>
    %62 = tpu.matmul %61, %2, %cst_54 {dimension_numbers = #tpu.dot_dimension_numbers<[1], [0], [0], [1], [0, 0, 1, 1], [], []>} : vector<64x256xbf16>, vector<256x4xbf16>, vector<64x4xf32> -> vector<64x4xf32>
    %63 = arith.truncf %62 : vector<64x4xf32> to vector<64x4xbf16>
    %c7_55 = arith.constant 7 : index
    %c0_56 = arith.constant 0 : index
    %c0_57 = arith.constant 0 : index
    %64 = vector.load %arg3[%c7_55, %c0_56, %c0_57] : memref<9x4x64xbf16, #tpu.memory_space<vmem>>, vector<1x4x64xbf16>
    %65 = vector.shape_cast %64 : vector<1x4x64xbf16> to vector<4x64xbf16>
    %cst_58 = arith.constant dense<0.000000e+00> : vector<64x64xf32>
    %66 = tpu.matmul %63, %65, %cst_58 {dimension_numbers = #tpu.dot_dimension_numbers<[1], [0], [0], [1], [0, 0, 1, 1], [], []>} : vector<64x4xbf16>, vector<4x64xbf16>, vector<64x64xf32> -> vector<64x64xf32>
    %67 = arith.addf %59, %66 : vector<64x64xf32>
    %c8 = arith.constant 8 : index
    %c0_59 = arith.constant 0 : index
    %c0_60 = arith.constant 0 : index
    %68 = vector.load %arg2[%c8, %c0_59, %c0_60] : memref<9x64x256xbf16, #tpu.memory_space<vmem>>, vector<1x64x256xbf16>
    %69 = vector.shape_cast %68 : vector<1x64x256xbf16> to vector<64x256xbf16>
    %cst_61 = arith.constant dense<0.000000e+00> : vector<64x4xf32>
    %70 = tpu.matmul %69, %2, %cst_61 {dimension_numbers = #tpu.dot_dimension_numbers<[1], [0], [0], [1], [0, 0, 1, 1], [], []>} : vector<64x256xbf16>, vector<256x4xbf16>, vector<64x4xf32> -> vector<64x4xf32>
    %71 = arith.truncf %70 : vector<64x4xf32> to vector<64x4xbf16>
    %c8_62 = arith.constant 8 : index
    %c0_63 = arith.constant 0 : index
    %c0_64 = arith.constant 0 : index
    %72 = vector.load %arg3[%c8_62, %c0_63, %c0_64] : memref<9x4x64xbf16, #tpu.memory_space<vmem>>, vector<1x4x64xbf16>
    %73 = vector.shape_cast %72 : vector<1x4x64xbf16> to vector<4x64xbf16>
    %cst_65 = arith.constant dense<0.000000e+00> : vector<64x64xf32>
    %74 = tpu.matmul %71, %73, %cst_65 {dimension_numbers = #tpu.dot_dimension_numbers<[1], [0], [0], [1], [0, 0, 1, 1], [], []>} : vector<64x4xbf16>, vector<4x64xbf16>, vector<64x64xf32> -> vector<64x64xf32>
    %75 = arith.addf %67, %74 : vector<64x64xf32>
    %c0_66 = arith.constant 0 : index
    %c0_67 = arith.constant 0 : index
    %76 = vector.load %arg4[%c0_66, %c0_67] : memref<1x64xf32, #tpu.memory_space<vmem>>, vector<1x64xf32>
    %77 = vector.broadcast %76 : vector<1x64xf32> to vector<64x64xf32>
    %78 = arith.addf %75, %77 : vector<64x64xf32>
    %cst_68 = arith.constant 0.000000e+00 : f32
    %79 = vector.broadcast %cst_68 : f32 to vector<64x64xf32>
    %80 = arith.maximumf %78, %79 : vector<64x64xf32>
    %81 = arith.truncf %80 : vector<64x64xf32> to vector<64x64xbf16>
    %cst_69 = arith.constant 0.000000e+00 : f32
    %82 = vector.broadcast %cst_69 : f32 to vector<64x64xf32>
    %c0_70 = arith.constant 0 : index
    %c0_71 = arith.constant 0 : index
    %c0_72 = arith.constant 0 : index
    %83 = vector.load %arg5[%c0_70, %c0_71, %c0_72] : memref<9x64x64xbf16, #tpu.memory_space<vmem>>, vector<1x64x64xbf16>
    %84 = vector.shape_cast %83 : vector<1x64x64xbf16> to vector<64x64xbf16>
    %cst_73 = arith.constant dense<0.000000e+00> : vector<64x64xf32>
    %85 = tpu.matmul %84, %81, %cst_73 {dimension_numbers = #tpu.dot_dimension_numbers<[1], [0], [0], [1], [0, 0, 1, 1], [], []>} : vector<64x64xbf16>, vector<64x64xbf16>, vector<64x64xf32> -> vector<64x64xf32>
    %86 = arith.truncf %85 : vector<64x64xf32> to vector<64x64xbf16>
    %c0_74 = arith.constant 0 : index
    %c0_75 = arith.constant 0 : index
    %c0_76 = arith.constant 0 : index
    %87 = vector.load %arg6[%c0_74, %c0_75, %c0_76] : memref<9x64x64xbf16, #tpu.memory_space<vmem>>, vector<1x64x64xbf16>
    %88 = vector.shape_cast %87 : vector<1x64x64xbf16> to vector<64x64xbf16>
    %cst_77 = arith.constant dense<0.000000e+00> : vector<64x64xf32>
    %89 = tpu.matmul %86, %88, %cst_77 {dimension_numbers = #tpu.dot_dimension_numbers<[1], [0], [0], [1], [0, 0, 1, 1], [], []>} : vector<64x64xbf16>, vector<64x64xbf16>, vector<64x64xf32> -> vector<64x64xf32>
    %90 = arith.addf %82, %89 : vector<64x64xf32>
    %c1_78 = arith.constant 1 : index
    %c0_79 = arith.constant 0 : index
    %c0_80 = arith.constant 0 : index
    %91 = vector.load %arg5[%c1_78, %c0_79, %c0_80] : memref<9x64x64xbf16, #tpu.memory_space<vmem>>, vector<1x64x64xbf16>
    %92 = vector.shape_cast %91 : vector<1x64x64xbf16> to vector<64x64xbf16>
    %cst_81 = arith.constant dense<0.000000e+00> : vector<64x64xf32>
    %93 = tpu.matmul %92, %81, %cst_81 {dimension_numbers = #tpu.dot_dimension_numbers<[1], [0], [0], [1], [0, 0, 1, 1], [], []>} : vector<64x64xbf16>, vector<64x64xbf16>, vector<64x64xf32> -> vector<64x64xf32>
    %94 = arith.truncf %93 : vector<64x64xf32> to vector<64x64xbf16>
    %c1_82 = arith.constant 1 : index
    %c0_83 = arith.constant 0 : index
    %c0_84 = arith.constant 0 : index
    %95 = vector.load %arg6[%c1_82, %c0_83, %c0_84] : memref<9x64x64xbf16, #tpu.memory_space<vmem>>, vector<1x64x64xbf16>
    %96 = vector.shape_cast %95 : vector<1x64x64xbf16> to vector<64x64xbf16>
    %cst_85 = arith.constant dense<0.000000e+00> : vector<64x64xf32>
    %97 = tpu.matmul %94, %96, %cst_85 {dimension_numbers = #tpu.dot_dimension_numbers<[1], [0], [0], [1], [0, 0, 1, 1], [], []>} : vector<64x64xbf16>, vector<64x64xbf16>, vector<64x64xf32> -> vector<64x64xf32>
    %98 = arith.addf %90, %97 : vector<64x64xf32>
    %c2_86 = arith.constant 2 : index
    %c0_87 = arith.constant 0 : index
    %c0_88 = arith.constant 0 : index
    %99 = vector.load %arg5[%c2_86, %c0_87, %c0_88] : memref<9x64x64xbf16, #tpu.memory_space<vmem>>, vector<1x64x64xbf16>
    %100 = vector.shape_cast %99 : vector<1x64x64xbf16> to vector<64x64xbf16>
    %cst_89 = arith.constant dense<0.000000e+00> : vector<64x64xf32>
    %101 = tpu.matmul %100, %81, %cst_89 {dimension_numbers = #tpu.dot_dimension_numbers<[1], [0], [0], [1], [0, 0, 1, 1], [], []>} : vector<64x64xbf16>, vector<64x64xbf16>, vector<64x64xf32> -> vector<64x64xf32>
    %102 = arith.truncf %101 : vector<64x64xf32> to vector<64x64xbf16>
    %c2_90 = arith.constant 2 : index
    %c0_91 = arith.constant 0 : index
    %c0_92 = arith.constant 0 : index
    %103 = vector.load %arg6[%c2_90, %c0_91, %c0_92] : memref<9x64x64xbf16, #tpu.memory_space<vmem>>, vector<1x64x64xbf16>
    %104 = vector.shape_cast %103 : vector<1x64x64xbf16> to vector<64x64xbf16>
    %cst_93 = arith.constant dense<0.000000e+00> : vector<64x64xf32>
    %105 = tpu.matmul %102, %104, %cst_93 {dimension_numbers = #tpu.dot_dimension_numbers<[1], [0], [0], [1], [0, 0, 1, 1], [], []>} : vector<64x64xbf16>, vector<64x64xbf16>, vector<64x64xf32> -> vector<64x64xf32>
    %106 = arith.addf %98, %105 : vector<64x64xf32>
    %c3_94 = arith.constant 3 : index
    %c0_95 = arith.constant 0 : index
    %c0_96 = arith.constant 0 : index
    %107 = vector.load %arg5[%c3_94, %c0_95, %c0_96] : memref<9x64x64xbf16, #tpu.memory_space<vmem>>, vector<1x64x64xbf16>
    %108 = vector.shape_cast %107 : vector<1x64x64xbf16> to vector<64x64xbf16>
    %cst_97 = arith.constant dense<0.000000e+00> : vector<64x64xf32>
    %109 = tpu.matmul %108, %81, %cst_97 {dimension_numbers = #tpu.dot_dimension_numbers<[1], [0], [0], [1], [0, 0, 1, 1], [], []>} : vector<64x64xbf16>, vector<64x64xbf16>, vector<64x64xf32> -> vector<64x64xf32>
    %110 = arith.truncf %109 : vector<64x64xf32> to vector<64x64xbf16>
    %c3_98 = arith.constant 3 : index
    %c0_99 = arith.constant 0 : index
    %c0_100 = arith.constant 0 : index
    %111 = vector.load %arg6[%c3_98, %c0_99, %c0_100] : memref<9x64x64xbf16, #tpu.memory_space<vmem>>, vector<1x64x64xbf16>
    %112 = vector.shape_cast %111 : vector<1x64x64xbf16> to vector<64x64xbf16>
    %cst_101 = arith.constant dense<0.000000e+00> : vector<64x64xf32>
    %113 = tpu.matmul %110, %112, %cst_101 {dimension_numbers = #tpu.dot_dimension_numbers<[1], [0], [0], [1], [0, 0, 1, 1], [], []>} : vector<64x64xbf16>, vector<64x64xbf16>, vector<64x64xf32> -> vector<64x64xf32>
    %114 = arith.addf %106, %113 : vector<64x64xf32>
    %c4_102 = arith.constant 4 : index
    %c0_103 = arith.constant 0 : index
    %c0_104 = arith.constant 0 : index
    %115 = vector.load %arg5[%c4_102, %c0_103, %c0_104] : memref<9x64x64xbf16, #tpu.memory_space<vmem>>, vector<1x64x64xbf16>
    %116 = vector.shape_cast %115 : vector<1x64x64xbf16> to vector<64x64xbf16>
    %cst_105 = arith.constant dense<0.000000e+00> : vector<64x64xf32>
    %117 = tpu.matmul %116, %81, %cst_105 {dimension_numbers = #tpu.dot_dimension_numbers<[1], [0], [0], [1], [0, 0, 1, 1], [], []>} : vector<64x64xbf16>, vector<64x64xbf16>, vector<64x64xf32> -> vector<64x64xf32>
    %118 = arith.truncf %117 : vector<64x64xf32> to vector<64x64xbf16>
    %c4_106 = arith.constant 4 : index
    %c0_107 = arith.constant 0 : index
    %c0_108 = arith.constant 0 : index
    %119 = vector.load %arg6[%c4_106, %c0_107, %c0_108] : memref<9x64x64xbf16, #tpu.memory_space<vmem>>, vector<1x64x64xbf16>
    %120 = vector.shape_cast %119 : vector<1x64x64xbf16> to vector<64x64xbf16>
    %cst_109 = arith.constant dense<0.000000e+00> : vector<64x64xf32>
    %121 = tpu.matmul %118, %120, %cst_109 {dimension_numbers = #tpu.dot_dimension_numbers<[1], [0], [0], [1], [0, 0, 1, 1], [], []>} : vector<64x64xbf16>, vector<64x64xbf16>, vector<64x64xf32> -> vector<64x64xf32>
    %122 = arith.addf %114, %121 : vector<64x64xf32>
    %c5_110 = arith.constant 5 : index
    %c0_111 = arith.constant 0 : index
    %c0_112 = arith.constant 0 : index
    %123 = vector.load %arg5[%c5_110, %c0_111, %c0_112] : memref<9x64x64xbf16, #tpu.memory_space<vmem>>, vector<1x64x64xbf16>
    %124 = vector.shape_cast %123 : vector<1x64x64xbf16> to vector<64x64xbf16>
    %cst_113 = arith.constant dense<0.000000e+00> : vector<64x64xf32>
    %125 = tpu.matmul %124, %81, %cst_113 {dimension_numbers = #tpu.dot_dimension_numbers<[1], [0], [0], [1], [0, 0, 1, 1], [], []>} : vector<64x64xbf16>, vector<64x64xbf16>, vector<64x64xf32> -> vector<64x64xf32>
    %126 = arith.truncf %125 : vector<64x64xf32> to vector<64x64xbf16>
    %c5_114 = arith.constant 5 : index
    %c0_115 = arith.constant 0 : index
    %c0_116 = arith.constant 0 : index
    %127 = vector.load %arg6[%c5_114, %c0_115, %c0_116] : memref<9x64x64xbf16, #tpu.memory_space<vmem>>, vector<1x64x64xbf16>
    %128 = vector.shape_cast %127 : vector<1x64x64xbf16> to vector<64x64xbf16>
    %cst_117 = arith.constant dense<0.000000e+00> : vector<64x64xf32>
    %129 = tpu.matmul %126, %128, %cst_117 {dimension_numbers = #tpu.dot_dimension_numbers<[1], [0], [0], [1], [0, 0, 1, 1], [], []>} : vector<64x64xbf16>, vector<64x64xbf16>, vector<64x64xf32> -> vector<64x64xf32>
    %130 = arith.addf %122, %129 : vector<64x64xf32>
    %c6_118 = arith.constant 6 : index
    %c0_119 = arith.constant 0 : index
    %c0_120 = arith.constant 0 : index
    %131 = vector.load %arg5[%c6_118, %c0_119, %c0_120] : memref<9x64x64xbf16, #tpu.memory_space<vmem>>, vector<1x64x64xbf16>
    %132 = vector.shape_cast %131 : vector<1x64x64xbf16> to vector<64x64xbf16>
    %cst_121 = arith.constant dense<0.000000e+00> : vector<64x64xf32>
    %133 = tpu.matmul %132, %81, %cst_121 {dimension_numbers = #tpu.dot_dimension_numbers<[1], [0], [0], [1], [0, 0, 1, 1], [], []>} : vector<64x64xbf16>, vector<64x64xbf16>, vector<64x64xf32> -> vector<64x64xf32>
    %134 = arith.truncf %133 : vector<64x64xf32> to vector<64x64xbf16>
    %c6_122 = arith.constant 6 : index
    %c0_123 = arith.constant 0 : index
    %c0_124 = arith.constant 0 : index
    %135 = vector.load %arg6[%c6_122, %c0_123, %c0_124] : memref<9x64x64xbf16, #tpu.memory_space<vmem>>, vector<1x64x64xbf16>
    %136 = vector.shape_cast %135 : vector<1x64x64xbf16> to vector<64x64xbf16>
    %cst_125 = arith.constant dense<0.000000e+00> : vector<64x64xf32>
    %137 = tpu.matmul %134, %136, %cst_125 {dimension_numbers = #tpu.dot_dimension_numbers<[1], [0], [0], [1], [0, 0, 1, 1], [], []>} : vector<64x64xbf16>, vector<64x64xbf16>, vector<64x64xf32> -> vector<64x64xf32>
    %138 = arith.addf %130, %137 : vector<64x64xf32>
    %c7_126 = arith.constant 7 : index
    %c0_127 = arith.constant 0 : index
    %c0_128 = arith.constant 0 : index
    %139 = vector.load %arg5[%c7_126, %c0_127, %c0_128] : memref<9x64x64xbf16, #tpu.memory_space<vmem>>, vector<1x64x64xbf16>
    %140 = vector.shape_cast %139 : vector<1x64x64xbf16> to vector<64x64xbf16>
    %cst_129 = arith.constant dense<0.000000e+00> : vector<64x64xf32>
    %141 = tpu.matmul %140, %81, %cst_129 {dimension_numbers = #tpu.dot_dimension_numbers<[1], [0], [0], [1], [0, 0, 1, 1], [], []>} : vector<64x64xbf16>, vector<64x64xbf16>, vector<64x64xf32> -> vector<64x64xf32>
    %142 = arith.truncf %141 : vector<64x64xf32> to vector<64x64xbf16>
    %c7_130 = arith.constant 7 : index
    %c0_131 = arith.constant 0 : index
    %c0_132 = arith.constant 0 : index
    %143 = vector.load %arg6[%c7_130, %c0_131, %c0_132] : memref<9x64x64xbf16, #tpu.memory_space<vmem>>, vector<1x64x64xbf16>
    %144 = vector.shape_cast %143 : vector<1x64x64xbf16> to vector<64x64xbf16>
    %cst_133 = arith.constant dense<0.000000e+00> : vector<64x64xf32>
    %145 = tpu.matmul %142, %144, %cst_133 {dimension_numbers = #tpu.dot_dimension_numbers<[1], [0], [0], [1], [0, 0, 1, 1], [], []>} : vector<64x64xbf16>, vector<64x64xbf16>, vector<64x64xf32> -> vector<64x64xf32>
    %146 = arith.addf %138, %145 : vector<64x64xf32>
    %c8_134 = arith.constant 8 : index
    %c0_135 = arith.constant 0 : index
    %c0_136 = arith.constant 0 : index
    %147 = vector.load %arg5[%c8_134, %c0_135, %c0_136] : memref<9x64x64xbf16, #tpu.memory_space<vmem>>, vector<1x64x64xbf16>
    %148 = vector.shape_cast %147 : vector<1x64x64xbf16> to vector<64x64xbf16>
    %cst_137 = arith.constant dense<0.000000e+00> : vector<64x64xf32>
    %149 = tpu.matmul %148, %81, %cst_137 {dimension_numbers = #tpu.dot_dimension_numbers<[1], [0], [0], [1], [0, 0, 1, 1], [], []>} : vector<64x64xbf16>, vector<64x64xbf16>, vector<64x64xf32> -> vector<64x64xf32>
    %150 = arith.truncf %149 : vector<64x64xf32> to vector<64x64xbf16>
    %c8_138 = arith.constant 8 : index
    %c0_139 = arith.constant 0 : index
    %c0_140 = arith.constant 0 : index
    %151 = vector.load %arg6[%c8_138, %c0_139, %c0_140] : memref<9x64x64xbf16, #tpu.memory_space<vmem>>, vector<1x64x64xbf16>
    %152 = vector.shape_cast %151 : vector<1x64x64xbf16> to vector<64x64xbf16>
    %cst_141 = arith.constant dense<0.000000e+00> : vector<64x64xf32>
    %153 = tpu.matmul %150, %152, %cst_141 {dimension_numbers = #tpu.dot_dimension_numbers<[1], [0], [0], [1], [0, 0, 1, 1], [], []>} : vector<64x64xbf16>, vector<64x64xbf16>, vector<64x64xf32> -> vector<64x64xf32>
    %154 = arith.addf %146, %153 : vector<64x64xf32>
    %c0_142 = arith.constant 0 : index
    %c0_143 = arith.constant 0 : index
    %155 = vector.load %arg7[%c0_142, %c0_143] : memref<1x64xf32, #tpu.memory_space<vmem>>, vector<1x64xf32>
    %156 = vector.broadcast %155 : vector<1x64xf32> to vector<64x64xf32>
    %157 = arith.addf %154, %156 : vector<64x64xf32>
    %cst_144 = arith.constant 0.000000e+00 : f32
    %158 = vector.broadcast %cst_144 : f32 to vector<64x64xf32>
    %159 = arith.maximumf %157, %158 : vector<64x64xf32>
    %160 = arith.truncf %159 : vector<64x64xf32> to vector<64x64xbf16>
    %cst_145 = arith.constant 0.000000e+00 : f32
    %161 = vector.broadcast %cst_145 : f32 to vector<64x64xf32>
    %c0_146 = arith.constant 0 : index
    %c0_147 = arith.constant 0 : index
    %c0_148 = arith.constant 0 : index
    %162 = vector.load %arg8[%c0_146, %c0_147, %c0_148] : memref<9x64x64xbf16, #tpu.memory_space<vmem>>, vector<1x64x64xbf16>
    %163 = vector.shape_cast %162 : vector<1x64x64xbf16> to vector<64x64xbf16>
    %cst_149 = arith.constant dense<0.000000e+00> : vector<64x64xf32>
    %164 = tpu.matmul %163, %160, %cst_149 {dimension_numbers = #tpu.dot_dimension_numbers<[1], [0], [0], [1], [0, 0, 1, 1], [], []>} : vector<64x64xbf16>, vector<64x64xbf16>, vector<64x64xf32> -> vector<64x64xf32>
    %165 = arith.truncf %164 : vector<64x64xf32> to vector<64x64xbf16>
    %c0_150 = arith.constant 0 : index
    %c0_151 = arith.constant 0 : index
    %c0_152 = arith.constant 0 : index
    %166 = vector.load %arg9[%c0_150, %c0_151, %c0_152] : memref<9x64x64xbf16, #tpu.memory_space<vmem>>, vector<1x64x64xbf16>
    %167 = vector.shape_cast %166 : vector<1x64x64xbf16> to vector<64x64xbf16>
    %cst_153 = arith.constant dense<0.000000e+00> : vector<64x64xf32>
    %168 = tpu.matmul %165, %167, %cst_153 {dimension_numbers = #tpu.dot_dimension_numbers<[1], [0], [0], [1], [0, 0, 1, 1], [], []>} : vector<64x64xbf16>, vector<64x64xbf16>, vector<64x64xf32> -> vector<64x64xf32>
    %169 = arith.addf %161, %168 : vector<64x64xf32>
    %c1_154 = arith.constant 1 : index
    %c0_155 = arith.constant 0 : index
    %c0_156 = arith.constant 0 : index
    %170 = vector.load %arg8[%c1_154, %c0_155, %c0_156] : memref<9x64x64xbf16, #tpu.memory_space<vmem>>, vector<1x64x64xbf16>
    %171 = vector.shape_cast %170 : vector<1x64x64xbf16> to vector<64x64xbf16>
    %cst_157 = arith.constant dense<0.000000e+00> : vector<64x64xf32>
    %172 = tpu.matmul %171, %160, %cst_157 {dimension_numbers = #tpu.dot_dimension_numbers<[1], [0], [0], [1], [0, 0, 1, 1], [], []>} : vector<64x64xbf16>, vector<64x64xbf16>, vector<64x64xf32> -> vector<64x64xf32>
    %173 = arith.truncf %172 : vector<64x64xf32> to vector<64x64xbf16>
    %c1_158 = arith.constant 1 : index
    %c0_159 = arith.constant 0 : index
    %c0_160 = arith.constant 0 : index
    %174 = vector.load %arg9[%c1_158, %c0_159, %c0_160] : memref<9x64x64xbf16, #tpu.memory_space<vmem>>, vector<1x64x64xbf16>
    %175 = vector.shape_cast %174 : vector<1x64x64xbf16> to vector<64x64xbf16>
    %cst_161 = arith.constant dense<0.000000e+00> : vector<64x64xf32>
    %176 = tpu.matmul %173, %175, %cst_161 {dimension_numbers = #tpu.dot_dimension_numbers<[1], [0], [0], [1], [0, 0, 1, 1], [], []>} : vector<64x64xbf16>, vector<64x64xbf16>, vector<64x64xf32> -> vector<64x64xf32>
    %177 = arith.addf %169, %176 : vector<64x64xf32>
    %c2_162 = arith.constant 2 : index
    %c0_163 = arith.constant 0 : index
    %c0_164 = arith.constant 0 : index
    %178 = vector.load %arg8[%c2_162, %c0_163, %c0_164] : memref<9x64x64xbf16, #tpu.memory_space<vmem>>, vector<1x64x64xbf16>
    %179 = vector.shape_cast %178 : vector<1x64x64xbf16> to vector<64x64xbf16>
    %cst_165 = arith.constant dense<0.000000e+00> : vector<64x64xf32>
    %180 = tpu.matmul %179, %160, %cst_165 {dimension_numbers = #tpu.dot_dimension_numbers<[1], [0], [0], [1], [0, 0, 1, 1], [], []>} : vector<64x64xbf16>, vector<64x64xbf16>, vector<64x64xf32> -> vector<64x64xf32>
    %181 = arith.truncf %180 : vector<64x64xf32> to vector<64x64xbf16>
    %c2_166 = arith.constant 2 : index
    %c0_167 = arith.constant 0 : index
    %c0_168 = arith.constant 0 : index
    %182 = vector.load %arg9[%c2_166, %c0_167, %c0_168] : memref<9x64x64xbf16, #tpu.memory_space<vmem>>, vector<1x64x64xbf16>
    %183 = vector.shape_cast %182 : vector<1x64x64xbf16> to vector<64x64xbf16>
    %cst_169 = arith.constant dense<0.000000e+00> : vector<64x64xf32>
    %184 = tpu.matmul %181, %183, %cst_169 {dimension_numbers = #tpu.dot_dimension_numbers<[1], [0], [0], [1], [0, 0, 1, 1], [], []>} : vector<64x64xbf16>, vector<64x64xbf16>, vector<64x64xf32> -> vector<64x64xf32>
    %185 = arith.addf %177, %184 : vector<64x64xf32>
    %c3_170 = arith.constant 3 : index
    %c0_171 = arith.constant 0 : index
    %c0_172 = arith.constant 0 : index
    %186 = vector.load %arg8[%c3_170, %c0_171, %c0_172] : memref<9x64x64xbf16, #tpu.memory_space<vmem>>, vector<1x64x64xbf16>
    %187 = vector.shape_cast %186 : vector<1x64x64xbf16> to vector<64x64xbf16>
    %cst_173 = arith.constant dense<0.000000e+00> : vector<64x64xf32>
    %188 = tpu.matmul %187, %160, %cst_173 {dimension_numbers = #tpu.dot_dimension_numbers<[1], [0], [0], [1], [0, 0, 1, 1], [], []>} : vector<64x64xbf16>, vector<64x64xbf16>, vector<64x64xf32> -> vector<64x64xf32>
    %189 = arith.truncf %188 : vector<64x64xf32> to vector<64x64xbf16>
    %c3_174 = arith.constant 3 : index
    %c0_175 = arith.constant 0 : index
    %c0_176 = arith.constant 0 : index
    %190 = vector.load %arg9[%c3_174, %c0_175, %c0_176] : memref<9x64x64xbf16, #tpu.memory_space<vmem>>, vector<1x64x64xbf16>
    %191 = vector.shape_cast %190 : vector<1x64x64xbf16> to vector<64x64xbf16>
    %cst_177 = arith.constant dense<0.000000e+00> : vector<64x64xf32>
    %192 = tpu.matmul %189, %191, %cst_177 {dimension_numbers = #tpu.dot_dimension_numbers<[1], [0], [0], [1], [0, 0, 1, 1], [], []>} : vector<64x64xbf16>, vector<64x64xbf16>, vector<64x64xf32> -> vector<64x64xf32>
    %193 = arith.addf %185, %192 : vector<64x64xf32>
    %c4_178 = arith.constant 4 : index
    %c0_179 = arith.constant 0 : index
    %c0_180 = arith.constant 0 : index
    %194 = vector.load %arg8[%c4_178, %c0_179, %c0_180] : memref<9x64x64xbf16, #tpu.memory_space<vmem>>, vector<1x64x64xbf16>
    %195 = vector.shape_cast %194 : vector<1x64x64xbf16> to vector<64x64xbf16>
    %cst_181 = arith.constant dense<0.000000e+00> : vector<64x64xf32>
    %196 = tpu.matmul %195, %160, %cst_181 {dimension_numbers = #tpu.dot_dimension_numbers<[1], [0], [0], [1], [0, 0, 1, 1], [], []>} : vector<64x64xbf16>, vector<64x64xbf16>, vector<64x64xf32> -> vector<64x64xf32>
    %197 = arith.truncf %196 : vector<64x64xf32> to vector<64x64xbf16>
    %c4_182 = arith.constant 4 : index
    %c0_183 = arith.constant 0 : index
    %c0_184 = arith.constant 0 : index
    %198 = vector.load %arg9[%c4_182, %c0_183, %c0_184] : memref<9x64x64xbf16, #tpu.memory_space<vmem>>, vector<1x64x64xbf16>
    %199 = vector.shape_cast %198 : vector<1x64x64xbf16> to vector<64x64xbf16>
    %cst_185 = arith.constant dense<0.000000e+00> : vector<64x64xf32>
    %200 = tpu.matmul %197, %199, %cst_185 {dimension_numbers = #tpu.dot_dimension_numbers<[1], [0], [0], [1], [0, 0, 1, 1], [], []>} : vector<64x64xbf16>, vector<64x64xbf16>, vector<64x64xf32> -> vector<64x64xf32>
    %201 = arith.addf %193, %200 : vector<64x64xf32>
    %c5_186 = arith.constant 5 : index
    %c0_187 = arith.constant 0 : index
    %c0_188 = arith.constant 0 : index
    %202 = vector.load %arg8[%c5_186, %c0_187, %c0_188] : memref<9x64x64xbf16, #tpu.memory_space<vmem>>, vector<1x64x64xbf16>
    %203 = vector.shape_cast %202 : vector<1x64x64xbf16> to vector<64x64xbf16>
    %cst_189 = arith.constant dense<0.000000e+00> : vector<64x64xf32>
    %204 = tpu.matmul %203, %160, %cst_189 {dimension_numbers = #tpu.dot_dimension_numbers<[1], [0], [0], [1], [0, 0, 1, 1], [], []>} : vector<64x64xbf16>, vector<64x64xbf16>, vector<64x64xf32> -> vector<64x64xf32>
    %205 = arith.truncf %204 : vector<64x64xf32> to vector<64x64xbf16>
    %c5_190 = arith.constant 5 : index
    %c0_191 = arith.constant 0 : index
    %c0_192 = arith.constant 0 : index
    %206 = vector.load %arg9[%c5_190, %c0_191, %c0_192] : memref<9x64x64xbf16, #tpu.memory_space<vmem>>, vector<1x64x64xbf16>
    %207 = vector.shape_cast %206 : vector<1x64x64xbf16> to vector<64x64xbf16>
    %cst_193 = arith.constant dense<0.000000e+00> : vector<64x64xf32>
    %208 = tpu.matmul %205, %207, %cst_193 {dimension_numbers = #tpu.dot_dimension_numbers<[1], [0], [0], [1], [0, 0, 1, 1], [], []>} : vector<64x64xbf16>, vector<64x64xbf16>, vector<64x64xf32> -> vector<64x64xf32>
    %209 = arith.addf %201, %208 : vector<64x64xf32>
    %c6_194 = arith.constant 6 : index
    %c0_195 = arith.constant 0 : index
    %c0_196 = arith.constant 0 : index
    %210 = vector.load %arg8[%c6_194, %c0_195, %c0_196] : memref<9x64x64xbf16, #tpu.memory_space<vmem>>, vector<1x64x64xbf16>
    %211 = vector.shape_cast %210 : vector<1x64x64xbf16> to vector<64x64xbf16>
    %cst_197 = arith.constant dense<0.000000e+00> : vector<64x64xf32>
    %212 = tpu.matmul %211, %160, %cst_197 {dimension_numbers = #tpu.dot_dimension_numbers<[1], [0], [0], [1], [0, 0, 1, 1], [], []>} : vector<64x64xbf16>, vector<64x64xbf16>, vector<64x64xf32> -> vector<64x64xf32>
    %213 = arith.truncf %212 : vector<64x64xf32> to vector<64x64xbf16>
    %c6_198 = arith.constant 6 : index
    %c0_199 = arith.constant 0 : index
    %c0_200 = arith.constant 0 : index
    %214 = vector.load %arg9[%c6_198, %c0_199, %c0_200] : memref<9x64x64xbf16, #tpu.memory_space<vmem>>, vector<1x64x64xbf16>
    %215 = vector.shape_cast %214 : vector<1x64x64xbf16> to vector<64x64xbf16>
    %cst_201 = arith.constant dense<0.000000e+00> : vector<64x64xf32>
    %216 = tpu.matmul %213, %215, %cst_201 {dimension_numbers = #tpu.dot_dimension_numbers<[1], [0], [0], [1], [0, 0, 1, 1], [], []>} : vector<64x64xbf16>, vector<64x64xbf16>, vector<64x64xf32> -> vector<64x64xf32>
    %217 = arith.addf %209, %216 : vector<64x64xf32>
    %c7_202 = arith.constant 7 : index
    %c0_203 = arith.constant 0 : index
    %c0_204 = arith.constant 0 : index
    %218 = vector.load %arg8[%c7_202, %c0_203, %c0_204] : memref<9x64x64xbf16, #tpu.memory_space<vmem>>, vector<1x64x64xbf16>
    %219 = vector.shape_cast %218 : vector<1x64x64xbf16> to vector<64x64xbf16>
    %cst_205 = arith.constant dense<0.000000e+00> : vector<64x64xf32>
    %220 = tpu.matmul %219, %160, %cst_205 {dimension_numbers = #tpu.dot_dimension_numbers<[1], [0], [0], [1], [0, 0, 1, 1], [], []>} : vector<64x64xbf16>, vector<64x64xbf16>, vector<64x64xf32> -> vector<64x64xf32>
    %221 = arith.truncf %220 : vector<64x64xf32> to vector<64x64xbf16>
    %c7_206 = arith.constant 7 : index
    %c0_207 = arith.constant 0 : index
    %c0_208 = arith.constant 0 : index
    %222 = vector.load %arg9[%c7_206, %c0_207, %c0_208] : memref<9x64x64xbf16, #tpu.memory_space<vmem>>, vector<1x64x64xbf16>
    %223 = vector.shape_cast %222 : vector<1x64x64xbf16> to vector<64x64xbf16>
    %cst_209 = arith.constant dense<0.000000e+00> : vector<64x64xf32>
    %224 = tpu.matmul %221, %223, %cst_209 {dimension_numbers = #tpu.dot_dimension_numbers<[1], [0], [0], [1], [0, 0, 1, 1], [], []>} : vector<64x64xbf16>, vector<64x64xbf16>, vector<64x64xf32> -> vector<64x64xf32>
    %225 = arith.addf %217, %224 : vector<64x64xf32>
    %c8_210 = arith.constant 8 : index
    %c0_211 = arith.constant 0 : index
    %c0_212 = arith.constant 0 : index
    %226 = vector.load %arg8[%c8_210, %c0_211, %c0_212] : memref<9x64x64xbf16, #tpu.memory_space<vmem>>, vector<1x64x64xbf16>
    %227 = vector.shape_cast %226 : vector<1x64x64xbf16> to vector<64x64xbf16>
    %cst_213 = arith.constant dense<0.000000e+00> : vector<64x64xf32>
    %228 = tpu.matmul %227, %160, %cst_213 {dimension_numbers = #tpu.dot_dimension_numbers<[1], [0], [0], [1], [0, 0, 1, 1], [], []>} : vector<64x64xbf16>, vector<64x64xbf16>, vector<64x64xf32> -> vector<64x64xf32>
    %229 = arith.truncf %228 : vector<64x64xf32> to vector<64x64xbf16>
    %c8_214 = arith.constant 8 : index
    %c0_215 = arith.constant 0 : index
    %c0_216 = arith.constant 0 : index
    %230 = vector.load %arg9[%c8_214, %c0_215, %c0_216] : memref<9x64x64xbf16, #tpu.memory_space<vmem>>, vector<1x64x64xbf16>
    %231 = vector.shape_cast %230 : vector<1x64x64xbf16> to vector<64x64xbf16>
    %cst_217 = arith.constant dense<0.000000e+00> : vector<64x64xf32>
    %232 = tpu.matmul %229, %231, %cst_217 {dimension_numbers = #tpu.dot_dimension_numbers<[1], [0], [0], [1], [0, 0, 1, 1], [], []>} : vector<64x64xbf16>, vector<64x64xbf16>, vector<64x64xf32> -> vector<64x64xf32>
    %233 = arith.addf %225, %232 : vector<64x64xf32>
    %c0_218 = arith.constant 0 : index
    %c0_219 = arith.constant 0 : index
    %234 = vector.load %arg10[%c0_218, %c0_219] : memref<1x64xf32, #tpu.memory_space<vmem>>, vector<1x64xf32>
    %235 = vector.broadcast %234 : vector<1x64xf32> to vector<64x64xf32>
    %236 = arith.addf %233, %235 : vector<64x64xf32>
    %237 = arith.addf %236, %80 : vector<64x64xf32>
    %cst_220 = arith.constant 0.000000e+00 : f32
    %238 = vector.broadcast %cst_220 : f32 to vector<64x64xf32>
    %239 = arith.maximumf %237, %238 : vector<64x64xf32>
    %240 = arith.truncf %239 : vector<64x64xf32> to vector<64x64xbf16>
    %cst_221 = arith.constant 0.000000e+00 : f32
    %241 = vector.broadcast %cst_221 : f32 to vector<16x128xf32>
    %c0_222 = arith.constant 0 : index
    %c0_223 = arith.constant 0 : index
    %c0_224 = arith.constant 0 : index
    %242 = vector.load %arg11[%c0_222, %c0_223, %c0_224] : memref<9x16x64xbf16, #tpu.memory_space<vmem>>, vector<1x16x64xbf16>
    %243 = vector.shape_cast %242 : vector<1x16x64xbf16> to vector<16x64xbf16>
    %cst_225 = arith.constant dense<0.000000e+00> : vector<16x64xf32>
    %244 = tpu.matmul %243, %240, %cst_225 {dimension_numbers = #tpu.dot_dimension_numbers<[1], [0], [0], [1], [0, 0, 1, 1], [], []>} : vector<16x64xbf16>, vector<64x64xbf16>, vector<16x64xf32> -> vector<16x64xf32>
    %245 = arith.truncf %244 : vector<16x64xf32> to vector<16x64xbf16>
    %c0_226 = arith.constant 0 : index
    %c0_227 = arith.constant 0 : index
    %c0_228 = arith.constant 0 : index
    %246 = vector.load %arg12[%c0_226, %c0_227, %c0_228] : memref<9x64x128xbf16, #tpu.memory_space<vmem>>, vector<1x64x128xbf16>
    %247 = vector.shape_cast %246 : vector<1x64x128xbf16> to vector<64x128xbf16>
    %cst_229 = arith.constant dense<0.000000e+00> : vector<16x128xf32>
    %248 = tpu.matmul %245, %247, %cst_229 {dimension_numbers = #tpu.dot_dimension_numbers<[1], [0], [0], [1], [0, 0, 1, 1], [], []>} : vector<16x64xbf16>, vector<64x128xbf16>, vector<16x128xf32> -> vector<16x128xf32>
    %249 = arith.addf %241, %248 : vector<16x128xf32>
    %c1_230 = arith.constant 1 : index
    %c0_231 = arith.constant 0 : index
    %c0_232 = arith.constant 0 : index
    %250 = vector.load %arg11[%c1_230, %c0_231, %c0_232] : memref<9x16x64xbf16, #tpu.memory_space<vmem>>, vector<1x16x64xbf16>
    %251 = vector.shape_cast %250 : vector<1x16x64xbf16> to vector<16x64xbf16>
    %cst_233 = arith.constant dense<0.000000e+00> : vector<16x64xf32>
    %252 = tpu.matmul %251, %240, %cst_233 {dimension_numbers = #tpu.dot_dimension_numbers<[1], [0], [0], [1], [0, 0, 1, 1], [], []>} : vector<16x64xbf16>, vector<64x64xbf16>, vector<16x64xf32> -> vector<16x64xf32>
    %253 = arith.truncf %252 : vector<16x64xf32> to vector<16x64xbf16>
    %c1_234 = arith.constant 1 : index
    %c0_235 = arith.constant 0 : index
    %c0_236 = arith.constant 0 : index
    %254 = vector.load %arg12[%c1_234, %c0_235, %c0_236] : memref<9x64x128xbf16, #tpu.memory_space<vmem>>, vector<1x64x128xbf16>
    %255 = vector.shape_cast %254 : vector<1x64x128xbf16> to vector<64x128xbf16>
    %cst_237 = arith.constant dense<0.000000e+00> : vector<16x128xf32>
    %256 = tpu.matmul %253, %255, %cst_237 {dimension_numbers = #tpu.dot_dimension_numbers<[1], [0], [0], [1], [0, 0, 1, 1], [], []>} : vector<16x64xbf16>, vector<64x128xbf16>, vector<16x128xf32> -> vector<16x128xf32>
    %257 = arith.addf %249, %256 : vector<16x128xf32>
    %c2_238 = arith.constant 2 : index
    %c0_239 = arith.constant 0 : index
    %c0_240 = arith.constant 0 : index
    %258 = vector.load %arg11[%c2_238, %c0_239, %c0_240] : memref<9x16x64xbf16, #tpu.memory_space<vmem>>, vector<1x16x64xbf16>
    %259 = vector.shape_cast %258 : vector<1x16x64xbf16> to vector<16x64xbf16>
    %cst_241 = arith.constant dense<0.000000e+00> : vector<16x64xf32>
    %260 = tpu.matmul %259, %240, %cst_241 {dimension_numbers = #tpu.dot_dimension_numbers<[1], [0], [0], [1], [0, 0, 1, 1], [], []>} : vector<16x64xbf16>, vector<64x64xbf16>, vector<16x64xf32> -> vector<16x64xf32>
    %261 = arith.truncf %260 : vector<16x64xf32> to vector<16x64xbf16>
    %c2_242 = arith.constant 2 : index
    %c0_243 = arith.constant 0 : index
    %c0_244 = arith.constant 0 : index
    %262 = vector.load %arg12[%c2_242, %c0_243, %c0_244] : memref<9x64x128xbf16, #tpu.memory_space<vmem>>, vector<1x64x128xbf16>
    %263 = vector.shape_cast %262 : vector<1x64x128xbf16> to vector<64x128xbf16>
    %cst_245 = arith.constant dense<0.000000e+00> : vector<16x128xf32>
    %264 = tpu.matmul %261, %263, %cst_245 {dimension_numbers = #tpu.dot_dimension_numbers<[1], [0], [0], [1], [0, 0, 1, 1], [], []>} : vector<16x64xbf16>, vector<64x128xbf16>, vector<16x128xf32> -> vector<16x128xf32>
    %265 = arith.addf %257, %264 : vector<16x128xf32>
    %c3_246 = arith.constant 3 : index
    %c0_247 = arith.constant 0 : index
    %c0_248 = arith.constant 0 : index
    %266 = vector.load %arg11[%c3_246, %c0_247, %c0_248] : memref<9x16x64xbf16, #tpu.memory_space<vmem>>, vector<1x16x64xbf16>
    %267 = vector.shape_cast %266 : vector<1x16x64xbf16> to vector<16x64xbf16>
    %cst_249 = arith.constant dense<0.000000e+00> : vector<16x64xf32>
    %268 = tpu.matmul %267, %240, %cst_249 {dimension_numbers = #tpu.dot_dimension_numbers<[1], [0], [0], [1], [0, 0, 1, 1], [], []>} : vector<16x64xbf16>, vector<64x64xbf16>, vector<16x64xf32> -> vector<16x64xf32>
    %269 = arith.truncf %268 : vector<16x64xf32> to vector<16x64xbf16>
    %c3_250 = arith.constant 3 : index
    %c0_251 = arith.constant 0 : index
    %c0_252 = arith.constant 0 : index
    %270 = vector.load %arg12[%c3_250, %c0_251, %c0_252] : memref<9x64x128xbf16, #tpu.memory_space<vmem>>, vector<1x64x128xbf16>
    %271 = vector.shape_cast %270 : vector<1x64x128xbf16> to vector<64x128xbf16>
    %cst_253 = arith.constant dense<0.000000e+00> : vector<16x128xf32>
    %272 = tpu.matmul %269, %271, %cst_253 {dimension_numbers = #tpu.dot_dimension_numbers<[1], [0], [0], [1], [0, 0, 1, 1], [], []>} : vector<16x64xbf16>, vector<64x128xbf16>, vector<16x128xf32> -> vector<16x128xf32>
    %273 = arith.addf %265, %272 : vector<16x128xf32>
    %c4_254 = arith.constant 4 : index
    %c0_255 = arith.constant 0 : index
    %c0_256 = arith.constant 0 : index
    %274 = vector.load %arg11[%c4_254, %c0_255, %c0_256] : memref<9x16x64xbf16, #tpu.memory_space<vmem>>, vector<1x16x64xbf16>
    %275 = vector.shape_cast %274 : vector<1x16x64xbf16> to vector<16x64xbf16>
    %cst_257 = arith.constant dense<0.000000e+00> : vector<16x64xf32>
    %276 = tpu.matmul %275, %240, %cst_257 {dimension_numbers = #tpu.dot_dimension_numbers<[1], [0], [0], [1], [0, 0, 1, 1], [], []>} : vector<16x64xbf16>, vector<64x64xbf16>, vector<16x64xf32> -> vector<16x64xf32>
    %277 = arith.truncf %276 : vector<16x64xf32> to vector<16x64xbf16>
    %c4_258 = arith.constant 4 : index
    %c0_259 = arith.constant 0 : index
    %c0_260 = arith.constant 0 : index
    %278 = vector.load %arg12[%c4_258, %c0_259, %c0_260] : memref<9x64x128xbf16, #tpu.memory_space<vmem>>, vector<1x64x128xbf16>
    %279 = vector.shape_cast %278 : vector<1x64x128xbf16> to vector<64x128xbf16>
    %cst_261 = arith.constant dense<0.000000e+00> : vector<16x128xf32>
    %280 = tpu.matmul %277, %279, %cst_261 {dimension_numbers = #tpu.dot_dimension_numbers<[1], [0], [0], [1], [0, 0, 1, 1], [], []>} : vector<16x64xbf16>, vector<64x128xbf16>, vector<16x128xf32> -> vector<16x128xf32>
    %281 = arith.addf %273, %280 : vector<16x128xf32>
    %c5_262 = arith.constant 5 : index
    %c0_263 = arith.constant 0 : index
    %c0_264 = arith.constant 0 : index
    %282 = vector.load %arg11[%c5_262, %c0_263, %c0_264] : memref<9x16x64xbf16, #tpu.memory_space<vmem>>, vector<1x16x64xbf16>
    %283 = vector.shape_cast %282 : vector<1x16x64xbf16> to vector<16x64xbf16>
    %cst_265 = arith.constant dense<0.000000e+00> : vector<16x64xf32>
    %284 = tpu.matmul %283, %240, %cst_265 {dimension_numbers = #tpu.dot_dimension_numbers<[1], [0], [0], [1], [0, 0, 1, 1], [], []>} : vector<16x64xbf16>, vector<64x64xbf16>, vector<16x64xf32> -> vector<16x64xf32>
    %285 = arith.truncf %284 : vector<16x64xf32> to vector<16x64xbf16>
    %c5_266 = arith.constant 5 : index
    %c0_267 = arith.constant 0 : index
    %c0_268 = arith.constant 0 : index
    %286 = vector.load %arg12[%c5_266, %c0_267, %c0_268] : memref<9x64x128xbf16, #tpu.memory_space<vmem>>, vector<1x64x128xbf16>
    %287 = vector.shape_cast %286 : vector<1x64x128xbf16> to vector<64x128xbf16>
    %cst_269 = arith.constant dense<0.000000e+00> : vector<16x128xf32>
    %288 = tpu.matmul %285, %287, %cst_269 {dimension_numbers = #tpu.dot_dimension_numbers<[1], [0], [0], [1], [0, 0, 1, 1], [], []>} : vector<16x64xbf16>, vector<64x128xbf16>, vector<16x128xf32> -> vector<16x128xf32>
    %289 = arith.addf %281, %288 : vector<16x128xf32>
    %c6_270 = arith.constant 6 : index
    %c0_271 = arith.constant 0 : index
    %c0_272 = arith.constant 0 : index
    %290 = vector.load %arg11[%c6_270, %c0_271, %c0_272] : memref<9x16x64xbf16, #tpu.memory_space<vmem>>, vector<1x16x64xbf16>
    %291 = vector.shape_cast %290 : vector<1x16x64xbf16> to vector<16x64xbf16>
    %cst_273 = arith.constant dense<0.000000e+00> : vector<16x64xf32>
    %292 = tpu.matmul %291, %240, %cst_273 {dimension_numbers = #tpu.dot_dimension_numbers<[1], [0], [0], [1], [0, 0, 1, 1], [], []>} : vector<16x64xbf16>, vector<64x64xbf16>, vector<16x64xf32> -> vector<16x64xf32>
    %293 = arith.truncf %292 : vector<16x64xf32> to vector<16x64xbf16>
    %c6_274 = arith.constant 6 : index
    %c0_275 = arith.constant 0 : index
    %c0_276 = arith.constant 0 : index
    %294 = vector.load %arg12[%c6_274, %c0_275, %c0_276] : memref<9x64x128xbf16, #tpu.memory_space<vmem>>, vector<1x64x128xbf16>
    %295 = vector.shape_cast %294 : vector<1x64x128xbf16> to vector<64x128xbf16>
    %cst_277 = arith.constant dense<0.000000e+00> : vector<16x128xf32>
    %296 = tpu.matmul %293, %295, %cst_277 {dimension_numbers = #tpu.dot_dimension_numbers<[1], [0], [0], [1], [0, 0, 1, 1], [], []>} : vector<16x64xbf16>, vector<64x128xbf16>, vector<16x128xf32> -> vector<16x128xf32>
    %297 = arith.addf %289, %296 : vector<16x128xf32>
    %c7_278 = arith.constant 7 : index
    %c0_279 = arith.constant 0 : index
    %c0_280 = arith.constant 0 : index
    %298 = vector.load %arg11[%c7_278, %c0_279, %c0_280] : memref<9x16x64xbf16, #tpu.memory_space<vmem>>, vector<1x16x64xbf16>
    %299 = vector.shape_cast %298 : vector<1x16x64xbf16> to vector<16x64xbf16>
    %cst_281 = arith.constant dense<0.000000e+00> : vector<16x64xf32>
    %300 = tpu.matmul %299, %240, %cst_281 {dimension_numbers = #tpu.dot_dimension_numbers<[1], [0], [0], [1], [0, 0, 1, 1], [], []>} : vector<16x64xbf16>, vector<64x64xbf16>, vector<16x64xf32> -> vector<16x64xf32>
    %301 = arith.truncf %300 : vector<16x64xf32> to vector<16x64xbf16>
    %c7_282 = arith.constant 7 : index
    %c0_283 = arith.constant 0 : index
    %c0_284 = arith.constant 0 : index
    %302 = vector.load %arg12[%c7_282, %c0_283, %c0_284] : memref<9x64x128xbf16, #tpu.memory_space<vmem>>, vector<1x64x128xbf16>
    %303 = vector.shape_cast %302 : vector<1x64x128xbf16> to vector<64x128xbf16>
    %cst_285 = arith.constant dense<0.000000e+00> : vector<16x128xf32>
    %304 = tpu.matmul %301, %303, %cst_285 {dimension_numbers = #tpu.dot_dimension_numbers<[1], [0], [0], [1], [0, 0, 1, 1], [], []>} : vector<16x64xbf16>, vector<64x128xbf16>, vector<16x128xf32> -> vector<16x128xf32>
    %305 = arith.addf %297, %304 : vector<16x128xf32>
    %c8_286 = arith.constant 8 : index
    %c0_287 = arith.constant 0 : index
    %c0_288 = arith.constant 0 : index
    %306 = vector.load %arg11[%c8_286, %c0_287, %c0_288] : memref<9x16x64xbf16, #tpu.memory_space<vmem>>, vector<1x16x64xbf16>
    %307 = vector.shape_cast %306 : vector<1x16x64xbf16> to vector<16x64xbf16>
    %cst_289 = arith.constant dense<0.000000e+00> : vector<16x64xf32>
    %308 = tpu.matmul %307, %240, %cst_289 {dimension_numbers = #tpu.dot_dimension_numbers<[1], [0], [0], [1], [0, 0, 1, 1], [], []>} : vector<16x64xbf16>, vector<64x64xbf16>, vector<16x64xf32> -> vector<16x64xf32>
    %309 = arith.truncf %308 : vector<16x64xf32> to vector<16x64xbf16>
    %c8_290 = arith.constant 8 : index
    %c0_291 = arith.constant 0 : index
    %c0_292 = arith.constant 0 : index
    %310 = vector.load %arg12[%c8_290, %c0_291, %c0_292] : memref<9x64x128xbf16, #tpu.memory_space<vmem>>, vector<1x64x128xbf16>
    %311 = vector.shape_cast %310 : vector<1x64x128xbf16> to vector<64x128xbf16>
    %cst_293 = arith.constant dense<0.000000e+00> : vector<16x128xf32>
    %312 = tpu.matmul %309, %311, %cst_293 {dimension_numbers = #tpu.dot_dimension_numbers<[1], [0], [0], [1], [0, 0, 1, 1], [], []>} : vector<16x64xbf16>, vector<64x128xbf16>, vector<16x128xf32> -> vector<16x128xf32>
    %313 = arith.addf %305, %312 : vector<16x128xf32>
    %c0_294 = arith.constant 0 : index
    %c0_295 = arith.constant 0 : index
    %314 = vector.load %arg13[%c0_294, %c0_295] : memref<1x128xf32, #tpu.memory_space<vmem>>, vector<1x128xf32>
    %315 = vector.broadcast %314 : vector<1x128xf32> to vector<16x128xf32>
    %316 = arith.addf %313, %315 : vector<16x128xf32>
    %cst_296 = arith.constant 0.000000e+00 : f32
    %317 = vector.broadcast %cst_296 : f32 to vector<16x128xf32>
    %318 = arith.maximumf %316, %317 : vector<16x128xf32>
    %319 = arith.truncf %318 : vector<16x128xf32> to vector<16x128xbf16>
    %cst_297 = arith.constant 0.000000e+00 : f32
    %320 = vector.broadcast %cst_297 : f32 to vector<16x128xf32>
    %c0_298 = arith.constant 0 : index
    %c0_299 = arith.constant 0 : index
    %c0_300 = arith.constant 0 : index
    %321 = vector.load %arg14[%c0_298, %c0_299, %c0_300] : memref<1x16x64xbf16, #tpu.memory_space<vmem>>, vector<1x16x64xbf16>
    %322 = vector.shape_cast %321 : vector<1x16x64xbf16> to vector<16x64xbf16>
    %cst_301 = arith.constant dense<0.000000e+00> : vector<16x64xf32>
    %323 = tpu.matmul %322, %240, %cst_301 {dimension_numbers = #tpu.dot_dimension_numbers<[1], [0], [0], [1], [0, 0, 1, 1], [], []>} : vector<16x64xbf16>, vector<64x64xbf16>, vector<16x64xf32> -> vector<16x64xf32>
    %324 = arith.truncf %323 : vector<16x64xf32> to vector<16x64xbf16>
    %c0_302 = arith.constant 0 : index
    %c0_303 = arith.constant 0 : index
    %c0_304 = arith.constant 0 : index
    %325 = vector.load %arg15[%c0_302, %c0_303, %c0_304] : memref<1x64x128xbf16, #tpu.memory_space<vmem>>, vector<1x64x128xbf16>
    %326 = vector.shape_cast %325 : vector<1x64x128xbf16> to vector<64x128xbf16>
    %cst_305 = arith.constant dense<0.000000e+00> : vector<16x128xf32>
    %327 = tpu.matmul %324, %326, %cst_305 {dimension_numbers = #tpu.dot_dimension_numbers<[1], [0], [0], [1], [0, 0, 1, 1], [], []>} : vector<16x64xbf16>, vector<64x128xbf16>, vector<16x128xf32> -> vector<16x128xf32>
    %328 = arith.addf %320, %327 : vector<16x128xf32>
    %c0_306 = arith.constant 0 : index
    %c0_307 = arith.constant 0 : index
    %329 = vector.load %arg16[%c0_306, %c0_307] : memref<1x128xf32, #tpu.memory_space<vmem>>, vector<1x128xf32>
    %330 = vector.broadcast %329 : vector<1x128xf32> to vector<16x128xf32>
    %331 = arith.addf %328, %330 : vector<16x128xf32>
    %cst_308 = arith.constant 0.000000e+00 : f32
    %332 = vector.broadcast %cst_308 : f32 to vector<16x128xf32>
    %c0_309 = arith.constant 0 : index
    %c0_310 = arith.constant 0 : index
    %c0_311 = arith.constant 0 : index
    %333 = vector.load %arg17[%c0_309, %c0_310, %c0_311] : memref<9x16x16xbf16, #tpu.memory_space<vmem>>, vector<1x16x16xbf16>
    %334 = vector.shape_cast %333 : vector<1x16x16xbf16> to vector<16x16xbf16>
    %cst_312 = arith.constant dense<0.000000e+00> : vector<16x128xf32>
    %335 = tpu.matmul %334, %319, %cst_312 {dimension_numbers = #tpu.dot_dimension_numbers<[1], [0], [0], [1], [0, 0, 1, 1], [], []>} : vector<16x16xbf16>, vector<16x128xbf16>, vector<16x128xf32> -> vector<16x128xf32>
    %336 = arith.truncf %335 : vector<16x128xf32> to vector<16x128xbf16>
    %c0_313 = arith.constant 0 : index
    %c0_314 = arith.constant 0 : index
    %c0_315 = arith.constant 0 : index
    %337 = vector.load %arg18[%c0_313, %c0_314, %c0_315] : memref<9x128x128xbf16, #tpu.memory_space<vmem>>, vector<1x128x128xbf16>
    %338 = vector.shape_cast %337 : vector<1x128x128xbf16> to vector<128x128xbf16>
    %cst_316 = arith.constant dense<0.000000e+00> : vector<16x128xf32>
    %339 = tpu.matmul %336, %338, %cst_316 {dimension_numbers = #tpu.dot_dimension_numbers<[1], [0], [0], [1], [0, 0, 1, 1], [], []>} : vector<16x128xbf16>, vector<128x128xbf16>, vector<16x128xf32> -> vector<16x128xf32>
    %340 = arith.addf %332, %339 : vector<16x128xf32>
    %c1_317 = arith.constant 1 : index
    %c0_318 = arith.constant 0 : index
    %c0_319 = arith.constant 0 : index
    %341 = vector.load %arg17[%c1_317, %c0_318, %c0_319] : memref<9x16x16xbf16, #tpu.memory_space<vmem>>, vector<1x16x16xbf16>
    %342 = vector.shape_cast %341 : vector<1x16x16xbf16> to vector<16x16xbf16>
    %cst_320 = arith.constant dense<0.000000e+00> : vector<16x128xf32>
    %343 = tpu.matmul %342, %319, %cst_320 {dimension_numbers = #tpu.dot_dimension_numbers<[1], [0], [0], [1], [0, 0, 1, 1], [], []>} : vector<16x16xbf16>, vector<16x128xbf16>, vector<16x128xf32> -> vector<16x128xf32>
    %344 = arith.truncf %343 : vector<16x128xf32> to vector<16x128xbf16>
    %c1_321 = arith.constant 1 : index
    %c0_322 = arith.constant 0 : index
    %c0_323 = arith.constant 0 : index
    %345 = vector.load %arg18[%c1_321, %c0_322, %c0_323] : memref<9x128x128xbf16, #tpu.memory_space<vmem>>, vector<1x128x128xbf16>
    %346 = vector.shape_cast %345 : vector<1x128x128xbf16> to vector<128x128xbf16>
    %cst_324 = arith.constant dense<0.000000e+00> : vector<16x128xf32>
    %347 = tpu.matmul %344, %346, %cst_324 {dimension_numbers = #tpu.dot_dimension_numbers<[1], [0], [0], [1], [0, 0, 1, 1], [], []>} : vector<16x128xbf16>, vector<128x128xbf16>, vector<16x128xf32> -> vector<16x128xf32>
    %348 = arith.addf %340, %347 : vector<16x128xf32>
    %c2_325 = arith.constant 2 : index
    %c0_326 = arith.constant 0 : index
    %c0_327 = arith.constant 0 : index
    %349 = vector.load %arg17[%c2_325, %c0_326, %c0_327] : memref<9x16x16xbf16, #tpu.memory_space<vmem>>, vector<1x16x16xbf16>
    %350 = vector.shape_cast %349 : vector<1x16x16xbf16> to vector<16x16xbf16>
    %cst_328 = arith.constant dense<0.000000e+00> : vector<16x128xf32>
    %351 = tpu.matmul %350, %319, %cst_328 {dimension_numbers = #tpu.dot_dimension_numbers<[1], [0], [0], [1], [0, 0, 1, 1], [], []>} : vector<16x16xbf16>, vector<16x128xbf16>, vector<16x128xf32> -> vector<16x128xf32>
    %352 = arith.truncf %351 : vector<16x128xf32> to vector<16x128xbf16>
    %c2_329 = arith.constant 2 : index
    %c0_330 = arith.constant 0 : index
    %c0_331 = arith.constant 0 : index
    %353 = vector.load %arg18[%c2_329, %c0_330, %c0_331] : memref<9x128x128xbf16, #tpu.memory_space<vmem>>, vector<1x128x128xbf16>
    %354 = vector.shape_cast %353 : vector<1x128x128xbf16> to vector<128x128xbf16>
    %cst_332 = arith.constant dense<0.000000e+00> : vector<16x128xf32>
    %355 = tpu.matmul %352, %354, %cst_332 {dimension_numbers = #tpu.dot_dimension_numbers<[1], [0], [0], [1], [0, 0, 1, 1], [], []>} : vector<16x128xbf16>, vector<128x128xbf16>, vector<16x128xf32> -> vector<16x128xf32>
    %356 = arith.addf %348, %355 : vector<16x128xf32>
    %c3_333 = arith.constant 3 : index
    %c0_334 = arith.constant 0 : index
    %c0_335 = arith.constant 0 : index
    %357 = vector.load %arg17[%c3_333, %c0_334, %c0_335] : memref<9x16x16xbf16, #tpu.memory_space<vmem>>, vector<1x16x16xbf16>
    %358 = vector.shape_cast %357 : vector<1x16x16xbf16> to vector<16x16xbf16>
    %cst_336 = arith.constant dense<0.000000e+00> : vector<16x128xf32>
    %359 = tpu.matmul %358, %319, %cst_336 {dimension_numbers = #tpu.dot_dimension_numbers<[1], [0], [0], [1], [0, 0, 1, 1], [], []>} : vector<16x16xbf16>, vector<16x128xbf16>, vector<16x128xf32> -> vector<16x128xf32>
    %360 = arith.truncf %359 : vector<16x128xf32> to vector<16x128xbf16>
    %c3_337 = arith.constant 3 : index
    %c0_338 = arith.constant 0 : index
    %c0_339 = arith.constant 0 : index
    %361 = vector.load %arg18[%c3_337, %c0_338, %c0_339] : memref<9x128x128xbf16, #tpu.memory_space<vmem>>, vector<1x128x128xbf16>
    %362 = vector.shape_cast %361 : vector<1x128x128xbf16> to vector<128x128xbf16>
    %cst_340 = arith.constant dense<0.000000e+00> : vector<16x128xf32>
    %363 = tpu.matmul %360, %362, %cst_340 {dimension_numbers = #tpu.dot_dimension_numbers<[1], [0], [0], [1], [0, 0, 1, 1], [], []>} : vector<16x128xbf16>, vector<128x128xbf16>, vector<16x128xf32> -> vector<16x128xf32>
    %364 = arith.addf %356, %363 : vector<16x128xf32>
    %c4_341 = arith.constant 4 : index
    %c0_342 = arith.constant 0 : index
    %c0_343 = arith.constant 0 : index
    %365 = vector.load %arg17[%c4_341, %c0_342, %c0_343] : memref<9x16x16xbf16, #tpu.memory_space<vmem>>, vector<1x16x16xbf16>
    %366 = vector.shape_cast %365 : vector<1x16x16xbf16> to vector<16x16xbf16>
    %cst_344 = arith.constant dense<0.000000e+00> : vector<16x128xf32>
    %367 = tpu.matmul %366, %319, %cst_344 {dimension_numbers = #tpu.dot_dimension_numbers<[1], [0], [0], [1], [0, 0, 1, 1], [], []>} : vector<16x16xbf16>, vector<16x128xbf16>, vector<16x128xf32> -> vector<16x128xf32>
    %368 = arith.truncf %367 : vector<16x128xf32> to vector<16x128xbf16>
    %c4_345 = arith.constant 4 : index
    %c0_346 = arith.constant 0 : index
    %c0_347 = arith.constant 0 : index
    %369 = vector.load %arg18[%c4_345, %c0_346, %c0_347] : memref<9x128x128xbf16, #tpu.memory_space<vmem>>, vector<1x128x128xbf16>
    %370 = vector.shape_cast %369 : vector<1x128x128xbf16> to vector<128x128xbf16>
    %cst_348 = arith.constant dense<0.000000e+00> : vector<16x128xf32>
    %371 = tpu.matmul %368, %370, %cst_348 {dimension_numbers = #tpu.dot_dimension_numbers<[1], [0], [0], [1], [0, 0, 1, 1], [], []>} : vector<16x128xbf16>, vector<128x128xbf16>, vector<16x128xf32> -> vector<16x128xf32>
    %372 = arith.addf %364, %371 : vector<16x128xf32>
    %c5_349 = arith.constant 5 : index
    %c0_350 = arith.constant 0 : index
    %c0_351 = arith.constant 0 : index
    %373 = vector.load %arg17[%c5_349, %c0_350, %c0_351] : memref<9x16x16xbf16, #tpu.memory_space<vmem>>, vector<1x16x16xbf16>
    %374 = vector.shape_cast %373 : vector<1x16x16xbf16> to vector<16x16xbf16>
    %cst_352 = arith.constant dense<0.000000e+00> : vector<16x128xf32>
    %375 = tpu.matmul %374, %319, %cst_352 {dimension_numbers = #tpu.dot_dimension_numbers<[1], [0], [0], [1], [0, 0, 1, 1], [], []>} : vector<16x16xbf16>, vector<16x128xbf16>, vector<16x128xf32> -> vector<16x128xf32>
    %376 = arith.truncf %375 : vector<16x128xf32> to vector<16x128xbf16>
    %c5_353 = arith.constant 5 : index
    %c0_354 = arith.constant 0 : index
    %c0_355 = arith.constant 0 : index
    %377 = vector.load %arg18[%c5_353, %c0_354, %c0_355] : memref<9x128x128xbf16, #tpu.memory_space<vmem>>, vector<1x128x128xbf16>
    %378 = vector.shape_cast %377 : vector<1x128x128xbf16> to vector<128x128xbf16>
    %cst_356 = arith.constant dense<0.000000e+00> : vector<16x128xf32>
    %379 = tpu.matmul %376, %378, %cst_356 {dimension_numbers = #tpu.dot_dimension_numbers<[1], [0], [0], [1], [0, 0, 1, 1], [], []>} : vector<16x128xbf16>, vector<128x128xbf16>, vector<16x128xf32> -> vector<16x128xf32>
    %380 = arith.addf %372, %379 : vector<16x128xf32>
    %c6_357 = arith.constant 6 : index
    %c0_358 = arith.constant 0 : index
    %c0_359 = arith.constant 0 : index
    %381 = vector.load %arg17[%c6_357, %c0_358, %c0_359] : memref<9x16x16xbf16, #tpu.memory_space<vmem>>, vector<1x16x16xbf16>
    %382 = vector.shape_cast %381 : vector<1x16x16xbf16> to vector<16x16xbf16>
    %cst_360 = arith.constant dense<0.000000e+00> : vector<16x128xf32>
    %383 = tpu.matmul %382, %319, %cst_360 {dimension_numbers = #tpu.dot_dimension_numbers<[1], [0], [0], [1], [0, 0, 1, 1], [], []>} : vector<16x16xbf16>, vector<16x128xbf16>, vector<16x128xf32> -> vector<16x128xf32>
    %384 = arith.truncf %383 : vector<16x128xf32> to vector<16x128xbf16>
    %c6_361 = arith.constant 6 : index
    %c0_362 = arith.constant 0 : index
    %c0_363 = arith.constant 0 : index
    %385 = vector.load %arg18[%c6_361, %c0_362, %c0_363] : memref<9x128x128xbf16, #tpu.memory_space<vmem>>, vector<1x128x128xbf16>
    %386 = vector.shape_cast %385 : vector<1x128x128xbf16> to vector<128x128xbf16>
    %cst_364 = arith.constant dense<0.000000e+00> : vector<16x128xf32>
    %387 = tpu.matmul %384, %386, %cst_364 {dimension_numbers = #tpu.dot_dimension_numbers<[1], [0], [0], [1], [0, 0, 1, 1], [], []>} : vector<16x128xbf16>, vector<128x128xbf16>, vector<16x128xf32> -> vector<16x128xf32>
    %388 = arith.addf %380, %387 : vector<16x128xf32>
    %c7_365 = arith.constant 7 : index
    %c0_366 = arith.constant 0 : index
    %c0_367 = arith.constant 0 : index
    %389 = vector.load %arg17[%c7_365, %c0_366, %c0_367] : memref<9x16x16xbf16, #tpu.memory_space<vmem>>, vector<1x16x16xbf16>
    %390 = vector.shape_cast %389 : vector<1x16x16xbf16> to vector<16x16xbf16>
    %cst_368 = arith.constant dense<0.000000e+00> : vector<16x128xf32>
    %391 = tpu.matmul %390, %319, %cst_368 {dimension_numbers = #tpu.dot_dimension_numbers<[1], [0], [0], [1], [0, 0, 1, 1], [], []>} : vector<16x16xbf16>, vector<16x128xbf16>, vector<16x128xf32> -> vector<16x128xf32>
    %392 = arith.truncf %391 : vector<16x128xf32> to vector<16x128xbf16>
    %c7_369 = arith.constant 7 : index
    %c0_370 = arith.constant 0 : index
    %c0_371 = arith.constant 0 : index
    %393 = vector.load %arg18[%c7_369, %c0_370, %c0_371] : memref<9x128x128xbf16, #tpu.memory_space<vmem>>, vector<1x128x128xbf16>
    %394 = vector.shape_cast %393 : vector<1x128x128xbf16> to vector<128x128xbf16>
    %cst_372 = arith.constant dense<0.000000e+00> : vector<16x128xf32>
    %395 = tpu.matmul %392, %394, %cst_372 {dimension_numbers = #tpu.dot_dimension_numbers<[1], [0], [0], [1], [0, 0, 1, 1], [], []>} : vector<16x128xbf16>, vector<128x128xbf16>, vector<16x128xf32> -> vector<16x128xf32>
    %396 = arith.addf %388, %395 : vector<16x128xf32>
    %c8_373 = arith.constant 8 : index
    %c0_374 = arith.constant 0 : index
    %c0_375 = arith.constant 0 : index
    %397 = vector.load %arg17[%c8_373, %c0_374, %c0_375] : memref<9x16x16xbf16, #tpu.memory_space<vmem>>, vector<1x16x16xbf16>
    %398 = vector.shape_cast %397 : vector<1x16x16xbf16> to vector<16x16xbf16>
    %cst_376 = arith.constant dense<0.000000e+00> : vector<16x128xf32>
    %399 = tpu.matmul %398, %319, %cst_376 {dimension_numbers = #tpu.dot_dimension_numbers<[1], [0], [0], [1], [0, 0, 1, 1], [], []>} : vector<16x16xbf16>, vector<16x128xbf16>, vector<16x128xf32> -> vector<16x128xf32>
    %400 = arith.truncf %399 : vector<16x128xf32> to vector<16x128xbf16>
    %c8_377 = arith.constant 8 : index
    %c0_378 = arith.constant 0 : index
    %c0_379 = arith.constant 0 : index
    %401 = vector.load %arg18[%c8_377, %c0_378, %c0_379] : memref<9x128x128xbf16, #tpu.memory_space<vmem>>, vector<1x128x128xbf16>
    %402 = vector.shape_cast %401 : vector<1x128x128xbf16> to vector<128x128xbf16>
    %cst_380 = arith.constant dense<0.000000e+00> : vector<16x128xf32>
    %403 = tpu.matmul %400, %402, %cst_380 {dimension_numbers = #tpu.dot_dimension_numbers<[1], [0], [0], [1], [0, 0, 1, 1], [], []>} : vector<16x128xbf16>, vector<128x128xbf16>, vector<16x128xf32> -> vector<16x128xf32>
    %404 = arith.addf %396, %403 : vector<16x128xf32>
    %c0_381 = arith.constant 0 : index
    %c0_382 = arith.constant 0 : index
    %405 = vector.load %arg19[%c0_381, %c0_382] : memref<1x128xf32, #tpu.memory_space<vmem>>, vector<1x128xf32>
    %406 = vector.broadcast %405 : vector<1x128xf32> to vector<16x128xf32>
    %407 = arith.addf %404, %406 : vector<16x128xf32>
    %408 = arith.addf %407, %331 : vector<16x128xf32>
    %cst_383 = arith.constant 0.000000e+00 : f32
    %409 = vector.broadcast %cst_383 : f32 to vector<16x128xf32>
    %410 = arith.maximumf %408, %409 : vector<16x128xf32>
    %c0_384 = arith.constant 0 : index
    %c0_385 = arith.constant 0 : index
    %c0_386 = arith.constant 0 : index
    %411 = vector.load %arg20[%c0_384, %c0_385, %c0_386] : memref<1x16x128xf32, #tpu.memory_space<vmem>>, vector<1x16x128xf32>
    %412 = vector.shape_cast %411 : vector<1x16x128xf32> to vector<16x128xf32>
    %413 = vector.shape_cast %410 : vector<16x128xf32> to vector<1x16x128xf32>
    tpu.vector_store %arg20[%c0_384, %c0_385, %c0_386], %413 {strides = array<i32>} : memref<1x16x128xf32, #tpu.memory_space<vmem>>, vector<1x16x128xf32>,
    return
  }
  func.func @transform_0(%arg0: i32) -> (i32, i32, i32) {
    %c0_i32 = arith.constant 0 : i32
    %c0_i32_0 = arith.constant 0 : i32
    %c0_i32_1 = arith.constant 0 : i32
    return %arg0, %c0_i32, %c0_i32_0 : i32, i32, i32
  }
  func.func @transform_1(%arg0: i32) -> (i32, i32, i32) {
    %c0_i32 = arith.constant 0 : i32
    %c0_i32_0 = arith.constant 0 : i32
    %c0_i32_1 = arith.constant 0 : i32
    %c0_i32_2 = arith.constant 0 : i32
    return %c0_i32, %c0_i32_0, %c0_i32_1 : i32, i32, i32
  }
  func.func @transform_2(%arg0: i32) -> (i32, i32, i32) {
    %c0_i32 = arith.constant 0 : i32
    %c0_i32_0 = arith.constant 0 : i32
    %c0_i32_1 = arith.constant 0 : i32
    %c0_i32_2 = arith.constant 0 : i32
    return %c0_i32, %c0_i32_0, %c0_i32_1 : i32, i32, i32
  }
  func.func @transform_3(%arg0: i32) -> (i32, i32) {
    %c0_i32 = arith.constant 0 : i32
    %c0_i32_0 = arith.constant 0 : i32
    %c0_i32_1 = arith.constant 0 : i32
    return %c0_i32, %c0_i32_0 : i32, i32
  }
  func.func @transform_4(%arg0: i32) -> (i32, i32, i32) {
    %c0_i32 = arith.constant 0 : i32
    %c0_i32_0 = arith.constant 0 : i32
    %c0_i32_1 = arith.constant 0 : i32
    %c0_i32_2 = arith.constant 0 : i32
    return %c0_i32, %c0_i32_0, %c0_i32_1 : i32, i32, i32
  }
  func.func @transform_5(%arg0: i32) -> (i32, i32, i32) {
    %c0_i32 = arith.constant 0 : i32
    %c0_i32_0 = arith.constant 0 : i32
    %c0_i32_1 = arith.constant 0 : i32
    %c0_i32_2 = arith.constant 0 : i32
    return %c0_i32, %c0_i32_0, %c0_i32_1 : i32, i32, i32
  }
  func.func @transform_6(%arg0: i32) -> (i32, i32) {
    %c0_i32 = arith.constant 0 : i32
    %c0_i32_0 = arith.constant 0 : i32
    %c0_i32_1 = arith.constant 0 : i32
    return %c0_i32, %c0_i32_0 : i32, i32
  }
  func.func @transform_7(%arg0: i32) -> (i32, i32, i32) {
    %c0_i32 = arith.constant 0 : i32
    %c0_i32_0 = arith.constant 0 : i32
    %c0_i32_1 = arith.constant 0 : i32
    %c0_i32_2 = arith.constant 0 : i32
    return %c0_i32, %c0_i32_0, %c0_i32_1 : i32, i32, i32
  }
  func.func @transform_8(%arg0: i32) -> (i32, i32, i32) {
    %c0_i32 = arith.constant 0 : i32
    %c0_i32_0 = arith.constant 0 : i32
    %c0_i32_1 = arith.constant 0 : i32
    %c0_i32_2 = arith.constant 0 : i32
    return %c0_i32, %c0_i32_0, %c0_i32_1 : i32, i32, i32
  }
  func.func @transform_9(%arg0: i32) -> (i32, i32) {
    %c0_i32 = arith.constant 0 : i32
    %c0_i32_0 = arith.constant 0 : i32
    %c0_i32_1 = arith.constant 0 : i32
    return %c0_i32, %c0_i32_0 : i32, i32
  }
  func.func @transform_10(%arg0: i32) -> (i32, i32, i32) {
    %c0_i32 = arith.constant 0 : i32
    %c0_i32_0 = arith.constant 0 : i32
    %c0_i32_1 = arith.constant 0 : i32
    %c0_i32_2 = arith.constant 0 : i32
    return %c0_i32, %c0_i32_0, %c0_i32_1 : i32, i32, i32
  }
  func.func @transform_11(%arg0: i32) -> (i32, i32, i32) {
    %c0_i32 = arith.constant 0 : i32
    %c0_i32_0 = arith.constant 0 : i32
    %c0_i32_1 = arith.constant 0 : i32
    %c0_i32_2 = arith.constant 0 : i32
    return %c0_i32, %c0_i32_0, %c0_i32_1 : i32, i32, i32
  }
  func.func @transform_12(%arg0: i32) -> (i32, i32) {
    %c0_i32 = arith.constant 0 : i32
    %c0_i32_0 = arith.constant 0 : i32
    %c0_i32_1 = arith.constant 0 : i32
    return %c0_i32, %c0_i32_0 : i32, i32
  }
  func.func @transform_13(%arg0: i32) -> (i32, i32, i32) {
    %c0_i32 = arith.constant 0 : i32
    %c0_i32_0 = arith.constant 0 : i32
    %c0_i32_1 = arith.constant 0 : i32
    %c0_i32_2 = arith.constant 0 : i32
    return %c0_i32, %c0_i32_0, %c0_i32_1 : i32, i32, i32
  }
  func.func @transform_14(%arg0: i32) -> (i32, i32, i32) {
    %c0_i32 = arith.constant 0 : i32
    %c0_i32_0 = arith.constant 0 : i32
    %c0_i32_1 = arith.constant 0 : i32
    %c0_i32_2 = arith.constant 0 : i32
    return %c0_i32, %c0_i32_0, %c0_i32_1 : i32, i32, i32
  }
  func.func @transform_15(%arg0: i32) -> (i32, i32) {
    %c0_i32 = arith.constant 0 : i32
    %c0_i32_0 = arith.constant 0 : i32
    %c0_i32_1 = arith.constant 0 : i32
    return %c0_i32, %c0_i32_0 : i32, i32
  }
  func.func @transform_16(%arg0: i32) -> (i32, i32, i32) {
    %c0_i32 = arith.constant 0 : i32
    %c0_i32_0 = arith.constant 0 : i32
    %c0_i32_1 = arith.constant 0 : i32
    %c0_i32_2 = arith.constant 0 : i32
    return %c0_i32, %c0_i32_0, %c0_i32_1 : i32, i32, i32
  }
  func.func @transform_17(%arg0: i32) -> (i32, i32, i32) {
    %c0_i32 = arith.constant 0 : i32
    %c0_i32_0 = arith.constant 0 : i32
    %c0_i32_1 = arith.constant 0 : i32
    %c0_i32_2 = arith.constant 0 : i32
    return %c0_i32, %c0_i32_0, %c0_i32_1 : i32, i32, i32
  }
  func.func @transform_18(%arg0: i32) -> (i32, i32) {
    %c0_i32 = arith.constant 0 : i32
    %c0_i32_0 = arith.constant 0 : i32
    %c0_i32_1 = arith.constant 0 : i32
    return %c0_i32, %c0_i32_0 : i32, i32
  }
  func.func @transform_19(%arg0: i32) -> (i32, i32, i32) {
    %c0_i32 = arith.constant 0 : i32
    %c0_i32_0 = arith.constant 0 : i32
    %c0_i32_1 = arith.constant 0 : i32
    return %arg0, %c0_i32, %c0_i32_0 : i32, i32, i32
  }
}

</mosaic_0001>

<llo_original>
// kernel: tpu_custom_call.1
$region0: #{tpu_custom_call.1}
  #allocation0 [shape = 'u32[]', space=smem, size = 0x4, offset = 0x4, fixed_abs, tag = 'smem constant byte address 0x4 - core index']
  #allocation1 [shape = 'u32[144,128]{1,0:T(1,128)}', space=vmem, size = 0x12000, scoped, tag = 'internal scratch']
  %s0 = inlined_call_operand.vmem [shape: f32[2,256,4], index: 0, kind: input, shape index: {}]
  %s1 = inlined_call_operand.hbm [shape: bf16[9,64,256], index: 1, kind: input, shape index: {}]
  %s2 = inlined_call_operand.hbm [shape: bf16[9,4,64], index: 2, kind: input, shape index: {}]
  %s3 = inlined_call_operand.vmem [shape: f32[1,64], index: 3, kind: input, shape index: {}]
  %s4 = inlined_call_operand.hbm [shape: bf16[9,64,64], index: 4, kind: input, shape index: {}]
  %s5 = inlined_call_operand.hbm [shape: bf16[9,64,64], index: 5, kind: input, shape index: {}]
  %s6 = inlined_call_operand.vmem [shape: f32[1,64], index: 6, kind: input, shape index: {}]
  %s7 = inlined_call_operand.hbm [shape: bf16[9,64,64], index: 7, kind: input, shape index: {}]
  %s8 = inlined_call_operand.hbm [shape: bf16[9,64,64], index: 8, kind: input, shape index: {}]
  %s9 = inlined_call_operand.vmem [shape: f32[1,64], index: 9, kind: input, shape index: {}]
  %s10 = inlined_call_operand.hbm [shape: bf16[9,16,64], index: 10, kind: input, shape index: {}]
  %s11 = inlined_call_operand.hbm [shape: bf16[9,64,128], index: 11, kind: input, shape index: {}]
  %s12 = inlined_call_operand.vmem [shape: f32[1,128], index: 12, kind: input, shape index: {}]
  %s13 = inlined_call_operand.vmem [shape: bf16[1,16,64], index: 13, kind: input, shape index: {}]
  %s14 = inlined_call_operand.hbm [shape: bf16[1,64,128], index: 14, kind: input, shape index: {}]
  %s15 = inlined_call_operand.vmem [shape: f32[1,128], index: 15, kind: input, shape index: {}]
  %s16 = inlined_call_operand.hbm [shape: bf16[9,16,16], index: 16, kind: input, shape index: {}]
  %s17 = inlined_call_operand.vmem [shape: bf16[9,128,128], index: 17, kind: input, shape index: {}]
  %s18 = inlined_call_operand.vmem [shape: f32[1,128], index: 18, kind: input, shape index: {}]
  %s19 = inlined_call_operand.hbm [shape: f32[2,16,128], index: 19, kind: output, shape index: {}]
  %s20 = sld [smem:[#allocation0]]
  $region149: #{tpu_custom_call.1} parent=0
    _
  %s22 = ssub.s32 1, %s20
  %s23 = scalar_select 0, %s22, %s20
  $region1: #{tpu_custom_call.1} parent=0
    #allocation2 [shape = 'u8[294912]{0}', space=vmem, size = 0x48000, scoped, tag = 'input window, operand 1, single buffered']
    #allocation3 [shape = 's32[2]{0}', space=sflag, size = 0x8, scoped, tag = 'scoped memory for tpu_custom_call.1']
    #allocation4 [shape = 's32[2]{0}', space=sflag, size = 0x8, scoped, tag = 'scoped memory for tpu_custom_call.1']
    #allocation5 [shape = 'u8[9216]{0}', space=vmem, size = 0x2400, scoped, tag = 'input window, operand 2, single buffered']
    #allocation6 [shape = 's32[1]{0}', space=sflag, size = 0x4, scoped, tag = 'scoped memory for tpu_custom_call.1']
    #allocation7 [shape = 'u8[147456]{0}', space=vmem, size = 0x24000, scoped, tag = 'input window, operand 4, single buffered']
    #allocation8 [shape = 'u8[147456]{0}', space=vmem, size = 0x24000, scoped, tag = 'input window, operand 5, single buffered']
    #allocation9 [shape = 's32[1]{0}', space=sflag, size = 0x4, scoped, tag = 'scoped memory for tpu_custom_call.1']
    #allocation10 [shape = 'u8[147456]{0}', space=vmem, size = 0x24000, scoped, tag = 'input window, operand 7, single buffered']
    #allocation11 [shape = 'u8[147456]{0}', space=vmem, size = 0x24000, scoped, tag = 'input window, operand 8, single buffered']
    #allocation12 [shape = 's32[1]{0}', space=sflag, size = 0x4, scoped, tag = 'scoped memory for tpu_custom_call.1']
    #allocation13 [shape = 'u8[36864]{0}', space=vmem, size = 0x9000, scoped, tag = 'input window, operand 10, single buffered']
    #allocation14 [shape = 'u8[147456]{0}', space=vmem, size = 0x24000, scoped, tag = 'input window, operand 11, single buffered']
    #allocation15 [shape = 's32[1]{0}', space=sflag, size = 0x4, scoped, tag = 'scoped memory for tpu_custom_call.1']
    #allocation16 [shape = 'u8[16384]{0}', space=vmem, size = 0x4000, scoped, tag = 'input window, operand 14, single buffered']
    #allocation17 [shape = 'u8[36864]{0}', space=vmem, size = 0x9000, scoped, tag = 'input window, operand 16, single buffered']
    #allocation18 [shape = 's32[1]{0}', space=sflag, size = 0x4, scoped, tag = 'scoped memory for tpu_custom_call.1']
    #allocation19 [shape = 'u8[16384]{0}', space=vmem, size = 0x4000, scoped, tag = 'output window, operand 0']
    %24 = vsyncpa [#allocation3], 0
    %25 = vsyncpa [#allocation6], 0
    %26 = vsyncpa [#allocation9], 0
    %27 = vsyncpa [#allocation12], 0
    %28 = vsyncpa [#allocation15], 0
    %29 = vsyncpa [#allocation18], 0
    %30 = vsyncpa [#allocation4], 0
    %s31 = scalar_lea.sflag [#allocation4], 1
    %32 = vsyncpa %s31, 0
    loop: start=0, step=1, limit=4
    $region2: #{tpu_custom_call.1} parent=1 // loop_pre_header
      _
    $region3: #{tpu_custom_call.1} parent=1 // loop_header
      %s34 = sphi 0, %s38
      %p35 = scmp.ge.s32.totalorder %s34, 4
      %s44 = sphi 0, %s46
      %s47 = sphi 0, %s44
      %s48 = sphi 0, %s47
      %s64 = sphi 0, %s48
      %s68 = sphi 0, %s68
      %s70 = sphi 0, %s68
      %s71 = sphi 0, %s70
      %s85 = sphi 0, %s71
      %s89 = sphi 0, %s89
      %s91 = sphi 0, %s89
      %s92 = sphi 0, %s91
      %s106 = sphi 0, %s92
      %s110 = sphi 0, %s110
      %s112 = sphi 0, %s110
      %s113 = sphi 0, %s112
      %s127 = sphi 0, %s113
      %s131 = sphi 0, %s131
      %s133 = sphi 0, %s131
      %s134 = sphi 0, %s133
      %s148 = sphi 0, %s134
      %s152 = sphi 0, %s152
      %s154 = sphi 0, %s152
      %s155 = sphi 0, %s154
      %s169 = sphi 0, %s155
      %s173 = sphi 0, %s173
      %s175 = sphi 0, %s173
      %s176 = sphi 0, %s175
      %s190 = sphi 0, %s176
      %s194 = sphi 0, %s194
      %s196 = sphi 0, %s194
      %s197 = sphi 0, %s196
      %s211 = sphi 0, %s197
      %s215 = sphi 0, %s215
      %s217 = sphi 0, %s215
      %s218 = sphi 0, %s217
      %s232 = sphi 0, %s218
      %s236 = sphi 0, %s236
      %s238 = sphi 0, %s236
      %s239 = sphi 0, %s238
      %s253 = sphi 0, %s239
      %s257 = sphi 0, %s257
      %s259 = sphi 0, %s257
      %s260 = sphi 0, %s259
      %s274 = sphi 0, %s260
      %s278 = sphi 0, %s278
      %s280 = sphi 0, %s278
      %s281 = sphi 0, %s280
      %s295 = sphi 0, %s281
      %s299 = sphi 0, %s299
      %s301 = sphi 0, %s299
      %s302 = sphi 0, %s301
      %s316 = sphi 0, %s302
      %s320 = sphi 0, %s320
      %s322 = sphi 0, %s320
      %s323 = sphi 0, %s322
      %s337 = sphi 0, %s323
      %s341 = sphi 0, %s341
      %s343 = sphi 0, %s341
      %s344 = sphi 0, %s343
      %s358 = sphi 0, %s344
      %s362 = sphi 0, %s362
      %s364 = sphi 0, %s362
      %s365 = sphi 0, %s364
      %s379 = sphi 0, %s365
      %s383 = sphi 0, %s383
      %s385 = sphi 0, %s383
      %s386 = sphi 0, %s385
      %s400 = sphi 0, %s386
      %s404 = sphi 0, %s404
      %s406 = sphi 0, %s404
      %s407 = sphi 0, %s406
      %s421 = sphi 0, %s407
      %s425 = sphi 0, %s425
      %s427 = sphi 0, %s425
      %s428 = sphi 0, %s427
      %s442 = sphi 0, %s428
      %s448 = sphi 0, %s450
      %s451 = sphi 0, %s448
      %s452 = sphi 0, %s451
      %s468 = sphi 0, %s452
    $region4: #{tpu_custom_call.1} parent=1 // loop_header_branch
      %37 = sbr.rel (%p35) target = $region8
    $region5: #{tpu_custom_call.1} parent=1 // loop_body
      %s39 = ssub.s32 %s34, 1
      %s40 = ssub.s32 %s34, 2
      %s41 = sadd.s32 %s34, 1
      %s42 = ssub.s32 %s34, %s41
      %p43 = scmp.eq.s32.totalorder %s42, 0
      %s45 = sadd.s32 %s44, 1
      %s46 = scalar_select %p43, %s44, %s45
      %p49 = pneg %p43
      %p50 = scmp.eq.s32.totalorder %s34, 1
      %p51 = por %p49, %p50
      %p52 = scmp.ne.s32.totalorder %s44, %s47
      %p53 = scmp.eq.s32.totalorder %s34, 0
      %p54 = por %p52, %p53
      %p55 = scmp.ne.s32.totalorder %s44, %s47
      %p56 = scmp.eq.s32.totalorder %s39, 1
      %p57 = por %p55, %p56
      %p58 = scmp.ne.s32.totalorder %s47, %s48
      %p59 = scmp.eq.s32.totalorder %s39, 0
      %p60 = por %p58, %p59
      %p61 = scmp.ne.s32.totalorder %s47, %s48
      %p62 = scmp.eq.s32.totalorder %s40, 1
      %p63 = por %p61, %p62
      %p65 = scmp.ne.s32.totalorder %s48, %s64
      %p66 = scmp.eq.s32.totalorder %s40, 0
      %p67 = por %p65, %p66
      %s69 = sadd.s32 %s68, 1
      %p72 = scmp.eq.s32.totalorder %s34, 1
      %p73 = scmp.ne.s32.totalorder %s68, %s70
      %p74 = scmp.eq.s32.totalorder %s34, 0
      %p75 = por %p73, %p74
      %p76 = scmp.ne.s32.totalorder %s68, %s70
      %p77 = scmp.eq.s32.totalorder %s39, 1
      %p78 = por %p76, %p77
      %p79 = scmp.ne.s32.totalorder %s70, %s71
      %p80 = scmp.eq.s32.totalorder %s39, 0
      %p81 = por %p79, %p80
      %p82 = scmp.ne.s32.totalorder %s70, %s71
      %p83 = scmp.eq.s32.totalorder %s40, 1
      %p84 = por %p82, %p83
      %p86 = scmp.ne.s32.totalorder %s71, %s85
      %p87 = scmp.eq.s32.totalorder %s40, 0
      %p88 = por %p86, %p87
      %s90 = sadd.s32 %s89, 1
      %p93 = scmp.eq.s32.totalorder %s34, 1
      %p94 = scmp.ne.s32.totalorder %s89, %s91
      %p95 = scmp.eq.s32.totalorder %s34, 0
      %p96 = por %p94, %p95
      %p97 = scmp.ne.s32.totalorder %s89, %s91
      %p98 = scmp.eq.s32.totalorder %s39, 1
      %p99 = por %p97, %p98
      %p100 = scmp.ne.s32.totalorder %s91, %s92
      %p101 = scmp.eq.s32.totalorder %s39, 0
      %p102 = por %p100, %p101
      %p103 = scmp.ne.s32.totalorder %s91, %s92
      %p104 = scmp.eq.s32.totalorder %s40, 1
      %p105 = por %p103, %p104
      %p107 = scmp.ne.s32.totalorder %s92, %s106
      %p108 = scmp.eq.s32.totalorder %s40, 0
      %p109 = por %p107, %p108
      %s111 = sadd.s32 %s110, 1
      %p114 = scmp.eq.s32.totalorder %s34, 1
      %p115 = scmp.ne.s32.totalorder %s110, %s112
      %p116 = scmp.eq.s32.totalorder %s34, 0
      %p117 = por %p115, %p116
      %p118 = scmp.ne.s32.totalorder %s110, %s112
      %p119 = scmp.eq.s32.totalorder %s39, 1
      %p120 = por %p118, %p119
      %p121 = scmp.ne.s32.totalorder %s112, %s113
      %p122 = scmp.eq.s32.totalorder %s39, 0
      %p123 = por %p121, %p122
      %p124 = scmp.ne.s32.totalorder %s112, %s113
      %p125 = scmp.eq.s32.totalorder %s40, 1
      %p126 = por %p124, %p125
      %p128 = scmp.ne.s32.totalorder %s113, %s127
      %p129 = scmp.eq.s32.totalorder %s40, 0
      %p130 = por %p128, %p129
      %s132 = sadd.s32 %s131, 1
      %p135 = scmp.eq.s32.totalorder %s34, 1
      %p136 = scmp.ne.s32.totalorder %s131, %s133
      %p137 = scmp.eq.s32.totalorder %s34, 0
      %p138 = por %p136, %p137
      %p139 = scmp.ne.s32.totalorder %s131, %s133
      %p140 = scmp.eq.s32.totalorder %s39, 1
      %p141 = por %p139, %p140
      %p142 = scmp.ne.s32.totalorder %s133, %s134
      %p143 = scmp.eq.s32.totalorder %s39, 0
      %p144 = por %p142, %p143
      %p145 = scmp.ne.s32.totalorder %s133, %s134
      %p146 = scmp.eq.s32.totalorder %s40, 1
      %p147 = por %p145, %p146
      %p149 = scmp.ne.s32.totalorder %s134, %s148
      %p150 = scmp.eq.s32.totalorder %s40, 0
      %p151 = por %p149, %p150
      %s153 = sadd.s32 %s152, 1
      %p156 = scmp.eq.s32.totalorder %s34, 1
      %p157 = scmp.ne.s32.totalorder %s152, %s154
      %p158 = scmp.eq.s32.totalorder %s34, 0
      %p159 = por %p157, %p158
      %p160 = scmp.ne.s32.totalorder %s152, %s154
      %p161 = scmp.eq.s32.totalorder %s39, 1
      %p162 = por %p160, %p161
      %p163 = scmp.ne.s32.totalorder %s154, %s155
      %p164 = scmp.eq.s32.totalorder %s39, 0
      %p165 = por %p163, %p164
      %p166 = scmp.ne.s32.totalorder %s154, %s155
      %p167 = scmp.eq.s32.totalorder %s40, 1
      %p168 = por %p166, %p167
      %p170 = scmp.ne.s32.totalorder %s155, %s169
      %p171 = scmp.eq.s32.totalorder %s40, 0
      %p172 = por %p170, %p171
      %s174 = sadd.s32 %s173, 1
      %p177 = scmp.eq.s32.totalorder %s34, 1
      %p178 = scmp.ne.s32.totalorder %s173, %s175
      %p179 = scmp.eq.s32.totalorder %s34, 0
      %p180 = por %p178, %p179
      %p181 = scmp.ne.s32.totalorder %s173, %s175
      %p182 = scmp.eq.s32.totalorder %s39, 1
      %p183 = por %p181, %p182
      %p184 = scmp.ne.s32.totalorder %s175, %s176
      %p185 = scmp.eq.s32.totalorder %s39, 0
      %p186 = por %p184, %p185
      %p187 = scmp.ne.s32.totalorder %s175, %s176
      %p188 = scmp.eq.s32.totalorder %s40, 1
      %p189 = por %p187, %p188
      %p191 = scmp.ne.s32.totalorder %s176, %s190
      %p192 = scmp.eq.s32.totalorder %s40, 0
      %p193 = por %p191, %p192
      %s195 = sadd.s32 %s194, 1
      %p198 = scmp.eq.s32.totalorder %s34, 1
      %p199 = scmp.ne.s32.totalorder %s194, %s196
      %p200 = scmp.eq.s32.totalorder %s34, 0
      %p201 = por %p199, %p200
      %p202 = scmp.ne.s32.totalorder %s194, %s196
      %p203 = scmp.eq.s32.totalorder %s39, 1
      %p204 = por %p202, %p203
      %p205 = scmp.ne.s32.totalorder %s196, %s197
      %p206 = scmp.eq.s32.totalorder %s39, 0
      %p207 = por %p205, %p206
      %p208 = scmp.ne.s32.totalorder %s196, %s197
      %p209 = scmp.eq.s32.totalorder %s40, 1
      %p210 = por %p208, %p209
      %p212 = scmp.ne.s32.totalorder %s197, %s211
      %p213 = scmp.eq.s32.totalorder %s40, 0
      %p214 = por %p212, %p213
      %s216 = sadd.s32 %s215, 1
      %p219 = scmp.eq.s32.totalorder %s34, 1
      %p220 = scmp.ne.s32.totalorder %s215, %s217
      %p221 = scmp.eq.s32.totalorder %s34, 0
      %p222 = por %p220, %p221
      %p223 = scmp.ne.s32.totalorder %s215, %s217
      %p224 = scmp.eq.s32.totalorder %s39, 1
      %p225 = por %p223, %p224
      %p226 = scmp.ne.s32.totalorder %s217, %s218
      %p227 = scmp.eq.s32.totalorder %s39, 0
      %p228 = por %p226, %p227
      %p229 = scmp.ne.s32.totalorder %s217, %s218
      %p230 = scmp.eq.s32.totalorder %s40, 1
      %p231 = por %p229, %p230
      %p233 = scmp.ne.s32.totalorder %s218, %s232
      %p234 = scmp.eq.s32.totalorder %s40, 0
      %p235 = por %p233, %p234
      %s237 = sadd.s32 %s236, 1
      %p240 = scmp.eq.s32.totalorder %s34, 1
      %p241 = scmp.ne.s32.totalorder %s236, %s238
      %p242 = scmp.eq.s32.totalorder %s34, 0
      %p243 = por %p241, %p242
      %p244 = scmp.ne.s32.totalorder %s236, %s238
      %p245 = scmp.eq.s32.totalorder %s39, 1
      %p246 = por %p244, %p245
      %p247 = scmp.ne.s32.totalorder %s238, %s239
      %p248 = scmp.eq.s32.totalorder %s39, 0
      %p249 = por %p247, %p248
      %p250 = scmp.ne.s32.totalorder %s238, %s239
      %p251 = scmp.eq.s32.totalorder %s40, 1
      %p252 = por %p250, %p251
      %p254 = scmp.ne.s32.totalorder %s239, %s253
      %p255 = scmp.eq.s32.totalorder %s40, 0
      %p256 = por %p254, %p255
      %s258 = sadd.s32 %s257, 1
      %p261 = scmp.eq.s32.totalorder %s34, 1
      %p262 = scmp.ne.s32.totalorder %s257, %s259
      %p263 = scmp.eq.s32.totalorder %s34, 0
      %p264 = por %p262, %p263
      %p265 = scmp.ne.s32.totalorder %s257, %s259
      %p266 = scmp.eq.s32.totalorder %s39, 1
      %p267 = por %p265, %p266
      %p268 = scmp.ne.s32.totalorder %s259, %s260
      %p269 = scmp.eq.s32.totalorder %s39, 0
      %p270 = por %p268, %p269
      %p271 = scmp.ne.s32.totalorder %s259, %s260
      %p272 = scmp.eq.s32.totalorder %s40, 1
      %p273 = por %p271, %p272
      %p275 = scmp.ne.s32.totalorder %s260, %s274
      %p276 = scmp.eq.s32.totalorder %s40, 0
      %p277 = por %p275, %p276
      %s279 = sadd.s32 %s278, 1
      %p282 = scmp.eq.s32.totalorder %s34, 1
      %p283 = scmp.ne.s32.totalorder %s278, %s280
      %p284 = scmp.eq.s32.totalorder %s34, 0
      %p285 = por %p283, %p284
      %p286 = scmp.ne.s32.totalorder %s278, %s280
      %p287 = scmp.eq.s32.totalorder %s39, 1
      %p288 = por %p286, %p287
      %p289 = scmp.ne.s32.totalorder %s280, %s281
      %p290 = scmp.eq.s32.totalorder %s39, 0
      %p291 = por %p289, %p290
      %p292 = scmp.ne.s32.totalorder %s280, %s281
      %p293 = scmp.eq.s32.totalorder %s40, 1
      %p294 = por %p292, %p293
      %p296 = scmp.ne.s32.totalorder %s281, %s295
      %p297 = scmp.eq.s32.totalorder %s40, 0
      %p298 = por %p296, %p297
      %s300 = sadd.s32 %s299, 1
      %p303 = scmp.eq.s32.totalorder %s34, 1
      %p304 = scmp.ne.s32.totalorder %s299, %s301
      %p305 = scmp.eq.s32.totalorder %s34, 0
      %p306 = por %p304, %p305
      %p307 = scmp.ne.s32.totalorder %s299, %s301
      %p308 = scmp.eq.s32.totalorder %s39, 1
      %p309 = por %p307, %p308
      %p310 = scmp.ne.s32.totalorder %s301, %s302
      %p311 = scmp.eq.s32.totalorder %s39, 0
      %p312 = por %p310, %p311
      %p313 = scmp.ne.s32.totalorder %s301, %s302
      %p314 = scmp.eq.s32.totalorder %s40, 1
      %p315 = por %p313, %p314
      %p317 = scmp.ne.s32.totalorder %s302, %s316
      %p318 = scmp.eq.s32.totalorder %s40, 0
      %p319 = por %p317, %p318
      %s321 = sadd.s32 %s320, 1
      %p324 = scmp.eq.s32.totalorder %s34, 1
      %p325 = scmp.ne.s32.totalorder %s320, %s322
      %p326 = scmp.eq.s32.totalorder %s34, 0
      %p327 = por %p325, %p326
      %p328 = scmp.ne.s32.totalorder %s320, %s322
      %p329 = scmp.eq.s32.totalorder %s39, 1
      %p330 = por %p328, %p329
      %p331 = scmp.ne.s32.totalorder %s322, %s323
      %p332 = scmp.eq.s32.totalorder %s39, 0
      %p333 = por %p331, %p332
      %p334 = scmp.ne.s32.totalorder %s322, %s323
      %p335 = scmp.eq.s32.totalorder %s40, 1
      %p336 = por %p334, %p335
      %p338 = scmp.ne.s32.totalorder %s323, %s337
      %p339 = scmp.eq.s32.totalorder %s40, 0
      %p340 = por %p338, %p339
      %s342 = sadd.s32 %s341, 1
      %p345 = scmp.eq.s32.totalorder %s34, 1
      %p346 = scmp.ne.s32.totalorder %s341, %s343
      %p347 = scmp.eq.s32.totalorder %s34, 0
      %p348 = por %p346, %p347
      %p349 = scmp.ne.s32.totalorder %s341, %s343
      %p350 = scmp.eq.s32.totalorder %s39, 1
      %p351 = por %p349, %p350
      %p352 = scmp.ne.s32.totalorder %s343, %s344
      %p353 = scmp.eq.s32.totalorder %s39, 0
      %p354 = por %p352, %p353
      %p355 = scmp.ne.s32.totalorder %s343, %s344
      %p356 = scmp.eq.s32.totalorder %s40, 1
      %p357 = por %p355, %p356
      %p359 = scmp.ne.s32.totalorder %s344, %s358
      %p360 = scmp.eq.s32.totalorder %s40, 0
      %p361 = por %p359, %p360
      %s363 = sadd.s32 %s362, 1
      %p366 = scmp.eq.s32.totalorder %s34, 1
      %p367 = scmp.ne.s32.totalorder %s362, %s364
      %p368 = scmp.eq.s32.totalorder %s34, 0
      %p369 = por %p367, %p368
      %p370 = scmp.ne.s32.totalorder %s362, %s364
      %p371 = scmp.eq.s32.totalorder %s39, 1
      %p372 = por %p370, %p371
      %p373 = scmp.ne.s32.totalorder %s364, %s365
      %p374 = scmp.eq.s32.totalorder %s39, 0
      %p375 = por %p373, %p374
      %p376 = scmp.ne.s32.totalorder %s364, %s365
      %p377 = scmp.eq.s32.totalorder %s40, 1
      %p378 = por %p376, %p377
      %p380 = scmp.ne.s32.totalorder %s365, %s379
      %p381 = scmp.eq.s32.totalorder %s40, 0
      %p382 = por %p380, %p381
      %s384 = sadd.s32 %s383, 1
      %p387 = scmp.eq.s32.totalorder %s34, 1
      %p388 = scmp.ne.s32.totalorder %s383, %s385
      %p389 = scmp.eq.s32.totalorder %s34, 0
      %p390 = por %p388, %p389
      %p391 = scmp.ne.s32.totalorder %s383, %s385
      %p392 = scmp.eq.s32.totalorder %s39, 1
      %p393 = por %p391, %p392
      %p394 = scmp.ne.s32.totalorder %s385, %s386
      %p395 = scmp.eq.s32.totalorder %s39, 0
      %p396 = por %p394, %p395
      %p397 = scmp.ne.s32.totalorder %s385, %s386
      %p398 = scmp.eq.s32.totalorder %s40, 1
      %p399 = por %p397, %p398
      %p401 = scmp.ne.s32.totalorder %s386, %s400
      %p402 = scmp.eq.s32.totalorder %s40, 0
      %p403 = por %p401, %p402
      %s405 = sadd.s32 %s404, 1
      %p408 = scmp.eq.s32.totalorder %s34, 1
      %p409 = scmp.ne.s32.totalorder %s404, %s406
      %p410 = scmp.eq.s32.totalorder %s34, 0
      %p411 = por %p409, %p410
      %p412 = scmp.ne.s32.totalorder %s404, %s406
      %p413 = scmp.eq.s32.totalorder %s39, 1
      %p414 = por %p412, %p413
      %p415 = scmp.ne.s32.totalorder %s406, %s407
      %p416 = scmp.eq.s32.totalorder %s39, 0
      %p417 = por %p415, %p416
      %p418 = scmp.ne.s32.totalorder %s406, %s407
      %p419 = scmp.eq.s32.totalorder %s40, 1
      %p420 = por %p418, %p419
      %p422 = scmp.ne.s32.totalorder %s407, %s421
      %p423 = scmp.eq.s32.totalorder %s40, 0
      %p424 = por %p422, %p423
      %s426 = sadd.s32 %s425, 1
      %p429 = scmp.eq.s32.totalorder %s34, 1
      %p430 = scmp.ne.s32.totalorder %s425, %s427
      %p431 = scmp.eq.s32.totalorder %s34, 0
      %p432 = por %p430, %p431
      %p433 = scmp.ne.s32.totalorder %s425, %s427
      %p434 = scmp.eq.s32.totalorder %s39, 1
      %p435 = por %p433, %p434
      %p436 = scmp.ne.s32.totalorder %s427, %s428
      %p437 = scmp.eq.s32.totalorder %s39, 0
      %p438 = por %p436, %p437
      %p439 = scmp.ne.s32.totalorder %s427, %s428
      %p440 = scmp.eq.s32.totalorder %s40, 1
      %p441 = por %p439, %p440
      %p443 = scmp.ne.s32.totalorder %s428, %s442
      %p444 = scmp.eq.s32.totalorder %s40, 0
      %p445 = por %p443, %p444
      %s446 = ssub.s32 %s34, %s41
      %p447 = scmp.eq.s32.totalorder %s446, 0
      %s449 = sadd.s32 %s448, 1
      %s450 = scalar_select %p447, %s448, %s449
      %p453 = pneg %p447
      %p454 = scmp.eq.s32.totalorder %s34, 1
      %p455 = por %p453, %p454
      %p456 = scmp.ne.s32.totalorder %s448, %s451
      %p457 = scmp.eq.s32.totalorder %s34, 0
      %p458 = por %p456, %p457
      %p459 = scmp.ne.s32.totalorder %s448, %s451
      %p460 = scmp.eq.s32.totalorder %s39, 1
      %p461 = por %p459, %p460
      %p462 = scmp.ne.s32.totalorder %s451, %s452
      %p463 = scmp.eq.s32.totalorder %s39, 0
      %p464 = por %p462, %p463
      %p465 = scmp.ne.s32.totalorder %s451, %s452
      %p466 = scmp.eq.s32.totalorder %s40, 1
      %p467 = por %p465, %p466
      %p469 = scmp.ne.s32.totalorder %s452, %s468
      %p470 = scmp.eq.s32.totalorder %s40, 0
      %p471 = por %p469, %p470
      %p472 = scmp.le.s32.totalorder 1, %s34
      %p473 = scmp.lt.s32.totalorder %s34, 3
      %p474 = pnand %p472, %p473
      %p475 = pneg %p474
      // Predicated region
      $region9: #{tpu_custom_call.1} parent=5 // pred_check
        _
      $region10: #{tpu_custom_call.1} parent=5 // pred_check_branch
        %477 = sbr.rel (%p474) target = $region12
      $region11: #{tpu_custom_call.1} parent=5 // pred_region
        %s478 = ssub.s32 %s34, 1
        // Predicated region
        $region13: #{tpu_custom_call.1} parent=11 // pred_check
          %p479 = pneg %p81
        $region14: #{tpu_custom_call.1} parent=11 // pred_check_branch
          %481 = sbr.rel (%p479) target = $region16
        $region15: #{tpu_custom_call.1} parent=11 // pred_region
          %s483 = ssub.s32 9216, 9216
          %484 = vsyncadd [#allocation3], %s483
          %s485 = sshll.u32 [#allocation2], 4
          %s486 = int_to_ptr.vmem [resolvable:$true] %s485
          %491 = dma.hbm_to_vmem [thread:$0]  %s1, 9216, %s486, [#allocation3], 128, 128, 8
        $region16: #{tpu_custom_call.1} parent=11 // pred_fallthru
          _
        // Predicated region
        $region17: #{tpu_custom_call.1} parent=11 // pred_check
          %p492 = pneg %p102
        $region18: #{tpu_custom_call.1} parent=11 // pred_check_branch
          %494 = sbr.rel (%p492) target = $region20
        $region19: #{tpu_custom_call.1} parent=11 // pred_region
          %s496 = ssub.s32 288, 288
          %497 = vsyncadd [#allocation6], %s496
          %s498 = sshll.u32 [#allocation5], 4
          %s499 = int_to_ptr.vmem [resolvable:$true] %s498
          %504 = dma.hbm_to_vmem [thread:$0]  %s2, 288, %s499, [#allocation6], 32, 32, 2
        $region20: #{tpu_custom_call.1} parent=11 // pred_fallthru
          _
        // Predicated region
        $region21: #{tpu_custom_call.1} parent=11 // pred_check
          %p505 = pneg %p123
        $region22: #{tpu_custom_call.1} parent=11 // pred_check_branch
          %507 = sbr.rel (%p505) target = $region24
        $region23: #{tpu_custom_call.1} parent=11 // pred_region
          _
        $region24: #{tpu_custom_call.1} parent=11 // pred_fallthru
          _
        // Predicated region
        $region25: #{tpu_custom_call.1} parent=11 // pred_check
          %p508 = pneg %p144
        $region26: #{tpu_custom_call.1} parent=11 // pred_check_branch
          %510 = sbr.rel (%p508) target = $region28
        $region27: #{tpu_custom_call.1} parent=11 // pred_region
          %s512 = ssub.s32 4608, 4608
          %513 = vsyncadd [#allocation6], %s512
          %s514 = sshll.u32 [#allocation7], 4
          %s515 = int_to_ptr.vmem [resolvable:$true] %s514
          %520 = dma.hbm_to_vmem [thread:$0]  %s4, 4608, %s515, [#allocation6], 64, 64, 4
        $region28: #{tpu_custom_call.1} parent=11 // pred_fallthru
          _
        // Predicated region
        $region29: #{tpu_custom_call.1} parent=11 // pred_check
          %p521 = pneg %p165
        $region30: #{tpu_custom_call.1} parent=11 // pred_check_branch
          %523 = sbr.rel (%p521) target = $region32
        $region31: #{tpu_custom_call.1} parent=11 // pred_region
          %s525 = ssub.s32 4608, 4608
          %526 = vsyncadd [#allocation9], %s525
          %s527 = sshll.u32 [#allocation8], 4
          %s528 = int_to_ptr.vmem [resolvable:$true] %s527
          %533 = dma.hbm_to_vmem [thread:$0]  %s5, 4608, %s528, [#allocation9], 64, 64, 4
        $region32: #{tpu_custom_call.1} parent=11 // pred_fallthru
          _
        // Predicated region
        $region33: #{tpu_custom_call.1} parent=11 // pred_check
          %p534 = pneg %p186
        $region34: #{tpu_custom_call.1} parent=11 // pred_check_branch
          %536 = sbr.rel (%p534) target = $region36
        $region35: #{tpu_custom_call.1} parent=11 // pred_region
          _
        $region36: #{tpu_custom_call.1} parent=11 // pred_fallthru
          _
        // Predicated region
        $region37: #{tpu_custom_call.1} parent=11 // pred_check
          %p537 = pneg %p207
        $region38: #{tpu_custom_call.1} parent=11 // pred_check_branch
          %539 = sbr.rel (%p537) target = $region40
        $region39: #{tpu_custom_call.1} parent=11 // pred_region
          %s541 = ssub.s32 4608, 4608
          %542 = vsyncadd [#allocation9], %s541
          %s543 = sshll.u32 [#allocation10], 4
          %s544 = int_to_ptr.vmem [resolvable:$true] %s543
          %549 = dma.hbm_to_vmem [thread:$0]  %s7, 4608, %s544, [#allocation9], 64, 64, 4
        $region40: #{tpu_custom_call.1} parent=11 // pred_fallthru
          _
        // Predicated region
        $region41: #{tpu_custom_call.1} parent=11 // pred_check
          %p550 = pneg %p228
        $region42: #{tpu_custom_call.1} parent=11 // pred_check_branch
          %552 = sbr.rel (%p550) target = $region44
        $region43: #{tpu_custom_call.1} parent=11 // pred_region
          %s554 = ssub.s32 4608, 4608
          %555 = vsyncadd [#allocation12], %s554
          %s556 = sshll.u32 [#allocation11], 4
          %s557 = int_to_ptr.vmem [resolvable:$true] %s556
          %562 = dma.hbm_to_vmem [thread:$0]  %s8, 4608, %s557, [#allocation12], 64, 64, 4
        $region44: #{tpu_custom_call.1} parent=11 // pred_fallthru
          _
        // Predicated region
        $region45: #{tpu_custom_call.1} parent=11 // pred_check
          %p563 = pneg %p249
        $region46: #{tpu_custom_call.1} parent=11 // pred_check_branch
          %565 = sbr.rel (%p563) target = $region48
        $region47: #{tpu_custom_call.1} parent=11 // pred_region
          _
        $region48: #{tpu_custom_call.1} parent=11 // pred_fallthru
          _
        // Predicated region
        $region49: #{tpu_custom_call.1} parent=11 // pred_check
          %p566 = pneg %p270
        $region50: #{tpu_custom_call.1} parent=11 // pred_check_branch
          %568 = sbr.rel (%p566) target = $region52
        $region51: #{tpu_custom_call.1} parent=11 // pred_region
          %s570 = ssub.s32 1152, 1152
          %571 = vsyncadd [#allocation12], %s570
          %s572 = sshll.u32 [#allocation13], 4
          %s573 = int_to_ptr.vmem [resolvable:$true] %s572
          %578 = dma.hbm_to_vmem [thread:$0]  %s10, 1152, %s573, [#allocation12], 64, 64, 4
        $region52: #{tpu_custom_call.1} parent=11 // pred_fallthru
          _
        // Predicated region
        $region53: #{tpu_custom_call.1} parent=11 // pred_check
          %p579 = pneg %p291
        $region54: #{tpu_custom_call.1} parent=11 // pred_check_branch
          %581 = sbr.rel (%p579) target = $region56
        $region55: #{tpu_custom_call.1} parent=11 // pred_region
          %s583 = ssub.s32 4608, 4608
          %584 = vsyncadd [#allocation15], %s583
          %s585 = sshll.u32 [#allocation14], 4
          %s586 = int_to_ptr.vmem [resolvable:$true] %s585
          %591 = dma.hbm_to_vmem [thread:$0]  %s11, 4608, %s586, [#allocation15], 64, 64, 4
        $region56: #{tpu_custom_call.1} parent=11 // pred_fallthru
          _
        // Predicated region
        $region57: #{tpu_custom_call.1} parent=11 // pred_check
          %p592 = pneg %p312
        $region58: #{tpu_custom_call.1} parent=11 // pred_check_branch
          %594 = sbr.rel (%p592) target = $region60
        $region59: #{tpu_custom_call.1} parent=11 // pred_region
          _
        $region60: #{tpu_custom_call.1} parent=11 // pred_fallthru
          _
        // Predicated region
        $region61: #{tpu_custom_call.1} parent=11 // pred_check
          %p595 = pneg %p333
        $region62: #{tpu_custom_call.1} parent=11 // pred_check_branch
          %597 = sbr.rel (%p595) target = $region64
        $region63: #{tpu_custom_call.1} parent=11 // pred_region
          _
        $region64: #{tpu_custom_call.1} parent=11 // pred_fallthru
          _
        // Predicated region
        $region65: #{tpu_custom_call.1} parent=11 // pred_check
          %p598 = pneg %p354
        $region66: #{tpu_custom_call.1} parent=11 // pred_check_branch
          %600 = sbr.rel (%p598) target = $region68
        $region67: #{tpu_custom_call.1} parent=11 // pred_region
          %s602 = ssub.s32 512, 512
          %603 = vsyncadd [#allocation15], %s602
          %s604 = sshll.u32 [#allocation16], 4
          %s605 = int_to_ptr.vmem [resolvable:$true] %s604
          %610 = dma.hbm_to_vmem [thread:$0]  %s14, 512, %s605, [#allocation15], 64, 64, 4
        $region68: #{tpu_custom_call.1} parent=11 // pred_fallthru
          _
        // Predicated region
        $region69: #{tpu_custom_call.1} parent=11 // pred_check
          %p611 = pneg %p375
        $region70: #{tpu_custom_call.1} parent=11 // pred_check_branch
          %613 = sbr.rel (%p611) target = $region72
        $region71: #{tpu_custom_call.1} parent=11 // pred_region
          _
        $region72: #{tpu_custom_call.1} parent=11 // pred_fallthru
          _
        // Predicated region
        $region73: #{tpu_custom_call.1} parent=11 // pred_check
          %p614 = pneg %p396
        $region74: #{tpu_custom_call.1} parent=11 // pred_check_branch
          %616 = sbr.rel (%p614) target = $region76
        $region75: #{tpu_custom_call.1} parent=11 // pred_region
          %s618 = ssub.s32 1152, 1152
          %619 = vsyncadd [#allocation18], %s618
          %s620 = sshll.u32 [#allocation17], 4
          %s621 = int_to_ptr.vmem [resolvable:$true] %s620
          %626 = dma.hbm_to_vmem [thread:$0]  %s16, 1152, %s621, [#allocation18], 64, 64, 4
        $region76: #{tpu_custom_call.1} parent=11 // pred_fallthru
          _
        // Predicated region
        $region77: #{tpu_custom_call.1} parent=11 // pred_check
          %p627 = pneg %p417
        $region78: #{tpu_custom_call.1} parent=11 // pred_check_branch
          %629 = sbr.rel (%p627) target = $region80
        $region79: #{tpu_custom_call.1} parent=11 // pred_region
          _
        $region80: #{tpu_custom_call.1} parent=11 // pred_fallthru
          _
        // Predicated region
        $region81: #{tpu_custom_call.1} parent=11 // pred_check
          %p630 = pneg %p438
        $region82: #{tpu_custom_call.1} parent=11 // pred_check_branch
          %632 = sbr.rel (%p630) target = $region84
        $region83: #{tpu_custom_call.1} parent=11 // pred_region
          _
        $region84: #{tpu_custom_call.1} parent=11 // pred_fallthru
          _
      $region12: #{tpu_custom_call.1} parent=5 // pred_fallthru
        _
      %p633 = scmp.lt.s32.totalorder %s34, 2
      // Predicated region
      $region85: #{tpu_custom_call.1} parent=5 // pred_check
        %p634 = pneg %p633
      $region86: #{tpu_custom_call.1} parent=5 // pred_check_branch
        %636 = sbr.rel (%p634) target = $region88
      $region87: #{tpu_custom_call.1} parent=5 // pred_region
        // Predicated region
        $region89: #{tpu_custom_call.1} parent=87 // pred_check
          %p637 = pneg %p54
        $region90: #{tpu_custom_call.1} parent=87 // pred_check_branch
          %639 = sbr.rel (%p637) target = $region92
        $region91: #{tpu_custom_call.1} parent=87 // pred_region
          %p640 = scmp.lt.s32.totalorder %s34, 1
          %s641 = scalar_select %p640, %s34, 1
          %s642 = smul.addr %s641, 32
          %s643 = smul.addr %s642, 8
          %s644 = scalar_lea.vmem %s0, %s643
        $region92: #{tpu_custom_call.1} parent=87 // pred_fallthru
          _
      $region88: #{tpu_custom_call.1} parent=5 // pred_fallthru
        _
      %p645 = scmp.le.s32.totalorder 1, %s34
      %p646 = scmp.lt.s32.totalorder %s34, 3
      %p647 = pnand %p645, %p646
      %p648 = pneg %p647
      // Predicated region
      $region93: #{tpu_custom_call.1} parent=5 // pred_check
        _
      $region94: #{tpu_custom_call.1} parent=5 // pred_check_branch
        %650 = sbr.rel (%p647) target = $region96
      $region95: #{tpu_custom_call.1} parent=5 // pred_region
        %s651 = ssub.s32 %s34, 1
        // Predicated region
        $region97: #{tpu_custom_call.1} parent=95 // pred_check
          %p652 = pneg %p81
        $region98: #{tpu_custom_call.1} parent=95 // pred_check_branch
          %654 = sbr.rel (%p652) target = $region100
        $region99: #{tpu_custom_call.1} parent=95 // pred_region
          %655 = dma.done [#allocation3], 9216
        $region100: #{tpu_custom_call.1} parent=95 // pred_fallthru
          _
        // Predicated region
        $region101: #{tpu_custom_call.1} parent=95 // pred_check
          %p656 = pneg %p102
        $region102: #{tpu_custom_call.1} parent=95 // pred_check_branch
          %658 = sbr.rel (%p656) target = $region104
        $region103: #{tpu_custom_call.1} parent=95 // pred_region
          %659 = dma.done [#allocation6], 288
        $region104: #{tpu_custom_call.1} parent=95 // pred_fallthru
          _
        // Predicated region
        $region105: #{tpu_custom_call.1} parent=95 // pred_check
          %p660 = pneg %p144
        $region106: #{tpu_custom_call.1} parent=95 // pred_check_branch
          %662 = sbr.rel (%p660) target = $region108
        $region107: #{tpu_custom_call.1} parent=95 // pred_region
          %663 = dma.done [#allocation6], 4608
        $region108: #{tpu_custom_call.1} parent=95 // pred_fallthru
          _
        // Predicated region
        $region109: #{tpu_custom_call.1} parent=95 // pred_check
          %p664 = pneg %p165
        $region110: #{tpu_custom_call.1} parent=95 // pred_check_branch
          %666 = sbr.rel (%p664) target = $region112
        $region111: #{tpu_custom_call.1} parent=95 // pred_region
          %667 = dma.done [#allocation9], 4608
        $region112: #{tpu_custom_call.1} parent=95 // pred_fallthru
          _
        // Predicated region
        $region113: #{tpu_custom_call.1} parent=95 // pred_check
          %p668 = pneg %p207
        $region114: #{tpu_custom_call.1} parent=95 // pred_check_branch
          %670 = sbr.rel (%p668) target = $region116
        $region115: #{tpu_custom_call.1} parent=95 // pred_region
          %671 = dma.done [#allocation9], 4608
        $region116: #{tpu_custom_call.1} parent=95 // pred_fallthru
          _
        // Predicated region
        $region117: #{tpu_custom_call.1} parent=95 // pred_check
          %p672 = pneg %p228
        $region118: #{tpu_custom_call.1} parent=95 // pred_check_branch
          %674 = sbr.rel (%p672) target = $region120
        $region119: #{tpu_custom_call.1} parent=95 // pred_region
          %675 = dma.done [#allocation12], 4608
        $region120: #{tpu_custom_call.1} parent=95 // pred_fallthru
          _
        // Predicated region
        $region121: #{tpu_custom_call.1} parent=95 // pred_check
          %p676 = pneg %p270
        $region122: #{tpu_custom_call.1} parent=95 // pred_check_branch
          %678 = sbr.rel (%p676) target = $region124
        $region123: #{tpu_custom_call.1} parent=95 // pred_region
          %679 = dma.done [#allocation12], 1152
        $region124: #{tpu_custom_call.1} parent=95 // pred_fallthru
          _
        // Predicated region
        $region125: #{tpu_custom_call.1} parent=95 // pred_check
          %p680 = pneg %p291
        $region126: #{tpu_custom_call.1} parent=95 // pred_check_branch
          %682 = sbr.rel (%p680) target = $region128
        $region127: #{tpu_custom_call.1} parent=95 // pred_region
          %683 = dma.done [#allocation15], 4608
        $region128: #{tpu_custom_call.1} parent=95 // pred_fallthru
          _
        // Predicated region
        $region129: #{tpu_custom_call.1} parent=95 // pred_check
          %p684 = pneg %p354
        $region130: #{tpu_custom_call.1} parent=95 // pred_check_branch
          %686 = sbr.rel (%p684) target = $region132
        $region131: #{tpu_custom_call.1} parent=95 // pred_region
          %687 = dma.done [#allocation15], 512
        $region132: #{tpu_custom_call.1} parent=95 // pred_fallthru
          _
        // Predicated region
        $region133: #{tpu_custom_call.1} parent=95 // pred_check
          %p688 = pneg %p396
        $region134: #{tpu_custom_call.1} parent=95 // pred_check_branch
          %690 = sbr.rel (%p688) target = $region136
        $region135: #{tpu_custom_call.1} parent=95 // pred_region
          %691 = dma.done [#allocation18], 1152
        $region136: #{tpu_custom_call.1} parent=95 // pred_fallthru
          _
        %p692 = scmp.lt.s32.totalorder %s39, 1
        %s693 = scalar_select %p692, %s39, 1
        %s694 = smul.addr %s693, 32
        %s695 = smul.addr %s694, 8
        %s696 = scalar_lea.vmem %s0, %s695
        %p697 = pneg %p60
        %p698 = pneg %p57
        %p699 = pneg %p81
        %p700 = pneg %p78
        %p701 = pneg %p102
        %p702 = pneg %p99
        %p703 = pneg %p123
        %p704 = pneg %p120
        %p705 = pneg %p144
        %p706 = pneg %p141
        %p707 = pneg %p165
        %p708 = pneg %p162
        %p709 = pneg %p186
        %p710 = pneg %p183
        %p711 = pneg %p207
        %p712 = pneg %p204
        %p713 = pneg %p228
        %p714 = pneg %p225
        %p715 = pneg %p249
        %p716 = pneg %p246
        %p717 = pneg %p270
        %p718 = pneg %p267
        %p719 = pneg %p291
        %p720 = pneg %p288
        %p721 = pneg %p312
        %p722 = pneg %p309
        %p723 = pneg %p333
        %p724 = pneg %p330
        %p725 = pneg %p354
        %p726 = pneg %p351
        %p727 = pneg %p375
        %p728 = pneg %p372
        %p729 = pneg %p396
        %p730 = pneg %p393
        %p731 = pneg %p417
        %p732 = pneg %p414
        %p733 = pneg %p438
        %p734 = pneg %p435
        %p735 = pneg %p464
        %p736 = pneg %p461
        %s737 = sand.u32 %s451, 1
        %s738 = scalar_lea.sflag [#allocation4], %s737
        %s739 = sand.u32 %s451, 1
        %s740 = smul.addr %s739, 16
        %s741 = scalar_lea.vmem [#allocation19], %s740
        %p742 = scmp.lt.s32.totalorder %s39, 1
        %s743 = scalar_select %p742, %s39, 1
        %s744 = smul.addr %s743, 32
        %s745 = smul.addr %s744, 8
        %s746 = scalar_lea.vmem %s0, %s745
        %v748 = vld [vmem:[%s746] sm:$0xff]
        %v749 = vld [vmem:[%s746 + $0x8] sm:$0xff]
        %v750 = vld [vmem:[%s746 + $0x10] sm:$0xff]
        %v751 = vld [vmem:[%s746 + $0x18] sm:$0xff]
        %v752 = vld [vmem:[%s746 + $0x20] sm:$0xff]
        %v753 = vld [vmem:[%s746 + $0x28] sm:$0xff]
        %v754 = vld [vmem:[%s746 + $0x30] sm:$0xff]
        %v755 = vld [vmem:[%s746 + $0x38] sm:$0xff]
        %v756 = vld [vmem:[%s746 + $0x40] sm:$0xff]
        %v757 = vld [vmem:[%s746 + $0x48] sm:$0xff]
        %v758 = vld [vmem:[%s746 + $0x50] sm:$0xff]
        %v759 = vld [vmem:[%s746 + $0x58] sm:$0xff]
        %v760 = vld [vmem:[%s746 + $0x60] sm:$0xff]
        %v761 = vld [vmem:[%s746 + $0x68] sm:$0xff]
        %v762 = vld [vmem:[%s746 + $0x70] sm:$0xff]
        %v763 = vld [vmem:[%s746 + $0x78] sm:$0xff]
        %v764 = vld [vmem:[%s746 + $0x80] sm:$0xff]
        %v765 = vld [vmem:[%s746 + $0x88] sm:$0xff]
        %v766 = vld [vmem:[%s746 + $0x90] sm:$0xff]
        %v767 = vld [vmem:[%s746 + $0x98] sm:$0xff]
        %v768 = vld [vmem:[%s746 + $0xa0] sm:$0xff]
        %v769 = vld [vmem:[%s746 + $0xa8] sm:$0xff]
        %v770 = vld [vmem:[%s746 + $0xb0] sm:$0xff]
        %v771 = vld [vmem:[%s746 + $0xb8] sm:$0xff]
        %v772 = vld [vmem:[%s746 + $0xc0] sm:$0xff]
        %v773 = vld [vmem:[%s746 + $0xc8] sm:$0xff]
        %v774 = vld [vmem:[%s746 + $0xd0] sm:$0xff]
        %v775 = vld [vmem:[%s746 + $0xd8] sm:$0xff]
        %v776 = vld [vmem:[%s746 + $0xe0] sm:$0xff]
        %v777 = vld [vmem:[%s746 + $0xe8] sm:$0xff]
        %v778 = vld [vmem:[%s746 + $0xf0] sm:$0xff]
        %v779 = vld [vmem:[%s746 + $0xf8] sm:$0xff]
        %v780 = vpack.c.bf16 %v749, %v748
        %v781 = vpack.c.bf16 %v751, %v750
        %v782 = vpack.c.bf16 %v753, %v752
        %v783 = vpack.c.bf16 %v755, %v754
        %v784 = vpack.c.bf16 %v757, %v756
        %v785 = vpack.c.bf16 %v759, %v758
        %v786 = vpack.c.bf16 %v761, %v760
        %v787 = vpack.c.bf16 %v763, %v762
        %v788 = vpack.c.bf16 %v765, %v764
        %v789 = vpack.c.bf16 %v767, %v766
        %v790 = vpack.c.bf16 %v769, %v768
        %v791 = vpack.c.bf16 %v771, %v770
        %v792 = vpack.c.bf16 %v773, %v772
        %v793 = vpack.c.bf16 %v775, %v774
        %v794 = vpack.c.bf16 %v777, %v776
        %v795 = vpack.c.bf16 %v779, %v778
        %v796 = vld [vmem:[#allocation2] sm:$0xff]
        %v797 = vld [vmem:[#allocation2 + $0x8] sm:$0xff]
        %v798 = vld [vmem:[#allocation2 + $0x10] sm:$0xff]
        %v799 = vld [vmem:[#allocation2 + $0x18] sm:$0xff]
        %v800 = vld [vmem:[#allocation2 + $0x20] sm:$0xff]
        %v801 = vld [vmem:[#allocation2 + $0x28] sm:$0xff]
        %v802 = vld [vmem:[#allocation2 + $0x30] sm:$0xff]
        %v803 = vld [vmem:[#allocation2 + $0x38] sm:$0xff]
        %v812 = vunpack.c.l.b16 %v796
        %v813 = vunpack.c.h.b16 %v796
        %v814 = vunpack.c.l.b16 %v797
        %v815 = vunpack.c.h.b16 %v797
        %v816 = vunpack.c.l.b16 %v798
        %v817 = vunpack.c.h.b16 %v798
        %v818 = vunpack.c.l.b16 %v799
        %v819 = vunpack.c.h.b16 %v799
        %v820 = vunpack.c.l.b16 %v800
        %v821 = vunpack.c.h.b16 %v800
        %v822 = vunpack.c.l.b16 %v801
        %v823 = vunpack.c.h.b16 %v801
        %v824 = vunpack.c.l.b16 %v802
        %v825 = vunpack.c.h.b16 %v802
        %v826 = vunpack.c.l.b16 %v803
        %v827 = vunpack.c.h.b16 %v803
        %v828 = vpack.c.b16 %v814, %v812
        %v829 = vpack.c.b16 %v815, %v813
        %v830 = vpack.c.b16 %v818, %v816
        %v831 = vpack.c.b16 %v819, %v817
        %v832 = vpack.c.b16 %v822, %v820
        %v833 = vpack.c.b16 %v823, %v821
        %v834 = vpack.c.b16 %v826, %v824
        %v835 = vpack.c.b16 %v827, %v825
        %844 = vmatprep.subr.bf16.mxu0 0
        %845 = vmatpush1.bf16.msra.mxu0 %v780
        %846 = vmatprep.subr.bf16.mxu0 0
        %847 = vmatpush1.bf16.msra.mxu0 %v781
        %848 = vmatprep.subr.bf16.mxu0 0
        %849 = vmatpush1.bf16.msra.mxu0 %v782
        %850 = vmatprep.subr.bf16.mxu0 0
        %851 = vmatpush1.bf16.msra.mxu0 %v783
        %852 = vmatprep.subr.bf16.mxu0 0
        %853 = vmatpush1.bf16.msra.mxu0 %v784
        %854 = vmatprep.subr.bf16.mxu0 0
        %855 = vmatpush1.bf16.msra.mxu0 %v785
        %856 = vmatprep.subr.bf16.mxu0 0
        %857 = vmatpush1.bf16.msra.mxu0 %v786
        %858 = vmatprep.subr.bf16.mxu0 0
        %859 = vmatpush1.bf16.msra.mxu0 %v787
        %860 = vmatprep.subr.bf16.mxu0 0
        %861 = vmatpush1.bf16.msra.mxu0 %v788
        %862 = vmatprep.subr.bf16.mxu0 0
        %863 = vmatpush1.bf16.msra.mxu0 %v789
        %864 = vmatprep.subr.bf16.mxu0 0
        %865 = vmatpush1.bf16.msra.mxu0 %v790
        %866 = vmatprep.subr.bf16.mxu0 0
        %867 = vmatpush1.bf16.msra.mxu0 %v791
        %868 = vmatprep.subr.bf16.mxu0 0
        %869 = vmatpush1.bf16.msra.mxu0 %v792
        %870 = vmatprep.subr.bf16.mxu0 0
        %871 = vmatpush1.bf16.msra.mxu0 %v793
        %872 = vmatprep.subr.bf16.mxu0 0
        %873 = vmatpush1.bf16.msra.mxu0 %v794
        %874 = vmatprep.subr.bf16.mxu0 0
        %875 = vmatpush1.bf16.msra.mxu0 %v795
        %876 = vmatprep.mubr.bf16.mxu0 %v829
        %877 = vmatmul.mubr.bf16.gmra.mrb[0].mxu0 %v828
        %v878 = vpop.f32.mrb[0].mxu0
        %v879 = vadd.f32 0.0, %v878
        %v880 = vpop.f32.mrb[0].mxu0
        %v881 = vpop.f32.mrb[0].mxu0
        %v882 = vadd.f32 0.0, %v881
        %v883 = vpop.f32.mrb[0].mxu0
        %884 = vmatprep.mubr.bf16.mxu0 %v831
        %885 = vmatmul.mubr.bf16.gmra.mrb[0].mxu0 %v830
        %v886 = vpop.f32.mrb[0].mxu0
        %v887 = vadd.f32 0.0, %v886
        %v888 = vpop.f32.mrb[0].mxu0
        %v889 = vpop.f32.mrb[0].mxu0
        %v890 = vadd.f32 0.0, %v889
        %v891 = vpop.f32.mrb[0].mxu0
        %892 = vmatprep.mubr.bf16.mxu0 %v833
        %893 = vmatmul.mubr.bf16.gmra.mrb[0].mxu0 %v832
        %v894 = vpop.f32.mrb[0].mxu0
        %v895 = vadd.f32 0.0, %v894
        %v896 = vpop.f32.mrb[0].mxu0
        %v897 = vpop.f32.mrb[0].mxu0
        %v898 = vadd.f32 0.0, %v897
        %v899 = vpop.f32.mrb[0].mxu0
        %900 = vmatprep.mubr.bf16.mxu0 %v835
        %901 = vmatmul.mubr.bf16.gmra.mrb[0].mxu0 %v834
        %v902 = vpop.f32.mrb[0].mxu0
        %v903 = vadd.f32 0.0, %v902
        %v904 = vpop.f32.mrb[0].mxu0
        %v905 = vpop.f32.mrb[0].mxu0
        %v906 = vadd.f32 0.0, %v905
        %v907 = vpop.f32.mrb[0].mxu0
        %908 = vdwg.mxu0
        %v909 = vpack.c.bf16 %v882, %v879
        %v910 = vpack.c.bf16 %v890, %v887
        %v911 = vpack.c.bf16 %v898, %v895
        %v912 = vpack.c.bf16 %v906, %v903
        %v913 = vld [vmem:[#allocation5] sm:$0x3]
        %s914 = scalar_lea.vmem [#allocation2], 64
        %v915 = vld [vmem:[%s914] sm:$0xff]
        %v916 = vld [vmem:[%s914 + $0x8] sm:$0xff]
        %v917 = vld [vmem:[%s914 + $0x10] sm:$0xff]
        %v918 = vld [vmem:[%s914 + $0x18] sm:$0xff]
        %v919 = vld [vmem:[%s914 + $0x20] sm:$0xff]
        %v920 = vld [vmem:[%s914 + $0x28] sm:$0xff]
        %v921 = vld [vmem:[%s914 + $0x30] sm:$0xff]
        %v922 = vld [vmem:[%s914 + $0x38] sm:$0xff]
        %v931 = vunpack.c.l.b16 %v915
        %v932 = vunpack.c.h.b16 %v915
        %v933 = vunpack.c.l.b16 %v916
        %v934 = vunpack.c.h.b16 %v916
        %v935 = vunpack.c.l.b16 %v917
        %v936 = vunpack.c.h.b16 %v917
        %v937 = vunpack.c.l.b16 %v918
        %v938 = vunpack.c.h.b16 %v918
        %v939 = vunpack.c.l.b16 %v919
        %v940 = vunpack.c.h.b16 %v919
        %v941 = vunpack.c.l.b16 %v920
        %v942 = vunpack.c.h.b16 %v920
        %v943 = vunpack.c.l.b16 %v921
        %v944 = vunpack.c.h.b16 %v921
        %v945 = vunpack.c.l.b16 %v922
        %v946 = vunpack.c.h.b16 %v922
        %v947 = vpack.c.b16 %v933, %v931
        %v948 = vpack.c.b16 %v934, %v932
        %v949 = vpack.c.b16 %v937, %v935
        %v950 = vpack.c.b16 %v938, %v936
        %v951 = vpack.c.b16 %v941, %v939
        %v952 = vpack.c.b16 %v942, %v940
        %v953 = vpack.c.b16 %v945, %v943
        %v954 = vpack.c.b16 %v946, %v944
        %963 = vmatprep.subr.bf16.mxu0 0
        %964 = vmatpush1.bf16.msra.mxu0 %v780
        %965 = vmatprep.subr.bf16.mxu0 0
        %966 = vmatpush1.bf16.msra.mxu0 %v781
        %967 = vmatprep.subr.bf16.mxu0 0
        %968 = vmatpush1.bf16.msra.mxu0 %v782
        %969 = vmatprep.subr.bf16.mxu0 0
        %970 = vmatpush1.bf16.msra.mxu0 %v783
        %971 = vmatprep.subr.bf16.mxu0 0
        %972 = vmatpush1.bf16.msra.mxu0 %v784
        %973 = vmatprep.subr.bf16.mxu0 0
        %974 = vmatpush1.bf16.msra.mxu0 %v785
        %975 = vmatprep.subr.bf16.mxu0 0
        %976 = vmatpush1.bf16.msra.mxu0 %v786
        %977 = vmatprep.subr.bf16.mxu0 0
        %978 = vmatpush1.bf16.msra.mxu0 %v787
        %979 = vmatprep.subr.bf16.mxu0 0
        %980 = vmatpush1.bf16.msra.mxu0 %v788
        %981 = vmatprep.subr.bf16.mxu0 0
        %982 = vmatpush1.bf16.msra.mxu0 %v789
        %983 = vmatprep.subr.bf16.mxu0 0
        %984 = vmatpush1.bf16.msra.mxu0 %v790
        %985 = vmatprep.subr.bf16.mxu0 0
        %986 = vmatpush1.bf16.msra.mxu0 %v791
        %987 = vmatprep.subr.bf16.mxu0 0
        %988 = vmatpush1.bf16.msra.mxu0 %v792
        %989 = vmatprep.subr.bf16.mxu0 0
        %990 = vmatpush1.bf16.msra.mxu0 %v793
        %991 = vmatprep.subr.bf16.mxu0 0
        %992 = vmatpush1.bf16.msra.mxu0 %v794
        %993 = vmatprep.subr.bf16.mxu0 0
        %994 = vmatpush1.bf16.msra.mxu0 %v795
        %995 = vmatprep.mubr.bf16.mxu0 %v948
        %996 = vmatmul.mubr.bf16.gmra.mrb[0].mxu0 %v947
        %v997 = vpop.f32.mrb[0].mxu0
        %v998 = vadd.f32 0.0, %v997
        %v999 = vpop.f32.mrb[0].mxu0
        %v1000 = vpop.f32.mrb[0].mxu0
        %v1001 = vadd.f32 0.0, %v1000
        %v1002 = vpop.f32.mrb[0].mxu0
        %1003 = vmatprep.mubr.bf16.mxu0 %v950
        %1004 = vmatmul.mubr.bf16.gmra.mrb[0].mxu0 %v949
        %v1005 = vpop.f32.mrb[0].mxu0
        %v1006 = vadd.f32 0.0, %v1005
        %v1007 = vpop.f32.mrb[0].mxu0
        %v1008 = vpop.f32.mrb[0].mxu0
        %v1009 = vadd.f32 0.0, %v1008
        %v1010 = vpop.f32.mrb[0].mxu0
        %1011 = vmatprep.mubr.bf16.mxu0 %v952
        %1012 = vmatmul.mubr.bf16.gmra.mrb[0].mxu0 %v951
        %v1013 = vpop.f32.mrb[0].mxu0
        %v1014 = vadd.f32 0.0, %v1013
        %v1015 = vpop.f32.mrb[0].mxu0
        %v1016 = vpop.f32.mrb[0].mxu0
        %v1017 = vadd.f32 0.0, %v1016
        %v1018 = vpop.f32.mrb[0].mxu0
        %1019 = vmatprep.mubr.bf16.mxu0 %v954
        %1020 = vmatmul.mubr.bf16.gmra.mrb[0].mxu0 %v953
        %v1021 = vpop.f32.mrb[0].mxu0
        %v1022 = vadd.f32 0.0, %v1021
        %v1023 = vpop.f32.mrb[0].mxu0
        %v1024 = vpop.f32.mrb[0].mxu0
        %v1025 = vadd.f32 0.0, %v1024
        %v1026 = vpop.f32.mrb[0].mxu0
        %1027 = vdwg.mxu0
        %v1028 = vpack.c.bf16 %v1001, %v998
        %v1029 = vpack.c.bf16 %v1009, %v1006
        %v1030 = vpack.c.bf16 %v1017, %v1014
        %v1031 = vpack.c.bf16 %v1025, %v1022
        %s1032 = scalar_lea.vmem [#allocation5], 2
        %v1033 = vld [vmem:[%s1032] sm:$0x3]
        %vm1034 = vcmask 31744
        %v1036 = vsel %vm1034, %v1028, 0
        %v1039 = vsel %vm1034, %v1029, 0
        %v1042 = vsel %vm1034, %v1030, 0
        %v1045 = vsel %vm1034, %v1031, 0
        %vm1047 = vcmask 1041408
        %v1049 = vsel %vm1047, %v1033, 0
        %1051 = vmatprep.subr.bf16.mxu0 0
        %1052 = vmatpush1.bf16.msra.mxu0 %v1049
        %1053 = vmatprep.subr.bf16.mxu0 0
        %1054 = vmatpush1.bf16.msra.mxu0 0
        %1055 = vmatprep.subr.bf16.mxu0 0
        %1056 = vmatpush1.bf16.msra.mxu0 0
        %1057 = vmatprep.subr.bf16.mxu0 0
        %1058 = vmatpush1.bf16.msra.mxu0 0
        %1059 = vmatprep.subr.bf16.mxu0 0
        %1060 = vmatpush1.bf16.msra.mxu0 0
        %1061 = vmatprep.subr.bf16.mxu0 0
        %1062 = vmatpush1.bf16.msra.mxu0 0
        %1063 = vmatprep.subr.bf16.mxu0 0
        %1064 = vmatpush1.bf16.msra.mxu0 0
        %1065 = vmatprep.subr.bf16.mxu0 0
        %1066 = vmatpush1.bf16.msra.mxu0 0
        %1067 = vmatprep.subr.bf16.mxu0 0
        %1068 = vmatpush1.bf16.msra.mxu0 0
        %1069 = vmatprep.subr.bf16.mxu0 0
        %1070 = vmatpush1.bf16.msra.mxu0 0
        %1071 = vmatprep.subr.bf16.mxu0 0
        %1072 = vmatpush1.bf16.msra.mxu0 0
        %1073 = vmatprep.subr.bf16.mxu0 0
        %1074 = vmatpush1.bf16.msra.mxu0 0
        %1075 = vmatprep.subr.bf16.mxu0 0
        %1076 = vmatpush1.bf16.msra.mxu0 0
        %1077 = vmatprep.subr.bf16.mxu0 0
        %1078 = vmatpush1.bf16.msra.mxu0 0
        %1079 = vmatprep.subr.bf16.mxu0 0
        %1080 = vmatpush1.bf16.msra.mxu0 0
        %1081 = vmatprep.subr.bf16.mxu0 0
        %1082 = vmatpush1.bf16.msra.mxu0 0
        %1083 = vmatprep.mubr.bf16.mxu0 0
        %1084 = vmatmul.mubr.bf16.gmra.mrb[0].mxu0 %v1036
        %v1085 = vpop.f32.mrb[0].mxu0
        %v1086 = vadd.f32 0.0, %v1085
        %v1087 = vpop.f32.mrb[0].mxu0
        %v1088 = vpop.f32.mrb[0].mxu0
        %v1089 = vadd.f32 0.0, %v1088
        %v1090 = vpop.f32.mrb[0].mxu0
        %1091 = vmatprep.mubr.bf16.mxu0 0
        %1092 = vmatmul.mubr.bf16.gmra.mrb[0].mxu0 %v1039
        %v1093 = vpop.f32.mrb[0].mxu0
        %v1094 = vadd.f32 0.0, %v1093
        %v1095 = vpop.f32.mrb[0].mxu0
        %v1096 = vpop.f32.mrb[0].mxu0
        %v1097 = vadd.f32 0.0, %v1096
        %v1098 = vpop.f32.mrb[0].mxu0
        %1099 = vmatprep.mubr.bf16.mxu0 0
        %1100 = vmatmul.mubr.bf16.gmra.mrb[0].mxu0 %v1042
        %v1101 = vpop.f32.mrb[0].mxu0
        %v1102 = vadd.f32 0.0, %v1101
        %v1103 = vpop.f32.mrb[0].mxu0
        %v1104 = vpop.f32.mrb[0].mxu0
        %v1105 = vadd.f32 0.0, %v1104
        %v1106 = vpop.f32.mrb[0].mxu0
        %1107 = vmatprep.mubr.bf16.mxu0 0
        %1108 = vmatmul.mubr.bf16.gmra.mrb[0].mxu0 %v1045
        %v1109 = vpop.f32.mrb[0].mxu0
        %v1110 = vadd.f32 0.0, %v1109
        %v1111 = vpop.f32.mrb[0].mxu0
        %v1112 = vpop.f32.mrb[0].mxu0
        %v1113 = vadd.f32 0.0, %v1112
        %v1114 = vpop.f32.mrb[0].mxu0
        %1115 = vdwg.mxu0
        %v1117 = vsel %vm1034, %v909, 0
        %v1120 = vsel %vm1034, %v910, 0
        %v1123 = vsel %vm1034, %v911, 0
        %v1126 = vsel %vm1034, %v912, 0
        %v1129 = vsel %vm1047, %v913, 0
        %1131 = vmatprep.subr.bf16.mxu0 0
        %1132 = vmatpush1.bf16.msra.mxu0 %v1129
        %1133 = vmatprep.subr.bf16.mxu0 0
        %1134 = vmatpush1.bf16.msra.mxu0 0
        %1135 = vmatprep.subr.bf16.mxu0 0
        %1136 = vmatpush1.bf16.msra.mxu0 0
        %1137 = vmatprep.subr.bf16.mxu0 0
        %1138 = vmatpush1.bf16.msra.mxu0 0
        %1139 = vmatprep.subr.bf16.mxu0 0
        %1140 = vmatpush1.bf16.msra.mxu0 0
        %1141 = vmatprep.subr.bf16.mxu0 0
        %1142 = vmatpush1.bf16.msra.mxu0 0
        %1143 = vmatprep.subr.bf16.mxu0 0
        %1144 = vmatpush1.bf16.msra.mxu0 0
        %1145 = vmatprep.subr.bf16.mxu0 0
        %1146 = vmatpush1.bf16.msra.mxu0 0
        %1147 = vmatprep.subr.bf16.mxu0 0
        %1148 = vmatpush1.bf16.msra.mxu0 0
        %1149 = vmatprep.subr.bf16.mxu0 0
        %1150 = vmatpush1.bf16.msra.mxu0 0
        %1151 = vmatprep.subr.bf16.mxu0 0
        %1152 = vmatpush1.bf16.msra.mxu0 0
        %1153 = vmatprep.subr.bf16.mxu0 0
        %1154 = vmatpush1.bf16.msra.mxu0 0
        %1155 = vmatprep.subr.bf16.mxu0 0
        %1156 = vmatpush1.bf16.msra.mxu0 0
        %1157 = vmatprep.subr.bf16.mxu0 0
        %1158 = vmatpush1.bf16.msra.mxu0 0
        %1159 = vmatprep.subr.bf16.mxu0 0
        %1160 = vmatpush1.bf16.msra.mxu0 0
        %1161 = vmatprep.subr.bf16.mxu0 0
        %1162 = vmatpush1.bf16.msra.mxu0 0
        %1163 = vmatprep.mubr.bf16.mxu0 0
        %1164 = vmatmul.mubr.bf16.gmra.mrb[0].mxu0 %v1117
        %v1165 = vpop.f32.mrb[0].mxu0
        %v1166 = vadd.f32 %v1086, %v1165
        %v1167 = vpop.f32.mrb[0].mxu0
        %v1168 = vpop.f32.mrb[0].mxu0
        %v1169 = vadd.f32 %v1089, %v1168
        %v1170 = vpop.f32.mrb[0].mxu0
        %1171 = vmatprep.mubr.bf16.mxu0 0
        %1172 = vmatmul.mubr.bf16.gmra.mrb[0].mxu0 %v1120
        %v1173 = vpop.f32.mrb[0].mxu0
        %v1174 = vadd.f32 %v1094, %v1173
        %v1175 = vpop.f32.mrb[0].mxu0
        %v1176 = vpop.f32.mrb[0].mxu0
        %v1177 = vadd.f32 %v1097, %v1176
        %v1178 = vpop.f32.mrb[0].mxu0
        %1179 = vmatprep.mubr.bf16.mxu0 0
        %1180 = vmatmul.mubr.bf16.gmra.mrb[0].mxu0 %v1123
        %v1181 = vpop.f32.mrb[0].mxu0
        %v1182 = vadd.f32 %v1102, %v1181
        %v1183 = vpop.f32.mrb[0].mxu0
        %v1184 = vpop.f32.mrb[0].mxu0
        %v1185 = vadd.f32 %v1105, %v1184
        %v1186 = vpop.f32.mrb[0].mxu0
        %1187 = vmatprep.mubr.bf16.mxu0 0
        %1188 = vmatmul.mubr.bf16.gmra.mrb[0].mxu0 %v1126
        %v1189 = vpop.f32.mrb[0].mxu0
        %v1190 = vadd.f32 %v1110, %v1189
        %v1191 = vpop.f32.mrb[0].mxu0
        %v1192 = vpop.f32.mrb[0].mxu0
        %v1193 = vadd.f32 %v1113, %v1192
        %v1194 = vpop.f32.mrb[0].mxu0
        %1195 = vdwg.mxu0
        %s1196 = scalar_lea.vmem [#allocation2], 128
        %v1197 = vld [vmem:[%s1196] sm:$0xff]
        %v1198 = vld [vmem:[%s1196 + $0x8] sm:$0xff]
        %v1199 = vld [vmem:[%s1196 + $0x10] sm:$0xff]
        %v1200 = vld [vmem:[%s1196 + $0x18] sm:$0xff]
        %v1201 = vld [vmem:[%s1196 + $0x20] sm:$0xff]
        %v1202 = vld [vmem:[%s1196 + $0x28] sm:$0xff]
        %v1203 = vld [vmem:[%s1196 + $0x30] sm:$0xff]
        %v1204 = vld [vmem:[%s1196 + $0x38] sm:$0xff]
        %v1213 = vunpack.c.l.b16 %v1197
        %v1214 = vunpack.c.h.b16 %v1197
        %v1215 = vunpack.c.l.b16 %v1198
        %v1216 = vunpack.c.h.b16 %v1198
        %v1217 = vunpack.c.l.b16 %v1199
        %v1218 = vunpack.c.h.b16 %v1199
        %v1219 = vunpack.c.l.b16 %v1200
        %v1220 = vunpack.c.h.b16 %v1200
        %v1221 = vunpack.c.l.b16 %v1201
        %v1222 = vunpack.c.h.b16 %v1201
        %v1223 = vunpack.c.l.b16 %v1202
        %v1224 = vunpack.c.h.b16 %v1202
        %v1225 = vunpack.c.l.b16 %v1203
        %v1226 = vunpack.c.h.b16 %v1203
        %v1227 = vunpack.c.l.b16 %v1204
        %v1228 = vunpack.c.h.b16 %v1204
        %v1229 = vpack.c.b16 %v1215, %v1213
        %v1230 = vpack.c.b16 %v1216, %v1214
        %v1231 = vpack.c.b16 %v1219, %v1217
        %v1232 = vpack.c.b16 %v1220, %v1218
        %v1233 = vpack.c.b16 %v1223, %v1221
        %v1234 = vpack.c.b16 %v1224, %v1222
        %v1235 = vpack.c.b16 %v1227, %v1225
        %v1236 = vpack.c.b16 %v1228, %v1226
        %1245 = vmatprep.subr.bf16.mxu0 0
        %1246 = vmatpush1.bf16.msra.mxu0 %v780
        %1247 = vmatprep.subr.bf16.mxu0 0
        %1248 = vmatpush1.bf16.msra.mxu0 %v781
        %1249 = vmatprep.subr.bf16.mxu0 0
        %1250 = vmatpush1.bf16.msra.mxu0 %v782
        %1251 = vmatprep.subr.bf16.mxu0 0
        %1252 = vmatpush1.bf16.msra.mxu0 %v783
        %1253 = vmatprep.subr.bf16.mxu0 0
        %1254 = vmatpush1.bf16.msra.mxu0 %v784
        %1255 = vmatprep.subr.bf16.mxu0 0
        %1256 = vmatpush1.bf16.msra.mxu0 %v785
        %1257 = vmatprep.subr.bf16.mxu0 0
        %1258 = vmatpush1.bf16.msra.mxu0 %v786
        %1259 = vmatprep.subr.bf16.mxu0 0
        %1260 = vmatpush1.bf16.msra.mxu0 %v787
        %1261 = vmatprep.subr.bf16.mxu0 0
        %1262 = vmatpush1.bf16.msra.mxu0 %v788
        %1263 = vmatprep.subr.bf16.mxu0 0
        %1264 = vmatpush1.bf16.msra.mxu0 %v789
        %1265 = vmatprep.subr.bf16.mxu0 0
        %1266 = vmatpush1.bf16.msra.mxu0 %v790
        %1267 = vmatprep.subr.bf16.mxu0 0
        %1268 = vmatpush1.bf16.msra.mxu0 %v791
        %1269 = vmatprep.subr.bf16.mxu0 0
        %1270 = vmatpush1.bf16.msra.mxu0 %v792
        %1271 = vmatprep.subr.bf16.mxu0 0
        %1272 = vmatpush1.bf16.msra.mxu0 %v793
        %1273 = vmatprep.subr.bf16.mxu0 0
        %1274 = vmatpush1.bf16.msra.mxu0 %v794
        %1275 = vmatprep.subr.bf16.mxu0 0
        %1276 = vmatpush1.bf16.msra.mxu0 %v795
        %1277 = vmatprep.mubr.bf16.mxu0 %v1230
        %1278 = vmatmul.mubr.bf16.gmra.mrb[0].mxu0 %v1229
        %v1279 = vpop.f32.mrb[0].mxu0
        %v1280 = vadd.f32 0.0, %v1279
        %v1281 = vpop.f32.mrb[0].mxu0
        %v1282 = vpop.f32.mrb[0].mxu0
        %v1283 = vadd.f32 0.0, %v1282
        %v1284 = vpop.f32.mrb[0].mxu0
        %1285 = vmatprep.mubr.bf16.mxu0 %v1232
        %1286 = vmatmul.mubr.bf16.gmra.mrb[0].mxu0 %v1231
        %v1287 = vpop.f32.mrb[0].mxu0
        %v1288 = vadd.f32 0.0, %v1287
        %v1289 = vpop.f32.mrb[0].mxu0
        %v1290 = vpop.f32.mrb[0].mxu0
        %v1291 = vadd.f32 0.0, %v1290
        %v1292 = vpop.f32.mrb[0].mxu0
        %1293 = vmatprep.mubr.bf16.mxu0 %v1234
        %1294 = vmatmul.mubr.bf16.gmra.mrb[0].mxu0 %v1233
        %v1295 = vpop.f32.mrb[0].mxu0
        %v1296 = vadd.f32 0.0, %v1295
        %v1297 = vpop.f32.mrb[0].mxu0
        %v1298 = vpop.f32.mrb[0].mxu0
        %v1299 = vadd.f32 0.0, %v1298
        %v1300 = vpop.f32.mrb[0].mxu0
        %1301 = vmatprep.mubr.bf16.mxu0 %v1236
        %1302 = vmatmul.mubr.bf16.gmra.mrb[0].mxu0 %v1235
        %v1303 = vpop.f32.mrb[0].mxu0
        %v1304 = vadd.f32 0.0, %v1303
        %v1305 = vpop.f32.mrb[0].mxu0
        %v1306 = vpop.f32.mrb[0].mxu0
        %v1307 = vadd.f32 0.0, %v1306
        %v1308 = vpop.f32.mrb[0].mxu0
        %1309 = vdwg.mxu0
        %v1310 = vpack.c.bf16 %v1283, %v1280
        %v1311 = vpack.c.bf16 %v1291, %v1288
        %v1312 = vpack.c.bf16 %v1299, %v1296
        %v1313 = vpack.c.bf16 %v1307, %v1304
        %s1314 = scalar_lea.vmem [#allocation5], 4
        %v1315 = vld [vmem:[%s1314] sm:$0x3]
        %v1317 = vsel %vm1034, %v1310, 0
        %v1320 = vsel %vm1034, %v1311, 0
        %v1323 = vsel %vm1034, %v1312, 0
        %v1326 = vsel %vm1034, %v1313, 0
        %v1329 = vsel %vm1047, %v1315, 0
        %1331 = vmatprep.subr.bf16.mxu0 0
        %1332 = vmatpush1.bf16.msra.mxu0 %v1329
        %1333 = vmatprep.subr.bf16.mxu0 0
        %1334 = vmatpush1.bf16.msra.mxu0 0
        %1335 = vmatprep.subr.bf16.mxu0 0
        %1336 = vmatpush1.bf16.msra.mxu0 0
        %1337 = vmatprep.subr.bf16.mxu0 0
        %1338 = vmatpush1.bf16.msra.mxu0 0
        %1339 = vmatprep.subr.bf16.mxu0 0
        %1340 = vmatpush1.bf16.msra.mxu0 0
        %1341 = vmatprep.subr.bf16.mxu0 0
        %1342 = vmatpush1.bf16.msra.mxu0 0
        %1343 = vmatprep.subr.bf16.mxu0 0
        %1344 = vmatpush1.bf16.msra.mxu0 0
        %1345 = vmatprep.subr.bf16.mxu0 0
        %1346 = vmatpush1.bf16.msra.mxu0 0
        %1347 = vmatprep.subr.bf16.mxu0 0
        %1348 = vmatpush1.bf16.msra.mxu0 0
        %1349 = vmatprep.subr.bf16.mxu0 0
        %1350 = vmatpush1.bf16.msra.mxu0 0
        %1351 = vmatprep.subr.bf16.mxu0 0
        %1352 = vmatpush1.bf16.msra.mxu0 0
        %1353 = vmatprep.subr.bf16.mxu0 0
        %1354 = vmatpush1.bf16.msra.mxu0 0
        %1355 = vmatprep.subr.bf16.mxu0 0
        %1356 = vmatpush1.bf16.msra.mxu0 0
        %1357 = vmatprep.subr.bf16.mxu0 0
        %1358 = vmatpush1.bf16.msra.mxu0 0
        %1359 = vmatprep.subr.bf16.mxu0 0
        %1360 = vmatpush1.bf16.msra.mxu0 0
        %1361 = vmatprep.subr.bf16.mxu0 0
        %1362 = vmatpush1.bf16.msra.mxu0 0
        %1363 = vmatprep.mubr.bf16.mxu0 0
        %1364 = vmatmul.mubr.bf16.gmra.mrb[0].mxu0 %v1317
        %v1365 = vpop.f32.mrb[0].mxu0
        %v1366 = vadd.f32 0.0, %v1365
        %v1367 = vpop.f32.mrb[0].mxu0
        %v1368 = vpop.f32.mrb[0].mxu0
        %v1369 = vadd.f32 0.0, %v1368
        %v1370 = vpop.f32.mrb[0].mxu0
        %1371 = vmatprep.mubr.bf16.mxu0 0
        %1372 = vmatmul.mubr.bf16.gmra.mrb[0].mxu0 %v1320
        %v1373 = vpop.f32.mrb[0].mxu0
        %v1374 = vadd.f32 0.0, %v1373
        %v1375 = vpop.f32.mrb[0].mxu0
        %v1376 = vpop.f32.mrb[0].mxu0
        %v1377 = vadd.f32 0.0, %v1376
        %v1378 = vpop.f32.mrb[0].mxu0
        %1379 = vmatprep.mubr.bf16.mxu0 0
        %1380 = vmatmul.mubr.bf16.gmra.mrb[0].mxu0 %v1323
        %v1381 = vpop.f32.mrb[0].mxu0
        %v1382 = vadd.f32 0.0, %v1381
        %v1383 = vpop.f32.mrb[0].mxu0
        %v1384 = vpop.f32.mrb[0].mxu0
        %v1385 = vadd.f32 0.0, %v1384
        %v1386 = vpop.f32.mrb[0].mxu0
        %1387 = vmatprep.mubr.bf16.mxu0 0
        %1388 = vmatmul.mubr.bf16.gmra.mrb[0].mxu0 %v1326
        %v1389 = vpop.f32.mrb[0].mxu0
        %v1390 = vadd.f32 0.0, %v1389
        %v1391 = vpop.f32.mrb[0].mxu0
        %v1392 = vpop.f32.mrb[0].mxu0
        %v1393 = vadd.f32 0.0, %v1392
        %v1394 = vpop.f32.mrb[0].mxu0
        %1395 = vdwg.mxu0
        %v1396 = vadd.f32 %v1166, %v1366
        %v1397 = vadd.f32 %v1169, %v1369
        %v1398 = vadd.f32 %v1174, %v1374
        %v1399 = vadd.f32 %v1177, %v1377
        %v1400 = vadd.f32 %v1182, %v1382
        %v1401 = vadd.f32 %v1185, %v1385
        %v1402 = vadd.f32 %v1190, %v1390
        %v1403 = vadd.f32 %v1193, %v1393
        %s1404 = scalar_lea.vmem [#allocation2], 192
        %v1405 = vld [vmem:[%s1404] sm:$0xff]
        %v1406 = vld [vmem:[%s1404 + $0x8] sm:$0xff]
        %v1407 = vld [vmem:[%s1404 + $0x10] sm:$0xff]
        %v1408 = vld [vmem:[%s1404 + $0x18] sm:$0xff]
        %v1409 = vld [vmem:[%s1404 + $0x20] sm:$0xff]
        %v1410 = vld [vmem:[%s1404 + $0x28] sm:$0xff]
        %v1411 = vld [vmem:[%s1404 + $0x30] sm:$0xff]
        %v1412 = vld [vmem:[%s1404 + $0x38] sm:$0xff]
        %v1421 = vunpack.c.l.b16 %v1405
        %v1422 = vunpack.c.h.b16 %v1405
        %v1423 = vunpack.c.l.b16 %v1406
        %v1424 = vunpack.c.h.b16 %v1406
        %v1425 = vunpack.c.l.b16 %v1407
        %v1426 = vunpack.c.h.b16 %v1407
        %v1427 = vunpack.c.l.b16 %v1408
        %v1428 = vunpack.c.h.b16 %v1408
        %v1429 = vunpack.c.l.b16 %v1409
        %v1430 = vunpack.c.h.b16 %v1409
        %v1431 = vunpack.c.l.b16 %v1410
        %v1432 = vunpack.c.h.b16 %v1410
        %v1433 = vunpack.c.l.b16 %v1411
        %v1434 = vunpack.c.h.b16 %v1411
        %v1435 = vunpack.c.l.b16 %v1412
        %v1436 = vunpack.c.h.b16 %v1412
        %v1437 = vpack.c.b16 %v1423, %v1421
        %v1438 = vpack.c.b16 %v1424, %v1422
        %v1439 = vpack.c.b16 %v1427, %v1425
        %v1440 = vpack.c.b16 %v1428, %v1426
        %v1441 = vpack.c.b16 %v1431, %v1429
        %v1442 = vpack.c.b16 %v1432, %v1430
        %v1443 = vpack.c.b16 %v1435, %v1433
        %v1444 = vpack.c.b16 %v1436, %v1434
        %1453 = vmatprep.subr.bf16.mxu0 0
        %1454 = vmatpush1.bf16.msra.mxu0 %v780
        %1455 = vmatprep.subr.bf16.mxu0 0
        %1456 = vmatpush1.bf16.msra.mxu0 %v781
        %1457 = vmatprep.subr.bf16.mxu0 0
        %1458 = vmatpush1.bf16.msra.mxu0 %v782
        %1459 = vmatprep.subr.bf16.mxu0 0
        %1460 = vmatpush1.bf16.msra.mxu0 %v783
        %1461 = vmatprep.subr.bf16.mxu0 0
        %1462 = vmatpush1.bf16.msra.mxu0 %v784
        %1463 = vmatprep.subr.bf16.mxu0 0
        %1464 = vmatpush1.bf16.msra.mxu0 %v785
        %1465 = vmatprep.subr.bf16.mxu0 0
        %1466 = vmatpush1.bf16.msra.mxu0 %v786
        %1467 = vmatprep.subr.bf16.mxu0 0
        %1468 = vmatpush1.bf16.msra.mxu0 %v787
        %1469 = vmatprep.subr.bf16.mxu0 0
        %1470 = vmatpush1.bf16.msra.mxu0 %v788
        %1471 = vmatprep.subr.bf16.mxu0 0
        %1472 = vmatpush1.bf16.msra.mxu0 %v789
        %1473 = vmatprep.subr.bf16.mxu0 0
        %1474 = vmatpush1.bf16.msra.mxu0 %v790
        %1475 = vmatprep.subr.bf16.mxu0 0
        %1476 = vmatpush1.bf16.msra.mxu0 %v791
        %1477 = vmatprep.subr.bf16.mxu0 0
        %1478 = vmatpush1.bf16.msra.mxu0 %v792
        %1479 = vmatprep.subr.bf16.mxu0 0
        %1480 = vmatpush1.bf16.msra.mxu0 %v793
        %1481 = vmatprep.subr.bf16.mxu0 0
        %1482 = vmatpush1.bf16.msra.mxu0 %v794
        %1483 = vmatprep.subr.bf16.mxu0 0
        %1484 = vmatpush1.bf16.msra.mxu0 %v795
        %1485 = vmatprep.mubr.bf16.mxu0 %v1438
        %1486 = vmatmul.mubr.bf16.gmra.mrb[0].mxu0 %v1437
        %v1487 = vpop.f32.mrb[0].mxu0
        %v1488 = vadd.f32 0.0, %v1487
        %v1489 = vpop.f32.mrb[0].mxu0
        %v1490 = vpop.f32.mrb[0].mxu0
        %v1491 = vadd.f32 0.0, %v1490
        %v1492 = vpop.f32.mrb[0].mxu0
        %1493 = vmatprep.mubr.bf16.mxu0 %v1440
        %1494 = vmatmul.mubr.bf16.gmra.mrb[0].mxu0 %v1439
        %v1495 = vpop.f32.mrb[0].mxu0
        %v1496 = vadd.f32 0.0, %v1495
        %v1497 = vpop.f32.mrb[0].mxu0
        %v1498 = vpop.f32.mrb[0].mxu0
        %v1499 = vadd.f32 0.0, %v1498
        %v1500 = vpop.f32.mrb[0].mxu0
        %1501 = vmatprep.mubr.bf16.mxu0 %v1442
        %1502 = vmatmul.mubr.bf16.gmra.mrb[0].mxu0 %v1441
        %v1503 = vpop.f32.mrb[0].mxu0
        %v1504 = vadd.f32 0.0, %v1503
        %v1505 = vpop.f32.mrb[0].mxu0
        %v1506 = vpop.f32.mrb[0].mxu0
        %v1507 = vadd.f32 0.0, %v1506
        %v1508 = vpop.f32.mrb[0].mxu0
        %1509 = vmatprep.mubr.bf16.mxu0 %v1444
        %1510 = vmatmul.mubr.bf16.gmra.mrb[0].mxu0 %v1443
        %v1511 = vpop.f32.mrb[0].mxu0
        %v1512 = vadd.f32 0.0, %v1511
        %v1513 = vpop.f32.mrb[0].mxu0
        %v1514 = vpop.f32.mrb[0].mxu0
        %v1515 = vadd.f32 0.0, %v1514
        %v1516 = vpop.f32.mrb[0].mxu0
        %1517 = vdwg.mxu0
        %v1518 = vpack.c.bf16 %v1491, %v1488
        %v1519 = vpack.c.bf16 %v1499, %v1496
        %v1520 = vpack.c.bf16 %v1507, %v1504
        %v1521 = vpack.c.bf16 %v1515, %v1512
        %s1522 = scalar_lea.vmem [#allocation5], 6
        %v1523 = vld [vmem:[%s1522] sm:$0x3]
        %v1525 = vsel %vm1034, %v1518, 0
        %v1528 = vsel %vm1034, %v1519, 0
        %v1531 = vsel %vm1034, %v1520, 0
        %v1534 = vsel %vm1034, %v1521, 0
        %v1537 = vsel %vm1047, %v1523, 0
        %1539 = vmatprep.subr.bf16.mxu0 0
        %1540 = vmatpush1.bf16.msra.mxu0 %v1537
        %1541 = vmatprep.subr.bf16.mxu0 0
        %1542 = vmatpush1.bf16.msra.mxu0 0
        %1543 = vmatprep.subr.bf16.mxu0 0
        %1544 = vmatpush1.bf16.msra.mxu0 0
        %1545 = vmatprep.subr.bf16.mxu0 0
        %1546 = vmatpush1.bf16.msra.mxu0 0
        %1547 = vmatprep.subr.bf16.mxu0 0
        %1548 = vmatpush1.bf16.msra.mxu0 0
        %1549 = vmatprep.subr.bf16.mxu0 0
        %1550 = vmatpush1.bf16.msra.mxu0 0
        %1551 = vmatprep.subr.bf16.mxu0 0
        %1552 = vmatpush1.bf16.msra.mxu0 0
        %1553 = vmatprep.subr.bf16.mxu0 0
        %1554 = vmatpush1.bf16.msra.mxu0 0
        %1555 = vmatprep.subr.bf16.mxu0 0
        %1556 = vmatpush1.bf16.msra.mxu0 0
        %1557 = vmatprep.subr.bf16.mxu0 0
        %1558 = vmatpush1.bf16.msra.mxu0 0
        %1559 = vmatprep.subr.bf16.mxu0 0
        %1560 = vmatpush1.bf16.msra.mxu0 0
        %1561 = vmatprep.subr.bf16.mxu0 0
        %1562 = vmatpush1.bf16.msra.mxu0 0
        %1563 = vmatprep.subr.bf16.mxu0 0
        %1564 = vmatpush1.bf16.msra.mxu0 0
        %1565 = vmatprep.subr.bf16.mxu0 0
        %1566 = vmatpush1.bf16.msra.mxu0 0
        %1567 = vmatprep.subr.bf16.mxu0 0
        %1568 = vmatpush1.bf16.msra.mxu0 0
        %1569 = vmatprep.subr.bf16.mxu0 0
        %1570 = vmatpush1.bf16.msra.mxu0 0
        %1571 = vmatprep.mubr.bf16.mxu0 0
        %1572 = vmatmul.mubr.bf16.gmra.mrb[0].mxu0 %v1525
        %v1573 = vpop.f32.mrb[0].mxu0
        %v1574 = vadd.f32 0.0, %v1573
        %v1575 = vpop.f32.mrb[0].mxu0
        %v1576 = vpop.f32.mrb[0].mxu0
        %v1577 = vadd.f32 0.0, %v1576
        %v1578 = vpop.f32.mrb[0].mxu0
        %1579 = vmatprep.mubr.bf16.mxu0 0
        %1580 = vmatmul.mubr.bf16.gmra.mrb[0].mxu0 %v1528
        %v1581 = vpop.f32.mrb[0].mxu0
        %v1582 = vadd.f32 0.0, %v1581
        %v1583 = vpop.f32.mrb[0].mxu0
        %v1584 = vpop.f32.mrb[0].mxu0
        %v1585 = vadd.f32 0.0, %v1584
        %v1586 = vpop.f32.mrb[0].mxu0
        %1587 = vmatprep.mubr.bf16.mxu0 0
        %1588 = vmatmul.mubr.bf16.gmra.mrb[0].mxu0 %v1531
        %v1589 = vpop.f32.mrb[0].mxu0
        %v1590 = vadd.f32 0.0, %v1589
        %v1591 = vpop.f32.mrb[0].mxu0
        %v1592 = vpop.f32.mrb[0].mxu0
        %v1593 = vadd.f32 0.0, %v1592
        %v1594 = vpop.f32.mrb[0].mxu0
        %1595 = vmatprep.mubr.bf16.mxu0 0
        %1596 = vmatmul.mubr.bf16.gmra.mrb[0].mxu0 %v1534
        %v1597 = vpop.f32.mrb[0].mxu0
        %v1598 = vadd.f32 0.0, %v1597
        %v1599 = vpop.f32.mrb[0].mxu0
        %v1600 = vpop.f32.mrb[0].mxu0
        %v1601 = vadd.f32 0.0, %v1600
        %v1602 = vpop.f32.mrb[0].mxu0
        %1603 = vdwg.mxu0
        %v1604 = vadd.f32 %v1396, %v1574
        %v1605 = vadd.f32 %v1397, %v1577
        %v1606 = vadd.f32 %v1398, %v1582
        %v1607 = vadd.f32 %v1399, %v1585
        %v1608 = vadd.f32 %v1400, %v1590
        %v1609 = vadd.f32 %v1401, %v1593
        %v1610 = vadd.f32 %v1402, %v1598
        %v1611 = vadd.f32 %v1403, %v1601
        %s1612 = scalar_lea.vmem [#allocation2], 256
        %v1613 = vld [vmem:[%s1612] sm:$0xff]
        %v1614 = vld [vmem:[%s1612 + $0x8] sm:$0xff]
        %v1615 = vld [vmem:[%s1612 + $0x10] sm:$0xff]
        %v1616 = vld [vmem:[%s1612 + $0x18] sm:$0xff]
        %v1617 = vld [vmem:[%s1612 + $0x20] sm:$0xff]
        %v1618 = vld [vmem:[%s1612 + $0x28] sm:$0xff]
        %v1619 = vld [vmem:[%s1612 + $0x30] sm:$0xff]
        %v1620 = vld [vmem:[%s1612 + $0x38] sm:$0xff]
        %v1629 = vunpack.c.l.b16 %v1613
        %v1630 = vunpack.c.h.b16 %v1613
        %v1631 = vunpack.c.l.b16 %v1614
        %v1632 = vunpack.c.h.b16 %v1614
        %v1633 = vunpack.c.l.b16 %v1615
        %v1634 = vunpack.c.h.b16 %v1615
        %v1635 = vunpack.c.l.b16 %v1616
        %v1636 = vunpack.c.h.b16 %v1616
        %v1637 = vunpack.c.l.b16 %v1617
        %v1638 = vunpack.c.h.b16 %v1617
        %v1639 = vunpack.c.l.b16 %v1618
        %v1640 = vunpack.c.h.b16 %v1618
        %v1641 = vunpack.c.l.b16 %v1619
        %v1642 = vunpack.c.h.b16 %v1619
        %v1643 = vunpack.c.l.b16 %v1620
        %v1644 = vunpack.c.h.b16 %v1620
        %v1645 = vpack.c.b16 %v1631, %v1629
        %v1646 = vpack.c.b16 %v1632, %v1630
        %v1647 = vpack.c.b16 %v1635, %v1633
        %v1648 = vpack.c.b16 %v1636, %v1634
        %v1649 = vpack.c.b16 %v1639, %v1637
        %v1650 = vpack.c.b16 %v1640, %v1638
        %v1651 = vpack.c.b16 %v1643, %v1641
        %v1652 = vpack.c.b16 %v1644, %v1642
        %1661 = vmatprep.subr.bf16.mxu0 0
        %1662 = vmatpush1.bf16.msra.mxu0 %v780
        %1663 = vmatprep.subr.bf16.mxu0 0
        %1664 = vmatpush1.bf16.msra.mxu0 %v781
        %1665 = vmatprep.subr.bf16.mxu0 0
        %1666 = vmatpush1.bf16.msra.mxu0 %v782
        %1667 = vmatprep.subr.bf16.mxu0 0
        %1668 = vmatpush1.bf16.msra.mxu0 %v783
        %1669 = vmatprep.subr.bf16.mxu0 0
        %1670 = vmatpush1.bf16.msra.mxu0 %v784
        %1671 = vmatprep.subr.bf16.mxu0 0
        %1672 = vmatpush1.bf16.msra.mxu0 %v785
        %1673 = vmatprep.subr.bf16.mxu0 0
        %1674 = vmatpush1.bf16.msra.mxu0 %v786
        %1675 = vmatprep.subr.bf16.mxu0 0
        %1676 = vmatpush1.bf16.msra.mxu0 %v787
        %1677 = vmatprep.subr.bf16.mxu0 0
        %1678 = vmatpush1.bf16.msra.mxu0 %v788
        %1679 = vmatprep.subr.bf16.mxu0 0
        %1680 = vmatpush1.bf16.msra.mxu0 %v789
        %1681 = vmatprep.subr.bf16.mxu0 0
        %1682 = vmatpush1.bf16.msra.mxu0 %v790
        %1683 = vmatprep.subr.bf16.mxu0 0
        %1684 = vmatpush1.bf16.msra.mxu0 %v791
        %1685 = vmatprep.subr.bf16.mxu0 0
        %1686 = vmatpush1.bf16.msra.mxu0 %v792
        %1687 = vmatprep.subr.bf16.mxu0 0
        %1688 = vmatpush1.bf16.msra.mxu0 %v793
        %1689 = vmatprep.subr.bf16.mxu0 0
        %1690 = vmatpush1.bf16.msra.mxu0 %v794
        %1691 = vmatprep.subr.bf16.mxu0 0
        %1692 = vmatpush1.bf16.msra.mxu0 %v795
        %1693 = vmatprep.mubr.bf16.mxu0 %v1646
        %1694 = vmatmul.mubr.bf16.gmra.mrb[0].mxu0 %v1645
        %v1695 = vpop.f32.mrb[0].mxu0
        %v1696 = vadd.f32 0.0, %v1695
        %v1697 = vpop.f32.mrb[0].mxu0
        %v1698 = vpop.f32.mrb[0].mxu0
        %v1699 = vadd.f32 0.0, %v1698
        %v1700 = vpop.f32.mrb[0].mxu0
        %1701 = vmatprep.mubr.bf16.mxu0 %v1648
        %1702 = vmatmul.mubr.bf16.gmra.mrb[0].mxu0 %v1647
        %v1703 = vpop.f32.mrb[0].mxu0
        %v1704 = vadd.f32 0.0, %v1703
        %v1705 = vpop.f32.mrb[0].mxu0
        %v1706 = vpop.f32.mrb[0].mxu0
        %v1707 = vadd.f32 0.0, %v1706
        %v1708 = vpop.f32.mrb[0].mxu0
        %1709 = vmatprep.mubr.bf16.mxu0 %v1650
        %1710 = vmatmul.mubr.bf16.gmra.mrb[0].mxu0 %v1649
        %v1711 = vpop.f32.mrb[0].mxu0
        %v1712 = vadd.f32 0.0, %v1711
        %v1713 = vpop.f32.mrb[0].mxu0
        %v1714 = vpop.f32.mrb[0].mxu0
        %v1715 = vadd.f32 0.0, %v1714
        %v1716 = vpop.f32.mrb[0].mxu0
        %1717 = vmatprep.mubr.bf16.mxu0 %v1652
        %1718 = vmatmul.mubr.bf16.gmra.mrb[0].mxu0 %v1651
        %v1719 = vpop.f32.mrb[0].mxu0
        %v1720 = vadd.f32 0.0, %v1719
        %v1721 = vpop.f32.mrb[0].mxu0
        %v1722 = vpop.f32.mrb[0].mxu0
        %v1723 = vadd.f32 0.0, %v1722
        %v1724 = vpop.f32.mrb[0].mxu0
        %1725 = vdwg.mxu0
        %v1726 = vpack.c.bf16 %v1699, %v1696
        %v1727 = vpack.c.bf16 %v1707, %v1704
        %v1728 = vpack.c.bf16 %v1715, %v1712
        %v1729 = vpack.c.bf16 %v1723, %v1720
        %s1730 = scalar_lea.vmem [#allocation5], 8
        %v1731 = vld [vmem:[%s1730] sm:$0x3]
        %v1733 = vsel %vm1034, %v1726, 0
        %v1736 = vsel %vm1034, %v1727, 0
        %v1739 = vsel %vm1034, %v1728, 0
        %v1742 = vsel %vm1034, %v1729, 0
        %v1745 = vsel %vm1047, %v1731, 0
        %1747 = vmatprep.subr.bf16.mxu0 0
        %1748 = vmatpush1.bf16.msra.mxu0 %v1745
        %1749 = vmatprep.subr.bf16.mxu0 0
        %1750 = vmatpush1.bf16.msra.mxu0 0
        %1751 = vmatprep.subr.bf16.mxu0 0
        %1752 = vmatpush1.bf16.msra.mxu0 0
        %1753 = vmatprep.subr.bf16.mxu0 0
        %1754 = vmatpush1.bf16.msra.mxu0 0
        %1755 = vmatprep.subr.bf16.mxu0 0
        %1756 = vmatpush1.bf16.msra.mxu0 0
        %1757 = vmatprep.subr.bf16.mxu0 0
        %1758 = vmatpush1.bf16.msra.mxu0 0
        %1759 = vmatprep.subr.bf16.mxu0 0
        %1760 = vmatpush1.bf16.msra.mxu0 0
        %1761 = vmatprep.subr.bf16.mxu0 0
        %1762 = vmatpush1.bf16.msra.mxu0 0
        %1763 = vmatprep.subr.bf16.mxu0 0
        %1764 = vmatpush1.bf16.msra.mxu0 0
        %1765 = vmatprep.subr.bf16.mxu0 0
        %1766 = vmatpush1.bf16.msra.mxu0 0
        %1767 = vmatprep.subr.bf16.mxu0 0
        %1768 = vmatpush1.bf16.msra.mxu0 0
        %1769 = vmatprep.subr.bf16.mxu0 0
        %1770 = vmatpush1.bf16.msra.mxu0 0
        %1771 = vmatprep.subr.bf16.mxu0 0
        %1772 = vmatpush1.bf16.msra.mxu0 0
        %1773 = vmatprep.subr.bf16.mxu0 0
        %1774 = vmatpush1.bf16.msra.mxu0 0
        %1775 = vmatprep.subr.bf16.mxu0 0
        %1776 = vmatpush1.bf16.msra.mxu0 0
        %1777 = vmatprep.subr.bf16.mxu0 0
        %1778 = vmatpush1.bf16.msra.mxu0 0
        %1779 = vmatprep.mubr.bf16.mxu0 0
        %1780 = vmatmul.mubr.bf16.gmra.mrb[0].mxu0 %v1733
        %v1781 = vpop.f32.mrb[0].mxu0
        %v1782 = vadd.f32 0.0, %v1781
        %v1783 = vpop.f32.mrb[0].mxu0
        %v1784 = vpop.f32.mrb[0].mxu0
        %v1785 = vadd.f32 0.0, %v1784
        %v1786 = vpop.f32.mrb[0].mxu0
        %1787 = vmatprep.mubr.bf16.mxu0 0
        %1788 = vmatmul.mubr.bf16.gmra.mrb[0].mxu0 %v1736
        %v1789 = vpop.f32.mrb[0].mxu0
        %v1790 = vadd.f32 0.0, %v1789
        %v1791 = vpop.f32.mrb[0].mxu0
        %v1792 = vpop.f32.mrb[0].mxu0
        %v1793 = vadd.f32 0.0, %v1792
        %v1794 = vpop.f32.mrb[0].mxu0
        %1795 = vmatprep.mubr.bf16.mxu0 0
        %1796 = vmatmul.mubr.bf16.gmra.mrb[0].mxu0 %v1739
        %v1797 = vpop.f32.mrb[0].mxu0
        %v1798 = vadd.f32 0.0, %v1797
        %v1799 = vpop.f32.mrb[0].mxu0
        %v1800 = vpop.f32.mrb[0].mxu0
        %v1801 = vadd.f32 0.0, %v1800
        %v1802 = vpop.f32.mrb[0].mxu0
        %1803 = vmatprep.mubr.bf16.mxu0 0
        %1804 = vmatmul.mubr.bf16.gmra.mrb[0].mxu0 %v1742
        %v1805 = vpop.f32.mrb[0].mxu0
        %v1806 = vadd.f32 0.0, %v1805
        %v1807 = vpop.f32.mrb[0].mxu0
        %v1808 = vpop.f32.mrb[0].mxu0
        %v1809 = vadd.f32 0.0, %v1808
        %v1810 = vpop.f32.mrb[0].mxu0
        %1811 = vdwg.mxu0
        %v1812 = vadd.f32 %v1604, %v1782
        %v1813 = vadd.f32 %v1605, %v1785
        %v1814 = vadd.f32 %v1606, %v1790
        %v1815 = vadd.f32 %v1607, %v1793
        %v1816 = vadd.f32 %v1608, %v1798
        %v1817 = vadd.f32 %v1609, %v1801
        %v1818 = vadd.f32 %v1610, %v1806
        %v1819 = vadd.f32 %v1611, %v1809
        %s1820 = scalar_lea.vmem [#allocation2], 320
        %v1821 = vld [vmem:[%s1820] sm:$0xff]
        %v1822 = vld [vmem:[%s1820 + $0x8] sm:$0xff]
        %v1823 = vld [vmem:[%s1820 + $0x10] sm:$0xff]
        %v1824 = vld [vmem:[%s1820 + $0x18] sm:$0xff]
        %v1825 = vld [vmem:[%s1820 + $0x20] sm:$0xff]
        %v1826 = vld [vmem:[%s1820 + $0x28] sm:$0xff]
        %v1827 = vld [vmem:[%s1820 + $0x30] sm:$0xff]
        %v1828 = vld [vmem:[%s1820 + $0x38] sm:$0xff]
        %v1837 = vunpack.c.l.b16 %v1821
        %v1838 = vunpack.c.h.b16 %v1821
        %v1839 = vunpack.c.l.b16 %v1822
        %v1840 = vunpack.c.h.b16 %v1822
        %v1841 = vunpack.c.l.b16 %v1823
        %v1842 = vunpack.c.h.b16 %v1823
        %v1843 = vunpack.c.l.b16 %v1824
        %v1844 = vunpack.c.h.b16 %v1824
        %v1845 = vunpack.c.l.b16 %v1825
        %v1846 = vunpack.c.h.b16 %v1825
        %v1847 = vunpack.c.l.b16 %v1826
        %v1848 = vunpack.c.h.b16 %v1826
        %v1849 = vunpack.c.l.b16 %v1827
        %v1850 = vunpack.c.h.b16 %v1827
        %v1851 = vunpack.c.l.b16 %v1828
        %v1852 = vunpack.c.h.b16 %v1828
        %v1853 = vpack.c.b16 %v1839, %v1837
        %v1854 = vpack.c.b16 %v1840, %v1838
        %v1855 = vpack.c.b16 %v1843, %v1841
        %v1856 = vpack.c.b16 %v1844, %v1842
        %v1857 = vpack.c.b16 %v1847, %v1845
        %v1858 = vpack.c.b16 %v1848, %v1846
        %v1859 = vpack.c.b16 %v1851, %v1849
        %v1860 = vpack.c.b16 %v1852, %v1850
        %1869 = vmatprep.subr.bf16.mxu0 0
        %1870 = vmatpush1.bf16.msra.mxu0 %v780
        %1871 = vmatprep.subr.bf16.mxu0 0
        %1872 = vmatpush1.bf16.msra.mxu0 %v781
        %1873 = vmatprep.subr.bf16.mxu0 0
        %1874 = vmatpush1.bf16.msra.mxu0 %v782
        %1875 = vmatprep.subr.bf16.mxu0 0
        %1876 = vmatpush1.bf16.msra.mxu0 %v783
        %1877 = vmatprep.subr.bf16.mxu0 0
        %1878 = vmatpush1.bf16.msra.mxu0 %v784
        %1879 = vmatprep.subr.bf16.mxu0 0
        %1880 = vmatpush1.bf16.msra.mxu0 %v785
        %1881 = vmatprep.subr.bf16.mxu0 0
        %1882 = vmatpush1.bf16.msra.mxu0 %v786
        %1883 = vmatprep.subr.bf16.mxu0 0
        %1884 = vmatpush1.bf16.msra.mxu0 %v787
        %1885 = vmatprep.subr.bf16.mxu0 0
        %1886 = vmatpush1.bf16.msra.mxu0 %v788
        %1887 = vmatprep.subr.bf16.mxu0 0
        %1888 = vmatpush1.bf16.msra.mxu0 %v789
        %1889 = vmatprep.subr.bf16.mxu0 0
        %1890 = vmatpush1.bf16.msra.mxu0 %v790
        %1891 = vmatprep.subr.bf16.mxu0 0
        %1892 = vmatpush1.bf16.msra.mxu0 %v791
        %1893 = vmatprep.subr.bf16.mxu0 0
        %1894 = vmatpush1.bf16.msra.mxu0 %v792
        %1895 = vmatprep.subr.bf16.mxu0 0
        %1896 = vmatpush1.bf16.msra.mxu0 %v793
        %1897 = vmatprep.subr.bf16.mxu0 0
        %1898 = vmatpush1.bf16.msra.mxu0 %v794
        %1899 = vmatprep.subr.bf16.mxu0 0
        %1900 = vmatpush1.bf16.msra.mxu0 %v795
        %1901 = vmatprep.mubr.bf16.mxu0 %v1854
        %1902 = vmatmul.mubr.bf16.gmra.mrb[0].mxu0 %v1853
        %v1903 = vpop.f32.mrb[0].mxu0
        %v1904 = vadd.f32 0.0, %v1903
        %v1905 = vpop.f32.mrb[0].mxu0
        %v1906 = vpop.f32.mrb[0].mxu0
        %v1907 = vadd.f32 0.0, %v1906
        %v1908 = vpop.f32.mrb[0].mxu0
        %1909 = vmatprep.mubr.bf16.mxu0 %v1856
        %1910 = vmatmul.mubr.bf16.gmra.mrb[0].mxu0 %v1855
        %v1911 = vpop.f32.mrb[0].mxu0
        %v1912 = vadd.f32 0.0, %v1911
        %v1913 = vpop.f32.mrb[0].mxu0
        %v1914 = vpop.f32.mrb[0].mxu0
        %v1915 = vadd.f32 0.0, %v1914
        %v1916 = vpop.f32.mrb[0].mxu0
        %1917 = vmatprep.mubr.bf16.mxu0 %v1858
        %1918 = vmatmul.mubr.bf16.gmra.mrb[0].mxu0 %v1857
        %v1919 = vpop.f32.mrb[0].mxu0
        %v1920 = vadd.f32 0.0, %v1919
        %v1921 = vpop.f32.mrb[0].mxu0
        %v1922 = vpop.f32.mrb[0].mxu0
        %v1923 = vadd.f32 0.0, %v1922
        %v1924 = vpop.f32.mrb[0].mxu0
        %1925 = vmatprep.mubr.bf16.mxu0 %v1860
        %1926 = vmatmul.mubr.bf16.gmra.mrb[0].mxu0 %v1859
        %v1927 = vpop.f32.mrb[0].mxu0
        %v1928 = vadd.f32 0.0, %v1927
        %v1929 = vpop.f32.mrb[0].mxu0
        %v1930 = vpop.f32.mrb[0].mxu0
        %v1931 = vadd.f32 0.0, %v1930
        %v1932 = vpop.f32.mrb[0].mxu0
        %1933 = vdwg.mxu0
        %v1934 = vpack.c.bf16 %v1907, %v1904
        %v1935 = vpack.c.bf16 %v1915, %v1912
        %v1936 = vpack.c.bf16 %v1923, %v1920
        %v1937 = vpack.c.bf16 %v1931, %v1928
        %s1938 = scalar_lea.vmem [#allocation5], 10
        %v1939 = vld [vmem:[%s1938] sm:$0x3]
        %v1941 = vsel %vm1034, %v1934, 0
        %v1944 = vsel %vm1034, %v1935, 0
        %v1947 = vsel %vm1034, %v1936, 0
        %v1950 = vsel %vm1034, %v1937, 0
        %v1953 = vsel %vm1047, %v1939, 0
        %1955 = vmatprep.subr.bf16.mxu0 0
        %1956 = vmatpush1.bf16.msra.mxu0 %v1953
        %1957 = vmatprep.subr.bf16.mxu0 0
        %1958 = vmatpush1.bf16.msra.mxu0 0
        %1959 = vmatprep.subr.bf16.mxu0 0
        %1960 = vmatpush1.bf16.msra.mxu0 0
        %1961 = vmatprep.subr.bf16.mxu0 0
        %1962 = vmatpush1.bf16.msra.mxu0 0
        %1963 = vmatprep.subr.bf16.mxu0 0
        %1964 = vmatpush1.bf16.msra.mxu0 0
        %1965 = vmatprep.subr.bf16.mxu0 0
        %1966 = vmatpush1.bf16.msra.mxu0 0
        %1967 = vmatprep.subr.bf16.mxu0 0
        %1968 = vmatpush1.bf16.msra.mxu0 0
        %1969 = vmatprep.subr.bf16.mxu0 0
        %1970 = vmatpush1.bf16.msra.mxu0 0
        %1971 = vmatprep.subr.bf16.mxu0 0
        %1972 = vmatpush1.bf16.msra.mxu0 0
        %1973 = vmatprep.subr.bf16.mxu0 0
        %1974 = vmatpush1.bf16.msra.mxu0 0
        %1975 = vmatprep.subr.bf16.mxu0 0
        %1976 = vmatpush1.bf16.msra.mxu0 0
        %1977 = vmatprep.subr.bf16.mxu0 0
        %1978 = vmatpush1.bf16.msra.mxu0 0
        %1979 = vmatprep.subr.bf16.mxu0 0
        %1980 = vmatpush1.bf16.msra.mxu0 0
        %1981 = vmatprep.subr.bf16.mxu0 0
        %1982 = vmatpush1.bf16.msra.mxu0 0
        %1983 = vmatprep.subr.bf16.mxu0 0
        %1984 = vmatpush1.bf16.msra.mxu0 0
        %1985 = vmatprep.subr.bf16.mxu0 0
        %1986 = vmatpush1.bf16.msra.mxu0 0
        %1987 = vmatprep.mubr.bf16.mxu0 0
        %1988 = vmatmul.mubr.bf16.gmra.mrb[0].mxu0 %v1941
        %v1989 = vpop.f32.mrb[0].mxu0
        %v1990 = vadd.f32 0.0, %v1989
        %v1991 = vpop.f32.mrb[0].mxu0
        %v1992 = vpop.f32.mrb[0].mxu0
        %v1993 = vadd.f32 0.0, %v1992
        %v1994 = vpop.f32.mrb[0].mxu0
        %1995 = vmatprep.mubr.bf16.mxu0 0
        %1996 = vmatmul.mubr.bf16.gmra.mrb[0].mxu0 %v1944
        %v1997 = vpop.f32.mrb[0].mxu0
        %v1998 = vadd.f32 0.0, %v1997
        %v1999 = vpop.f32.mrb[0].mxu0
        %v2000 = vpop.f32.mrb[0].mxu0
        %v2001 = vadd.f32 0.0, %v2000
        %v2002 = vpop.f32.mrb[0].mxu0
        %2003 = vmatprep.mubr.bf16.mxu0 0
        %2004 = vmatmul.mubr.bf16.gmra.mrb[0].mxu0 %v1947
        %v2005 = vpop.f32.mrb[0].mxu0
        %v2006 = vadd.f32 0.0, %v2005
        %v2007 = vpop.f32.mrb[0].mxu0
        %v2008 = vpop.f32.mrb[0].mxu0
        %v2009 = vadd.f32 0.0, %v2008
        %v2010 = vpop.f32.mrb[0].mxu0
        %2011 = vmatprep.mubr.bf16.mxu0 0
        %2012 = vmatmul.mubr.bf16.gmra.mrb[0].mxu0 %v1950
        %v2013 = vpop.f32.mrb[0].mxu0
        %v2014 = vadd.f32 0.0, %v2013
        %v2015 = vpop.f32.mrb[0].mxu0
        %v2016 = vpop.f32.mrb[0].mxu0
        %v2017 = vadd.f32 0.0, %v2016
        %v2018 = vpop.f32.mrb[0].mxu0
        %2019 = vdwg.mxu0
        %v2020 = vadd.f32 %v1812, %v1990
        %v2021 = vadd.f32 %v1813, %v1993
        %v2022 = vadd.f32 %v1814, %v1998
        %v2023 = vadd.f32 %v1815, %v2001
        %v2024 = vadd.f32 %v1816, %v2006
        %v2025 = vadd.f32 %v1817, %v2009
        %v2026 = vadd.f32 %v1818, %v2014
        %v2027 = vadd.f32 %v1819, %v2017
        %s2028 = scalar_lea.vmem [#allocation2], 384
        %v2029 = vld [vmem:[%s2028] sm:$0xff]
        %v2030 = vld [vmem:[%s2028 + $0x8] sm:$0xff]
        %v2031 = vld [vmem:[%s2028 + $0x10] sm:$0xff]
        %v2032 = vld [vmem:[%s2028 + $0x18] sm:$0xff]
        %v2033 = vld [vmem:[%s2028 + $0x20] sm:$0xff]
        %v2034 = vld [vmem:[%s2028 + $0x28] sm:$0xff]
        %v2035 = vld [vmem:[%s2028 + $0x30] sm:$0xff]
        %v2036 = vld [vmem:[%s2028 + $0x38] sm:$0xff]
        %v2045 = vunpack.c.l.b16 %v2029
        %v2046 = vunpack.c.h.b16 %v2029
        %v2047 = vunpack.c.l.b16 %v2030
        %v2048 = vunpack.c.h.b16 %v2030
        %v2049 = vunpack.c.l.b16 %v2031
        %v2050 = vunpack.c.h.b16 %v2031
        %v2051 = vunpack.c.l.b16 %v2032
        %v2052 = vunpack.c.h.b16 %v2032
        %v2053 = vunpack.c.l.b16 %v2033
        %v2054 = vunpack.c.h.b16 %v2033
        %v2055 = vunpack.c.l.b16 %v2034
        %v2056 = vunpack.c.h.b16 %v2034
        %v2057 = vunpack.c.l.b16 %v2035
        %v2058 = vunpack.c.h.b16 %v2035
        %v2059 = vunpack.c.l.b16 %v2036
        %v2060 = vunpack.c.h.b16 %v2036
        %v2061 = vpack.c.b16 %v2047, %v2045
        %v2062 = vpack.c.b16 %v2048, %v2046
        %v2063 = vpack.c.b16 %v2051, %v2049
        %v2064 = vpack.c.b16 %v2052, %v2050
        %v2065 = vpack.c.b16 %v2055, %v2053
        %v2066 = vpack.c.b16 %v2056, %v2054
        %v2067 = vpack.c.b16 %v2059, %v2057
        %v2068 = vpack.c.b16 %v2060, %v2058
        %2077 = vmatprep.subr.bf16.mxu0 0
        %2078 = vmatpush1.bf16.msra.mxu0 %v780
        %2079 = vmatprep.subr.bf16.mxu0 0
        %2080 = vmatpush1.bf16.msra.mxu0 %v781
        %2081 = vmatprep.subr.bf16.mxu0 0
        %2082 = vmatpush1.bf16.msra.mxu0 %v782
        %2083 = vmatprep.subr.bf16.mxu0 0
        %2084 = vmatpush1.bf16.msra.mxu0 %v783
        %2085 = vmatprep.subr.bf16.mxu0 0
        %2086 = vmatpush1.bf16.msra.mxu0 %v784
        %2087 = vmatprep.subr.bf16.mxu0 0
        %2088 = vmatpush1.bf16.msra.mxu0 %v785
        %2089 = vmatprep.subr.bf16.mxu0 0
        %2090 = vmatpush1.bf16.msra.mxu0 %v786
        %2091 = vmatprep.subr.bf16.mxu0 0
        %2092 = vmatpush1.bf16.msra.mxu0 %v787
        %2093 = vmatprep.subr.bf16.mxu0 0
        %2094 = vmatpush1.bf16.msra.mxu0 %v788
        %2095 = vmatprep.subr.bf16.mxu0 0
        %2096 = vmatpush1.bf16.msra.mxu0 %v789
        %2097 = vmatprep.subr.bf16.mxu0 0
        %2098 = vmatpush1.bf16.msra.mxu0 %v790
        %2099 = vmatprep.subr.bf16.mxu0 0
        %2100 = vmatpush1.bf16.msra.mxu0 %v791
        %2101 = vmatprep.subr.bf16.mxu0 0
        %2102 = vmatpush1.bf16.msra.mxu0 %v792
        %2103 = vmatprep.subr.bf16.mxu0 0
        %2104 = vmatpush1.bf16.msra.mxu0 %v793
        %2105 = vmatprep.subr.bf16.mxu0 0
        %2106 = vmatpush1.bf16.msra.mxu0 %v794
        %2107 = vmatprep.subr.bf16.mxu0 0
        %2108 = vmatpush1.bf16.msra.mxu0 %v795
        %2109 = vmatprep.mubr.bf16.mxu0 %v2062
        %2110 = vmatmul.mubr.bf16.gmra.mrb[0].mxu0 %v2061
        %v2111 = vpop.f32.mrb[0].mxu0
        %v2112 = vadd.f32 0.0, %v2111
        %v2113 = vpop.f32.mrb[0].mxu0
        %v2114 = vpop.f32.mrb[0].mxu0
        %v2115 = vadd.f32 0.0, %v2114
        %v2116 = vpop.f32.mrb[0].mxu0
        %2117 = vmatprep.mubr.bf16.mxu0 %v2064
        %2118 = vmatmul.mubr.bf16.gmra.mrb[0].mxu0 %v2063
        %v2119 = vpop.f32.mrb[0].mxu0
        %v2120 = vadd.f32 0.0, %v2119
        %v2121 = vpop.f32.mrb[0].mxu0
        %v2122 = vpop.f32.mrb[0].mxu0
        %v2123 = vadd.f32 0.0, %v2122
        %v2124 = vpop.f32.mrb[0].mxu0
        %2125 = vmatprep.mubr.bf16.mxu0 %v2066
        %2126 = vmatmul.mubr.bf16.gmra.mrb[0].mxu0 %v2065
        %v2127 = vpop.f32.mrb[0].mxu0
        %v2128 = vadd.f32 0.0, %v2127
        %v2129 = vpop.f32.mrb[0].mxu0
        %v2130 = vpop.f32.mrb[0].mxu0
        %v2131 = vadd.f32 0.0, %v2130
        %v2132 = vpop.f32.mrb[0].mxu0
        %2133 = vmatprep.mubr.bf16.mxu0 %v2068
        %2134 = vmatmul.mubr.bf16.gmra.mrb[0].mxu0 %v2067
        %v2135 = vpop.f32.mrb[0].mxu0
        %v2136 = vadd.f32 0.0, %v2135
        %v2137 = vpop.f32.mrb[0].mxu0
        %v2138 = vpop.f32.mrb[0].mxu0
        %v2139 = vadd.f32 0.0, %v2138
        %v2140 = vpop.f32.mrb[0].mxu0
        %2141 = vdwg.mxu0
        %v2142 = vpack.c.bf16 %v2115, %v2112
        %v2143 = vpack.c.bf16 %v2123, %v2120
        %v2144 = vpack.c.bf16 %v2131, %v2128
        %v2145 = vpack.c.bf16 %v2139, %v2136
        %s2146 = scalar_lea.vmem [#allocation5], 12
        %v2147 = vld [vmem:[%s2146] sm:$0x3]
        %v2149 = vsel %vm1034, %v2142, 0
        %v2152 = vsel %vm1034, %v2143, 0
        %v2155 = vsel %vm1034, %v2144, 0
        %v2158 = vsel %vm1034, %v2145, 0
        %v2161 = vsel %vm1047, %v2147, 0
        %2163 = vmatprep.subr.bf16.mxu0 0
        %2164 = vmatpush1.bf16.msra.mxu0 %v2161
        %2165 = vmatprep.subr.bf16.mxu0 0
        %2166 = vmatpush1.bf16.msra.mxu0 0
        %2167 = vmatprep.subr.bf16.mxu0 0
        %2168 = vmatpush1.bf16.msra.mxu0 0
        %2169 = vmatprep.subr.bf16.mxu0 0
        %2170 = vmatpush1.bf16.msra.mxu0 0
        %2171 = vmatprep.subr.bf16.mxu0 0
        %2172 = vmatpush1.bf16.msra.mxu0 0
        %2173 = vmatprep.subr.bf16.mxu0 0
        %2174 = vmatpush1.bf16.msra.mxu0 0
        %2175 = vmatprep.subr.bf16.mxu0 0
        %2176 = vmatpush1.bf16.msra.mxu0 0
        %2177 = vmatprep.subr.bf16.mxu0 0
        %2178 = vmatpush1.bf16.msra.mxu0 0
        %2179 = vmatprep.subr.bf16.mxu0 0
        %2180 = vmatpush1.bf16.msra.mxu0 0
        %2181 = vmatprep.subr.bf16.mxu0 0
        %2182 = vmatpush1.bf16.msra.mxu0 0
        %2183 = vmatprep.subr.bf16.mxu0 0
        %2184 = vmatpush1.bf16.msra.mxu0 0
        %2185 = vmatprep.subr.bf16.mxu0 0
        %2186 = vmatpush1.bf16.msra.mxu0 0
        %2187 = vmatprep.subr.bf16.mxu0 0
        %2188 = vmatpush1.bf16.msra.mxu0 0
        %2189 = vmatprep.subr.bf16.mxu0 0
        %2190 = vmatpush1.bf16.msra.mxu0 0
        %2191 = vmatprep.subr.bf16.mxu0 0
        %2192 = vmatpush1.bf16.msra.mxu0 0
        %2193 = vmatprep.subr.bf16.mxu0 0
        %2194 = vmatpush1.bf16.msra.mxu0 0
        %2195 = vmatprep.mubr.bf16.mxu0 0
        %2196 = vmatmul.mubr.bf16.gmra.mrb[0].mxu0 %v2149
        %v2197 = vpop.f32.mrb[0].mxu0
        %v2198 = vadd.f32 0.0, %v2197
        %v2199 = vpop.f32.mrb[0].mxu0
        %v2200 = vpop.f32.mrb[0].mxu0
        %v2201 = vadd.f32 0.0, %v2200
        %v2202 = vpop.f32.mrb[0].mxu0
        %2203 = vmatprep.mubr.bf16.mxu0 0
        %2204 = vmatmul.mubr.bf16.gmra.mrb[0].mxu0 %v2152
        %v2205 = vpop.f32.mrb[0].mxu0
        %v2206 = vadd.f32 0.0, %v2205
        %v2207 = vpop.f32.mrb[0].mxu0
        %v2208 = vpop.f32.mrb[0].mxu0
        %v2209 = vadd.f32 0.0, %v2208
        %v2210 = vpop.f32.mrb[0].mxu0
        %2211 = vmatprep.mubr.bf16.mxu0 0
        %2212 = vmatmul.mubr.bf16.gmra.mrb[0].mxu0 %v2155
        %v2213 = vpop.f32.mrb[0].mxu0
        %v2214 = vadd.f32 0.0, %v2213
        %v2215 = vpop.f32.mrb[0].mxu0
        %v2216 = vpop.f32.mrb[0].mxu0
        %v2217 = vadd.f32 0.0, %v2216
        %v2218 = vpop.f32.mrb[0].mxu0
        %2219 = vmatprep.mubr.bf16.mxu0 0
        %2220 = vmatmul.mubr.bf16.gmra.mrb[0].mxu0 %v2158
        %v2221 = vpop.f32.mrb[0].mxu0
        %v2222 = vadd.f32 0.0, %v2221
        %v2223 = vpop.f32.mrb[0].mxu0
        %v2224 = vpop.f32.mrb[0].mxu0
        %v2225 = vadd.f32 0.0, %v2224
        %v2226 = vpop.f32.mrb[0].mxu0
        %2227 = vdwg.mxu0
        %v2228 = vadd.f32 %v2020, %v2198
        %v2229 = vadd.f32 %v2021, %v2201
        %v2230 = vadd.f32 %v2022, %v2206
        %v2231 = vadd.f32 %v2023, %v2209
        %v2232 = vadd.f32 %v2024, %v2214
        %v2233 = vadd.f32 %v2025, %v2217
        %v2234 = vadd.f32 %v2026, %v2222
        %v2235 = vadd.f32 %v2027, %v2225
        %s2236 = scalar_lea.vmem [#allocation2], 448
        %v2237 = vld [vmem:[%s2236] sm:$0xff]
        %v2238 = vld [vmem:[%s2236 + $0x8] sm:$0xff]
        %v2239 = vld [vmem:[%s2236 + $0x10] sm:$0xff]
        %v2240 = vld [vmem:[%s2236 + $0x18] sm:$0xff]
        %v2241 = vld [vmem:[%s2236 + $0x20] sm:$0xff]
        %v2242 = vld [vmem:[%s2236 + $0x28] sm:$0xff]
        %v2243 = vld [vmem:[%s2236 + $0x30] sm:$0xff]
        %v2244 = vld [vmem:[%s2236 + $0x38] sm:$0xff]
        %v2253 = vunpack.c.l.b16 %v2237
        %v2254 = vunpack.c.h.b16 %v2237
        %v2255 = vunpack.c.l.b16 %v2238
        %v2256 = vunpack.c.h.b16 %v2238
        %v2257 = vunpack.c.l.b16 %v2239
        %v2258 = vunpack.c.h.b16 %v2239
        %v2259 = vunpack.c.l.b16 %v2240
        %v2260 = vunpack.c.h.b16 %v2240
        %v2261 = vunpack.c.l.b16 %v2241
        %v2262 = vunpack.c.h.b16 %v2241
        %v2263 = vunpack.c.l.b16 %v2242
        %v2264 = vunpack.c.h.b16 %v2242
        %v2265 = vunpack.c.l.b16 %v2243
        %v2266 = vunpack.c.h.b16 %v2243
        %v2267 = vunpack.c.l.b16 %v2244
        %v2268 = vunpack.c.h.b16 %v2244
        %v2269 = vpack.c.b16 %v2255, %v2253
        %v2270 = vpack.c.b16 %v2256, %v2254
        %v2271 = vpack.c.b16 %v2259, %v2257
        %v2272 = vpack.c.b16 %v2260, %v2258
        %v2273 = vpack.c.b16 %v2263, %v2261
        %v2274 = vpack.c.b16 %v2264, %v2262
        %v2275 = vpack.c.b16 %v2267, %v2265
        %v2276 = vpack.c.b16 %v2268, %v2266
        %2285 = vmatprep.subr.bf16.mxu0 0
        %2286 = vmatpush1.bf16.msra.mxu0 %v780
        %2287 = vmatprep.subr.bf16.mxu0 0
        %2288 = vmatpush1.bf16.msra.mxu0 %v781
        %2289 = vmatprep.subr.bf16.mxu0 0
        %2290 = vmatpush1.bf16.msra.mxu0 %v782
        %2291 = vmatprep.subr.bf16.mxu0 0
        %2292 = vmatpush1.bf16.msra.mxu0 %v783
        %2293 = vmatprep.subr.bf16.mxu0 0
        %2294 = vmatpush1.bf16.msra.mxu0 %v784
        %2295 = vmatprep.subr.bf16.mxu0 0
        %2296 = vmatpush1.bf16.msra.mxu0 %v785
        %2297 = vmatprep.subr.bf16.mxu0 0
        %2298 = vmatpush1.bf16.msra.mxu0 %v786
        %2299 = vmatprep.subr.bf16.mxu0 0
        %2300 = vmatpush1.bf16.msra.mxu0 %v787
        %2301 = vmatprep.subr.bf16.mxu0 0
        %2302 = vmatpush1.bf16.msra.mxu0 %v788
        %2303 = vmatprep.subr.bf16.mxu0 0
        %2304 = vmatpush1.bf16.msra.mxu0 %v789
        %2305 = vmatprep.subr.bf16.mxu0 0
        %2306 = vmatpush1.bf16.msra.mxu0 %v790
        %2307 = vmatprep.subr.bf16.mxu0 0
        %2308 = vmatpush1.bf16.msra.mxu0 %v791
        %2309 = vmatprep.subr.bf16.mxu0 0
        %2310 = vmatpush1.bf16.msra.mxu0 %v792
        %2311 = vmatprep.subr.bf16.mxu0 0
        %2312 = vmatpush1.bf16.msra.mxu0 %v793
        %2313 = vmatprep.subr.bf16.mxu0 0
        %2314 = vmatpush1.bf16.msra.mxu0 %v794
        %2315 = vmatprep.subr.bf16.mxu0 0
        %2316 = vmatpush1.bf16.msra.mxu0 %v795
        %2317 = vmatprep.mubr.bf16.mxu0 %v2270
        %2318 = vmatmul.mubr.bf16.gmra.mrb[0].mxu0 %v2269
        %v2319 = vpop.f32.mrb[0].mxu0
        %v2320 = vadd.f32 0.0, %v2319
        %v2321 = vpop.f32.mrb[0].mxu0
        %v2322 = vpop.f32.mrb[0].mxu0
        %v2323 = vadd.f32 0.0, %v2322
        %v2324 = vpop.f32.mrb[0].mxu0
        %2325 = vmatprep.mubr.bf16.mxu0 %v2272
        %2326 = vmatmul.mubr.bf16.gmra.mrb[0].mxu0 %v2271
        %v2327 = vpop.f32.mrb[0].mxu0
        %v2328 = vadd.f32 0.0, %v2327
        %v2329 = vpop.f32.mrb[0].mxu0
        %v2330 = vpop.f32.mrb[0].mxu0
        %v2331 = vadd.f32 0.0, %v2330
        %v2332 = vpop.f32.mrb[0].mxu0
        %2333 = vmatprep.mubr.bf16.mxu0 %v2274
        %2334 = vmatmul.mubr.bf16.gmra.mrb[0].mxu0 %v2273
        %v2335 = vpop.f32.mrb[0].mxu0
        %v2336 = vadd.f32 0.0, %v2335
        %v2337 = vpop.f32.mrb[0].mxu0
        %v2338 = vpop.f32.mrb[0].mxu0
        %v2339 = vadd.f32 0.0, %v2338
        %v2340 = vpop.f32.mrb[0].mxu0
        %2341 = vmatprep.mubr.bf16.mxu0 %v2276
        %2342 = vmatmul.mubr.bf16.gmra.mrb[0].mxu0 %v2275
        %v2343 = vpop.f32.mrb[0].mxu0
        %v2344 = vadd.f32 0.0, %v2343
        %v2345 = vpop.f32.mrb[0].mxu0
        %v2346 = vpop.f32.mrb[0].mxu0
        %v2347 = vadd.f32 0.0, %v2346
        %v2348 = vpop.f32.mrb[0].mxu0
        %2349 = vdwg.mxu0
        %v2350 = vpack.c.bf16 %v2323, %v2320
        %v2351 = vpack.c.bf16 %v2331, %v2328
        %v2352 = vpack.c.bf16 %v2339, %v2336
        %v2353 = vpack.c.bf16 %v2347, %v2344
        %s2354 = scalar_lea.vmem [#allocation5], 14
        %v2355 = vld [vmem:[%s2354] sm:$0x3]
        %v2357 = vsel %vm1034, %v2350, 0
        %v2360 = vsel %vm1034, %v2351, 0
        %v2363 = vsel %vm1034, %v2352, 0
        %v2366 = vsel %vm1034, %v2353, 0
        %v2369 = vsel %vm1047, %v2355, 0
        %2371 = vmatprep.subr.bf16.mxu0 0
        %2372 = vmatpush1.bf16.msra.mxu0 %v2369
        %2373 = vmatprep.subr.bf16.mxu0 0
        %2374 = vmatpush1.bf16.msra.mxu0 0
        %2375 = vmatprep.subr.bf16.mxu0 0
        %2376 = vmatpush1.bf16.msra.mxu0 0
        %2377 = vmatprep.subr.bf16.mxu0 0
        %2378 = vmatpush1.bf16.msra.mxu0 0
        %2379 = vmatprep.subr.bf16.mxu0 0
        %2380 = vmatpush1.bf16.msra.mxu0 0
        %2381 = vmatprep.subr.bf16.mxu0 0
        %2382 = vmatpush1.bf16.msra.mxu0 0
        %2383 = vmatprep.subr.bf16.mxu0 0
        %2384 = vmatpush1.bf16.msra.mxu0 0
        %2385 = vmatprep.subr.bf16.mxu0 0
        %2386 = vmatpush1.bf16.msra.mxu0 0
        %2387 = vmatprep.subr.bf16.mxu0 0
        %2388 = vmatpush1.bf16.msra.mxu0 0
        %2389 = vmatprep.subr.bf16.mxu0 0
        %2390 = vmatpush1.bf16.msra.mxu0 0
        %2391 = vmatprep.subr.bf16.mxu0 0
        %2392 = vmatpush1.bf16.msra.mxu0 0
        %2393 = vmatprep.subr.bf16.mxu0 0
        %2394 = vmatpush1.bf16.msra.mxu0 0
        %2395 = vmatprep.subr.bf16.mxu0 0
        %2396 = vmatpush1.bf16.msra.mxu0 0
        %2397 = vmatprep.subr.bf16.mxu0 0
        %2398 = vmatpush1.bf16.msra.mxu0 0
        %2399 = vmatprep.subr.bf16.mxu0 0
        %2400 = vmatpush1.bf16.msra.mxu0 0
        %2401 = vmatprep.subr.bf16.mxu0 0
        %2402 = vmatpush1.bf16.msra.mxu0 0
        %2403 = vmatprep.mubr.bf16.mxu0 0
        %2404 = vmatmul.mubr.bf16.gmra.mrb[0].mxu0 %v2357
        %v2405 = vpop.f32.mrb[0].mxu0
        %v2406 = vadd.f32 0.0, %v2405
        %v2407 = vpop.f32.mrb[0].mxu0
        %v2408 = vpop.f32.mrb[0].mxu0
        %v2409 = vadd.f32 0.0, %v2408
        %v2410 = vpop.f32.mrb[0].mxu0
        %2411 = vmatprep.mubr.bf16.mxu0 0
        %2412 = vmatmul.mubr.bf16.gmra.mrb[0].mxu0 %v2360
        %v2413 = vpop.f32.mrb[0].mxu0
        %v2414 = vadd.f32 0.0, %v2413
        %v2415 = vpop.f32.mrb[0].mxu0
        %v2416 = vpop.f32.mrb[0].mxu0
        %v2417 = vadd.f32 0.0, %v2416
        %v2418 = vpop.f32.mrb[0].mxu0
        %2419 = vmatprep.mubr.bf16.mxu0 0
        %2420 = vmatmul.mubr.bf16.gmra.mrb[0].mxu0 %v2363
        %v2421 = vpop.f32.mrb[0].mxu0
        %v2422 = vadd.f32 0.0, %v2421
        %v2423 = vpop.f32.mrb[0].mxu0
        %v2424 = vpop.f32.mrb[0].mxu0
        %v2425 = vadd.f32 0.0, %v2424
        %v2426 = vpop.f32.mrb[0].mxu0
        %2427 = vmatprep.mubr.bf16.mxu0 0
        %2428 = vmatmul.mubr.bf16.gmra.mrb[0].mxu0 %v2366
        %v2429 = vpop.f32.mrb[0].mxu0
        %v2430 = vadd.f32 0.0, %v2429
        %v2431 = vpop.f32.mrb[0].mxu0
        %v2432 = vpop.f32.mrb[0].mxu0
        %v2433 = vadd.f32 0.0, %v2432
        %v2434 = vpop.f32.mrb[0].mxu0
        %2435 = vdwg.mxu0
        %v2436 = vadd.f32 %v2228, %v2406
        %v2437 = vadd.f32 %v2229, %v2409
        %v2438 = vadd.f32 %v2230, %v2414
        %v2439 = vadd.f32 %v2231, %v2417
        %v2440 = vadd.f32 %v2232, %v2422
        %v2441 = vadd.f32 %v2233, %v2425
        %v2442 = vadd.f32 %v2234, %v2430
        %v2443 = vadd.f32 %v2235, %v2433
        %s2444 = scalar_lea.vmem [#allocation2], 512
        %v2445 = vld [vmem:[%s2444] sm:$0xff]
        %v2446 = vld [vmem:[%s2444 + $0x8] sm:$0xff]
        %v2447 = vld [vmem:[%s2444 + $0x10] sm:$0xff]
        %v2448 = vld [vmem:[%s2444 + $0x18] sm:$0xff]
        %v2449 = vld [vmem:[%s2444 + $0x20] sm:$0xff]
        %v2450 = vld [vmem:[%s2444 + $0x28] sm:$0xff]
        %v2451 = vld [vmem:[%s2444 + $0x30] sm:$0xff]
        %v2452 = vld [vmem:[%s2444 + $0x38] sm:$0xff]
        %v2461 = vunpack.c.l.b16 %v2445
        %v2462 = vunpack.c.h.b16 %v2445
        %v2463 = vunpack.c.l.b16 %v2446
        %v2464 = vunpack.c.h.b16 %v2446
        %v2465 = vunpack.c.l.b16 %v2447
        %v2466 = vunpack.c.h.b16 %v2447
        %v2467 = vunpack.c.l.b16 %v2448
        %v2468 = vunpack.c.h.b16 %v2448
        %v2469 = vunpack.c.l.b16 %v2449
        %v2470 = vunpack.c.h.b16 %v2449
        %v2471 = vunpack.c.l.b16 %v2450
        %v2472 = vunpack.c.h.b16 %v2450
        %v2473 = vunpack.c.l.b16 %v2451
        %v2474 = vunpack.c.h.b16 %v2451
        %v2475 = vunpack.c.l.b16 %v2452
        %v2476 = vunpack.c.h.b16 %v2452
        %v2477 = vpack.c.b16 %v2463, %v2461
        %v2478 = vpack.c.b16 %v2464, %v2462
        %v2479 = vpack.c.b16 %v2467, %v2465
        %v2480 = vpack.c.b16 %v2468, %v2466
        %v2481 = vpack.c.b16 %v2471, %v2469
        %v2482 = vpack.c.b16 %v2472, %v2470
        %v2483 = vpack.c.b16 %v2475, %v2473
        %v2484 = vpack.c.b16 %v2476, %v2474
        %2493 = vmatprep.subr.bf16.mxu0 0
        %2494 = vmatpush1.bf16.msra.mxu0 %v780
        %2495 = vmatprep.subr.bf16.mxu0 0
        %2496 = vmatpush1.bf16.msra.mxu0 %v781
        %2497 = vmatprep.subr.bf16.mxu0 0
        %2498 = vmatpush1.bf16.msra.mxu0 %v782
        %2499 = vmatprep.subr.bf16.mxu0 0
        %2500 = vmatpush1.bf16.msra.mxu0 %v783
        %2501 = vmatprep.subr.bf16.mxu0 0
        %2502 = vmatpush1.bf16.msra.mxu0 %v784
        %2503 = vmatprep.subr.bf16.mxu0 0
        %2504 = vmatpush1.bf16.msra.mxu0 %v785
        %2505 = vmatprep.subr.bf16.mxu0 0
        %2506 = vmatpush1.bf16.msra.mxu0 %v786
        %2507 = vmatprep.subr.bf16.mxu0 0
        %2508 = vmatpush1.bf16.msra.mxu0 %v787
        %2509 = vmatprep.subr.bf16.mxu0 0
        %2510 = vmatpush1.bf16.msra.mxu0 %v788
        %2511 = vmatprep.subr.bf16.mxu0 0
        %2512 = vmatpush1.bf16.msra.mxu0 %v789
        %2513 = vmatprep.subr.bf16.mxu0 0
        %2514 = vmatpush1.bf16.msra.mxu0 %v790
        %2515 = vmatprep.subr.bf16.mxu0 0
        %2516 = vmatpush1.bf16.msra.mxu0 %v791
        %2517 = vmatprep.subr.bf16.mxu0 0
        %2518 = vmatpush1.bf16.msra.mxu0 %v792
        %2519 = vmatprep.subr.bf16.mxu0 0
        %2520 = vmatpush1.bf16.msra.mxu0 %v793
        %2521 = vmatprep.subr.bf16.mxu0 0
        %2522 = vmatpush1.bf16.msra.mxu0 %v794
        %2523 = vmatprep.subr.bf16.mxu0 0
        %2524 = vmatpush1.bf16.msra.mxu0 %v795
        %2525 = vmatprep.mubr.bf16.mxu0 %v2478
        %2526 = vmatmul.mubr.bf16.gmra.mrb[0].mxu0 %v2477
        %v2527 = vpop.f32.mrb[0].mxu0
        %v2528 = vadd.f32 0.0, %v2527
        %v2529 = vpop.f32.mrb[0].mxu0
        %v2530 = vpop.f32.mrb[0].mxu0
        %v2531 = vadd.f32 0.0, %v2530
        %v2532 = vpop.f32.mrb[0].mxu0
        %2533 = vmatprep.mubr.bf16.mxu0 %v2480
        %2534 = vmatmul.mubr.bf16.gmra.mrb[0].mxu0 %v2479
        %v2535 = vpop.f32.mrb[0].mxu0
        %v2536 = vadd.f32 0.0, %v2535
        %v2537 = vpop.f32.mrb[0].mxu0
        %v2538 = vpop.f32.mrb[0].mxu0
        %v2539 = vadd.f32 0.0, %v2538
        %v2540 = vpop.f32.mrb[0].mxu0
        %2541 = vmatprep.mubr.bf16.mxu0 %v2482
        %2542 = vmatmul.mubr.bf16.gmra.mrb[0].mxu0 %v2481
        %v2543 = vpop.f32.mrb[0].mxu0
        %v2544 = vadd.f32 0.0, %v2543
        %v2545 = vpop.f32.mrb[0].mxu0
        %v2546 = vpop.f32.mrb[0].mxu0
        %v2547 = vadd.f32 0.0, %v2546
        %v2548 = vpop.f32.mrb[0].mxu0
        %2549 = vmatprep.mubr.bf16.mxu0 %v2484
        %2550 = vmatmul.mubr.bf16.gmra.mrb[0].mxu0 %v2483
        %v2551 = vpop.f32.mrb[0].mxu0
        %v2552 = vadd.f32 0.0, %v2551
        %v2553 = vpop.f32.mrb[0].mxu0
        %v2554 = vpop.f32.mrb[0].mxu0
        %v2555 = vadd.f32 0.0, %v2554
        %v2556 = vpop.f32.mrb[0].mxu0
        %2557 = vdwg.mxu0
        %v2558 = vpack.c.bf16 %v2531, %v2528
        %v2559 = vpack.c.bf16 %v2539, %v2536
        %v2560 = vpack.c.bf16 %v2547, %v2544
        %v2561 = vpack.c.bf16 %v2555, %v2552
        %s2562 = scalar_lea.vmem [#allocation5], 16
        %v2563 = vld [vmem:[%s2562] sm:$0x3]
        %v2565 = vsel %vm1034, %v2558, 0
        %v2568 = vsel %vm1034, %v2559, 0
        %v2571 = vsel %vm1034, %v2560, 0
        %v2574 = vsel %vm1034, %v2561, 0
        %v2577 = vsel %vm1047, %v2563, 0
        %2579 = vmatprep.subr.bf16.mxu0 0
        %2580 = vmatpush1.bf16.msra.mxu0 %v2577
        %2581 = vmatprep.subr.bf16.mxu0 0
        %2582 = vmatpush1.bf16.msra.mxu0 0
        %2583 = vmatprep.subr.bf16.mxu0 0
        %2584 = vmatpush1.bf16.msra.mxu0 0
        %2585 = vmatprep.subr.bf16.mxu0 0
        %2586 = vmatpush1.bf16.msra.mxu0 0
        %2587 = vmatprep.subr.bf16.mxu0 0
        %2588 = vmatpush1.bf16.msra.mxu0 0
        %2589 = vmatprep.subr.bf16.mxu0 0
        %2590 = vmatpush1.bf16.msra.mxu0 0
        %2591 = vmatprep.subr.bf16.mxu0 0
        %2592 = vmatpush1.bf16.msra.mxu0 0
        %2593 = vmatprep.subr.bf16.mxu0 0
        %2594 = vmatpush1.bf16.msra.mxu0 0
        %2595 = vmatprep.subr.bf16.mxu0 0
        %2596 = vmatpush1.bf16.msra.mxu0 0
        %2597 = vmatprep.subr.bf16.mxu0 0
        %2598 = vmatpush1.bf16.msra.mxu0 0
        %2599 = vmatprep.subr.bf16.mxu0 0
        %2600 = vmatpush1.bf16.msra.mxu0 0
        %2601 = vmatprep.subr.bf16.mxu0 0
        %2602 = vmatpush1.bf16.msra.mxu0 0
        %2603 = vmatprep.subr.bf16.mxu0 0
        %2604 = vmatpush1.bf16.msra.mxu0 0
        %2605 = vmatprep.subr.bf16.mxu0 0
        %2606 = vmatpush1.bf16.msra.mxu0 0
        %2607 = vmatprep.subr.bf16.mxu0 0
        %2608 = vmatpush1.bf16.msra.mxu0 0
        %2609 = vmatprep.subr.bf16.mxu0 0
        %2610 = vmatpush1.bf16.msra.mxu0 0
        %2611 = vmatprep.mubr.bf16.mxu0 0
        %2612 = vmatmul.mubr.bf16.gmra.mrb[0].mxu0 %v2565
        %v2613 = vpop.f32.mrb[0].mxu0
        %v2614 = vadd.f32 0.0, %v2613
        %v2615 = vpop.f32.mrb[0].mxu0
        %v2616 = vpop.f32.mrb[0].mxu0
        %v2617 = vadd.f32 0.0, %v2616
        %v2618 = vpop.f32.mrb[0].mxu0
        %2619 = vmatprep.mubr.bf16.mxu0 0
        %2620 = vmatmul.mubr.bf16.gmra.mrb[0].mxu0 %v2568
        %v2621 = vpop.f32.mrb[0].mxu0
        %v2622 = vadd.f32 0.0, %v2621
        %v2623 = vpop.f32.mrb[0].mxu0
        %v2624 = vpop.f32.mrb[0].mxu0
        %v2625 = vadd.f32 0.0, %v2624
        %v2626 = vpop.f32.mrb[0].mxu0
        %2627 = vmatprep.mubr.bf16.mxu0 0
        %2628 = vmatmul.mubr.bf16.gmra.mrb[0].mxu0 %v2571
        %v2629 = vpop.f32.mrb[0].mxu0
        %v2630 = vadd.f32 0.0, %v2629
        %v2631 = vpop.f32.mrb[0].mxu0
        %v2632 = vpop.f32.mrb[0].mxu0
        %v2633 = vadd.f32 0.0, %v2632
        %v2634 = vpop.f32.mrb[0].mxu0
        %2635 = vmatprep.mubr.bf16.mxu0 0
        %2636 = vmatmul.mubr.bf16.gmra.mrb[0].mxu0 %v2574
        %v2637 = vpop.f32.mrb[0].mxu0
        %v2638 = vadd.f32 0.0, %v2637
        %v2639 = vpop.f32.mrb[0].mxu0
        %v2640 = vpop.f32.mrb[0].mxu0
        %v2641 = vadd.f32 0.0, %v2640
        %v2642 = vpop.f32.mrb[0].mxu0
        %2643 = vdwg.mxu0
        %v2644 = vadd.f32 %v2436, %v2614
        %v2645 = vadd.f32 %v2437, %v2617
        %v2646 = vadd.f32 %v2438, %v2622
        %v2647 = vadd.f32 %v2439, %v2625
        %v2648 = vadd.f32 %v2440, %v2630
        %v2649 = vadd.f32 %v2441, %v2633
        %v2650 = vadd.f32 %v2442, %v2638
        %v2651 = vadd.f32 %v2443, %v2641
        %v2652 = vld [vmem:[%s3] sm:$0x1]
        %v2654 = vlaneseq
        %v2655 = vshrl.u32 %v2654, 7
        %v2656 = vsub.s32 0, %v2655
        %v2657 = vrot.slane %v2652, %v2656
        %v2659 = vadd.f32 %v2644, %v2657
        %v2660 = vadd.f32 %v2645, %v2657
        %v2661 = vadd.f32 %v2646, %v2657
        %v2662 = vadd.f32 %v2647, %v2657
        %v2663 = vadd.f32 %v2648, %v2657
        %v2664 = vadd.f32 %v2649, %v2657
        %v2665 = vadd.f32 %v2650, %v2657
        %v2666 = vadd.f32 %v2651, %v2657
        %v2667 = vmax.f32 %v2659, 0.0
        %v2668 = vmax.f32 %v2660, 0.0
        %v2669 = vmax.f32 %v2661, 0.0
        %v2670 = vmax.f32 %v2662, 0.0
        %v2671 = vmax.f32 %v2663, 0.0
        %v2672 = vmax.f32 %v2664, 0.0
        %v2673 = vmax.f32 %v2665, 0.0
        %v2674 = vmax.f32 %v2666, 0.0
        %v2675 = vpack.c.bf16 %v2668, %v2667
        %v2676 = vpack.c.bf16 %v2670, %v2669
        %v2677 = vpack.c.bf16 %v2672, %v2671
        %v2678 = vpack.c.bf16 %v2674, %v2673
        %v2679 = vld [vmem:[#allocation7] sm:$0xf]
        %v2680 = vld [vmem:[#allocation7 + $0x4] sm:$0xf]
        %v2681 = vld [vmem:[#allocation7 + $0x8] sm:$0xf]
        %v2682 = vld [vmem:[#allocation7 + $0xc] sm:$0xf]
        %v2683 = vld [vmem:[#allocation7 + $0x10] sm:$0xf]
        %v2684 = vld [vmem:[#allocation7 + $0x14] sm:$0xf]
        %v2685 = vld [vmem:[#allocation7 + $0x18] sm:$0xf]
        %v2686 = vld [vmem:[#allocation7 + $0x1c] sm:$0xf]
        %v2695 = vunpack.c.l.b16 %v2679
        %v2696 = vunpack.c.l.b16 %v2680
        %v2697 = vunpack.c.l.b16 %v2681
        %v2698 = vunpack.c.l.b16 %v2682
        %v2699 = vunpack.c.l.b16 %v2683
        %v2700 = vunpack.c.l.b16 %v2684
        %v2701 = vunpack.c.l.b16 %v2685
        %v2702 = vunpack.c.l.b16 %v2686
        %v2703 = vpack.c.b16 %v2696, %v2695
        %v2704 = vpack.c.b16 %v2698, %v2697
        %v2705 = vpack.c.b16 %v2700, %v2699
        %v2706 = vpack.c.b16 %v2702, %v2701
        %vm2707 = vcmask 523264
        %v2709 = vsel %vm2707, %v2703, 0
        %v2712 = vsel %vm2707, %v2704, 0
        %v2715 = vsel %vm2707, %v2705, 0
        %v2718 = vsel %vm2707, %v2706, 0
        %2720 = vmatprep.subr.bf16.mxu0 0
        %2721 = vmatpush1.bf16.msra.mxu0 %v2675
        %2722 = vmatprep.subr.bf16.mxu0 0
        %2723 = vmatpush1.bf16.msra.mxu0 %v2676
        %2724 = vmatprep.subr.bf16.mxu0 0
        %2725 = vmatpush1.bf16.msra.mxu0 %v2677
        %2726 = vmatprep.subr.bf16.mxu0 0
        %2727 = vmatpush1.bf16.msra.mxu0 %v2678
        %2728 = vmatprep.subr.bf16.mxu0 0
        %2729 = vmatpush1.bf16.msra.mxu0 0
        %2730 = vmatprep.subr.bf16.mxu0 0
        %2731 = vmatpush1.bf16.msra.mxu0 0
        %2732 = vmatprep.subr.bf16.mxu0 0
        %2733 = vmatpush1.bf16.msra.mxu0 0
        %2734 = vmatprep.subr.bf16.mxu0 0
        %2735 = vmatpush1.bf16.msra.mxu0 0
        %2736 = vmatprep.subr.bf16.mxu0 0
        %2737 = vmatpush1.bf16.msra.mxu0 0
        %2738 = vmatprep.subr.bf16.mxu0 0
        %2739 = vmatpush1.bf16.msra.mxu0 0
        %2740 = vmatprep.subr.bf16.mxu0 0
        %2741 = vmatpush1.bf16.msra.mxu0 0
        %2742 = vmatprep.subr.bf16.mxu0 0
        %2743 = vmatpush1.bf16.msra.mxu0 0
        %2744 = vmatprep.subr.bf16.mxu0 0
        %2745 = vmatpush1.bf16.msra.mxu0 0
        %2746 = vmatprep.subr.bf16.mxu0 0
        %2747 = vmatpush1.bf16.msra.mxu0 0
        %2748 = vmatprep.subr.bf16.mxu0 0
        %2749 = vmatpush1.bf16.msra.mxu0 0
        %2750 = vmatprep.subr.bf16.mxu0 0
        %2751 = vmatpush1.bf16.msra.mxu0 0
        %2752 = vmatprep.mubr.bf16.mxu0 0
        %2753 = vmatmul.mubr.bf16.gmra.mrb[0].mxu0 %v2709
        %v2754 = vpop.f32.mrb[0].mxu0
        %v2755 = vadd.f32 0.0, %v2754
        %v2756 = vpop.f32.mrb[0].mxu0
        %v2757 = vpop.f32.mrb[0].mxu0
        %v2758 = vadd.f32 0.0, %v2757
        %v2759 = vpop.f32.mrb[0].mxu0
        %2760 = vmatprep.mubr.bf16.mxu0 0
        %2761 = vmatmul.mubr.bf16.gmra.mrb[0].mxu0 %v2712
        %v2762 = vpop.f32.mrb[0].mxu0
        %v2763 = vadd.f32 0.0, %v2762
        %v2764 = vpop.f32.mrb[0].mxu0
        %v2765 = vpop.f32.mrb[0].mxu0
        %v2766 = vadd.f32 0.0, %v2765
        %v2767 = vpop.f32.mrb[0].mxu0
        %2768 = vmatprep.mubr.bf16.mxu0 0
        %2769 = vmatmul.mubr.bf16.gmra.mrb[0].mxu0 %v2715
        %v2770 = vpop.f32.mrb[0].mxu0
        %v2771 = vadd.f32 0.0, %v2770
        %v2772 = vpop.f32.mrb[0].mxu0
        %v2773 = vpop.f32.mrb[0].mxu0
        %v2774 = vadd.f32 0.0, %v2773
        %v2775 = vpop.f32.mrb[0].mxu0
        %2776 = vmatprep.mubr.bf16.mxu0 0
        %2777 = vmatmul.mubr.bf16.gmra.mrb[0].mxu0 %v2718
        %v2778 = vpop.f32.mrb[0].mxu0
        %v2779 = vadd.f32 0.0, %v2778
        %v2780 = vpop.f32.mrb[0].mxu0
        %v2781 = vpop.f32.mrb[0].mxu0
        %v2782 = vadd.f32 0.0, %v2781
        %v2783 = vpop.f32.mrb[0].mxu0
        %2784 = vdwg.mxu0
        %v2785 = vpack.c.bf16 %v2758, %v2755
        %v2786 = vpack.c.bf16 %v2766, %v2763
        %v2787 = vpack.c.bf16 %v2774, %v2771
        %v2788 = vpack.c.bf16 %v2782, %v2779
        %v2789 = vld [vmem:[#allocation8] sm:$0xf]
        %v2790 = vld [vmem:[#allocation8 + $0x4] sm:$0xf]
        %v2791 = vld [vmem:[#allocation8 + $0x8] sm:$0xf]
        %v2792 = vld [vmem:[#allocation8 + $0xc] sm:$0xf]
        %v2793 = vld [vmem:[#allocation8 + $0x10] sm:$0xf]
        %v2794 = vld [vmem:[#allocation8 + $0x14] sm:$0xf]
        %v2795 = vld [vmem:[#allocation8 + $0x18] sm:$0xf]
        %v2796 = vld [vmem:[#allocation8 + $0x1c] sm:$0xf]
        %s2797 = scalar_lea.vmem [#allocation7], 32
        %v2798 = vld [vmem:[%s2797] sm:$0xf]
        %v2799 = vld [vmem:[%s2797 + $0x4] sm:$0xf]
        %v2800 = vld [vmem:[%s2797 + $0x8] sm:$0xf]
        %v2801 = vld [vmem:[%s2797 + $0xc] sm:$0xf]
        %v2802 = vld [vmem:[%s2797 + $0x10] sm:$0xf]
        %v2803 = vld [vmem:[%s2797 + $0x14] sm:$0xf]
        %v2804 = vld [vmem:[%s2797 + $0x18] sm:$0xf]
        %v2805 = vld [vmem:[%s2797 + $0x1c] sm:$0xf]
        %v2814 = vunpack.c.l.b16 %v2798
        %v2815 = vunpack.c.l.b16 %v2799
        %v2816 = vunpack.c.l.b16 %v2800
        %v2817 = vunpack.c.l.b16 %v2801
        %v2818 = vunpack.c.l.b16 %v2802
        %v2819 = vunpack.c.l.b16 %v2803
        %v2820 = vunpack.c.l.b16 %v2804
        %v2821 = vunpack.c.l.b16 %v2805
        %v2822 = vpack.c.b16 %v2815, %v2814
        %v2823 = vpack.c.b16 %v2817, %v2816
        %v2824 = vpack.c.b16 %v2819, %v2818
        %v2825 = vpack.c.b16 %v2821, %v2820
        %v2827 = vsel %vm2707, %v2822, 0
        %v2830 = vsel %vm2707, %v2823, 0
        %v2833 = vsel %vm2707, %v2824, 0
        %v2836 = vsel %vm2707, %v2825, 0
        %2838 = vmatprep.subr.bf16.mxu0 0
        %2839 = vmatpush1.bf16.msra.mxu0 %v2675
        %2840 = vmatprep.subr.bf16.mxu0 0
        %2841 = vmatpush1.bf16.msra.mxu0 %v2676
        %2842 = vmatprep.subr.bf16.mxu0 0
        %2843 = vmatpush1.bf16.msra.mxu0 %v2677
        %2844 = vmatprep.subr.bf16.mxu0 0
        %2845 = vmatpush1.bf16.msra.mxu0 %v2678
        %2846 = vmatprep.subr.bf16.mxu0 0
        %2847 = vmatpush1.bf16.msra.mxu0 0
        %2848 = vmatprep.subr.bf16.mxu0 0
        %2849 = vmatpush1.bf16.msra.mxu0 0
        %2850 = vmatprep.subr.bf16.mxu0 0
        %2851 = vmatpush1.bf16.msra.mxu0 0
        %2852 = vmatprep.subr.bf16.mxu0 0
        %2853 = vmatpush1.bf16.msra.mxu0 0
        %2854 = vmatprep.subr.bf16.mxu0 0
        %2855 = vmatpush1.bf16.msra.mxu0 0
        %2856 = vmatprep.subr.bf16.mxu0 0
        %2857 = vmatpush1.bf16.msra.mxu0 0
        %2858 = vmatprep.subr.bf16.mxu0 0
        %2859 = vmatpush1.bf16.msra.mxu0 0
        %2860 = vmatprep.subr.bf16.mxu0 0
        %2861 = vmatpush1.bf16.msra.mxu0 0
        %2862 = vmatprep.subr.bf16.mxu0 0
        %2863 = vmatpush1.bf16.msra.mxu0 0
        %2864 = vmatprep.subr.bf16.mxu0 0
        %2865 = vmatpush1.bf16.msra.mxu0 0
        %2866 = vmatprep.subr.bf16.mxu0 0
        %2867 = vmatpush1.bf16.msra.mxu0 0
        %2868 = vmatprep.subr.bf16.mxu0 0
        %2869 = vmatpush1.bf16.msra.mxu0 0
        %2870 = vmatprep.mubr.bf16.mxu0 0
        %2871 = vmatmul.mubr.bf16.gmra.mrb[0].mxu0 %v2827
        %v2872 = vpop.f32.mrb[0].mxu0
        %v2873 = vadd.f32 0.0, %v2872
        %v2874 = vpop.f32.mrb[0].mxu0
        %v2875 = vpop.f32.mrb[0].mxu0
        %v2876 = vadd.f32 0.0, %v2875
        %v2877 = vpop.f32.mrb[0].mxu0
        %2878 = vmatprep.mubr.bf16.mxu0 0
        %2879 = vmatmul.mubr.bf16.gmra.mrb[0].mxu0 %v2830
        %v2880 = vpop.f32.mrb[0].mxu0
        %v2881 = vadd.f32 0.0, %v2880
        %v2882 = vpop.f32.mrb[0].mxu0
        %v2883 = vpop.f32.mrb[0].mxu0
        %v2884 = vadd.f32 0.0, %v2883
        %v2885 = vpop.f32.mrb[0].mxu0
        %2886 = vmatprep.mubr.bf16.mxu0 0
        %2887 = vmatmul.mubr.bf16.gmra.mrb[0].mxu0 %v2833
        %v2888 = vpop.f32.mrb[0].mxu0
        %v2889 = vadd.f32 0.0, %v2888
        %v2890 = vpop.f32.mrb[0].mxu0
        %v2891 = vpop.f32.mrb[0].mxu0
        %v2892 = vadd.f32 0.0, %v2891
        %v2893 = vpop.f32.mrb[0].mxu0
        %2894 = vmatprep.mubr.bf16.mxu0 0
        %2895 = vmatmul.mubr.bf16.gmra.mrb[0].mxu0 %v2836
        %v2896 = vpop.f32.mrb[0].mxu0
        %v2897 = vadd.f32 0.0, %v2896
        %v2898 = vpop.f32.mrb[0].mxu0
        %v2899 = vpop.f32.mrb[0].mxu0
        %v2900 = vadd.f32 0.0, %v2899
        %v2901 = vpop.f32.mrb[0].mxu0
        %2902 = vdwg.mxu0
        %v2903 = vpack.c.bf16 %v2876, %v2873
        %v2904 = vpack.c.bf16 %v2884, %v2881
        %v2905 = vpack.c.bf16 %v2892, %v2889
        %v2906 = vpack.c.bf16 %v2900, %v2897
        %s2907 = scalar_lea.vmem [#allocation8], 32
        %v2908 = vld [vmem:[%s2907] sm:$0xf]
        %v2909 = vld [vmem:[%s2907 + $0x4] sm:$0xf]
        %v2910 = vld [vmem:[%s2907 + $0x8] sm:$0xf]
        %v2911 = vld [vmem:[%s2907 + $0xc] sm:$0xf]
        %v2912 = vld [vmem:[%s2907 + $0x10] sm:$0xf]
        %v2913 = vld [vmem:[%s2907 + $0x14] sm:$0xf]
        %v2914 = vld [vmem:[%s2907 + $0x18] sm:$0xf]
        %v2915 = vld [vmem:[%s2907 + $0x1c] sm:$0xf]
        %v2924 = vunpack.c.l.b16 %v2908
        %v2925 = vunpack.c.l.b16 %v2909
        %v2926 = vunpack.c.l.b16 %v2910
        %v2927 = vunpack.c.l.b16 %v2911
        %v2928 = vunpack.c.l.b16 %v2912
        %v2929 = vunpack.c.l.b16 %v2913
        %v2930 = vunpack.c.l.b16 %v2914
        %v2931 = vunpack.c.l.b16 %v2915
        %v2932 = vpack.c.b16 %v2925, %v2924
        %v2933 = vpack.c.b16 %v2927, %v2926
        %v2934 = vpack.c.b16 %v2929, %v2928
        %v2935 = vpack.c.b16 %v2931, %v2930
        %v2941 = vsel %vm2707, %v2903, 0
        %v2944 = vsel %vm2707, %v2904, 0
        %v2947 = vsel %vm2707, %v2905, 0
        %v2950 = vsel %vm2707, %v2906, 0
        %2952 = vmatprep.subr.bf16.mxu0 0
        %2953 = vmatpush1.bf16.msra.mxu0 %v2932
        %2954 = vmatprep.subr.bf16.mxu0 0
        %2955 = vmatpush1.bf16.msra.mxu0 %v2933
        %2956 = vmatprep.subr.bf16.mxu0 0
        %2957 = vmatpush1.bf16.msra.mxu0 %v2934
        %2958 = vmatprep.subr.bf16.mxu0 0
        %2959 = vmatpush1.bf16.msra.mxu0 %v2935
        %2960 = vmatprep.subr.bf16.mxu0 0
        %2961 = vmatpush1.bf16.msra.mxu0 0
        %2962 = vmatprep.subr.bf16.mxu0 0
        %2963 = vmatpush1.bf16.msra.mxu0 0
        %2964 = vmatprep.subr.bf16.mxu0 0
        %2965 = vmatpush1.bf16.msra.mxu0 0
        %2966 = vmatprep.subr.bf16.mxu0 0
        %2967 = vmatpush1.bf16.msra.mxu0 0
        %2968 = vmatprep.subr.bf16.mxu0 0
        %2969 = vmatpush1.bf16.msra.mxu0 0
        %2970 = vmatprep.subr.bf16.mxu0 0
        %2971 = vmatpush1.bf16.msra.mxu0 0
        %2972 = vmatprep.subr.bf16.mxu0 0
        %2973 = vmatpush1.bf16.msra.mxu0 0
        %2974 = vmatprep.subr.bf16.mxu0 0
        %2975 = vmatpush1.bf16.msra.mxu0 0
        %2976 = vmatprep.subr.bf16.mxu0 0
        %2977 = vmatpush1.bf16.msra.mxu0 0
        %2978 = vmatprep.subr.bf16.mxu0 0
        %2979 = vmatpush1.bf16.msra.mxu0 0
        %2980 = vmatprep.subr.bf16.mxu0 0
        %2981 = vmatpush1.bf16.msra.mxu0 0
        %2982 = vmatprep.subr.bf16.mxu0 0
        %2983 = vmatpush1.bf16.msra.mxu0 0
        %2984 = vmatprep.mubr.bf16.mxu0 0
        %2985 = vmatmul.mubr.bf16.gmra.mrb[0].mxu0 %v2941
        %v2986 = vpop.f32.mrb[0].mxu0
        %v2987 = vadd.f32 0.0, %v2986
        %v2988 = vpop.f32.mrb[0].mxu0
        %v2989 = vpop.f32.mrb[0].mxu0
        %v2990 = vadd.f32 0.0, %v2989
        %v2991 = vpop.f32.mrb[0].mxu0
        %2992 = vmatprep.mubr.bf16.mxu0 0
        %2993 = vmatmul.mubr.bf16.gmra.mrb[0].mxu0 %v2944
        %v2994 = vpop.f32.mrb[0].mxu0
        %v2995 = vadd.f32 0.0, %v2994
        %v2996 = vpop.f32.mrb[0].mxu0
        %v2997 = vpop.f32.mrb[0].mxu0
        %v2998 = vadd.f32 0.0, %v2997
        %v2999 = vpop.f32.mrb[0].mxu0
        %3000 = vmatprep.mubr.bf16.mxu0 0
        %3001 = vmatmul.mubr.bf16.gmra.mrb[0].mxu0 %v2947
        %v3002 = vpop.f32.mrb[0].mxu0
        %v3003 = vadd.f32 0.0, %v3002
        %v3004 = vpop.f32.mrb[0].mxu0
        %v3005 = vpop.f32.mrb[0].mxu0
        %v3006 = vadd.f32 0.0, %v3005
        %v3007 = vpop.f32.mrb[0].mxu0
        %3008 = vmatprep.mubr.bf16.mxu0 0
        %3009 = vmatmul.mubr.bf16.gmra.mrb[0].mxu0 %v2950
        %v3010 = vpop.f32.mrb[0].mxu0
        %v3011 = vadd.f32 0.0, %v3010
        %v3012 = vpop.f32.mrb[0].mxu0
        %v3013 = vpop.f32.mrb[0].mxu0
        %v3014 = vadd.f32 0.0, %v3013
        %v3015 = vpop.f32.mrb[0].mxu0
        %3016 = vdwg.mxu0
        %v3025 = vunpack.c.l.b16 %v2789
        %v3026 = vunpack.c.l.b16 %v2790
        %v3027 = vunpack.c.l.b16 %v2791
        %v3028 = vunpack.c.l.b16 %v2792
        %v3029 = vunpack.c.l.b16 %v2793
        %v3030 = vunpack.c.l.b16 %v2794
        %v3031 = vunpack.c.l.b16 %v2795
        %v3032 = vunpack.c.l.b16 %v2796
        %v3033 = vpack.c.b16 %v3026, %v3025
        %v3034 = vpack.c.b16 %v3028, %v3027
        %v3035 = vpack.c.b16 %v3030, %v3029
        %v3036 = vpack.c.b16 %v3032, %v3031
        %v3042 = vsel %vm2707, %v2785, 0
        %v3045 = vsel %vm2707, %v2786, 0
        %v3048 = vsel %vm2707, %v2787, 0
        %v3051 = vsel %vm2707, %v2788, 0
        %3053 = vmatprep.subr.bf16.mxu0 0
        %3054 = vmatpush1.bf16.msra.mxu0 %v3033
        %3055 = vmatprep.subr.bf16.mxu0 0
        %3056 = vmatpush1.bf16.msra.mxu0 %v3034
        %3057 = vmatprep.subr.bf16.mxu0 0
        %3058 = vmatpush1.bf16.msra.mxu0 %v3035
        %3059 = vmatprep.subr.bf16.mxu0 0
        %3060 = vmatpush1.bf16.msra.mxu0 %v3036
        %3061 = vmatprep.subr.bf16.mxu0 0
        %3062 = vmatpush1.bf16.msra.mxu0 0
        %3063 = vmatprep.subr.bf16.mxu0 0
        %3064 = vmatpush1.bf16.msra.mxu0 0
        %3065 = vmatprep.subr.bf16.mxu0 0
        %3066 = vmatpush1.bf16.msra.mxu0 0
        %3067 = vmatprep.subr.bf16.mxu0 0
        %3068 = vmatpush1.bf16.msra.mxu0 0
        %3069 = vmatprep.subr.bf16.mxu0 0
        %3070 = vmatpush1.bf16.msra.mxu0 0
        %3071 = vmatprep.subr.bf16.mxu0 0
        %3072 = vmatpush1.bf16.msra.mxu0 0
        %3073 = vmatprep.subr.bf16.mxu0 0
        %3074 = vmatpush1.bf16.msra.mxu0 0
        %3075 = vmatprep.subr.bf16.mxu0 0
        %3076 = vmatpush1.bf16.msra.mxu0 0
        %3077 = vmatprep.subr.bf16.mxu0 0
        %3078 = vmatpush1.bf16.msra.mxu0 0
        %3079 = vmatprep.subr.bf16.mxu0 0
        %3080 = vmatpush1.bf16.msra.mxu0 0
        %3081 = vmatprep.subr.bf16.mxu0 0
        %3082 = vmatpush1.bf16.msra.mxu0 0
        %3083 = vmatprep.subr.bf16.mxu0 0
        %3084 = vmatpush1.bf16.msra.mxu0 0
        %3085 = vmatprep.mubr.bf16.mxu0 0
        %3086 = vmatmul.mubr.bf16.gmra.mrb[0].mxu0 %v3042
        %v3087 = vpop.f32.mrb[0].mxu0
        %v3088 = vadd.f32 %v2987, %v3087
        %v3089 = vpop.f32.mrb[0].mxu0
        %v3090 = vpop.f32.mrb[0].mxu0
        %v3091 = vadd.f32 %v2990, %v3090
        %v3092 = vpop.f32.mrb[0].mxu0
        %3093 = vmatprep.mubr.bf16.mxu0 0
        %3094 = vmatmul.mubr.bf16.gmra.mrb[0].mxu0 %v3045
        %v3095 = vpop.f32.mrb[0].mxu0
        %v3096 = vadd.f32 %v2995, %v3095
        %v3097 = vpop.f32.mrb[0].mxu0
        %v3098 = vpop.f32.mrb[0].mxu0
        %v3099 = vadd.f32 %v2998, %v3098
        %v3100 = vpop.f32.mrb[0].mxu0
        %3101 = vmatprep.mubr.bf16.mxu0 0
        %3102 = vmatmul.mubr.bf16.gmra.mrb[0].mxu0 %v3048
        %v3103 = vpop.f32.mrb[0].mxu0
        %v3104 = vadd.f32 %v3003, %v3103
        %v3105 = vpop.f32.mrb[0].mxu0
        %v3106 = vpop.f32.mrb[0].mxu0
        %v3107 = vadd.f32 %v3006, %v3106
        %v3108 = vpop.f32.mrb[0].mxu0
        %3109 = vmatprep.mubr.bf16.mxu0 0
        %3110 = vmatmul.mubr.bf16.gmra.mrb[0].mxu0 %v3051
        %v3111 = vpop.f32.mrb[0].mxu0
        %v3112 = vadd.f32 %v3011, %v3111
        %v3113 = vpop.f32.mrb[0].mxu0
        %v3114 = vpop.f32.mrb[0].mxu0
        %v3115 = vadd.f32 %v3014, %v3114
        %v3116 = vpop.f32.mrb[0].mxu0
        %3117 = vdwg.mxu0
        %s3118 = scalar_lea.vmem [#allocation7], 64
        %v3119 = vld [vmem:[%s3118] sm:$0xf]
        %v3120 = vld [vmem:[%s3118 + $0x4] sm:$0xf]
        %v3121 = vld [vmem:[%s3118 + $0x8] sm:$0xf]
        %v3122 = vld [vmem:[%s3118 + $0xc] sm:$0xf]
        %v3123 = vld [vmem:[%s3118 + $0x10] sm:$0xf]
        %v3124 = vld [vmem:[%s3118 + $0x14] sm:$0xf]
        %v3125 = vld [vmem:[%s3118 + $0x18] sm:$0xf]
        %v3126 = vld [vmem:[%s3118 + $0x1c] sm:$0xf]
        %v3135 = vunpack.c.l.b16 %v3119
        %v3136 = vunpack.c.l.b16 %v3120
        %v3137 = vunpack.c.l.b16 %v3121
        %v3138 = vunpack.c.l.b16 %v3122
        %v3139 = vunpack.c.l.b16 %v3123
        %v3140 = vunpack.c.l.b16 %v3124
        %v3141 = vunpack.c.l.b16 %v3125
        %v3142 = vunpack.c.l.b16 %v3126
        %v3143 = vpack.c.b16 %v3136, %v3135
        %v3144 = vpack.c.b16 %v3138, %v3137
        %v3145 = vpack.c.b16 %v3140, %v3139
        %v3146 = vpack.c.b16 %v3142, %v3141
        %v3148 = vsel %vm2707, %v3143, 0
        %v3151 = vsel %vm2707, %v3144, 0
        %v3154 = vsel %vm2707, %v3145, 0
        %v3157 = vsel %vm2707, %v3146, 0
        %3159 = vmatprep.subr.bf16.mxu0 0
        %3160 = vmatpush1.bf16.msra.mxu0 %v2675
        %3161 = vmatprep.subr.bf16.mxu0 0
        %3162 = vmatpush1.bf16.msra.mxu0 %v2676
        %3163 = vmatprep.subr.bf16.mxu0 0
        %3164 = vmatpush1.bf16.msra.mxu0 %v2677
        %3165 = vmatprep.subr.bf16.mxu0 0
        %3166 = vmatpush1.bf16.msra.mxu0 %v2678
        %3167 = vmatprep.subr.bf16.mxu0 0
        %3168 = vmatpush1.bf16.msra.mxu0 0
        %3169 = vmatprep.subr.bf16.mxu0 0
        %3170 = vmatpush1.bf16.msra.mxu0 0
        %3171 = vmatprep.subr.bf16.mxu0 0
        %3172 = vmatpush1.bf16.msra.mxu0 0
        %3173 = vmatprep.subr.bf16.mxu0 0
        %3174 = vmatpush1.bf16.msra.mxu0 0
        %3175 = vmatprep.subr.bf16.mxu0 0
        %3176 = vmatpush1.bf16.msra.mxu0 0
        %3177 = vmatprep.subr.bf16.mxu0 0
        %3178 = vmatpush1.bf16.msra.mxu0 0
        %3179 = vmatprep.subr.bf16.mxu0 0
        %3180 = vmatpush1.bf16.msra.mxu0 0
        %3181 = vmatprep.subr.bf16.mxu0 0
        %3182 = vmatpush1.bf16.msra.mxu0 0
        %3183 = vmatprep.subr.bf16.mxu0 0
        %3184 = vmatpush1.bf16.msra.mxu0 0
        %3185 = vmatprep.subr.bf16.mxu0 0
        %3186 = vmatpush1.bf16.msra.mxu0 0
        %3187 = vmatprep.subr.bf16.mxu0 0
        %3188 = vmatpush1.bf16.msra.mxu0 0
        %3189 = vmatprep.subr.bf16.mxu0 0
        %3190 = vmatpush1.bf16.msra.mxu0 0
        %3191 = vmatprep.mubr.bf16.mxu0 0
        %3192 = vmatmul.mubr.bf16.gmra.mrb[0].mxu0 %v3148
        %v3193 = vpop.f32.mrb[0].mxu0
        %v3194 = vadd.f32 0.0, %v3193
        %v3195 = vpop.f32.mrb[0].mxu0
        %v3196 = vpop.f32.mrb[0].mxu0
        %v3197 = vadd.f32 0.0, %v3196
        %v3198 = vpop.f32.mrb[0].mxu0
        %3199 = vmatprep.mubr.bf16.mxu0 0
        %3200 = vmatmul.mubr.bf16.gmra.mrb[0].mxu0 %v3151
        %v3201 = vpop.f32.mrb[0].mxu0
        %v3202 = vadd.f32 0.0, %v3201
        %v3203 = vpop.f32.mrb[0].mxu0
        %v3204 = vpop.f32.mrb[0].mxu0
        %v3205 = vadd.f32 0.0, %v3204
        %v3206 = vpop.f32.mrb[0].mxu0
        %3207 = vmatprep.mubr.bf16.mxu0 0
        %3208 = vmatmul.mubr.bf16.gmra.mrb[0].mxu0 %v3154
        %v3209 = vpop.f32.mrb[0].mxu0
        %v3210 = vadd.f32 0.0, %v3209
        %v3211 = vpop.f32.mrb[0].mxu0
        %v3212 = vpop.f32.mrb[0].mxu0
        %v3213 = vadd.f32 0.0, %v3212
        %v3214 = vpop.f32.mrb[0].mxu0
        %3215 = vmatprep.mubr.bf16.mxu0 0
        %3216 = vmatmul.mubr.bf16.gmra.mrb[0].mxu0 %v3157
        %v3217 = vpop.f32.mrb[0].mxu0
        %v3218 = vadd.f32 0.0, %v3217
        %v3219 = vpop.f32.mrb[0].mxu0
        %v3220 = vpop.f32.mrb[0].mxu0
        %v3221 = vadd.f32 0.0, %v3220
        %v3222 = vpop.f32.mrb[0].mxu0
        %3223 = vdwg.mxu0
        %v3224 = vpack.c.bf16 %v3197, %v3194
        %v3225 = vpack.c.bf16 %v3205, %v3202
        %v3226 = vpack.c.bf16 %v3213, %v3210
        %v3227 = vpack.c.bf16 %v3221, %v3218
        %s3228 = scalar_lea.vmem [#allocation8], 64
        %v3229 = vld [vmem:[%s3228] sm:$0xf]
        %v3230 = vld [vmem:[%s3228 + $0x4] sm:$0xf]
        %v3231 = vld [vmem:[%s3228 + $0x8] sm:$0xf]
        %v3232 = vld [vmem:[%s3228 + $0xc] sm:$0xf]
        %v3233 = vld [vmem:[%s3228 + $0x10] sm:$0xf]
        %v3234 = vld [vmem:[%s3228 + $0x14] sm:$0xf]
        %v3235 = vld [vmem:[%s3228 + $0x18] sm:$0xf]
        %v3236 = vld [vmem:[%s3228 + $0x1c] sm:$0xf]
        %v3245 = vunpack.c.l.b16 %v3229
        %v3246 = vunpack.c.l.b16 %v3230
        %v3247 = vunpack.c.l.b16 %v3231
        %v3248 = vunpack.c.l.b16 %v3232
        %v3249 = vunpack.c.l.b16 %v3233
        %v3250 = vunpack.c.l.b16 %v3234
        %v3251 = vunpack.c.l.b16 %v3235
        %v3252 = vunpack.c.l.b16 %v3236
        %v3253 = vpack.c.b16 %v3246, %v3245
        %v3254 = vpack.c.b16 %v3248, %v3247
        %v3255 = vpack.c.b16 %v3250, %v3249
        %v3256 = vpack.c.b16 %v3252, %v3251
        %v3262 = vsel %vm2707, %v3224, 0
        %v3265 = vsel %vm2707, %v3225, 0
        %v3268 = vsel %vm2707, %v3226, 0
        %v3271 = vsel %vm2707, %v3227, 0
        %3273 = vmatprep.subr.bf16.mxu0 0
        %3274 = vmatpush1.bf16.msra.mxu0 %v3253
        %3275 = vmatprep.subr.bf16.mxu0 0
        %3276 = vmatpush1.bf16.msra.mxu0 %v3254
        %3277 = vmatprep.subr.bf16.mxu0 0
        %3278 = vmatpush1.bf16.msra.mxu0 %v3255
        %3279 = vmatprep.subr.bf16.mxu0 0
        %3280 = vmatpush1.bf16.msra.mxu0 %v3256
        %3281 = vmatprep.subr.bf16.mxu0 0
        %3282 = vmatpush1.bf16.msra.mxu0 0
        %3283 = vmatprep.subr.bf16.mxu0 0
        %3284 = vmatpush1.bf16.msra.mxu0 0
        %3285 = vmatprep.subr.bf16.mxu0 0
        %3286 = vmatpush1.bf16.msra.mxu0 0
        %3287 = vmatprep.subr.bf16.mxu0 0
        %3288 = vmatpush1.bf16.msra.mxu0 0
        %3289 = vmatprep.subr.bf16.mxu0 0
        %3290 = vmatpush1.bf16.msra.mxu0 0
        %3291 = vmatprep.subr.bf16.mxu0 0
        %3292 = vmatpush1.bf16.msra.mxu0 0
        %3293 = vmatprep.subr.bf16.mxu0 0
        %3294 = vmatpush1.bf16.msra.mxu0 0
        %3295 = vmatprep.subr.bf16.mxu0 0
        %3296 = vmatpush1.bf16.msra.mxu0 0
        %3297 = vmatprep.subr.bf16.mxu0 0
        %3298 = vmatpush1.bf16.msra.mxu0 0
        %3299 = vmatprep.subr.bf16.mxu0 0
        %3300 = vmatpush1.bf16.msra.mxu0 0
        %3301 = vmatprep.subr.bf16.mxu0 0
        %3302 = vmatpush1.bf16.msra.mxu0 0
        %3303 = vmatprep.subr.bf16.mxu0 0
        %3304 = vmatpush1.bf16.msra.mxu0 0
        %3305 = vmatprep.mubr.bf16.mxu0 0
        %3306 = vmatmul.mubr.bf16.gmra.mrb[0].mxu0 %v3262
        %v3307 = vpop.f32.mrb[0].mxu0
        %v3308 = vadd.f32 0.0, %v3307
        %v3309 = vpop.f32.mrb[0].mxu0
        %v3310 = vpop.f32.mrb[0].mxu0
        %v3311 = vadd.f32 0.0, %v3310
        %v3312 = vpop.f32.mrb[0].mxu0
        %3313 = vmatprep.mubr.bf16.mxu0 0
        %3314 = vmatmul.mubr.bf16.gmra.mrb[0].mxu0 %v3265
        %v3315 = vpop.f32.mrb[0].mxu0
        %v3316 = vadd.f32 0.0, %v3315
        %v3317 = vpop.f32.mrb[0].mxu0
        %v3318 = vpop.f32.mrb[0].mxu0
        %v3319 = vadd.f32 0.0, %v3318
        %v3320 = vpop.f32.mrb[0].mxu0
        %3321 = vmatprep.mubr.bf16.mxu0 0
        %3322 = vmatmul.mubr.bf16.gmra.mrb[0].mxu0 %v3268
        %v3323 = vpop.f32.mrb[0].mxu0
        %v3324 = vadd.f32 0.0, %v3323
        %v3325 = vpop.f32.mrb[0].mxu0
        %v3326 = vpop.f32.mrb[0].mxu0
        %v3327 = vadd.f32 0.0, %v3326
        %v3328 = vpop.f32.mrb[0].mxu0
        %3329 = vmatprep.mubr.bf16.mxu0 0
        %3330 = vmatmul.mubr.bf16.gmra.mrb[0].mxu0 %v3271
        %v3331 = vpop.f32.mrb[0].mxu0
        %v3332 = vadd.f32 0.0, %v3331
        %v3333 = vpop.f32.mrb[0].mxu0
        %v3334 = vpop.f32.mrb[0].mxu0
        %v3335 = vadd.f32 0.0, %v3334
        %v3336 = vpop.f32.mrb[0].mxu0
        %3337 = vdwg.mxu0
        %v3338 = vadd.f32 %v3088, %v3308
        %v3339 = vadd.f32 %v3091, %v3311
        %v3340 = vadd.f32 %v3096, %v3316
        %v3341 = vadd.f32 %v3099, %v3319
        %v3342 = vadd.f32 %v3104, %v3324
        %v3343 = vadd.f32 %v3107, %v3327
        %v3344 = vadd.f32 %v3112, %v3332
        %v3345 = vadd.f32 %v3115, %v3335
        %s3346 = scalar_lea.vmem [#allocation7], 96
        %v3347 = vld [vmem:[%s3346] sm:$0xf]
        %v3348 = vld [vmem:[%s3346 + $0x4] sm:$0xf]
        %v3349 = vld [vmem:[%s3346 + $0x8] sm:$0xf]
        %v3350 = vld [vmem:[%s3346 + $0xc] sm:$0xf]
        %v3351 = vld [vmem:[%s3346 + $0x10] sm:$0xf]
        %v3352 = vld [vmem:[%s3346 + $0x14] sm:$0xf]
        %v3353 = vld [vmem:[%s3346 + $0x18] sm:$0xf]
        %v3354 = vld [vmem:[%s3346 + $0x1c] sm:$0xf]
        %v3363 = vunpack.c.l.b16 %v3347
        %v3364 = vunpack.c.l.b16 %v3348
        %v3365 = vunpack.c.l.b16 %v3349
        %v3366 = vunpack.c.l.b16 %v3350
        %v3367 = vunpack.c.l.b16 %v3351
        %v3368 = vunpack.c.l.b16 %v3352
        %v3369 = vunpack.c.l.b16 %v3353
        %v3370 = vunpack.c.l.b16 %v3354
        %v3371 = vpack.c.b16 %v3364, %v3363
        %v3372 = vpack.c.b16 %v3366, %v3365
        %v3373 = vpack.c.b16 %v3368, %v3367
        %v3374 = vpack.c.b16 %v3370, %v3369
        %v3376 = vsel %vm2707, %v3371, 0
        %v3379 = vsel %vm2707, %v3372, 0
        %v3382 = vsel %vm2707, %v3373, 0
        %v3385 = vsel %vm2707, %v3374, 0
        %3387 = vmatprep.subr.bf16.mxu0 0
        %3388 = vmatpush1.bf16.msra.mxu0 %v2675
        %3389 = vmatprep.subr.bf16.mxu0 0
        %3390 = vmatpush1.bf16.msra.mxu0 %v2676
        %3391 = vmatprep.subr.bf16.mxu0 0
        %3392 = vmatpush1.bf16.msra.mxu0 %v2677
        %3393 = vmatprep.subr.bf16.mxu0 0
        %3394 = vmatpush1.bf16.msra.mxu0 %v2678
        %3395 = vmatprep.subr.bf16.mxu0 0
        %3396 = vmatpush1.bf16.msra.mxu0 0
        %3397 = vmatprep.subr.bf16.mxu0 0
        %3398 = vmatpush1.bf16.msra.mxu0 0
        %3399 = vmatprep.subr.bf16.mxu0 0
        %3400 = vmatpush1.bf16.msra.mxu0 0
        %3401 = vmatprep.subr.bf16.mxu0 0
        %3402 = vmatpush1.bf16.msra.mxu0 0
        %3403 = vmatprep.subr.bf16.mxu0 0
        %3404 = vmatpush1.bf16.msra.mxu0 0
        %3405 = vmatprep.subr.bf16.mxu0 0
        %3406 = vmatpush1.bf16.msra.mxu0 0
        %3407 = vmatprep.subr.bf16.mxu0 0
        %3408 = vmatpush1.bf16.msra.mxu0 0
        %3409 = vmatprep.subr.bf16.mxu0 0
        %3410 = vmatpush1.bf16.msra.mxu0 0
        %3411 = vmatprep.subr.bf16.mxu0 0
        %3412 = vmatpush1.bf16.msra.mxu0 0
        %3413 = vmatprep.subr.bf16.mxu0 0
        %3414 = vmatpush1.bf16.msra.mxu0 0
        %3415 = vmatprep.subr.bf16.mxu0 0
        %3416 = vmatpush1.bf16.msra.mxu0 0
        %3417 = vmatprep.subr.bf16.mxu0 0
        %3418 = vmatpush1.bf16.msra.mxu0 0
        %3419 = vmatprep.mubr.bf16.mxu0 0
        %3420 = vmatmul.mubr.bf16.gmra.mrb[0].mxu0 %v3376
        %v3421 = vpop.f32.mrb[0].mxu0
        %v3422 = vadd.f32 0.0, %v3421
        %v3423 = vpop.f32.mrb[0].mxu0
        %v3424 = vpop.f32.mrb[0].mxu0
        %v3425 = vadd.f32 0.0, %v3424
        %v3426 = vpop.f32.mrb[0].mxu0
        %3427 = vmatprep.mubr.bf16.mxu0 0
        %3428 = vmatmul.mubr.bf16.gmra.mrb[0].mxu0 %v3379
        %v3429 = vpop.f32.mrb[0].mxu0
        %v3430 = vadd.f32 0.0, %v3429
        %v3431 = vpop.f32.mrb[0].mxu0
        %v3432 = vpop.f32.mrb[0].mxu0
        %v3433 = vadd.f32 0.0, %v3432
        %v3434 = vpop.f32.mrb[0].mxu0
        %3435 = vmatprep.mubr.bf16.mxu0 0
        %3436 = vmatmul.mubr.bf16.gmra.mrb[0].mxu0 %v3382
        %v3437 = vpop.f32.mrb[0].mxu0
        %v3438 = vadd.f32 0.0, %v3437
        %v3439 = vpop.f32.mrb[0].mxu0
        %v3440 = vpop.f32.mrb[0].mxu0
        %v3441 = vadd.f32 0.0, %v3440
        %v3442 = vpop.f32.mrb[0].mxu0
        %3443 = vmatprep.mubr.bf16.mxu0 0
        %3444 = vmatmul.mubr.bf16.gmra.mrb[0].mxu0 %v3385
        %v3445 = vpop.f32.mrb[0].mxu0
        %v3446 = vadd.f32 0.0, %v3445
        %v3447 = vpop.f32.mrb[0].mxu0
        %v3448 = vpop.f32.mrb[0].mxu0
        %v3449 = vadd.f32 0.0, %v3448
        %v3450 = vpop.f32.mrb[0].mxu0
        %3451 = vdwg.mxu0
        %v3452 = vpack.c.bf16 %v3425, %v3422
        %v3453 = vpack.c.bf16 %v3433, %v3430
        %v3454 = vpack.c.bf16 %v3441, %v3438
        %v3455 = vpack.c.bf16 %v3449, %v3446
        %s3456 = scalar_lea.vmem [#allocation8], 96
        %v3457 = vld [vmem:[%s3456] sm:$0xf]
        %v3458 = vld [vmem:[%s3456 + $0x4] sm:$0xf]
        %v3459 = vld [vmem:[%s3456 + $0x8] sm:$0xf]
        %v3460 = vld [vmem:[%s3456 + $0xc] sm:$0xf]
        %v3461 = vld [vmem:[%s3456 + $0x10] sm:$0xf]
        %v3462 = vld [vmem:[%s3456 + $0x14] sm:$0xf]
        %v3463 = vld [vmem:[%s3456 + $0x18] sm:$0xf]
        %v3464 = vld [vmem:[%s3456 + $0x1c] sm:$0xf]
        %v3473 = vunpack.c.l.b16 %v3457
        %v3474 = vunpack.c.l.b16 %v3458
        %v3475 = vunpack.c.l.b16 %v3459
        %v3476 = vunpack.c.l.b16 %v3460
        %v3477 = vunpack.c.l.b16 %v3461
        %v3478 = vunpack.c.l.b16 %v3462
        %v3479 = vunpack.c.l.b16 %v3463
        %v3480 = vunpack.c.l.b16 %v3464
        %v3481 = vpack.c.b16 %v3474, %v3473
        %v3482 = vpack.c.b16 %v3476, %v3475
        %v3483 = vpack.c.b16 %v3478, %v3477
        %v3484 = vpack.c.b16 %v3480, %v3479
        %v3490 = vsel %vm2707, %v3452, 0
        %v3493 = vsel %vm2707, %v3453, 0
        %v3496 = vsel %vm2707, %v3454, 0
        %v3499 = vsel %vm2707, %v3455, 0
        %3501 = vmatprep.subr.bf16.mxu0 0
        %3502 = vmatpush1.bf16.msra.mxu0 %v3481
        %3503 = vmatprep.subr.bf16.mxu0 0
        %3504 = vmatpush1.bf16.msra.mxu0 %v3482
        %3505 = vmatprep.subr.bf16.mxu0 0
        %3506 = vmatpush1.bf16.msra.mxu0 %v3483
        %3507 = vmatprep.subr.bf16.mxu0 0
        %3508 = vmatpush1.bf16.msra.mxu0 %v3484
        %3509 = vmatprep.subr.bf16.mxu0 0
        %3510 = vmatpush1.bf16.msra.mxu0 0
        %3511 = vmatprep.subr.bf16.mxu0 0
        %3512 = vmatpush1.bf16.msra.mxu0 0
        %3513 = vmatprep.subr.bf16.mxu0 0
        %3514 = vmatpush1.bf16.msra.mxu0 0
        %3515 = vmatprep.subr.bf16.mxu0 0
        %3516 = vmatpush1.bf16.msra.mxu0 0
        %3517 = vmatprep.subr.bf16.mxu0 0
        %3518 = vmatpush1.bf16.msra.mxu0 0
        %3519 = vmatprep.subr.bf16.mxu0 0
        %3520 = vmatpush1.bf16.msra.mxu0 0
        %3521 = vmatprep.subr.bf16.mxu0 0
        %3522 = vmatpush1.bf16.msra.mxu0 0
        %3523 = vmatprep.subr.bf16.mxu0 0
        %3524 = vmatpush1.bf16.msra.mxu0 0
        %3525 = vmatprep.subr.bf16.mxu0 0
        %3526 = vmatpush1.bf16.msra.mxu0 0
        %3527 = vmatprep.subr.bf16.mxu0 0
        %3528 = vmatpush1.bf16.msra.mxu0 0
        %3529 = vmatprep.subr.bf16.mxu0 0
        %3530 = vmatpush1.bf16.msra.mxu0 0
        %3531 = vmatprep.subr.bf16.mxu0 0
        %3532 = vmatpush1.bf16.msra.mxu0 0
        %3533 = vmatprep.mubr.bf16.mxu0 0
        %3534 = vmatmul.mubr.bf16.gmra.mrb[0].mxu0 %v3490
        %v3535 = vpop.f32.mrb[0].mxu0
        %v3536 = vadd.f32 0.0, %v3535
        %v3537 = vpop.f32.mrb[0].mxu0
        %v3538 = vpop.f32.mrb[0].mxu0
        %v3539 = vadd.f32 0.0, %v3538
        %v3540 = vpop.f32.mrb[0].mxu0
        %3541 = vmatprep.mubr.bf16.mxu0 0
        %3542 = vmatmul.mubr.bf16.gmra.mrb[0].mxu0 %v3493
        %v3543 = vpop.f32.mrb[0].mxu0
        %v3544 = vadd.f32 0.0, %v3543
        %v3545 = vpop.f32.mrb[0].mxu0
        %v3546 = vpop.f32.mrb[0].mxu0
        %v3547 = vadd.f32 0.0, %v3546
        %v3548 = vpop.f32.mrb[0].mxu0
        %3549 = vmatprep.mubr.bf16.mxu0 0
        %3550 = vmatmul.mubr.bf16.gmra.mrb[0].mxu0 %v3496
        %v3551 = vpop.f32.mrb[0].mxu0
        %v3552 = vadd.f32 0.0, %v3551
        %v3553 = vpop.f32.mrb[0].mxu0
        %v3554 = vpop.f32.mrb[0].mxu0
        %v3555 = vadd.f32 0.0, %v3554
        %v3556 = vpop.f32.mrb[0].mxu0
        %3557 = vmatprep.mubr.bf16.mxu0 0
        %3558 = vmatmul.mubr.bf16.gmra.mrb[0].mxu0 %v3499
        %v3559 = vpop.f32.mrb[0].mxu0
        %v3560 = vadd.f32 0.0, %v3559
        %v3561 = vpop.f32.mrb[0].mxu0
        %v3562 = vpop.f32.mrb[0].mxu0
        %v3563 = vadd.f32 0.0, %v3562
        %v3564 = vpop.f32.mrb[0].mxu0
        %3565 = vdwg.mxu0
        %v3566 = vadd.f32 %v3338, %v3536
        %v3567 = vadd.f32 %v3339, %v3539
        %v3568 = vadd.f32 %v3340, %v3544
        %v3569 = vadd.f32 %v3341, %v3547
        %v3570 = vadd.f32 %v3342, %v3552
        %v3571 = vadd.f32 %v3343, %v3555
        %v3572 = vadd.f32 %v3344, %v3560
        %v3573 = vadd.f32 %v3345, %v3563
        %s3574 = scalar_lea.vmem [#allocation7], 128
        %v3575 = vld [vmem:[%s3574] sm:$0xf]
        %v3576 = vld [vmem:[%s3574 + $0x4] sm:$0xf]
        %v3577 = vld [vmem:[%s3574 + $0x8] sm:$0xf]
        %v3578 = vld [vmem:[%s3574 + $0xc] sm:$0xf]
        %v3579 = vld [vmem:[%s3574 + $0x10] sm:$0xf]
        %v3580 = vld [vmem:[%s3574 + $0x14] sm:$0xf]
        %v3581 = vld [vmem:[%s3574 + $0x18] sm:$0xf]
        %v3582 = vld [vmem:[%s3574 + $0x1c] sm:$0xf]
        %v3591 = vunpack.c.l.b16 %v3575
        %v3592 = vunpack.c.l.b16 %v3576
        %v3593 = vunpack.c.l.b16 %v3577
        %v3594 = vunpack.c.l.b16 %v3578
        %v3595 = vunpack.c.l.b16 %v3579
        %v3596 = vunpack.c.l.b16 %v3580
        %v3597 = vunpack.c.l.b16 %v3581
        %v3598 = vunpack.c.l.b16 %v3582
        %v3599 = vpack.c.b16 %v3592, %v3591
        %v3600 = vpack.c.b16 %v3594, %v3593
        %v3601 = vpack.c.b16 %v3596, %v3595
        %v3602 = vpack.c.b16 %v3598, %v3597
        %v3604 = vsel %vm2707, %v3599, 0
        %v3607 = vsel %vm2707, %v3600, 0
        %v3610 = vsel %vm2707, %v3601, 0
        %v3613 = vsel %vm2707, %v3602, 0
        %3615 = vmatprep.subr.bf16.mxu0 0
        %3616 = vmatpush1.bf16.msra.mxu0 %v2675
        %3617 = vmatprep.subr.bf16.mxu0 0
        %3618 = vmatpush1.bf16.msra.mxu0 %v2676
        %3619 = vmatprep.subr.bf16.mxu0 0
        %3620 = vmatpush1.bf16.msra.mxu0 %v2677
        %3621 = vmatprep.subr.bf16.mxu0 0
        %3622 = vmatpush1.bf16.msra.mxu0 %v2678
        %3623 = vmatprep.subr.bf16.mxu0 0
        %3624 = vmatpush1.bf16.msra.mxu0 0
        %3625 = vmatprep.subr.bf16.mxu0 0
        %3626 = vmatpush1.bf16.msra.mxu0 0
        %3627 = vmatprep.subr.bf16.mxu0 0
        %3628 = vmatpush1.bf16.msra.mxu0 0
        %3629 = vmatprep.subr.bf16.mxu0 0
        %3630 = vmatpush1.bf16.msra.mxu0 0
        %3631 = vmatprep.subr.bf16.mxu0 0
        %3632 = vmatpush1.bf16.msra.mxu0 0
        %3633 = vmatprep.subr.bf16.mxu0 0
        %3634 = vmatpush1.bf16.msra.mxu0 0
        %3635 = vmatprep.subr.bf16.mxu0 0
        %3636 = vmatpush1.bf16.msra.mxu0 0
        %3637 = vmatprep.subr.bf16.mxu0 0
        %3638 = vmatpush1.bf16.msra.mxu0 0
        %3639 = vmatprep.subr.bf16.mxu0 0
        %3640 = vmatpush1.bf16.msra.mxu0 0
        %3641 = vmatprep.subr.bf16.mxu0 0
        %3642 = vmatpush1.bf16.msra.mxu0 0
        %3643 = vmatprep.subr.bf16.mxu0 0
        %3644 = vmatpush1.bf16.msra.mxu0 0
        %3645 = vmatprep.subr.bf16.mxu0 0
        %3646 = vmatpush1.bf16.msra.mxu0 0
        %3647 = vmatprep.mubr.bf16.mxu0 0
        %3648 = vmatmul.mubr.bf16.gmra.mrb[0].mxu0 %v3604
        %v3649 = vpop.f32.mrb[0].mxu0
        %v3650 = vadd.f32 0.0, %v3649
        %v3651 = vpop.f32.mrb[0].mxu0
        %v3652 = vpop.f32.mrb[0].mxu0
        %v3653 = vadd.f32 0.0, %v3652
        %v3654 = vpop.f32.mrb[0].mxu0
        %3655 = vmatprep.mubr.bf16.mxu0 0
        %3656 = vmatmul.mubr.bf16.gmra.mrb[0].mxu0 %v3607
        %v3657 = vpop.f32.mrb[0].mxu0
        %v3658 = vadd.f32 0.0, %v3657
        %v3659 = vpop.f32.mrb[0].mxu0
        %v3660 = vpop.f32.mrb[0].mxu0
        %v3661 = vadd.f32 0.0, %v3660
        %v3662 = vpop.f32.mrb[0].mxu0
        %3663 = vmatprep.mubr.bf16.mxu0 0
        %3664 = vmatmul.mubr.bf16.gmra.mrb[0].mxu0 %v3610
        %v3665 = vpop.f32.mrb[0].mxu0
        %v3666 = vadd.f32 0.0, %v3665
        %v3667 = vpop.f32.mrb[0].mxu0
        %v3668 = vpop.f32.mrb[0].mxu0
        %v3669 = vadd.f32 0.0, %v3668
        %v3670 = vpop.f32.mrb[0].mxu0
        %3671 = vmatprep.mubr.bf16.mxu0 0
        %3672 = vmatmul.mubr.bf16.gmra.mrb[0].mxu0 %v3613
        %v3673 = vpop.f32.mrb[0].mxu0
        %v3674 = vadd.f32 0.0, %v3673
        %v3675 = vpop.f32.mrb[0].mxu0
        %v3676 = vpop.f32.mrb[0].mxu0
        %v3677 = vadd.f32 0.0, %v3676
        %v3678 = vpop.f32.mrb[0].mxu0
        %3679 = vdwg.mxu0
        %v3680 = vpack.c.bf16 %v3653, %v3650
        %v3681 = vpack.c.bf16 %v3661, %v3658
        %v3682 = vpack.c.bf16 %v3669, %v3666
        %v3683 = vpack.c.bf16 %v3677, %v3674
        %s3684 = scalar_lea.vmem [#allocation8], 128
        %v3685 = vld [vmem:[%s3684] sm:$0xf]
        %v3686 = vld [vmem:[%s3684 + $0x4] sm:$0xf]
        %v3687 = vld [vmem:[%s3684 + $0x8] sm:$0xf]
        %v3688 = vld [vmem:[%s3684 + $0xc] sm:$0xf]
        %v3689 = vld [vmem:[%s3684 + $0x10] sm:$0xf]
        %v3690 = vld [vmem:[%s3684 + $0x14] sm:$0xf]
        %v3691 = vld [vmem:[%s3684 + $0x18] sm:$0xf]
        %v3692 = vld [vmem:[%s3684 + $0x1c] sm:$0xf]
        %v3701 = vunpack.c.l.b16 %v3685
        %v3702 = vunpack.c.l.b16 %v3686
        %v3703 = vunpack.c.l.b16 %v3687
        %v3704 = vunpack.c.l.b16 %v3688
        %v3705 = vunpack.c.l.b16 %v3689
        %v3706 = vunpack.c.l.b16 %v3690
        %v3707 = vunpack.c.l.b16 %v3691
        %v3708 = vunpack.c.l.b16 %v3692
        %v3709 = vpack.c.b16 %v3702, %v3701
        %v3710 = vpack.c.b16 %v3704, %v3703
        %v3711 = vpack.c.b16 %v3706, %v3705
        %v3712 = vpack.c.b16 %v3708, %v3707
        %v3718 = vsel %vm2707, %v3680, 0
        %v3721 = vsel %vm2707, %v3681, 0
        %v3724 = vsel %vm2707, %v3682, 0
        %v3727 = vsel %vm2707, %v3683, 0
        %3729 = vmatprep.subr.bf16.mxu0 0
        %3730 = vmatpush1.bf16.msra.mxu0 %v3709
        %3731 = vmatprep.subr.bf16.mxu0 0
        %3732 = vmatpush1.bf16.msra.mxu0 %v3710
        %3733 = vmatprep.subr.bf16.mxu0 0
        %3734 = vmatpush1.bf16.msra.mxu0 %v3711
        %3735 = vmatprep.subr.bf16.mxu0 0
        %3736 = vmatpush1.bf16.msra.mxu0 %v3712
        %3737 = vmatprep.subr.bf16.mxu0 0
        %3738 = vmatpush1.bf16.msra.mxu0 0
        %3739 = vmatprep.subr.bf16.mxu0 0
        %3740 = vmatpush1.bf16.msra.mxu0 0
        %3741 = vmatprep.subr.bf16.mxu0 0
        %3742 = vmatpush1.bf16.msra.mxu0 0
        %3743 = vmatprep.subr.bf16.mxu0 0
        %3744 = vmatpush1.bf16.msra.mxu0 0
        %3745 = vmatprep.subr.bf16.mxu0 0
        %3746 = vmatpush1.bf16.msra.mxu0 0
        %3747 = vmatprep.subr.bf16.mxu0 0
        %3748 = vmatpush1.bf16.msra.mxu0 0
        %3749 = vmatprep.subr.bf16.mxu0 0
        %3750 = vmatpush1.bf16.msra.mxu0 0
        %3751 = vmatprep.subr.bf16.mxu0 0
        %3752 = vmatpush1.bf16.msra.mxu0 0
        %3753 = vmatprep.subr.bf16.mxu0 0
        %3754 = vmatpush1.bf16.msra.mxu0 0
        %3755 = vmatprep.subr.bf16.mxu0 0
        %3756 = vmatpush1.bf16.msra.mxu0 0
        %3757 = vmatprep.subr.bf16.mxu0 0
        %3758 = vmatpush1.bf16.msra.mxu0 0
        %3759 = vmatprep.subr.bf16.mxu0 0
        %3760 = vmatpush1.bf16.msra.mxu0 0
        %3761 = vmatprep.mubr.bf16.mxu0 0
        %3762 = vmatmul.mubr.bf16.gmra.mrb[0].mxu0 %v3718
        %v3763 = vpop.f32.mrb[0].mxu0
        %v3764 = vadd.f32 0.0, %v3763
        %v3765 = vpop.f32.mrb[0].mxu0
        %v3766 = vpop.f32.mrb[0].mxu0
        %v3767 = vadd.f32 0.0, %v3766
        %v3768 = vpop.f32.mrb[0].mxu0
        %3769 = vmatprep.mubr.bf16.mxu0 0
        %3770 = vmatmul.mubr.bf16.gmra.mrb[0].mxu0 %v3721
        %v3771 = vpop.f32.mrb[0].mxu0
        %v3772 = vadd.f32 0.0, %v3771
        %v3773 = vpop.f32.mrb[0].mxu0
        %v3774 = vpop.f32.mrb[0].mxu0
        %v3775 = vadd.f32 0.0, %v3774
        %v3776 = vpop.f32.mrb[0].mxu0
        %3777 = vmatprep.mubr.bf16.mxu0 0
        %3778 = vmatmul.mubr.bf16.gmra.mrb[0].mxu0 %v3724
        %v3779 = vpop.f32.mrb[0].mxu0
        %v3780 = vadd.f32 0.0, %v3779
        %v3781 = vpop.f32.mrb[0].mxu0
        %v3782 = vpop.f32.mrb[0].mxu0
        %v3783 = vadd.f32 0.0, %v3782
        %v3784 = vpop.f32.mrb[0].mxu0
        %3785 = vmatprep.mubr.bf16.mxu0 0
        %3786 = vmatmul.mubr.bf16.gmra.mrb[0].mxu0 %v3727
        %v3787 = vpop.f32.mrb[0].mxu0
        %v3788 = vadd.f32 0.0, %v3787
        %v3789 = vpop.f32.mrb[0].mxu0
        %v3790 = vpop.f32.mrb[0].mxu0
        %v3791 = vadd.f32 0.0, %v3790
        %v3792 = vpop.f32.mrb[0].mxu0
        %3793 = vdwg.mxu0
        %v3794 = vadd.f32 %v3566, %v3764
        %v3795 = vadd.f32 %v3567, %v3767
        %v3796 = vadd.f32 %v3568, %v3772
        %v3797 = vadd.f32 %v3569, %v3775
        %v3798 = vadd.f32 %v3570, %v3780
        %v3799 = vadd.f32 %v3571, %v3783
        %v3800 = vadd.f32 %v3572, %v3788
        %v3801 = vadd.f32 %v3573, %v3791
        %s3802 = scalar_lea.vmem [#allocation7], 160
        %v3803 = vld [vmem:[%s3802] sm:$0xf]
        %v3804 = vld [vmem:[%s3802 + $0x4] sm:$0xf]
        %v3805 = vld [vmem:[%s3802 + $0x8] sm:$0xf]
        %v3806 = vld [vmem:[%s3802 + $0xc] sm:$0xf]
        %v3807 = vld [vmem:[%s3802 + $0x10] sm:$0xf]
        %v3808 = vld [vmem:[%s3802 + $0x14] sm:$0xf]
        %v3809 = vld [vmem:[%s3802 + $0x18] sm:$0xf]
        %v3810 = vld [vmem:[%s3802 + $0x1c] sm:$0xf]
        %v3819 = vunpack.c.l.b16 %v3803
        %v3820 = vunpack.c.l.b16 %v3804
        %v3821 = vunpack.c.l.b16 %v3805
        %v3822 = vunpack.c.l.b16 %v3806
        %v3823 = vunpack.c.l.b16 %v3807
        %v3824 = vunpack.c.l.b16 %v3808
        %v3825 = vunpack.c.l.b16 %v3809
        %v3826 = vunpack.c.l.b16 %v3810
        %v3827 = vpack.c.b16 %v3820, %v3819
        %v3828 = vpack.c.b16 %v3822, %v3821
        %v3829 = vpack.c.b16 %v3824, %v3823
        %v3830 = vpack.c.b16 %v3826, %v3825
        %v3832 = vsel %vm2707, %v3827, 0
        %v3835 = vsel %vm2707, %v3828, 0
        %v3838 = vsel %vm2707, %v3829, 0
        %v3841 = vsel %vm2707, %v3830, 0
        %3843 = vmatprep.subr.bf16.mxu0 0
        %3844 = vmatpush1.bf16.msra.mxu0 %v2675
        %3845 = vmatprep.subr.bf16.mxu0 0
        %3846 = vmatpush1.bf16.msra.mxu0 %v2676
        %3847 = vmatprep.subr.bf16.mxu0 0
        %3848 = vmatpush1.bf16.msra.mxu0 %v2677
        %3849 = vmatprep.subr.bf16.mxu0 0
        %3850 = vmatpush1.bf16.msra.mxu0 %v2678
        %3851 = vmatprep.subr.bf16.mxu0 0
        %3852 = vmatpush1.bf16.msra.mxu0 0
        %3853 = vmatprep.subr.bf16.mxu0 0
        %3854 = vmatpush1.bf16.msra.mxu0 0
        %3855 = vmatprep.subr.bf16.mxu0 0
        %3856 = vmatpush1.bf16.msra.mxu0 0
        %3857 = vmatprep.subr.bf16.mxu0 0
        %3858 = vmatpush1.bf16.msra.mxu0 0
        %3859 = vmatprep.subr.bf16.mxu0 0
        %3860 = vmatpush1.bf16.msra.mxu0 0
        %3861 = vmatprep.subr.bf16.mxu0 0
        %3862 = vmatpush1.bf16.msra.mxu0 0
        %3863 = vmatprep.subr.bf16.mxu0 0
        %3864 = vmatpush1.bf16.msra.mxu0 0
        %3865 = vmatprep.subr.bf16.mxu0 0
        %3866 = vmatpush1.bf16.msra.mxu0 0
        %3867 = vmatprep.subr.bf16.mxu0 0
        %3868 = vmatpush1.bf16.msra.mxu0 0
        %3869 = vmatprep.subr.bf16.mxu0 0
        %3870 = vmatpush1.bf16.msra.mxu0 0
        %3871 = vmatprep.subr.bf16.mxu0 0
        %3872 = vmatpush1.bf16.msra.mxu0 0
        %3873 = vmatprep.subr.bf16.mxu0 0
        %3874 = vmatpush1.bf16.msra.mxu0 0
        %3875 = vmatprep.mubr.bf16.mxu0 0
        %3876 = vmatmul.mubr.bf16.gmra.mrb[0].mxu0 %v3832
        %v3877 = vpop.f32.mrb[0].mxu0
        %v3878 = vadd.f32 0.0, %v3877
        %v3879 = vpop.f32.mrb[0].mxu0
        %v3880 = vpop.f32.mrb[0].mxu0
        %v3881 = vadd.f32 0.0, %v3880
        %v3882 = vpop.f32.mrb[0].mxu0
        %3883 = vmatprep.mubr.bf16.mxu0 0
        %3884 = vmatmul.mubr.bf16.gmra.mrb[0].mxu0 %v3835
        %v3885 = vpop.f32.mrb[0].mxu0
        %v3886 = vadd.f32 0.0, %v3885
        %v3887 = vpop.f32.mrb[0].mxu0
        %v3888 = vpop.f32.mrb[0].mxu0
        %v3889 = vadd.f32 0.0, %v3888
        %v3890 = vpop.f32.mrb[0].mxu0
        %3891 = vmatprep.mubr.bf16.mxu0 0
        %3892 = vmatmul.mubr.bf16.gmra.mrb[0].mxu0 %v3838
        %v3893 = vpop.f32.mrb[0].mxu0
        %v3894 = vadd.f32 0.0, %v3893
        %v3895 = vpop.f32.mrb[0].mxu0
        %v3896 = vpop.f32.mrb[0].mxu0
        %v3897 = vadd.f32 0.0, %v3896
        %v3898 = vpop.f32.mrb[0].mxu0
        %3899 = vmatprep.mubr.bf16.mxu0 0
        %3900 = vmatmul.mubr.bf16.gmra.mrb[0].mxu0 %v3841
        %v3901 = vpop.f32.mrb[0].mxu0
        %v3902 = vadd.f32 0.0, %v3901
        %v3903 = vpop.f32.mrb[0].mxu0
        %v3904 = vpop.f32.mrb[0].mxu0
        %v3905 = vadd.f32 0.0, %v3904
        %v3906 = vpop.f32.mrb[0].mxu0
        %3907 = vdwg.mxu0
        %v3908 = vpack.c.bf16 %v3881, %v3878
        %v3909 = vpack.c.bf16 %v3889, %v3886
        %v3910 = vpack.c.bf16 %v3897, %v3894
        %v3911 = vpack.c.bf16 %v3905, %v3902
        %s3912 = scalar_lea.vmem [#allocation8], 160
        %v3913 = vld [vmem:[%s3912] sm:$0xf]
        %v3914 = vld [vmem:[%s3912 + $0x4] sm:$0xf]
        %v3915 = vld [vmem:[%s3912 + $0x8] sm:$0xf]
        %v3916 = vld [vmem:[%s3912 + $0xc] sm:$0xf]
        %v3917 = vld [vmem:[%s3912 + $0x10] sm:$0xf]
        %v3918 = vld [vmem:[%s3912 + $0x14] sm:$0xf]
        %v3919 = vld [vmem:[%s3912 + $0x18] sm:$0xf]
        %v3920 = vld [vmem:[%s3912 + $0x1c] sm:$0xf]
        %v3929 = vunpack.c.l.b16 %v3913
        %v3930 = vunpack.c.l.b16 %v3914
        %v3931 = vunpack.c.l.b16 %v3915
        %v3932 = vunpack.c.l.b16 %v3916
        %v3933 = vunpack.c.l.b16 %v3917
        %v3934 = vunpack.c.l.b16 %v3918
        %v3935 = vunpack.c.l.b16 %v3919
        %v3936 = vunpack.c.l.b16 %v3920
        %v3937 = vpack.c.b16 %v3930, %v3929
        %v3938 = vpack.c.b16 %v3932, %v3931
        %v3939 = vpack.c.b16 %v3934, %v3933
        %v3940 = vpack.c.b16 %v3936, %v3935
        %v3946 = vsel %vm2707, %v3908, 0
        %v3949 = vsel %vm2707, %v3909, 0
        %v3952 = vsel %vm2707, %v3910, 0
        %v3955 = vsel %vm2707, %v3911, 0
        %3957 = vmatprep.subr.bf16.mxu0 0
        %3958 = vmatpush1.bf16.msra.mxu0 %v3937
        %3959 = vmatprep.subr.bf16.mxu0 0
        %3960 = vmatpush1.bf16.msra.mxu0 %v3938
        %3961 = vmatprep.subr.bf16.mxu0 0
        %3962 = vmatpush1.bf16.msra.mxu0 %v3939
        %3963 = vmatprep.subr.bf16.mxu0 0
        %3964 = vmatpush1.bf16.msra.mxu0 %v3940
        %3965 = vmatprep.subr.bf16.mxu0 0
        %3966 = vmatpush1.bf16.msra.mxu0 0
        %3967 = vmatprep.subr.bf16.mxu0 0
        %3968 = vmatpush1.bf16.msra.mxu0 0
        %3969 = vmatprep.subr.bf16.mxu0 0
        %3970 = vmatpush1.bf16.msra.mxu0 0
        %3971 = vmatprep.subr.bf16.mxu0 0
        %3972 = vmatpush1.bf16.msra.mxu0 0
        %3973 = vmatprep.subr.bf16.mxu0 0
        %3974 = vmatpush1.bf16.msra.mxu0 0
        %3975 = vmatprep.subr.bf16.mxu0 0
        %3976 = vmatpush1.bf16.msra.mxu0 0
        %3977 = vmatprep.subr.bf16.mxu0 0
        %3978 = vmatpush1.bf16.msra.mxu0 0
        %3979 = vmatprep.subr.bf16.mxu0 0
        %3980 = vmatpush1.bf16.msra.mxu0 0
        %3981 = vmatprep.subr.bf16.mxu0 0
        %3982 = vmatpush1.bf16.msra.mxu0 0
        %3983 = vmatprep.subr.bf16.mxu0 0
        %3984 = vmatpush1.bf16.msra.mxu0 0
        %3985 = vmatprep.subr.bf16.mxu0 0
        %3986 = vmatpush1.bf16.msra.mxu0 0
        %3987 = vmatprep.subr.bf16.mxu0 0
        %3988 = vmatpush1.bf16.msra.mxu0 0
        %3989 = vmatprep.mubr.bf16.mxu0 0
        %3990 = vmatmul.mubr.bf16.gmra.mrb[0].mxu0 %v3946
        %v3991 = vpop.f32.mrb[0].mxu0
        %v3992 = vadd.f32 0.0, %v3991
        %v3993 = vpop.f32.mrb[0].mxu0
        %v3994 = vpop.f32.mrb[0].mxu0
        %v3995 = vadd.f32 0.0, %v3994
        %v3996 = vpop.f32.mrb[0].mxu0
        %3997 = vmatprep.mubr.bf16.mxu0 0
        %3998 = vmatmul.mubr.bf16.gmra.mrb[0].mxu0 %v3949
        %v3999 = vpop.f32.mrb[0].mxu0
        %v4000 = vadd.f32 0.0, %v3999
        %v4001 = vpop.f32.mrb[0].mxu0
        %v4002 = vpop.f32.mrb[0].mxu0
        %v4003 = vadd.f32 0.0, %v4002
        %v4004 = vpop.f32.mrb[0].mxu0
        %4005 = vmatprep.mubr.bf16.mxu0 0
        %4006 = vmatmul.mubr.bf16.gmra.mrb[0].mxu0 %v3952
        %v4007 = vpop.f32.mrb[0].mxu0
        %v4008 = vadd.f32 0.0, %v4007
        %v4009 = vpop.f32.mrb[0].mxu0
        %v4010 = vpop.f32.mrb[0].mxu0
        %v4011 = vadd.f32 0.0, %v4010
        %v4012 = vpop.f32.mrb[0].mxu0
        %4013 = vmatprep.mubr.bf16.mxu0 0
        %4014 = vmatmul.mubr.bf16.gmra.mrb[0].mxu0 %v3955
        %v4015 = vpop.f32.mrb[0].mxu0
        %v4016 = vadd.f32 0.0, %v4015
        %v4017 = vpop.f32.mrb[0].mxu0
        %v4018 = vpop.f32.mrb[0].mxu0
        %v4019 = vadd.f32 0.0, %v4018
        %v4020 = vpop.f32.mrb[0].mxu0
        %4021 = vdwg.mxu0
        %v4022 = vadd.f32 %v3794, %v3992
        %v4023 = vadd.f32 %v3795, %v3995
        %v4024 = vadd.f32 %v3796, %v4000
        %v4025 = vadd.f32 %v3797, %v4003
        %v4026 = vadd.f32 %v3798, %v4008
        %v4027 = vadd.f32 %v3799, %v4011
        %v4028 = vadd.f32 %v3800, %v4016
        %v4029 = vadd.f32 %v3801, %v4019
        %s4030 = scalar_lea.vmem [#allocation7], 192
        %v4031 = vld [vmem:[%s4030] sm:$0xf]
        %v4032 = vld [vmem:[%s4030 + $0x4] sm:$0xf]
        %v4033 = vld [vmem:[%s4030 + $0x8] sm:$0xf]
        %v4034 = vld [vmem:[%s4030 + $0xc] sm:$0xf]
        %v4035 = vld [vmem:[%s4030 + $0x10] sm:$0xf]
        %v4036 = vld [vmem:[%s4030 + $0x14] sm:$0xf]
        %v4037 = vld [vmem:[%s4030 + $0x18] sm:$0xf]
        %v4038 = vld [vmem:[%s4030 + $0x1c] sm:$0xf]
        %v4047 = vunpack.c.l.b16 %v4031
        %v4048 = vunpack.c.l.b16 %v4032
        %v4049 = vunpack.c.l.b16 %v4033
        %v4050 = vunpack.c.l.b16 %v4034
        %v4051 = vunpack.c.l.b16 %v4035
        %v4052 = vunpack.c.l.b16 %v4036
        %v4053 = vunpack.c.l.b16 %v4037
        %v4054 = vunpack.c.l.b16 %v4038
        %v4055 = vpack.c.b16 %v4048, %v4047
        %v4056 = vpack.c.b16 %v4050, %v4049
        %v4057 = vpack.c.b16 %v4052, %v4051
        %v4058 = vpack.c.b16 %v4054, %v4053
        %v4060 = vsel %vm2707, %v4055, 0
        %v4063 = vsel %vm2707, %v4056, 0
        %v4066 = vsel %vm2707, %v4057, 0
        %v4069 = vsel %vm2707, %v4058, 0
        %4071 = vmatprep.subr.bf16.mxu0 0
        %4072 = vmatpush1.bf16.msra.mxu0 %v2675
        %4073 = vmatprep.subr.bf16.mxu0 0
        %4074 = vmatpush1.bf16.msra.mxu0 %v2676
        %4075 = vmatprep.subr.bf16.mxu0 0
        %4076 = vmatpush1.bf16.msra.mxu0 %v2677
        %4077 = vmatprep.subr.bf16.mxu0 0
        %4078 = vmatpush1.bf16.msra.mxu0 %v2678
        %4079 = vmatprep.subr.bf16.mxu0 0
        %4080 = vmatpush1.bf16.msra.mxu0 0
        %4081 = vmatprep.subr.bf16.mxu0 0
        %4082 = vmatpush1.bf16.msra.mxu0 0
        %4083 = vmatprep.subr.bf16.mxu0 0
        %4084 = vmatpush1.bf16.msra.mxu0 0
        %4085 = vmatprep.subr.bf16.mxu0 0
        %4086 = vmatpush1.bf16.msra.mxu0 0
        %4087 = vmatprep.subr.bf16.mxu0 0
        %4088 = vmatpush1.bf16.msra.mxu0 0
        %4089 = vmatprep.subr.bf16.mxu0 0
        %4090 = vmatpush1.bf16.msra.mxu0 0
        %4091 = vmatprep.subr.bf16.mxu0 0
        %4092 = vmatpush1.bf16.msra.mxu0 0
        %4093 = vmatprep.subr.bf16.mxu0 0
        %4094 = vmatpush1.bf16.msra.mxu0 0
        %4095 = vmatprep.subr.bf16.mxu0 0
        %4096 = vmatpush1.bf16.msra.mxu0 0
        %4097 = vmatprep.subr.bf16.mxu0 0
        %4098 = vmatpush1.bf16.msra.mxu0 0
        %4099 = vmatprep.subr.bf16.mxu0 0
        %4100 = vmatpush1.bf16.msra.mxu0 0
        %4101 = vmatprep.subr.bf16.mxu0 0
        %4102 = vmatpush1.bf16.msra.mxu0 0
        %4103 = vmatprep.mubr.bf16.mxu0 0
        %4104 = vmatmul.mubr.bf16.gmra.mrb[0].mxu0 %v4060
        %v4105 = vpop.f32.mrb[0].mxu0
        %v4106 = vadd.f32 0.0, %v4105
        %v4107 = vpop.f32.mrb[0].mxu0
        %v4108 = vpop.f32.mrb[0].mxu0
        %v4109 = vadd.f32 0.0, %v4108
        %v4110 = vpop.f32.mrb[0].mxu0
        %4111 = vmatprep.mubr.bf16.mxu0 0
        %4112 = vmatmul.mubr.bf16.gmra.mrb[0].mxu0 %v4063
        %v4113 = vpop.f32.mrb[0].mxu0
        %v4114 = vadd.f32 0.0, %v4113
        %v4115 = vpop.f32.mrb[0].mxu0
        %v4116 = vpop.f32.mrb[0].mxu0
        %v4117 = vadd.f32 0.0, %v4116
        %v4118 = vpop.f32.mrb[0].mxu0
        %4119 = vmatprep.mubr.bf16.mxu0 0
        %4120 = vmatmul.mubr.bf16.gmra.mrb[0].mxu0 %v4066
        %v4121 = vpop.f32.mrb[0].mxu0
        %v4122 = vadd.f32 0.0, %v4121
        %v4123 = vpop.f32.mrb[0].mxu0
        %v4124 = vpop.f32.mrb[0].mxu0
        %v4125 = vadd.f32 0.0, %v4124
        %v4126 = vpop.f32.mrb[0].mxu0
        %4127 = vmatprep.mubr.bf16.mxu0 0
        %4128 = vmatmul.mubr.bf16.gmra.mrb[0].mxu0 %v4069
        %v4129 = vpop.f32.mrb[0].mxu0
        %v4130 = vadd.f32 0.0, %v4129
        %v4131 = vpop.f32.mrb[0].mxu0
        %v4132 = vpop.f32.mrb[0].mxu0
        %v4133 = vadd.f32 0.0, %v4132
        %v4134 = vpop.f32.mrb[0].mxu0
        %4135 = vdwg.mxu0
        %v4136 = vpack.c.bf16 %v4109, %v4106
        %v4137 = vpack.c.bf16 %v4117, %v4114
        %v4138 = vpack.c.bf16 %v4125, %v4122
        %v4139 = vpack.c.bf16 %v4133, %v4130
        %s4140 = scalar_lea.vmem [#allocation8], 192
        %v4141 = vld [vmem:[%s4140] sm:$0xf]
        %v4142 = vld [vmem:[%s4140 + $0x4] sm:$0xf]
        %v4143 = vld [vmem:[%s4140 + $0x8] sm:$0xf]
        %v4144 = vld [vmem:[%s4140 + $0xc] sm:$0xf]
        %v4145 = vld [vmem:[%s4140 + $0x10] sm:$0xf]
        %v4146 = vld [vmem:[%s4140 + $0x14] sm:$0xf]
        %v4147 = vld [vmem:[%s4140 + $0x18] sm:$0xf]
        %v4148 = vld [vmem:[%s4140 + $0x1c] sm:$0xf]
        %v4157 = vunpack.c.l.b16 %v4141
        %v4158 = vunpack.c.l.b16 %v4142
        %v4159 = vunpack.c.l.b16 %v4143
        %v4160 = vunpack.c.l.b16 %v4144
        %v4161 = vunpack.c.l.b16 %v4145
        %v4162 = vunpack.c.l.b16 %v4146
        %v4163 = vunpack.c.l.b16 %v4147
        %v4164 = vunpack.c.l.b16 %v4148
        %v4165 = vpack.c.b16 %v4158, %v4157
        %v4166 = vpack.c.b16 %v4160, %v4159
        %v4167 = vpack.c.b16 %v4162, %v4161
        %v4168 = vpack.c.b16 %v4164, %v4163
        %v4174 = vsel %vm2707, %v4136, 0
        %v4177 = vsel %vm2707, %v4137, 0
        %v4180 = vsel %vm2707, %v4138, 0
        %v4183 = vsel %vm2707, %v4139, 0
        %4185 = vmatprep.subr.bf16.mxu0 0
        %4186 = vmatpush1.bf16.msra.mxu0 %v4165
        %4187 = vmatprep.subr.bf16.mxu0 0
        %4188 = vmatpush1.bf16.msra.mxu0 %v4166
        %4189 = vmatprep.subr.bf16.mxu0 0
        %4190 = vmatpush1.bf16.msra.mxu0 %v4167
        %4191 = vmatprep.subr.bf16.mxu0 0
        %4192 = vmatpush1.bf16.msra.mxu0 %v4168
        %4193 = vmatprep.subr.bf16.mxu0 0
        %4194 = vmatpush1.bf16.msra.mxu0 0
        %4195 = vmatprep.subr.bf16.mxu0 0
        %4196 = vmatpush1.bf16.msra.mxu0 0
        %4197 = vmatprep.subr.bf16.mxu0 0
        %4198 = vmatpush1.bf16.msra.mxu0 0
        %4199 = vmatprep.subr.bf16.mxu0 0
        %4200 = vmatpush1.bf16.msra.mxu0 0
        %4201 = vmatprep.subr.bf16.mxu0 0
        %4202 = vmatpush1.bf16.msra.mxu0 0
        %4203 = vmatprep.subr.bf16.mxu0 0
        %4204 = vmatpush1.bf16.msra.mxu0 0
        %4205 = vmatprep.subr.bf16.mxu0 0
        %4206 = vmatpush1.bf16.msra.mxu0 0
        %4207 = vmatprep.subr.bf16.mxu0 0
        %4208 = vmatpush1.bf16.msra.mxu0 0
        %4209 = vmatprep.subr.bf16.mxu0 0
        %4210 = vmatpush1.bf16.msra.mxu0 0
        %4211 = vmatprep.subr.bf16.mxu0 0
        %4212 = vmatpush1.bf16.msra.mxu0 0
        %4213 = vmatprep.subr.bf16.mxu0 0
        %4214 = vmatpush1.bf16.msra.mxu0 0
        %4215 = vmatprep.subr.bf16.mxu0 0
        %4216 = vmatpush1.bf16.msra.mxu0 0
        %4217 = vmatprep.mubr.bf16.mxu0 0
        %4218 = vmatmul.mubr.bf16.gmra.mrb[0].mxu0 %v4174
        %v4219 = vpop.f32.mrb[0].mxu0
        %v4220 = vadd.f32 0.0, %v4219
        %v4221 = vpop.f32.mrb[0].mxu0
        %v4222 = vpop.f32.mrb[0].mxu0
        %v4223 = vadd.f32 0.0, %v4222
        %v4224 = vpop.f32.mrb[0].mxu0
        %4225 = vmatprep.mubr.bf16.mxu0 0
        %4226 = vmatmul.mubr.bf16.gmra.mrb[0].mxu0 %v4177
        %v4227 = vpop.f32.mrb[0].mxu0
        %v4228 = vadd.f32 0.0, %v4227
        %v4229 = vpop.f32.mrb[0].mxu0
        %v4230 = vpop.f32.mrb[0].mxu0
        %v4231 = vadd.f32 0.0, %v4230
        %v4232 = vpop.f32.mrb[0].mxu0
        %4233 = vmatprep.mubr.bf16.mxu0 0
        %4234 = vmatmul.mubr.bf16.gmra.mrb[0].mxu0 %v4180
        %v4235 = vpop.f32.mrb[0].mxu0
        %v4236 = vadd.f32 0.0, %v4235
        %v4237 = vpop.f32.mrb[0].mxu0
        %v4238 = vpop.f32.mrb[0].mxu0
        %v4239 = vadd.f32 0.0, %v4238
        %v4240 = vpop.f32.mrb[0].mxu0
        %4241 = vmatprep.mubr.bf16.mxu0 0
        %4242 = vmatmul.mubr.bf16.gmra.mrb[0].mxu0 %v4183
        %v4243 = vpop.f32.mrb[0].mxu0
        %v4244 = vadd.f32 0.0, %v4243
        %v4245 = vpop.f32.mrb[0].mxu0
        %v4246 = vpop.f32.mrb[0].mxu0
        %v4247 = vadd.f32 0.0, %v4246
        %v4248 = vpop.f32.mrb[0].mxu0
        %4249 = vdwg.mxu0
        %v4250 = vadd.f32 %v4022, %v4220
        %v4251 = vadd.f32 %v4023, %v4223
        %v4252 = vadd.f32 %v4024, %v4228
        %v4253 = vadd.f32 %v4025, %v4231
        %v4254 = vadd.f32 %v4026, %v4236
        %v4255 = vadd.f32 %v4027, %v4239
        %v4256 = vadd.f32 %v4028, %v4244
        %v4257 = vadd.f32 %v4029, %v4247
        %s4258 = scalar_lea.vmem [#allocation7], 224
        %v4259 = vld [vmem:[%s4258] sm:$0xf]
        %v4260 = vld [vmem:[%s4258 + $0x4] sm:$0xf]
        %v4261 = vld [vmem:[%s4258 + $0x8] sm:$0xf]
        %v4262 = vld [vmem:[%s4258 + $0xc] sm:$0xf]
        %v4263 = vld [vmem:[%s4258 + $0x10] sm:$0xf]
        %v4264 = vld [vmem:[%s4258 + $0x14] sm:$0xf]
        %v4265 = vld [vmem:[%s4258 + $0x18] sm:$0xf]
        %v4266 = vld [vmem:[%s4258 + $0x1c] sm:$0xf]
        %v4275 = vunpack.c.l.b16 %v4259
        %v4276 = vunpack.c.l.b16 %v4260
        %v4277 = vunpack.c.l.b16 %v4261
        %v4278 = vunpack.c.l.b16 %v4262
        %v4279 = vunpack.c.l.b16 %v4263
        %v4280 = vunpack.c.l.b16 %v4264
        %v4281 = vunpack.c.l.b16 %v4265
        %v4282 = vunpack.c.l.b16 %v4266
        %v4283 = vpack.c.b16 %v4276, %v4275
        %v4284 = vpack.c.b16 %v4278, %v4277
        %v4285 = vpack.c.b16 %v4280, %v4279
        %v4286 = vpack.c.b16 %v4282, %v4281
        %v4288 = vsel %vm2707, %v4283, 0
        %v4291 = vsel %vm2707, %v4284, 0
        %v4294 = vsel %vm2707, %v4285, 0
        %v4297 = vsel %vm2707, %v4286, 0
        %4299 = vmatprep.subr.bf16.mxu0 0
        %4300 = vmatpush1.bf16.msra.mxu0 %v2675
        %4301 = vmatprep.subr.bf16.mxu0 0
        %4302 = vmatpush1.bf16.msra.mxu0 %v2676
        %4303 = vmatprep.subr.bf16.mxu0 0
        %4304 = vmatpush1.bf16.msra.mxu0 %v2677
        %4305 = vmatprep.subr.bf16.mxu0 0
        %4306 = vmatpush1.bf16.msra.mxu0 %v2678
        %4307 = vmatprep.subr.bf16.mxu0 0
        %4308 = vmatpush1.bf16.msra.mxu0 0
        %4309 = vmatprep.subr.bf16.mxu0 0
        %4310 = vmatpush1.bf16.msra.mxu0 0
        %4311 = vmatprep.subr.bf16.mxu0 0
        %4312 = vmatpush1.bf16.msra.mxu0 0
        %4313 = vmatprep.subr.bf16.mxu0 0
        %4314 = vmatpush1.bf16.msra.mxu0 0
        %4315 = vmatprep.subr.bf16.mxu0 0
        %4316 = vmatpush1.bf16.msra.mxu0 0
        %4317 = vmatprep.subr.bf16.mxu0 0
        %4318 = vmatpush1.bf16.msra.mxu0 0
        %4319 = vmatprep.subr.bf16.mxu0 0
        %4320 = vmatpush1.bf16.msra.mxu0 0
        %4321 = vmatprep.subr.bf16.mxu0 0
        %4322 = vmatpush1.bf16.msra.mxu0 0
        %4323 = vmatprep.subr.bf16.mxu0 0
        %4324 = vmatpush1.bf16.msra.mxu0 0
        %4325 = vmatprep.subr.bf16.mxu0 0
        %4326 = vmatpush1.bf16.msra.mxu0 0
        %4327 = vmatprep.subr.bf16.mxu0 0
        %4328 = vmatpush1.bf16.msra.mxu0 0
        %4329 = vmatprep.subr.bf16.mxu0 0
        %4330 = vmatpush1.bf16.msra.mxu0 0
        %4331 = vmatprep.mubr.bf16.mxu0 0
        %4332 = vmatmul.mubr.bf16.gmra.mrb[0].mxu0 %v4288
        %v4333 = vpop.f32.mrb[0].mxu0
        %v4334 = vadd.f32 0.0, %v4333
        %v4335 = vpop.f32.mrb[0].mxu0
        %v4336 = vpop.f32.mrb[0].mxu0
        %v4337 = vadd.f32 0.0, %v4336
        %v4338 = vpop.f32.mrb[0].mxu0
        %4339 = vmatprep.mubr.bf16.mxu0 0
        %4340 = vmatmul.mubr.bf16.gmra.mrb[0].mxu0 %v4291
        %v4341 = vpop.f32.mrb[0].mxu0
        %v4342 = vadd.f32 0.0, %v4341
        %v4343 = vpop.f32.mrb[0].mxu0
        %v4344 = vpop.f32.mrb[0].mxu0
        %v4345 = vadd.f32 0.0, %v4344
        %v4346 = vpop.f32.mrb[0].mxu0
        %4347 = vmatprep.mubr.bf16.mxu0 0
        %4348 = vmatmul.mubr.bf16.gmra.mrb[0].mxu0 %v4294
        %v4349 = vpop.f32.mrb[0].mxu0
        %v4350 = vadd.f32 0.0, %v4349
        %v4351 = vpop.f32.mrb[0].mxu0
        %v4352 = vpop.f32.mrb[0].mxu0
        %v4353 = vadd.f32 0.0, %v4352
        %v4354 = vpop.f32.mrb[0].mxu0
        %4355 = vmatprep.mubr.bf16.mxu0 0
        %4356 = vmatmul.mubr.bf16.gmra.mrb[0].mxu0 %v4297
        %v4357 = vpop.f32.mrb[0].mxu0
        %v4358 = vadd.f32 0.0, %v4357
        %v4359 = vpop.f32.mrb[0].mxu0
        %v4360 = vpop.f32.mrb[0].mxu0
        %v4361 = vadd.f32 0.0, %v4360
        %v4362 = vpop.f32.mrb[0].mxu0
        %4363 = vdwg.mxu0
        %v4364 = vpack.c.bf16 %v4337, %v4334
        %v4365 = vpack.c.bf16 %v4345, %v4342
        %v4366 = vpack.c.bf16 %v4353, %v4350
        %v4367 = vpack.c.bf16 %v4361, %v4358
        %s4368 = scalar_lea.vmem [#allocation8], 224
        %v4369 = vld [vmem:[%s4368] sm:$0xf]
        %v4370 = vld [vmem:[%s4368 + $0x4] sm:$0xf]
        %v4371 = vld [vmem:[%s4368 + $0x8] sm:$0xf]
        %v4372 = vld [vmem:[%s4368 + $0xc] sm:$0xf]
        %v4373 = vld [vmem:[%s4368 + $0x10] sm:$0xf]
        %v4374 = vld [vmem:[%s4368 + $0x14] sm:$0xf]
        %v4375 = vld [vmem:[%s4368 + $0x18] sm:$0xf]
        %v4376 = vld [vmem:[%s4368 + $0x1c] sm:$0xf]
        %v4385 = vunpack.c.l.b16 %v4369
        %v4386 = vunpack.c.l.b16 %v4370
        %v4387 = vunpack.c.l.b16 %v4371
        %v4388 = vunpack.c.l.b16 %v4372
        %v4389 = vunpack.c.l.b16 %v4373
        %v4390 = vunpack.c.l.b16 %v4374
        %v4391 = vunpack.c.l.b16 %v4375
        %v4392 = vunpack.c.l.b16 %v4376
        %v4393 = vpack.c.b16 %v4386, %v4385
        %v4394 = vpack.c.b16 %v4388, %v4387
        %v4395 = vpack.c.b16 %v4390, %v4389
        %v4396 = vpack.c.b16 %v4392, %v4391
        %v4402 = vsel %vm2707, %v4364, 0
        %v4405 = vsel %vm2707, %v4365, 0
        %v4408 = vsel %vm2707, %v4366, 0
        %v4411 = vsel %vm2707, %v4367, 0
        %4413 = vmatprep.subr.bf16.mxu0 0
        %4414 = vmatpush1.bf16.msra.mxu0 %v4393
        %4415 = vmatprep.subr.bf16.mxu0 0
        %4416 = vmatpush1.bf16.msra.mxu0 %v4394
        %4417 = vmatprep.subr.bf16.mxu0 0
        %4418 = vmatpush1.bf16.msra.mxu0 %v4395
        %4419 = vmatprep.subr.bf16.mxu0 0
        %4420 = vmatpush1.bf16.msra.mxu0 %v4396
        %4421 = vmatprep.subr.bf16.mxu0 0
        %4422 = vmatpush1.bf16.msra.mxu0 0
        %4423 = vmatprep.subr.bf16.mxu0 0
        %4424 = vmatpush1.bf16.msra.mxu0 0
        %4425 = vmatprep.subr.bf16.mxu0 0
        %4426 = vmatpush1.bf16.msra.mxu0 0
        %4427 = vmatprep.subr.bf16.mxu0 0
        %4428 = vmatpush1.bf16.msra.mxu0 0
        %4429 = vmatprep.subr.bf16.mxu0 0
        %4430 = vmatpush1.bf16.msra.mxu0 0
        %4431 = vmatprep.subr.bf16.mxu0 0
        %4432 = vmatpush1.bf16.msra.mxu0 0
        %4433 = vmatprep.subr.bf16.mxu0 0
        %4434 = vmatpush1.bf16.msra.mxu0 0
        %4435 = vmatprep.subr.bf16.mxu0 0
        %4436 = vmatpush1.bf16.msra.mxu0 0
        %4437 = vmatprep.subr.bf16.mxu0 0
        %4438 = vmatpush1.bf16.msra.mxu0 0
        %4439 = vmatprep.subr.bf16.mxu0 0
        %4440 = vmatpush1.bf16.msra.mxu0 0
        %4441 = vmatprep.subr.bf16.mxu0 0
        %4442 = vmatpush1.bf16.msra.mxu0 0
        %4443 = vmatprep.subr.bf16.mxu0 0
        %4444 = vmatpush1.bf16.msra.mxu0 0
        %4445 = vmatprep.mubr.bf16.mxu0 0
        %4446 = vmatmul.mubr.bf16.gmra.mrb[0].mxu0 %v4402
        %v4447 = vpop.f32.mrb[0].mxu0
        %v4448 = vadd.f32 0.0, %v4447
        %v4449 = vpop.f32.mrb[0].mxu0
        %v4450 = vpop.f32.mrb[0].mxu0
        %v4451 = vadd.f32 0.0, %v4450
        %v4452 = vpop.f32.mrb[0].mxu0
        %4453 = vmatprep.mubr.bf16.mxu0 0
        %4454 = vmatmul.mubr.bf16.gmra.mrb[0].mxu0 %v4405
        %v4455 = vpop.f32.mrb[0].mxu0
        %v4456 = vadd.f32 0.0, %v4455
        %v4457 = vpop.f32.mrb[0].mxu0
        %v4458 = vpop.f32.mrb[0].mxu0
        %v4459 = vadd.f32 0.0, %v4458
        %v4460 = vpop.f32.mrb[0].mxu0
        %4461 = vmatprep.mubr.bf16.mxu0 0
        %4462 = vmatmul.mubr.bf16.gmra.mrb[0].mxu0 %v4408
        %v4463 = vpop.f32.mrb[0].mxu0
        %v4464 = vadd.f32 0.0, %v4463
        %v4465 = vpop.f32.mrb[0].mxu0
        %v4466 = vpop.f32.mrb[0].mxu0
        %v4467 = vadd.f32 0.0, %v4466
        %v4468 = vpop.f32.mrb[0].mxu0
        %4469 = vmatprep.mubr.bf16.mxu0 0
        %4470 = vmatmul.mubr.bf16.gmra.mrb[0].mxu0 %v4411
        %v4471 = vpop.f32.mrb[0].mxu0
        %v4472 = vadd.f32 0.0, %v4471
        %v4473 = vpop.f32.mrb[0].mxu0
        %v4474 = vpop.f32.mrb[0].mxu0
        %v4475 = vadd.f32 0.0, %v4474
        %v4476 = vpop.f32.mrb[0].mxu0
        %4477 = vdwg.mxu0
        %v4478 = vadd.f32 %v4250, %v4448
        %v4479 = vadd.f32 %v4251, %v4451
        %v4480 = vadd.f32 %v4252, %v4456
        %v4481 = vadd.f32 %v4253, %v4459
        %v4482 = vadd.f32 %v4254, %v4464
        %v4483 = vadd.f32 %v4255, %v4467
        %v4484 = vadd.f32 %v4256, %v4472
        %v4485 = vadd.f32 %v4257, %v4475
        %s4486 = scalar_lea.vmem [#allocation7], 256
        %v4487 = vld [vmem:[%s4486] sm:$0xf]
        %v4488 = vld [vmem:[%s4486 + $0x4] sm:$0xf]
        %v4489 = vld [vmem:[%s4486 + $0x8] sm:$0xf]
        %v4490 = vld [vmem:[%s4486 + $0xc] sm:$0xf]
        %v4491 = vld [vmem:[%s4486 + $0x10] sm:$0xf]
        %v4492 = vld [vmem:[%s4486 + $0x14] sm:$0xf]
        %v4493 = vld [vmem:[%s4486 + $0x18] sm:$0xf]
        %v4494 = vld [vmem:[%s4486 + $0x1c] sm:$0xf]
        %v4503 = vunpack.c.l.b16 %v4487
        %v4504 = vunpack.c.l.b16 %v4488
        %v4505 = vunpack.c.l.b16 %v4489
        %v4506 = vunpack.c.l.b16 %v4490
        %v4507 = vunpack.c.l.b16 %v4491
        %v4508 = vunpack.c.l.b16 %v4492
        %v4509 = vunpack.c.l.b16 %v4493
        %v4510 = vunpack.c.l.b16 %v4494
        %v4511 = vpack.c.b16 %v4504, %v4503
        %v4512 = vpack.c.b16 %v4506, %v4505
        %v4513 = vpack.c.b16 %v4508, %v4507
        %v4514 = vpack.c.b16 %v4510, %v4509
        %v4516 = vsel %vm2707, %v4511, 0
        %v4519 = vsel %vm2707, %v4512, 0
        %v4522 = vsel %vm2707, %v4513, 0
        %v4525 = vsel %vm2707, %v4514, 0
        %4527 = vmatprep.subr.bf16.mxu0 0
        %4528 = vmatpush1.bf16.msra.mxu0 %v2675
        %4529 = vmatprep.subr.bf16.mxu0 0
        %4530 = vmatpush1.bf16.msra.mxu0 %v2676
        %4531 = vmatprep.subr.bf16.mxu0 0
        %4532 = vmatpush1.bf16.msra.mxu0 %v2677
        %4533 = vmatprep.subr.bf16.mxu0 0
        %4534 = vmatpush1.bf16.msra.mxu0 %v2678
        %4535 = vmatprep.subr.bf16.mxu0 0
        %4536 = vmatpush1.bf16.msra.mxu0 0
        %4537 = vmatprep.subr.bf16.mxu0 0
        %4538 = vmatpush1.bf16.msra.mxu0 0
        %4539 = vmatprep.subr.bf16.mxu0 0
        %4540 = vmatpush1.bf16.msra.mxu0 0
        %4541 = vmatprep.subr.bf16.mxu0 0
        %4542 = vmatpush1.bf16.msra.mxu0 0
        %4543 = vmatprep.subr.bf16.mxu0 0
        %4544 = vmatpush1.bf16.msra.mxu0 0
        %4545 = vmatprep.subr.bf16.mxu0 0
        %4546 = vmatpush1.bf16.msra.mxu0 0
        %4547 = vmatprep.subr.bf16.mxu0 0
        %4548 = vmatpush1.bf16.msra.mxu0 0
        %4549 = vmatprep.subr.bf16.mxu0 0
        %4550 = vmatpush1.bf16.msra.mxu0 0
        %4551 = vmatprep.subr.bf16.mxu0 0
        %4552 = vmatpush1.bf16.msra.mxu0 0
        %4553 = vmatprep.subr.bf16.mxu0 0
        %4554 = vmatpush1.bf16.msra.mxu0 0
        %4555 = vmatprep.subr.bf16.mxu0 0
        %4556 = vmatpush1.bf16.msra.mxu0 0
        %4557 = vmatprep.subr.bf16.mxu0 0
        %4558 = vmatpush1.bf16.msra.mxu0 0
        %4559 = vmatprep.mubr.bf16.mxu0 0
        %4560 = vmatmul.mubr.bf16.gmra.mrb[0].mxu0 %v4516
        %v4561 = vpop.f32.mrb[0].mxu0
        %v4562 = vadd.f32 0.0, %v4561
        %v4563 = vpop.f32.mrb[0].mxu0
        %v4564 = vpop.f32.mrb[0].mxu0
        %v4565 = vadd.f32 0.0, %v4564
        %v4566 = vpop.f32.mrb[0].mxu0
        %4567 = vmatprep.mubr.bf16.mxu0 0
        %4568 = vmatmul.mubr.bf16.gmra.mrb[0].mxu0 %v4519
        %v4569 = vpop.f32.mrb[0].mxu0
        %v4570 = vadd.f32 0.0, %v4569
        %v4571 = vpop.f32.mrb[0].mxu0
        %v4572 = vpop.f32.mrb[0].mxu0
        %v4573 = vadd.f32 0.0, %v4572
        %v4574 = vpop.f32.mrb[0].mxu0
        %4575 = vmatprep.mubr.bf16.mxu0 0
        %4576 = vmatmul.mubr.bf16.gmra.mrb[0].mxu0 %v4522
        %v4577 = vpop.f32.mrb[0].mxu0
        %v4578 = vadd.f32 0.0, %v4577
        %v4579 = vpop.f32.mrb[0].mxu0
        %v4580 = vpop.f32.mrb[0].mxu0
        %v4581 = vadd.f32 0.0, %v4580
        %v4582 = vpop.f32.mrb[0].mxu0
        %4583 = vmatprep.mubr.bf16.mxu0 0
        %4584 = vmatmul.mubr.bf16.gmra.mrb[0].mxu0 %v4525
        %v4585 = vpop.f32.mrb[0].mxu0
        %v4586 = vadd.f32 0.0, %v4585
        %v4587 = vpop.f32.mrb[0].mxu0
        %v4588 = vpop.f32.mrb[0].mxu0
        %v4589 = vadd.f32 0.0, %v4588
        %v4590 = vpop.f32.mrb[0].mxu0
        %4591 = vdwg.mxu0
        %v4592 = vpack.c.bf16 %v4565, %v4562
        %v4593 = vpack.c.bf16 %v4573, %v4570
        %v4594 = vpack.c.bf16 %v4581, %v4578
        %v4595 = vpack.c.bf16 %v4589, %v4586
        %s4596 = scalar_lea.vmem [#allocation8], 256
        %v4597 = vld [vmem:[%s4596] sm:$0xf]
        %v4598 = vld [vmem:[%s4596 + $0x4] sm:$0xf]
        %v4599 = vld [vmem:[%s4596 + $0x8] sm:$0xf]
        %v4600 = vld [vmem:[%s4596 + $0xc] sm:$0xf]
        %v4601 = vld [vmem:[%s4596 + $0x10] sm:$0xf]
        %v4602 = vld [vmem:[%s4596 + $0x14] sm:$0xf]
        %v4603 = vld [vmem:[%s4596 + $0x18] sm:$0xf]
        %v4604 = vld [vmem:[%s4596 + $0x1c] sm:$0xf]
        %v4613 = vunpack.c.l.b16 %v4597
        %v4614 = vunpack.c.l.b16 %v4598
        %v4615 = vunpack.c.l.b16 %v4599
        %v4616 = vunpack.c.l.b16 %v4600
        %v4617 = vunpack.c.l.b16 %v4601
        %v4618 = vunpack.c.l.b16 %v4602
        %v4619 = vunpack.c.l.b16 %v4603
        %v4620 = vunpack.c.l.b16 %v4604
        %v4621 = vpack.c.b16 %v4614, %v4613
        %v4622 = vpack.c.b16 %v4616, %v4615
        %v4623 = vpack.c.b16 %v4618, %v4617
        %v4624 = vpack.c.b16 %v4620, %v4619
        %v4630 = vsel %vm2707, %v4592, 0
        %v4633 = vsel %vm2707, %v4593, 0
        %v4636 = vsel %vm2707, %v4594, 0
        %v4639 = vsel %vm2707, %v4595, 0
        %4641 = vmatprep.subr.bf16.mxu0 0
        %4642 = vmatpush1.bf16.msra.mxu0 %v4621
        %4643 = vmatprep.subr.bf16.mxu0 0
        %4644 = vmatpush1.bf16.msra.mxu0 %v4622
        %4645 = vmatprep.subr.bf16.mxu0 0
        %4646 = vmatpush1.bf16.msra.mxu0 %v4623
        %4647 = vmatprep.subr.bf16.mxu0 0
        %4648 = vmatpush1.bf16.msra.mxu0 %v4624
        %4649 = vmatprep.subr.bf16.mxu0 0
        %4650 = vmatpush1.bf16.msra.mxu0 0
        %4651 = vmatprep.subr.bf16.mxu0 0
        %4652 = vmatpush1.bf16.msra.mxu0 0
        %4653 = vmatprep.subr.bf16.mxu0 0
        %4654 = vmatpush1.bf16.msra.mxu0 0
        %4655 = vmatprep.subr.bf16.mxu0 0
        %4656 = vmatpush1.bf16.msra.mxu0 0
        %4657 = vmatprep.subr.bf16.mxu0 0
        %4658 = vmatpush1.bf16.msra.mxu0 0
        %4659 = vmatprep.subr.bf16.mxu0 0
        %4660 = vmatpush1.bf16.msra.mxu0 0
        %4661 = vmatprep.subr.bf16.mxu0 0
        %4662 = vmatpush1.bf16.msra.mxu0 0
        %4663 = vmatprep.subr.bf16.mxu0 0
        %4664 = vmatpush1.bf16.msra.mxu0 0
        %4665 = vmatprep.subr.bf16.mxu0 0
        %4666 = vmatpush1.bf16.msra.mxu0 0
        %4667 = vmatprep.subr.bf16.mxu0 0
        %4668 = vmatpush1.bf16.msra.mxu0 0
        %4669 = vmatprep.subr.bf16.mxu0 0
        %4670 = vmatpush1.bf16.msra.mxu0 0
        %4671 = vmatprep.subr.bf16.mxu0 0
        %4672 = vmatpush1.bf16.msra.mxu0 0
        %4673 = vmatprep.mubr.bf16.mxu0 0
        %4674 = vmatmul.mubr.bf16.gmra.mrb[0].mxu0 %v4630
        %v4675 = vpop.f32.mrb[0].mxu0
        %v4676 = vadd.f32 0.0, %v4675
        %v4677 = vpop.f32.mrb[0].mxu0
        %v4678 = vpop.f32.mrb[0].mxu0
        %v4679 = vadd.f32 0.0, %v4678
        %v4680 = vpop.f32.mrb[0].mxu0
        %4681 = vmatprep.mubr.bf16.mxu0 0
        %4682 = vmatmul.mubr.bf16.gmra.mrb[0].mxu0 %v4633
        %v4683 = vpop.f32.mrb[0].mxu0
        %v4684 = vadd.f32 0.0, %v4683
        %v4685 = vpop.f32.mrb[0].mxu0
        %v4686 = vpop.f32.mrb[0].mxu0
        %v4687 = vadd.f32 0.0, %v4686
        %v4688 = vpop.f32.mrb[0].mxu0
        %4689 = vmatprep.mubr.bf16.mxu0 0
        %4690 = vmatmul.mubr.bf16.gmra.mrb[0].mxu0 %v4636
        %v4691 = vpop.f32.mrb[0].mxu0
        %v4692 = vadd.f32 0.0, %v4691
        %v4693 = vpop.f32.mrb[0].mxu0
        %v4694 = vpop.f32.mrb[0].mxu0
        %v4695 = vadd.f32 0.0, %v4694
        %v4696 = vpop.f32.mrb[0].mxu0
        %4697 = vmatprep.mubr.bf16.mxu0 0
        %4698 = vmatmul.mubr.bf16.gmra.mrb[0].mxu0 %v4639
        %v4699 = vpop.f32.mrb[0].mxu0
        %v4700 = vadd.f32 0.0, %v4699
        %v4701 = vpop.f32.mrb[0].mxu0
        %v4702 = vpop.f32.mrb[0].mxu0
        %v4703 = vadd.f32 0.0, %v4702
        %v4704 = vpop.f32.mrb[0].mxu0
        %4705 = vdwg.mxu0
        %v4706 = vadd.f32 %v4478, %v4676
        %v4707 = vadd.f32 %v4479, %v4679
        %v4708 = vadd.f32 %v4480, %v4684
        %v4709 = vadd.f32 %v4481, %v4687
        %v4710 = vadd.f32 %v4482, %v4692
        %v4711 = vadd.f32 %v4483, %v4695
        %v4712 = vadd.f32 %v4484, %v4700
        %v4713 = vadd.f32 %v4485, %v4703
        %v4714 = vld [vmem:[%s6] sm:$0x1]
        %v4716 = vlaneseq
        %v4717 = vshrl.u32 %v4716, 7
        %v4718 = vsub.s32 0, %v4717
        %v4719 = vrot.slane %v4714, %v4718
        %v4721 = vadd.f32 %v4706, %v4719
        %v4722 = vadd.f32 %v4707, %v4719
        %v4723 = vadd.f32 %v4708, %v4719
        %v4724 = vadd.f32 %v4709, %v4719
        %v4725 = vadd.f32 %v4710, %v4719
        %v4726 = vadd.f32 %v4711, %v4719
        %v4727 = vadd.f32 %v4712, %v4719
        %v4728 = vadd.f32 %v4713, %v4719
        %v4729 = vmax.f32 %v4721, 0.0
        %v4730 = vmax.f32 %v4722, 0.0
        %v4731 = vmax.f32 %v4723, 0.0
        %v4732 = vmax.f32 %v4724, 0.0
        %v4733 = vmax.f32 %v4725, 0.0
        %v4734 = vmax.f32 %v4726, 0.0
        %v4735 = vmax.f32 %v4727, 0.0
        %v4736 = vmax.f32 %v4728, 0.0
        %v4737 = vpack.c.bf16 %v4730, %v4729
        %v4738 = vpack.c.bf16 %v4732, %v4731
        %v4739 = vpack.c.bf16 %v4734, %v4733
        %v4740 = vpack.c.bf16 %v4736, %v4735
        %v4741 = vld [vmem:[#allocation10] sm:$0xf]
        %v4742 = vld [vmem:[#allocation10 + $0x4] sm:$0xf]
        %v4743 = vld [vmem:[#allocation10 + $0x8] sm:$0xf]
        %v4744 = vld [vmem:[#allocation10 + $0xc] sm:$0xf]
        %v4745 = vld [vmem:[#allocation10 + $0x10] sm:$0xf]
        %v4746 = vld [vmem:[#allocation10 + $0x14] sm:$0xf]
        %v4747 = vld [vmem:[#allocation10 + $0x18] sm:$0xf]
        %v4748 = vld [vmem:[#allocation10 + $0x1c] sm:$0xf]
        %v4757 = vunpack.c.l.b16 %v4741
        %v4758 = vunpack.c.l.b16 %v4742
        %v4759 = vunpack.c.l.b16 %v4743
        %v4760 = vunpack.c.l.b16 %v4744
        %v4761 = vunpack.c.l.b16 %v4745
        %v4762 = vunpack.c.l.b16 %v4746
        %v4763 = vunpack.c.l.b16 %v4747
        %v4764 = vunpack.c.l.b16 %v4748
        %v4765 = vpack.c.b16 %v4758, %v4757
        %v4766 = vpack.c.b16 %v4760, %v4759
        %v4767 = vpack.c.b16 %v4762, %v4761
        %v4768 = vpack.c.b16 %v4764, %v4763
        %v4770 = vsel %vm2707, %v4765, 0
        %v4773 = vsel %vm2707, %v4766, 0
        %v4776 = vsel %vm2707, %v4767, 0
        %v4779 = vsel %vm2707, %v4768, 0
        %4781 = vmatprep.subr.bf16.mxu0 0
        %4782 = vmatpush1.bf16.msra.mxu0 %v4737
        %4783 = vmatprep.subr.bf16.mxu0 0
        %4784 = vmatpush1.bf16.msra.mxu0 %v4738
        %4785 = vmatprep.subr.bf16.mxu0 0
        %4786 = vmatpush1.bf16.msra.mxu0 %v4739
        %4787 = vmatprep.subr.bf16.mxu0 0
        %4788 = vmatpush1.bf16.msra.mxu0 %v4740
        %4789 = vmatprep.subr.bf16.mxu0 0
        %4790 = vmatpush1.bf16.msra.mxu0 0
        %4791 = vmatprep.subr.bf16.mxu0 0
        %4792 = vmatpush1.bf16.msra.mxu0 0
        %4793 = vmatprep.subr.bf16.mxu0 0
        %4794 = vmatpush1.bf16.msra.mxu0 0
        %4795 = vmatprep.subr.bf16.mxu0 0
        %4796 = vmatpush1.bf16.msra.mxu0 0
        %4797 = vmatprep.subr.bf16.mxu0 0
        %4798 = vmatpush1.bf16.msra.mxu0 0
        %4799 = vmatprep.subr.bf16.mxu0 0
        %4800 = vmatpush1.bf16.msra.mxu0 0
        %4801 = vmatprep.subr.bf16.mxu0 0
        %4802 = vmatpush1.bf16.msra.mxu0 0
        %4803 = vmatprep.subr.bf16.mxu0 0
        %4804 = vmatpush1.bf16.msra.mxu0 0
        %4805 = vmatprep.subr.bf16.mxu0 0
        %4806 = vmatpush1.bf16.msra.mxu0 0
        %4807 = vmatprep.subr.bf16.mxu0 0
        %4808 = vmatpush1.bf16.msra.mxu0 0
        %4809 = vmatprep.subr.bf16.mxu0 0
        %4810 = vmatpush1.bf16.msra.mxu0 0
        %4811 = vmatprep.subr.bf16.mxu0 0
        %4812 = vmatpush1.bf16.msra.mxu0 0
        %4813 = vmatprep.mubr.bf16.mxu0 0
        %4814 = vmatmul.mubr.bf16.gmra.mrb[0].mxu0 %v4770
        %v4815 = vpop.f32.mrb[0].mxu0
        %v4816 = vadd.f32 0.0, %v4815
        %v4817 = vpop.f32.mrb[0].mxu0
        %v4818 = vpop.f32.mrb[0].mxu0
        %v4819 = vadd.f32 0.0, %v4818
        %v4820 = vpop.f32.mrb[0].mxu0
        %4821 = vmatprep.mubr.bf16.mxu0 0
        %4822 = vmatmul.mubr.bf16.gmra.mrb[0].mxu0 %v4773
        %v4823 = vpop.f32.mrb[0].mxu0
        %v4824 = vadd.f32 0.0, %v4823
        %v4825 = vpop.f32.mrb[0].mxu0
        %v4826 = vpop.f32.mrb[0].mxu0
        %v4827 = vadd.f32 0.0, %v4826
        %v4828 = vpop.f32.mrb[0].mxu0
        %4829 = vmatprep.mubr.bf16.mxu0 0
        %4830 = vmatmul.mubr.bf16.gmra.mrb[0].mxu0 %v4776
        %v4831 = vpop.f32.mrb[0].mxu0
        %v4832 = vadd.f32 0.0, %v4831
        %v4833 = vpop.f32.mrb[0].mxu0
        %v4834 = vpop.f32.mrb[0].mxu0
        %v4835 = vadd.f32 0.0, %v4834
        %v4836 = vpop.f32.mrb[0].mxu0
        %4837 = vmatprep.mubr.bf16.mxu0 0
        %4838 = vmatmul.mubr.bf16.gmra.mrb[0].mxu0 %v4779
        %v4839 = vpop.f32.mrb[0].mxu0
        %v4840 = vadd.f32 0.0, %v4839
        %v4841 = vpop.f32.mrb[0].mxu0
        %v4842 = vpop.f32.mrb[0].mxu0
        %v4843 = vadd.f32 0.0, %v4842
        %v4844 = vpop.f32.mrb[0].mxu0
        %4845 = vdwg.mxu0
        %v4846 = vpack.c.bf16 %v4819, %v4816
        %v4847 = vpack.c.bf16 %v4827, %v4824
        %v4848 = vpack.c.bf16 %v4835, %v4832
        %v4849 = vpack.c.bf16 %v4843, %v4840
        %v4850 = vld [vmem:[#allocation11] sm:$0xf]
        %v4851 = vld [vmem:[#allocation11 + $0x4] sm:$0xf]
        %v4852 = vld [vmem:[#allocation11 + $0x8] sm:$0xf]
        %v4853 = vld [vmem:[#allocation11 + $0xc] sm:$0xf]
        %v4854 = vld [vmem:[#allocation11 + $0x10] sm:$0xf]
        %v4855 = vld [vmem:[#allocation11 + $0x14] sm:$0xf]
        %v4856 = vld [vmem:[#allocation11 + $0x18] sm:$0xf]
        %v4857 = vld [vmem:[#allocation11 + $0x1c] sm:$0xf]
        %s4858 = scalar_lea.vmem [#allocation10], 32
        %v4859 = vld [vmem:[%s4858] sm:$0xf]
        %v4860 = vld [vmem:[%s4858 + $0x4] sm:$0xf]
        %v4861 = vld [vmem:[%s4858 + $0x8] sm:$0xf]
        %v4862 = vld [vmem:[%s4858 + $0xc] sm:$0xf]
        %v4863 = vld [vmem:[%s4858 + $0x10] sm:$0xf]
        %v4864 = vld [vmem:[%s4858 + $0x14] sm:$0xf]
        %v4865 = vld [vmem:[%s4858 + $0x18] sm:$0xf]
        %v4866 = vld [vmem:[%s4858 + $0x1c] sm:$0xf]
        %v4875 = vunpack.c.l.b16 %v4859
        %v4876 = vunpack.c.l.b16 %v4860
        %v4877 = vunpack.c.l.b16 %v4861
        %v4878 = vunpack.c.l.b16 %v4862
        %v4879 = vunpack.c.l.b16 %v4863
        %v4880 = vunpack.c.l.b16 %v4864
        %v4881 = vunpack.c.l.b16 %v4865
        %v4882 = vunpack.c.l.b16 %v4866
        %v4883 = vpack.c.b16 %v4876, %v4875
        %v4884 = vpack.c.b16 %v4878, %v4877
        %v4885 = vpack.c.b16 %v4880, %v4879
        %v4886 = vpack.c.b16 %v4882, %v4881
        %v4888 = vsel %vm2707, %v4883, 0
        %v4891 = vsel %vm2707, %v4884, 0
        %v4894 = vsel %vm2707, %v4885, 0
        %v4897 = vsel %vm2707, %v4886, 0
        %4899 = vmatprep.subr.bf16.mxu0 0
        %4900 = vmatpush1.bf16.msra.mxu0 %v4737
        %4901 = vmatprep.subr.bf16.mxu0 0
        %4902 = vmatpush1.bf16.msra.mxu0 %v4738
        %4903 = vmatprep.subr.bf16.mxu0 0
        %4904 = vmatpush1.bf16.msra.mxu0 %v4739
        %4905 = vmatprep.subr.bf16.mxu0 0
        %4906 = vmatpush1.bf16.msra.mxu0 %v4740
        %4907 = vmatprep.subr.bf16.mxu0 0
        %4908 = vmatpush1.bf16.msra.mxu0 0
        %4909 = vmatprep.subr.bf16.mxu0 0
        %4910 = vmatpush1.bf16.msra.mxu0 0
        %4911 = vmatprep.subr.bf16.mxu0 0
        %4912 = vmatpush1.bf16.msra.mxu0 0
        %4913 = vmatprep.subr.bf16.mxu0 0
        %4914 = vmatpush1.bf16.msra.mxu0 0
        %4915 = vmatprep.subr.bf16.mxu0 0
        %4916 = vmatpush1.bf16.msra.mxu0 0
        %4917 = vmatprep.subr.bf16.mxu0 0
        %4918 = vmatpush1.bf16.msra.mxu0 0
        %4919 = vmatprep.subr.bf16.mxu0 0
        %4920 = vmatpush1.bf16.msra.mxu0 0
        %4921 = vmatprep.subr.bf16.mxu0 0
        %4922 = vmatpush1.bf16.msra.mxu0 0
        %4923 = vmatprep.subr.bf16.mxu0 0
        %4924 = vmatpush1.bf16.msra.mxu0 0
        %4925 = vmatprep.subr.bf16.mxu0 0
        %4926 = vmatpush1.bf16.msra.mxu0 0
        %4927 = vmatprep.subr.bf16.mxu0 0
        %4928 = vmatpush1.bf16.msra.mxu0 0
        %4929 = vmatprep.subr.bf16.mxu0 0
        %4930 = vmatpush1.bf16.msra.mxu0 0
        %4931 = vmatprep.mubr.bf16.mxu0 0
        %4932 = vmatmul.mubr.bf16.gmra.mrb[0].mxu0 %v4888
        %v4933 = vpop.f32.mrb[0].mxu0
        %v4934 = vadd.f32 0.0, %v4933
        %v4935 = vpop.f32.mrb[0].mxu0
        %v4936 = vpop.f32.mrb[0].mxu0
        %v4937 = vadd.f32 0.0, %v4936
        %v4938 = vpop.f32.mrb[0].mxu0
        %4939 = vmatprep.mubr.bf16.mxu0 0
        %4940 = vmatmul.mubr.bf16.gmra.mrb[0].mxu0 %v4891
        %v4941 = vpop.f32.mrb[0].mxu0
        %v4942 = vadd.f32 0.0, %v4941
        %v4943 = vpop.f32.mrb[0].mxu0
        %v4944 = vpop.f32.mrb[0].mxu0
        %v4945 = vadd.f32 0.0, %v4944
        %v4946 = vpop.f32.mrb[0].mxu0
        %4947 = vmatprep.mubr.bf16.mxu0 0
        %4948 = vmatmul.mubr.bf16.gmra.mrb[0].mxu0 %v4894
        %v4949 = vpop.f32.mrb[0].mxu0
        %v4950 = vadd.f32 0.0, %v4949
        %v4951 = vpop.f32.mrb[0].mxu0
        %v4952 = vpop.f32.mrb[0].mxu0
        %v4953 = vadd.f32 0.0, %v4952
        %v4954 = vpop.f32.mrb[0].mxu0
        %4955 = vmatprep.mubr.bf16.mxu0 0
        %4956 = vmatmul.mubr.bf16.gmra.mrb[0].mxu0 %v4897
        %v4957 = vpop.f32.mrb[0].mxu0
        %v4958 = vadd.f32 0.0, %v4957
        %v4959 = vpop.f32.mrb[0].mxu0
        %v4960 = vpop.f32.mrb[0].mxu0
        %v4961 = vadd.f32 0.0, %v4960
        %v4962 = vpop.f32.mrb[0].mxu0
        %4963 = vdwg.mxu0
        %v4964 = vpack.c.bf16 %v4937, %v4934
        %v4965 = vpack.c.bf16 %v4945, %v4942
        %v4966 = vpack.c.bf16 %v4953, %v4950
        %v4967 = vpack.c.bf16 %v4961, %v4958
        %s4968 = scalar_lea.vmem [#allocation11], 32
        %v4969 = vld [vmem:[%s4968] sm:$0xf]
        %v4970 = vld [vmem:[%s4968 + $0x4] sm:$0xf]
        %v4971 = vld [vmem:[%s4968 + $0x8] sm:$0xf]
        %v4972 = vld [vmem:[%s4968 + $0xc] sm:$0xf]
        %v4973 = vld [vmem:[%s4968 + $0x10] sm:$0xf]
        %v4974 = vld [vmem:[%s4968 + $0x14] sm:$0xf]
        %v4975 = vld [vmem:[%s4968 + $0x18] sm:$0xf]
        %v4976 = vld [vmem:[%s4968 + $0x1c] sm:$0xf]
        %v4985 = vunpack.c.l.b16 %v4969
        %v4986 = vunpack.c.l.b16 %v4970
        %v4987 = vunpack.c.l.b16 %v4971
        %v4988 = vunpack.c.l.b16 %v4972
        %v4989 = vunpack.c.l.b16 %v4973
        %v4990 = vunpack.c.l.b16 %v4974
        %v4991 = vunpack.c.l.b16 %v4975
        %v4992 = vunpack.c.l.b16 %v4976
        %v4993 = vpack.c.b16 %v4986, %v4985
        %v4994 = vpack.c.b16 %v4988, %v4987
        %v4995 = vpack.c.b16 %v4990, %v4989
        %v4996 = vpack.c.b16 %v4992, %v4991
        %v5002 = vsel %vm2707, %v4964, 0
        %v5005 = vsel %vm2707, %v4965, 0
        %v5008 = vsel %vm2707, %v4966, 0
        %v5011 = vsel %vm2707, %v4967, 0
        %5013 = vmatprep.subr.bf16.mxu0 0
        %5014 = vmatpush1.bf16.msra.mxu0 %v4993
        %5015 = vmatprep.subr.bf16.mxu0 0
        %5016 = vmatpush1.bf16.msra.mxu0 %v4994
        %5017 = vmatprep.subr.bf16.mxu0 0
        %5018 = vmatpush1.bf16.msra.mxu0 %v4995
        %5019 = vmatprep.subr.bf16.mxu0 0
        %5020 = vmatpush1.bf16.msra.mxu0 %v4996
        %5021 = vmatprep.subr.bf16.mxu0 0
        %5022 = vmatpush1.bf16.msra.mxu0 0
        %5023 = vmatprep.subr.bf16.mxu0 0
        %5024 = vmatpush1.bf16.msra.mxu0 0
        %5025 = vmatprep.subr.bf16.mxu0 0
        %5026 = vmatpush1.bf16.msra.mxu0 0
        %5027 = vmatprep.subr.bf16.mxu0 0
        %5028 = vmatpush1.bf16.msra.mxu0 0
        %5029 = vmatprep.subr.bf16.mxu0 0
        %5030 = vmatpush1.bf16.msra.mxu0 0
        %5031 = vmatprep.subr.bf16.mxu0 0
        %5032 = vmatpush1.bf16.msra.mxu0 0
        %5033 = vmatprep.subr.bf16.mxu0 0
        %5034 = vmatpush1.bf16.msra.mxu0 0
        %5035 = vmatprep.subr.bf16.mxu0 0
        %5036 = vmatpush1.bf16.msra.mxu0 0
        %5037 = vmatprep.subr.bf16.mxu0 0
        %5038 = vmatpush1.bf16.msra.mxu0 0
        %5039 = vmatprep.subr.bf16.mxu0 0
        %5040 = vmatpush1.bf16.msra.mxu0 0
        %5041 = vmatprep.subr.bf16.mxu0 0
        %5042 = vmatpush1.bf16.msra.mxu0 0
        %5043 = vmatprep.subr.bf16.mxu0 0
        %5044 = vmatpush1.bf16.msra.mxu0 0
        %5045 = vmatprep.mubr.bf16.mxu0 0
        %5046 = vmatmul.mubr.bf16.gmra.mrb[0].mxu0 %v5002
        %v5047 = vpop.f32.mrb[0].mxu0
        %v5048 = vadd.f32 0.0, %v5047
        %v5049 = vpop.f32.mrb[0].mxu0
        %v5050 = vpop.f32.mrb[0].mxu0
        %v5051 = vadd.f32 0.0, %v5050
        %v5052 = vpop.f32.mrb[0].mxu0
        %5053 = vmatprep.mubr.bf16.mxu0 0
        %5054 = vmatmul.mubr.bf16.gmra.mrb[0].mxu0 %v5005
        %v5055 = vpop.f32.mrb[0].mxu0
        %v5056 = vadd.f32 0.0, %v5055
        %v5057 = vpop.f32.mrb[0].mxu0
        %v5058 = vpop.f32.mrb[0].mxu0
        %v5059 = vadd.f32 0.0, %v5058
        %v5060 = vpop.f32.mrb[0].mxu0
        %5061 = vmatprep.mubr.bf16.mxu0 0
        %5062 = vmatmul.mubr.bf16.gmra.mrb[0].mxu0 %v5008
        %v5063 = vpop.f32.mrb[0].mxu0
        %v5064 = vadd.f32 0.0, %v5063
        %v5065 = vpop.f32.mrb[0].mxu0
        %v5066 = vpop.f32.mrb[0].mxu0
        %v5067 = vadd.f32 0.0, %v5066
        %v5068 = vpop.f32.mrb[0].mxu0
        %5069 = vmatprep.mubr.bf16.mxu0 0
        %5070 = vmatmul.mubr.bf16.gmra.mrb[0].mxu0 %v5011
        %v5071 = vpop.f32.mrb[0].mxu0
        %v5072 = vadd.f32 0.0, %v5071
        %v5073 = vpop.f32.mrb[0].mxu0
        %v5074 = vpop.f32.mrb[0].mxu0
        %v5075 = vadd.f32 0.0, %v5074
        %v5076 = vpop.f32.mrb[0].mxu0
        %5077 = vdwg.mxu0
        %v5086 = vunpack.c.l.b16 %v4850
        %v5087 = vunpack.c.l.b16 %v4851
        %v5088 = vunpack.c.l.b16 %v4852
        %v5089 = vunpack.c.l.b16 %v4853
        %v5090 = vunpack.c.l.b16 %v4854
        %v5091 = vunpack.c.l.b16 %v4855
        %v5092 = vunpack.c.l.b16 %v4856
        %v5093 = vunpack.c.l.b16 %v4857
        %v5094 = vpack.c.b16 %v5087, %v5086
        %v5095 = vpack.c.b16 %v5089, %v5088
        %v5096 = vpack.c.b16 %v5091, %v5090
        %v5097 = vpack.c.b16 %v5093, %v5092
        %v5103 = vsel %vm2707, %v4846, 0
        %v5106 = vsel %vm2707, %v4847, 0
        %v5109 = vsel %vm2707, %v4848, 0
        %v5112 = vsel %vm2707, %v4849, 0
        %5114 = vmatprep.subr.bf16.mxu0 0
        %5115 = vmatpush1.bf16.msra.mxu0 %v5094
        %5116 = vmatprep.subr.bf16.mxu0 0
        %5117 = vmatpush1.bf16.msra.mxu0 %v5095
        %5118 = vmatprep.subr.bf16.mxu0 0
        %5119 = vmatpush1.bf16.msra.mxu0 %v5096
        %5120 = vmatprep.subr.bf16.mxu0 0
        %5121 = vmatpush1.bf16.msra.mxu0 %v5097
        %5122 = vmatprep.subr.bf16.mxu0 0
        %5123 = vmatpush1.bf16.msra.mxu0 0
        %5124 = vmatprep.subr.bf16.mxu0 0
        %5125 = vmatpush1.bf16.msra.mxu0 0
        %5126 = vmatprep.subr.bf16.mxu0 0
        %5127 = vmatpush1.bf16.msra.mxu0 0
        %5128 = vmatprep.subr.bf16.mxu0 0
        %5129 = vmatpush1.bf16.msra.mxu0 0
        %5130 = vmatprep.subr.bf16.mxu0 0
        %5131 = vmatpush1.bf16.msra.mxu0 0
        %5132 = vmatprep.subr.bf16.mxu0 0
        %5133 = vmatpush1.bf16.msra.mxu0 0
        %5134 = vmatprep.subr.bf16.mxu0 0
        %5135 = vmatpush1.bf16.msra.mxu0 0
        %5136 = vmatprep.subr.bf16.mxu0 0
        %5137 = vmatpush1.bf16.msra.mxu0 0
        %5138 = vmatprep.subr.bf16.mxu0 0
        %5139 = vmatpush1.bf16.msra.mxu0 0
        %5140 = vmatprep.subr.bf16.mxu0 0
        %5141 = vmatpush1.bf16.msra.mxu0 0
        %5142 = vmatprep.subr.bf16.mxu0 0
        %5143 = vmatpush1.bf16.msra.mxu0 0
        %5144 = vmatprep.subr.bf16.mxu0 0
        %5145 = vmatpush1.bf16.msra.mxu0 0
        %5146 = vmatprep.mubr.bf16.mxu0 0
        %5147 = vmatmul.mubr.bf16.gmra.mrb[0].mxu0 %v5103
        %v5148 = vpop.f32.mrb[0].mxu0
        %v5149 = vadd.f32 %v5048, %v5148
        %v5150 = vpop.f32.mrb[0].mxu0
        %v5151 = vpop.f32.mrb[0].mxu0
        %v5152 = vadd.f32 %v5051, %v5151
        %v5153 = vpop.f32.mrb[0].mxu0
        %5154 = vmatprep.mubr.bf16.mxu0 0
        %5155 = vmatmul.mubr.bf16.gmra.mrb[0].mxu0 %v5106
        %v5156 = vpop.f32.mrb[0].mxu0
        %v5157 = vadd.f32 %v5056, %v5156
        %v5158 = vpop.f32.mrb[0].mxu0
        %v5159 = vpop.f32.mrb[0].mxu0
        %v5160 = vadd.f32 %v5059, %v5159
        %v5161 = vpop.f32.mrb[0].mxu0
        %5162 = vmatprep.mubr.bf16.mxu0 0
        %5163 = vmatmul.mubr.bf16.gmra.mrb[0].mxu0 %v5109
        %v5164 = vpop.f32.mrb[0].mxu0
        %v5165 = vadd.f32 %v5064, %v5164
        %v5166 = vpop.f32.mrb[0].mxu0
        %v5167 = vpop.f32.mrb[0].mxu0
        %v5168 = vadd.f32 %v5067, %v5167
        %v5169 = vpop.f32.mrb[0].mxu0
        %5170 = vmatprep.mubr.bf16.mxu0 0
        %5171 = vmatmul.mubr.bf16.gmra.mrb[0].mxu0 %v5112
        %v5172 = vpop.f32.mrb[0].mxu0
        %v5173 = vadd.f32 %v5072, %v5172
        %v5174 = vpop.f32.mrb[0].mxu0
        %v5175 = vpop.f32.mrb[0].mxu0
        %v5176 = vadd.f32 %v5075, %v5175
        %v5177 = vpop.f32.mrb[0].mxu0
        %5178 = vdwg.mxu0
        %s5179 = scalar_lea.vmem [#allocation10], 64
        %v5180 = vld [vmem:[%s5179] sm:$0xf]
        %v5181 = vld [vmem:[%s5179 + $0x4] sm:$0xf]
        %v5182 = vld [vmem:[%s5179 + $0x8] sm:$0xf]
        %v5183 = vld [vmem:[%s5179 + $0xc] sm:$0xf]
        %v5184 = vld [vmem:[%s5179 + $0x10] sm:$0xf]
        %v5185 = vld [vmem:[%s5179 + $0x14] sm:$0xf]
        %v5186 = vld [vmem:[%s5179 + $0x18] sm:$0xf]
        %v5187 = vld [vmem:[%s5179 + $0x1c] sm:$0xf]
        %v5196 = vunpack.c.l.b16 %v5180
        %v5197 = vunpack.c.l.b16 %v5181
        %v5198 = vunpack.c.l.b16 %v5182
        %v5199 = vunpack.c.l.b16 %v5183
        %v5200 = vunpack.c.l.b16 %v5184
        %v5201 = vunpack.c.l.b16 %v5185
        %v5202 = vunpack.c.l.b16 %v5186
        %v5203 = vunpack.c.l.b16 %v5187
        %v5204 = vpack.c.b16 %v5197, %v5196
        %v5205 = vpack.c.b16 %v5199, %v5198
        %v5206 = vpack.c.b16 %v5201, %v5200
        %v5207 = vpack.c.b16 %v5203, %v5202
        %v5209 = vsel %vm2707, %v5204, 0
        %v5212 = vsel %vm2707, %v5205, 0
        %v5215 = vsel %vm2707, %v5206, 0
        %v5218 = vsel %vm2707, %v5207, 0
        %5220 = vmatprep.subr.bf16.mxu0 0
        %5221 = vmatpush1.bf16.msra.mxu0 %v4737
        %5222 = vmatprep.subr.bf16.mxu0 0
        %5223 = vmatpush1.bf16.msra.mxu0 %v4738
        %5224 = vmatprep.subr.bf16.mxu0 0
        %5225 = vmatpush1.bf16.msra.mxu0 %v4739
        %5226 = vmatprep.subr.bf16.mxu0 0
        %5227 = vmatpush1.bf16.msra.mxu0 %v4740
        %5228 = vmatprep.subr.bf16.mxu0 0
        %5229 = vmatpush1.bf16.msra.mxu0 0
        %5230 = vmatprep.subr.bf16.mxu0 0
        %5231 = vmatpush1.bf16.msra.mxu0 0
        %5232 = vmatprep.subr.bf16.mxu0 0
        %5233 = vmatpush1.bf16.msra.mxu0 0
        %5234 = vmatprep.subr.bf16.mxu0 0
        %5235 = vmatpush1.bf16.msra.mxu0 0
        %5236 = vmatprep.subr.bf16.mxu0 0
        %5237 = vmatpush1.bf16.msra.mxu0 0
        %5238 = vmatprep.subr.bf16.mxu0 0
        %5239 = vmatpush1.bf16.msra.mxu0 0
        %5240 = vmatprep.subr.bf16.mxu0 0
        %5241 = vmatpush1.bf16.msra.mxu0 0
        %5242 = vmatprep.subr.bf16.mxu0 0
        %5243 = vmatpush1.bf16.msra.mxu0 0
        %5244 = vmatprep.subr.bf16.mxu0 0
        %5245 = vmatpush1.bf16.msra.mxu0 0
        %5246 = vmatprep.subr.bf16.mxu0 0
        %5247 = vmatpush1.bf16.msra.mxu0 0
        %5248 = vmatprep.subr.bf16.mxu0 0
        %5249 = vmatpush1.bf16.msra.mxu0 0
        %5250 = vmatprep.subr.bf16.mxu0 0
        %5251 = vmatpush1.bf16.msra.mxu0 0
        %5252 = vmatprep.mubr.bf16.mxu0 0
        %5253 = vmatmul.mubr.bf16.gmra.mrb[0].mxu0 %v5209
        %v5254 = vpop.f32.mrb[0].mxu0
        %v5255 = vadd.f32 0.0, %v5254
        %v5256 = vpop.f32.mrb[0].mxu0
        %v5257 = vpop.f32.mrb[0].mxu0
        %v5258 = vadd.f32 0.0, %v5257
        %v5259 = vpop.f32.mrb[0].mxu0
        %5260 = vmatprep.mubr.bf16.mxu0 0
        %5261 = vmatmul.mubr.bf16.gmra.mrb[0].mxu0 %v5212
        %v5262 = vpop.f32.mrb[0].mxu0
        %v5263 = vadd.f32 0.0, %v5262
        %v5264 = vpop.f32.mrb[0].mxu0
        %v5265 = vpop.f32.mrb[0].mxu0
        %v5266 = vadd.f32 0.0, %v5265
        %v5267 = vpop.f32.mrb[0].mxu0
        %5268 = vmatprep.mubr.bf16.mxu0 0
        %5269 = vmatmul.mubr.bf16.gmra.mrb[0].mxu0 %v5215
        %v5270 = vpop.f32.mrb[0].mxu0
        %v5271 = vadd.f32 0.0, %v5270
        %v5272 = vpop.f32.mrb[0].mxu0
        %v5273 = vpop.f32.mrb[0].mxu0
        %v5274 = vadd.f32 0.0, %v5273
        %v5275 = vpop.f32.mrb[0].mxu0
        %5276 = vmatprep.mubr.bf16.mxu0 0
        %5277 = vmatmul.mubr.bf16.gmra.mrb[0].mxu0 %v5218
        %v5278 = vpop.f32.mrb[0].mxu0
        %v5279 = vadd.f32 0.0, %v5278
        %v5280 = vpop.f32.mrb[0].mxu0
        %v5281 = vpop.f32.mrb[0].mxu0
        %v5282 = vadd.f32 0.0, %v5281
        %v5283 = vpop.f32.mrb[0].mxu0
        %5284 = vdwg.mxu0
        %v5285 = vpack.c.bf16 %v5258, %v5255
        %v5286 = vpack.c.bf16 %v5266, %v5263
        %v5287 = vpack.c.bf16 %v5274, %v5271
        %v5288 = vpack.c.bf16 %v5282, %v5279
        %s5289 = scalar_lea.vmem [#allocation11], 64
        %v5290 = vld [vmem:[%s5289] sm:$0xf]
        %v5291 = vld [vmem:[%s5289 + $0x4] sm:$0xf]
        %v5292 = vld [vmem:[%s5289 + $0x8] sm:$0xf]
        %v5293 = vld [vmem:[%s5289 + $0xc] sm:$0xf]
        %v5294 = vld [vmem:[%s5289 + $0x10] sm:$0xf]
        %v5295 = vld [vmem:[%s5289 + $0x14] sm:$0xf]
        %v5296 = vld [vmem:[%s5289 + $0x18] sm:$0xf]
        %v5297 = vld [vmem:[%s5289 + $0x1c] sm:$0xf]
        %v5306 = vunpack.c.l.b16 %v5290
        %v5307 = vunpack.c.l.b16 %v5291
        %v5308 = vunpack.c.l.b16 %v5292
        %v5309 = vunpack.c.l.b16 %v5293
        %v5310 = vunpack.c.l.b16 %v5294
        %v5311 = vunpack.c.l.b16 %v5295
        %v5312 = vunpack.c.l.b16 %v5296
        %v5313 = vunpack.c.l.b16 %v5297
        %v5314 = vpack.c.b16 %v5307, %v5306
        %v5315 = vpack.c.b16 %v5309, %v5308
        %v5316 = vpack.c.b16 %v5311, %v5310
        %v5317 = vpack.c.b16 %v5313, %v5312
        %v5323 = vsel %vm2707, %v5285, 0
        %v5326 = vsel %vm2707, %v5286, 0
        %v5329 = vsel %vm2707, %v5287, 0
        %v5332 = vsel %vm2707, %v5288, 0
        %5334 = vmatprep.subr.bf16.mxu0 0
        %5335 = vmatpush1.bf16.msra.mxu0 %v5314
        %5336 = vmatprep.subr.bf16.mxu0 0
        %5337 = vmatpush1.bf16.msra.mxu0 %v5315
        %5338 = vmatprep.subr.bf16.mxu0 0
        %5339 = vmatpush1.bf16.msra.mxu0 %v5316
        %5340 = vmatprep.subr.bf16.mxu0 0
        %5341 = vmatpush1.bf16.msra.mxu0 %v5317
        %5342 = vmatprep.subr.bf16.mxu0 0
        %5343 = vmatpush1.bf16.msra.mxu0 0
        %5344 = vmatprep.subr.bf16.mxu0 0
        %5345 = vmatpush1.bf16.msra.mxu0 0
        %5346 = vmatprep.subr.bf16.mxu0 0
        %5347 = vmatpush1.bf16.msra.mxu0 0
        %5348 = vmatprep.subr.bf16.mxu0 0
        %5349 = vmatpush1.bf16.msra.mxu0 0
        %5350 = vmatprep.subr.bf16.mxu0 0
        %5351 = vmatpush1.bf16.msra.mxu0 0
        %5352 = vmatprep.subr.bf16.mxu0 0
        %5353 = vmatpush1.bf16.msra.mxu0 0
        %5354 = vmatprep.subr.bf16.mxu0 0
        %5355 = vmatpush1.bf16.msra.mxu0 0
        %5356 = vmatprep.subr.bf16.mxu0 0
        %5357 = vmatpush1.bf16.msra.mxu0 0
        %5358 = vmatprep.subr.bf16.mxu0 0
        %5359 = vmatpush1.bf16.msra.mxu0 0
        %5360 = vmatprep.subr.bf16.mxu0 0
        %5361 = vmatpush1.bf16.msra.mxu0 0
        %5362 = vmatprep.subr.bf16.mxu0 0
        %5363 = vmatpush1.bf16.msra.mxu0 0
        %5364 = vmatprep.subr.bf16.mxu0 0
        %5365 = vmatpush1.bf16.msra.mxu0 0
        %5366 = vmatprep.mubr.bf16.mxu0 0
        %5367 = vmatmul.mubr.bf16.gmra.mrb[0].mxu0 %v5323
        %v5368 = vpop.f32.mrb[0].mxu0
        %v5369 = vadd.f32 0.0, %v5368
        %v5370 = vpop.f32.mrb[0].mxu0
        %v5371 = vpop.f32.mrb[0].mxu0
        %v5372 = vadd.f32 0.0, %v5371
        %v5373 = vpop.f32.mrb[0].mxu0
        %5374 = vmatprep.mubr.bf16.mxu0 0
        %5375 = vmatmul.mubr.bf16.gmra.mrb[0].mxu0 %v5326
        %v5376 = vpop.f32.mrb[0].mxu0
        %v5377 = vadd.f32 0.0, %v5376
        %v5378 = vpop.f32.mrb[0].mxu0
        %v5379 = vpop.f32.mrb[0].mxu0
        %v5380 = vadd.f32 0.0, %v5379
        %v5381 = vpop.f32.mrb[0].mxu0
        %5382 = vmatprep.mubr.bf16.mxu0 0
        %5383 = vmatmul.mubr.bf16.gmra.mrb[0].mxu0 %v5329
        %v5384 = vpop.f32.mrb[0].mxu0
        %v5385 = vadd.f32 0.0, %v5384
        %v5386 = vpop.f32.mrb[0].mxu0
        %v5387 = vpop.f32.mrb[0].mxu0
        %v5388 = vadd.f32 0.0, %v5387
        %v5389 = vpop.f32.mrb[0].mxu0
        %5390 = vmatprep.mubr.bf16.mxu0 0
        %5391 = vmatmul.mubr.bf16.gmra.mrb[0].mxu0 %v5332
        %v5392 = vpop.f32.mrb[0].mxu0
        %v5393 = vadd.f32 0.0, %v5392
        %v5394 = vpop.f32.mrb[0].mxu0
        %v5395 = vpop.f32.mrb[0].mxu0
        %v5396 = vadd.f32 0.0, %v5395
        %v5397 = vpop.f32.mrb[0].mxu0
        %5398 = vdwg.mxu0
        %v5399 = vadd.f32 %v5149, %v5369
        %v5400 = vadd.f32 %v5152, %v5372
        %v5401 = vadd.f32 %v5157, %v5377
        %v5402 = vadd.f32 %v5160, %v5380
        %v5403 = vadd.f32 %v5165, %v5385
        %v5404 = vadd.f32 %v5168, %v5388
        %v5405 = vadd.f32 %v5173, %v5393
        %v5406 = vadd.f32 %v5176, %v5396
        %s5407 = scalar_lea.vmem [#allocation10], 96
        %v5408 = vld [vmem:[%s5407] sm:$0xf]
        %v5409 = vld [vmem:[%s5407 + $0x4] sm:$0xf]
        %v5410 = vld [vmem:[%s5407 + $0x8] sm:$0xf]
        %v5411 = vld [vmem:[%s5407 + $0xc] sm:$0xf]
        %v5412 = vld [vmem:[%s5407 + $0x10] sm:$0xf]
        %v5413 = vld [vmem:[%s5407 + $0x14] sm:$0xf]
        %v5414 = vld [vmem:[%s5407 + $0x18] sm:$0xf]
        %v5415 = vld [vmem:[%s5407 + $0x1c] sm:$0xf]
        %v5424 = vunpack.c.l.b16 %v5408
        %v5425 = vunpack.c.l.b16 %v5409
        %v5426 = vunpack.c.l.b16 %v5410
        %v5427 = vunpack.c.l.b16 %v5411
        %v5428 = vunpack.c.l.b16 %v5412
        %v5429 = vunpack.c.l.b16 %v5413
        %v5430 = vunpack.c.l.b16 %v5414
        %v5431 = vunpack.c.l.b16 %v5415
        %v5432 = vpack.c.b16 %v5425, %v5424
        %v5433 = vpack.c.b16 %v5427, %v5426
        %v5434 = vpack.c.b16 %v5429, %v5428
        %v5435 = vpack.c.b16 %v5431, %v5430
        %v5437 = vsel %vm2707, %v5432, 0
        %v5440 = vsel %vm2707, %v5433, 0
        %v5443 = vsel %vm2707, %v5434, 0
        %v5446 = vsel %vm2707, %v5435, 0
        %5448 = vmatprep.subr.bf16.mxu0 0
        %5449 = vmatpush1.bf16.msra.mxu0 %v4737
        %5450 = vmatprep.subr.bf16.mxu0 0
        %5451 = vmatpush1.bf16.msra.mxu0 %v4738
        %5452 = vmatprep.subr.bf16.mxu0 0
        %5453 = vmatpush1.bf16.msra.mxu0 %v4739
        %5454 = vmatprep.subr.bf16.mxu0 0
        %5455 = vmatpush1.bf16.msra.mxu0 %v4740
        %5456 = vmatprep.subr.bf16.mxu0 0
        %5457 = vmatpush1.bf16.msra.mxu0 0
        %5458 = vmatprep.subr.bf16.mxu0 0
        %5459 = vmatpush1.bf16.msra.mxu0 0
        %5460 = vmatprep.subr.bf16.mxu0 0
        %5461 = vmatpush1.bf16.msra.mxu0 0
        %5462 = vmatprep.subr.bf16.mxu0 0
        %5463 = vmatpush1.bf16.msra.mxu0 0
        %5464 = vmatprep.subr.bf16.mxu0 0
        %5465 = vmatpush1.bf16.msra.mxu0 0
        %5466 = vmatprep.subr.bf16.mxu0 0
        %5467 = vmatpush1.bf16.msra.mxu0 0
        %5468 = vmatprep.subr.bf16.mxu0 0
        %5469 = vmatpush1.bf16.msra.mxu0 0
        %5470 = vmatprep.subr.bf16.mxu0 0
        %5471 = vmatpush1.bf16.msra.mxu0 0
        %5472 = vmatprep.subr.bf16.mxu0 0
        %5473 = vmatpush1.bf16.msra.mxu0 0
        %5474 = vmatprep.subr.bf16.mxu0 0
        %5475 = vmatpush1.bf16.msra.mxu0 0
        %5476 = vmatprep.subr.bf16.mxu0 0
        %5477 = vmatpush1.bf16.msra.mxu0 0
        %5478 = vmatprep.subr.bf16.mxu0 0
        %5479 = vmatpush1.bf16.msra.mxu0 0
        %5480 = vmatprep.mubr.bf16.mxu0 0
        %5481 = vmatmul.mubr.bf16.gmra.mrb[0].mxu0 %v5437
        %v5482 = vpop.f32.mrb[0].mxu0
        %v5483 = vadd.f32 0.0, %v5482
        %v5484 = vpop.f32.mrb[0].mxu0
        %v5485 = vpop.f32.mrb[0].mxu0
        %v5486 = vadd.f32 0.0, %v5485
        %v5487 = vpop.f32.mrb[0].mxu0
        %5488 = vmatprep.mubr.bf16.mxu0 0
        %5489 = vmatmul.mubr.bf16.gmra.mrb[0].mxu0 %v5440
        %v5490 = vpop.f32.mrb[0].mxu0
        %v5491 = vadd.f32 0.0, %v5490
        %v5492 = vpop.f32.mrb[0].mxu0
        %v5493 = vpop.f32.mrb[0].mxu0
        %v5494 = vadd.f32 0.0, %v5493
        %v5495 = vpop.f32.mrb[0].mxu0
        %5496 = vmatprep.mubr.bf16.mxu0 0
        %5497 = vmatmul.mubr.bf16.gmra.mrb[0].mxu0 %v5443
        %v5498 = vpop.f32.mrb[0].mxu0
        %v5499 = vadd.f32 0.0, %v5498
        %v5500 = vpop.f32.mrb[0].mxu0
        %v5501 = vpop.f32.mrb[0].mxu0
        %v5502 = vadd.f32 0.0, %v5501
        %v5503 = vpop.f32.mrb[0].mxu0
        %5504 = vmatprep.mubr.bf16.mxu0 0
        %5505 = vmatmul.mubr.bf16.gmra.mrb[0].mxu0 %v5446
        %v5506 = vpop.f32.mrb[0].mxu0
        %v5507 = vadd.f32 0.0, %v5506
        %v5508 = vpop.f32.mrb[0].mxu0
        %v5509 = vpop.f32.mrb[0].mxu0
        %v5510 = vadd.f32 0.0, %v5509
        %v5511 = vpop.f32.mrb[0].mxu0
        %5512 = vdwg.mxu0
        %v5513 = vpack.c.bf16 %v5486, %v5483
        %v5514 = vpack.c.bf16 %v5494, %v5491
        %v5515 = vpack.c.bf16 %v5502, %v5499
        %v5516 = vpack.c.bf16 %v5510, %v5507
        %s5517 = scalar_lea.vmem [#allocation11], 96
        %v5518 = vld [vmem:[%s5517] sm:$0xf]
        %v5519 = vld [vmem:[%s5517 + $0x4] sm:$0xf]
        %v5520 = vld [vmem:[%s5517 + $0x8] sm:$0xf]
        %v5521 = vld [vmem:[%s5517 + $0xc] sm:$0xf]
        %v5522 = vld [vmem:[%s5517 + $0x10] sm:$0xf]
        %v5523 = vld [vmem:[%s5517 + $0x14] sm:$0xf]
        %v5524 = vld [vmem:[%s5517 + $0x18] sm:$0xf]
        %v5525 = vld [vmem:[%s5517 + $0x1c] sm:$0xf]
        %v5534 = vunpack.c.l.b16 %v5518
        %v5535 = vunpack.c.l.b16 %v5519
        %v5536 = vunpack.c.l.b16 %v5520
        %v5537 = vunpack.c.l.b16 %v5521
        %v5538 = vunpack.c.l.b16 %v5522
        %v5539 = vunpack.c.l.b16 %v5523
        %v5540 = vunpack.c.l.b16 %v5524
        %v5541 = vunpack.c.l.b16 %v5525
        %v5542 = vpack.c.b16 %v5535, %v5534
        %v5543 = vpack.c.b16 %v5537, %v5536
        %v5544 = vpack.c.b16 %v5539, %v5538
        %v5545 = vpack.c.b16 %v5541, %v5540
        %v5551 = vsel %vm2707, %v5513, 0
        %v5554 = vsel %vm2707, %v5514, 0
        %v5557 = vsel %vm2707, %v5515, 0
        %v5560 = vsel %vm2707, %v5516, 0
        %5562 = vmatprep.subr.bf16.mxu0 0
        %5563 = vmatpush1.bf16.msra.mxu0 %v5542
        %5564 = vmatprep.subr.bf16.mxu0 0
        %5565 = vmatpush1.bf16.msra.mxu0 %v5543
        %5566 = vmatprep.subr.bf16.mxu0 0
        %5567 = vmatpush1.bf16.msra.mxu0 %v5544
        %5568 = vmatprep.subr.bf16.mxu0 0
        %5569 = vmatpush1.bf16.msra.mxu0 %v5545
        %5570 = vmatprep.subr.bf16.mxu0 0
        %5571 = vmatpush1.bf16.msra.mxu0 0
        %5572 = vmatprep.subr.bf16.mxu0 0
        %5573 = vmatpush1.bf16.msra.mxu0 0
        %5574 = vmatprep.subr.bf16.mxu0 0
        %5575 = vmatpush1.bf16.msra.mxu0 0
        %5576 = vmatprep.subr.bf16.mxu0 0
        %5577 = vmatpush1.bf16.msra.mxu0 0
        %5578 = vmatprep.subr.bf16.mxu0 0
        %5579 = vmatpush1.bf16.msra.mxu0 0
        %5580 = vmatprep.subr.bf16.mxu0 0
        %5581 = vmatpush1.bf16.msra.mxu0 0
        %5582 = vmatprep.subr.bf16.mxu0 0
        %5583 = vmatpush1.bf16.msra.mxu0 0
        %5584 = vmatprep.subr.bf16.mxu0 0
        %5585 = vmatpush1.bf16.msra.mxu0 0
        %5586 = vmatprep.subr.bf16.mxu0 0
        %5587 = vmatpush1.bf16.msra.mxu0 0
        %5588 = vmatprep.subr.bf16.mxu0 0
        %5589 = vmatpush1.bf16.msra.mxu0 0
        %5590 = vmatprep.subr.bf16.mxu0 0
        %5591 = vmatpush1.bf16.msra.mxu0 0
        %5592 = vmatprep.subr.bf16.mxu0 0
        %5593 = vmatpush1.bf16.msra.mxu0 0
        %5594 = vmatprep.mubr.bf16.mxu0 0
        %5595 = vmatmul.mubr.bf16.gmra.mrb[0].mxu0 %v5551
        %v5596 = vpop.f32.mrb[0].mxu0
        %v5597 = vadd.f32 0.0, %v5596
        %v5598 = vpop.f32.mrb[0].mxu0
        %v5599 = vpop.f32.mrb[0].mxu0
        %v5600 = vadd.f32 0.0, %v5599
        %v5601 = vpop.f32.mrb[0].mxu0
        %5602 = vmatprep.mubr.bf16.mxu0 0
        %5603 = vmatmul.mubr.bf16.gmra.mrb[0].mxu0 %v5554
        %v5604 = vpop.f32.mrb[0].mxu0
        %v5605 = vadd.f32 0.0, %v5604
        %v5606 = vpop.f32.mrb[0].mxu0
        %v5607 = vpop.f32.mrb[0].mxu0
        %v5608 = vadd.f32 0.0, %v5607
        %v5609 = vpop.f32.mrb[0].mxu0
        %5610 = vmatprep.mubr.bf16.mxu0 0
        %5611 = vmatmul.mubr.bf16.gmra.mrb[0].mxu0 %v5557
        %v5612 = vpop.f32.mrb[0].mxu0
        %v5613 = vadd.f32 0.0, %v5612
        %v5614 = vpop.f32.mrb[0].mxu0
        %v5615 = vpop.f32.mrb[0].mxu0
        %v5616 = vadd.f32 0.0, %v5615
        %v5617 = vpop.f32.mrb[0].mxu0
        %5618 = vmatprep.mubr.bf16.mxu0 0
        %5619 = vmatmul.mubr.bf16.gmra.mrb[0].mxu0 %v5560
        %v5620 = vpop.f32.mrb[0].mxu0
        %v5621 = vadd.f32 0.0, %v5620
        %v5622 = vpop.f32.mrb[0].mxu0
        %v5623 = vpop.f32.mrb[0].mxu0
        %v5624 = vadd.f32 0.0, %v5623
        %v5625 = vpop.f32.mrb[0].mxu0
        %5626 = vdwg.mxu0
        %v5627 = vadd.f32 %v5399, %v5597
        %v5628 = vadd.f32 %v5400, %v5600
        %v5629 = vadd.f32 %v5401, %v5605
        %v5630 = vadd.f32 %v5402, %v5608
        %v5631 = vadd.f32 %v5403, %v5613
        %v5632 = vadd.f32 %v5404, %v5616
        %v5633 = vadd.f32 %v5405, %v5621
        %v5634 = vadd.f32 %v5406, %v5624
        %s5635 = scalar_lea.vmem [#allocation10], 128
        %v5636 = vld [vmem:[%s5635] sm:$0xf]
        %v5637 = vld [vmem:[%s5635 + $0x4] sm:$0xf]
        %v5638 = vld [vmem:[%s5635 + $0x8] sm:$0xf]
        %v5639 = vld [vmem:[%s5635 + $0xc] sm:$0xf]
        %v5640 = vld [vmem:[%s5635 + $0x10] sm:$0xf]
        %v5641 = vld [vmem:[%s5635 + $0x14] sm:$0xf]
        %v5642 = vld [vmem:[%s5635 + $0x18] sm:$0xf]
        %v5643 = vld [vmem:[%s5635 + $0x1c] sm:$0xf]
        %v5652 = vunpack.c.l.b16 %v5636
        %v5653 = vunpack.c.l.b16 %v5637
        %v5654 = vunpack.c.l.b16 %v5638
        %v5655 = vunpack.c.l.b16 %v5639
        %v5656 = vunpack.c.l.b16 %v5640
        %v5657 = vunpack.c.l.b16 %v5641
        %v5658 = vunpack.c.l.b16 %v5642
        %v5659 = vunpack.c.l.b16 %v5643
        %v5660 = vpack.c.b16 %v5653, %v5652
        %v5661 = vpack.c.b16 %v5655, %v5654
        %v5662 = vpack.c.b16 %v5657, %v5656
        %v5663 = vpack.c.b16 %v5659, %v5658
        %v5665 = vsel %vm2707, %v5660, 0
        %v5668 = vsel %vm2707, %v5661, 0
        %v5671 = vsel %vm2707, %v5662, 0
        %v5674 = vsel %vm2707, %v5663, 0
        %5676 = vmatprep.subr.bf16.mxu0 0
        %5677 = vmatpush1.bf16.msra.mxu0 %v4737
        %5678 = vmatprep.subr.bf16.mxu0 0
        %5679 = vmatpush1.bf16.msra.mxu0 %v4738
        %5680 = vmatprep.subr.bf16.mxu0 0
        %5681 = vmatpush1.bf16.msra.mxu0 %v4739
        %5682 = vmatprep.subr.bf16.mxu0 0
        %5683 = vmatpush1.bf16.msra.mxu0 %v4740
        %5684 = vmatprep.subr.bf16.mxu0 0
        %5685 = vmatpush1.bf16.msra.mxu0 0
        %5686 = vmatprep.subr.bf16.mxu0 0
        %5687 = vmatpush1.bf16.msra.mxu0 0
        %5688 = vmatprep.subr.bf16.mxu0 0
        %5689 = vmatpush1.bf16.msra.mxu0 0
        %5690 = vmatprep.subr.bf16.mxu0 0
        %5691 = vmatpush1.bf16.msra.mxu0 0
        %5692 = vmatprep.subr.bf16.mxu0 0
        %5693 = vmatpush1.bf16.msra.mxu0 0
        %5694 = vmatprep.subr.bf16.mxu0 0
        %5695 = vmatpush1.bf16.msra.mxu0 0
        %5696 = vmatprep.subr.bf16.mxu0 0
        %5697 = vmatpush1.bf16.msra.mxu0 0
        %5698 = vmatprep.subr.bf16.mxu0 0
        %5699 = vmatpush1.bf16.msra.mxu0 0
        %5700 = vmatprep.subr.bf16.mxu0 0
        %5701 = vmatpush1.bf16.msra.mxu0 0
        %5702 = vmatprep.subr.bf16.mxu0 0
        %5703 = vmatpush1.bf16.msra.mxu0 0
        %5704 = vmatprep.subr.bf16.mxu0 0
        %5705 = vmatpush1.bf16.msra.mxu0 0
        %5706 = vmatprep.subr.bf16.mxu0 0
        %5707 = vmatpush1.bf16.msra.mxu0 0
        %5708 = vmatprep.mubr.bf16.mxu0 0
        %5709 = vmatmul.mubr.bf16.gmra.mrb[0].mxu0 %v5665
        %v5710 = vpop.f32.mrb[0].mxu0
        %v5711 = vadd.f32 0.0, %v5710
        %v5712 = vpop.f32.mrb[0].mxu0
        %v5713 = vpop.f32.mrb[0].mxu0
        %v5714 = vadd.f32 0.0, %v5713
        %v5715 = vpop.f32.mrb[0].mxu0
        %5716 = vmatprep.mubr.bf16.mxu0 0
        %5717 = vmatmul.mubr.bf16.gmra.mrb[0].mxu0 %v5668
        %v5718 = vpop.f32.mrb[0].mxu0
        %v5719 = vadd.f32 0.0, %v5718
        %v5720 = vpop.f32.mrb[0].mxu0
        %v5721 = vpop.f32.mrb[0].mxu0
        %v5722 = vadd.f32 0.0, %v5721
        %v5723 = vpop.f32.mrb[0].mxu0
        %5724 = vmatprep.mubr.bf16.mxu0 0
        %5725 = vmatmul.mubr.bf16.gmra.mrb[0].mxu0 %v5671
        %v5726 = vpop.f32.mrb[0].mxu0
        %v5727 = vadd.f32 0.0, %v5726
        %v5728 = vpop.f32.mrb[0].mxu0
        %v5729 = vpop.f32.mrb[0].mxu0
        %v5730 = vadd.f32 0.0, %v5729
        %v5731 = vpop.f32.mrb[0].mxu0
        %5732 = vmatprep.mubr.bf16.mxu0 0
        %5733 = vmatmul.mubr.bf16.gmra.mrb[0].mxu0 %v5674
        %v5734 = vpop.f32.mrb[0].mxu0
        %v5735 = vadd.f32 0.0, %v5734
        %v5736 = vpop.f32.mrb[0].mxu0
        %v5737 = vpop.f32.mrb[0].mxu0
        %v5738 = vadd.f32 0.0, %v5737
        %v5739 = vpop.f32.mrb[0].mxu0
        %5740 = vdwg.mxu0
        %v5741 = vpack.c.bf16 %v5714, %v5711
        %v5742 = vpack.c.bf16 %v5722, %v5719
        %v5743 = vpack.c.bf16 %v5730, %v5727
        %v5744 = vpack.c.bf16 %v5738, %v5735
        %s5745 = scalar_lea.vmem [#allocation11], 128
        %v5746 = vld [vmem:[%s5745] sm:$0xf]
        %v5747 = vld [vmem:[%s5745 + $0x4] sm:$0xf]
        %v5748 = vld [vmem:[%s5745 + $0x8] sm:$0xf]
        %v5749 = vld [vmem:[%s5745 + $0xc] sm:$0xf]
        %v5750 = vld [vmem:[%s5745 + $0x10] sm:$0xf]
        %v5751 = vld [vmem:[%s5745 + $0x14] sm:$0xf]
        %v5752 = vld [vmem:[%s5745 + $0x18] sm:$0xf]
        %v5753 = vld [vmem:[%s5745 + $0x1c] sm:$0xf]
        %v5762 = vunpack.c.l.b16 %v5746
        %v5763 = vunpack.c.l.b16 %v5747
        %v5764 = vunpack.c.l.b16 %v5748
        %v5765 = vunpack.c.l.b16 %v5749
        %v5766 = vunpack.c.l.b16 %v5750
        %v5767 = vunpack.c.l.b16 %v5751
        %v5768 = vunpack.c.l.b16 %v5752
        %v5769 = vunpack.c.l.b16 %v5753
        %v5770 = vpack.c.b16 %v5763, %v5762
        %v5771 = vpack.c.b16 %v5765, %v5764
        %v5772 = vpack.c.b16 %v5767, %v5766
        %v5773 = vpack.c.b16 %v5769, %v5768
        %v5779 = vsel %vm2707, %v5741, 0
        %v5782 = vsel %vm2707, %v5742, 0
        %v5785 = vsel %vm2707, %v5743, 0
        %v5788 = vsel %vm2707, %v5744, 0
        %5790 = vmatprep.subr.bf16.mxu0 0
        %5791 = vmatpush1.bf16.msra.mxu0 %v5770
        %5792 = vmatprep.subr.bf16.mxu0 0
        %5793 = vmatpush1.bf16.msra.mxu0 %v5771
        %5794 = vmatprep.subr.bf16.mxu0 0
        %5795 = vmatpush1.bf16.msra.mxu0 %v5772
        %5796 = vmatprep.subr.bf16.mxu0 0
        %5797 = vmatpush1.bf16.msra.mxu0 %v5773
        %5798 = vmatprep.subr.bf16.mxu0 0
        %5799 = vmatpush1.bf16.msra.mxu0 0
        %5800 = vmatprep.subr.bf16.mxu0 0
        %5801 = vmatpush1.bf16.msra.mxu0 0
        %5802 = vmatprep.subr.bf16.mxu0 0
        %5803 = vmatpush1.bf16.msra.mxu0 0
        %5804 = vmatprep.subr.bf16.mxu0 0
        %5805 = vmatpush1.bf16.msra.mxu0 0
        %5806 = vmatprep.subr.bf16.mxu0 0
        %5807 = vmatpush1.bf16.msra.mxu0 0
        %5808 = vmatprep.subr.bf16.mxu0 0
        %5809 = vmatpush1.bf16.msra.mxu0 0
        %5810 = vmatprep.subr.bf16.mxu0 0
        %5811 = vmatpush1.bf16.msra.mxu0 0
        %5812 = vmatprep.subr.bf16.mxu0 0
        %5813 = vmatpush1.bf16.msra.mxu0 0
        %5814 = vmatprep.subr.bf16.mxu0 0
        %5815 = vmatpush1.bf16.msra.mxu0 0
        %5816 = vmatprep.subr.bf16.mxu0 0
        %5817 = vmatpush1.bf16.msra.mxu0 0
        %5818 = vmatprep.subr.bf16.mxu0 0
        %5819 = vmatpush1.bf16.msra.mxu0 0
        %5820 = vmatprep.subr.bf16.mxu0 0
        %5821 = vmatpush1.bf16.msra.mxu0 0
        %5822 = vmatprep.mubr.bf16.mxu0 0
        %5823 = vmatmul.mubr.bf16.gmra.mrb[0].mxu0 %v5779
        %v5824 = vpop.f32.mrb[0].mxu0
        %v5825 = vadd.f32 0.0, %v5824
        %v5826 = vpop.f32.mrb[0].mxu0
        %v5827 = vpop.f32.mrb[0].mxu0
        %v5828 = vadd.f32 0.0, %v5827
        %v5829 = vpop.f32.mrb[0].mxu0
        %5830 = vmatprep.mubr.bf16.mxu0 0
        %5831 = vmatmul.mubr.bf16.gmra.mrb[0].mxu0 %v5782
        %v5832 = vpop.f32.mrb[0].mxu0
        %v5833 = vadd.f32 0.0, %v5832
        %v5834 = vpop.f32.mrb[0].mxu0
        %v5835 = vpop.f32.mrb[0].mxu0
        %v5836 = vadd.f32 0.0, %v5835
        %v5837 = vpop.f32.mrb[0].mxu0
        %5838 = vmatprep.mubr.bf16.mxu0 0
        %5839 = vmatmul.mubr.bf16.gmra.mrb[0].mxu0 %v5785
        %v5840 = vpop.f32.mrb[0].mxu0
        %v5841 = vadd.f32 0.0, %v5840
        %v5842 = vpop.f32.mrb[0].mxu0
        %v5843 = vpop.f32.mrb[0].mxu0
        %v5844 = vadd.f32 0.0, %v5843
        %v5845 = vpop.f32.mrb[0].mxu0
        %5846 = vmatprep.mubr.bf16.mxu0 0
        %5847 = vmatmul.mubr.bf16.gmra.mrb[0].mxu0 %v5788
        %v5848 = vpop.f32.mrb[0].mxu0
        %v5849 = vadd.f32 0.0, %v5848
        %v5850 = vpop.f32.mrb[0].mxu0
        %v5851 = vpop.f32.mrb[0].mxu0
        %v5852 = vadd.f32 0.0, %v5851
        %v5853 = vpop.f32.mrb[0].mxu0
        %5854 = vdwg.mxu0
        %v5855 = vadd.f32 %v5627, %v5825
        %v5856 = vadd.f32 %v5628, %v5828
        %v5857 = vadd.f32 %v5629, %v5833
        %v5858 = vadd.f32 %v5630, %v5836
        %v5859 = vadd.f32 %v5631, %v5841
        %v5860 = vadd.f32 %v5632, %v5844
        %v5861 = vadd.f32 %v5633, %v5849
        %v5862 = vadd.f32 %v5634, %v5852
        %s5863 = scalar_lea.vmem [#allocation10], 160
        %v5864 = vld [vmem:[%s5863] sm:$0xf]
        %v5865 = vld [vmem:[%s5863 + $0x4] sm:$0xf]
        %v5866 = vld [vmem:[%s5863 + $0x8] sm:$0xf]
        %v5867 = vld [vmem:[%s5863 + $0xc] sm:$0xf]
        %v5868 = vld [vmem:[%s5863 + $0x10] sm:$0xf]
        %v5869 = vld [vmem:[%s5863 + $0x14] sm:$0xf]
        %v5870 = vld [vmem:[%s5863 + $0x18] sm:$0xf]
        %v5871 = vld [vmem:[%s5863 + $0x1c] sm:$0xf]
        %v5880 = vunpack.c.l.b16 %v5864
        %v5881 = vunpack.c.l.b16 %v5865
        %v5882 = vunpack.c.l.b16 %v5866
        %v5883 = vunpack.c.l.b16 %v5867
        %v5884 = vunpack.c.l.b16 %v5868
        %v5885 = vunpack.c.l.b16 %v5869
        %v5886 = vunpack.c.l.b16 %v5870
        %v5887 = vunpack.c.l.b16 %v5871
        %v5888 = vpack.c.b16 %v5881, %v5880
        %v5889 = vpack.c.b16 %v5883, %v5882
        %v5890 = vpack.c.b16 %v5885, %v5884
        %v5891 = vpack.c.b16 %v5887, %v5886
        %v5893 = vsel %vm2707, %v5888, 0
        %v5896 = vsel %vm2707, %v5889, 0
        %v5899 = vsel %vm2707, %v5890, 0
        %v5902 = vsel %vm2707, %v5891, 0
        %5904 = vmatprep.subr.bf16.mxu0 0
        %5905 = vmatpush1.bf16.msra.mxu0 %v4737
        %5906 = vmatprep.subr.bf16.mxu0 0
        %5907 = vmatpush1.bf16.msra.mxu0 %v4738
        %5908 = vmatprep.subr.bf16.mxu0 0
        %5909 = vmatpush1.bf16.msra.mxu0 %v4739
        %5910 = vmatprep.subr.bf16.mxu0 0
        %5911 = vmatpush1.bf16.msra.mxu0 %v4740
        %5912 = vmatprep.subr.bf16.mxu0 0
        %5913 = vmatpush1.bf16.msra.mxu0 0
        %5914 = vmatprep.subr.bf16.mxu0 0
        %5915 = vmatpush1.bf16.msra.mxu0 0
        %5916 = vmatprep.subr.bf16.mxu0 0
        %5917 = vmatpush1.bf16.msra.mxu0 0
        %5918 = vmatprep.subr.bf16.mxu0 0
        %5919 = vmatpush1.bf16.msra.mxu0 0
        %5920 = vmatprep.subr.bf16.mxu0 0
        %5921 = vmatpush1.bf16.msra.mxu0 0
        %5922 = vmatprep.subr.bf16.mxu0 0
        %5923 = vmatpush1.bf16.msra.mxu0 0
        %5924 = vmatprep.subr.bf16.mxu0 0
        %5925 = vmatpush1.bf16.msra.mxu0 0
        %5926 = vmatprep.subr.bf16.mxu0 0
        %5927 = vmatpush1.bf16.msra.mxu0 0
        %5928 = vmatprep.subr.bf16.mxu0 0
        %5929 = vmatpush1.bf16.msra.mxu0 0
        %5930 = vmatprep.subr.bf16.mxu0 0
        %5931 = vmatpush1.bf16.msra.mxu0 0
        %5932 = vmatprep.subr.bf16.mxu0 0
        %5933 = vmatpush1.bf16.msra.mxu0 0
        %5934 = vmatprep.subr.bf16.mxu0 0
        %5935 = vmatpush1.bf16.msra.mxu0 0
        %5936 = vmatprep.mubr.bf16.mxu0 0
        %5937 = vmatmul.mubr.bf16.gmra.mrb[0].mxu0 %v5893
        %v5938 = vpop.f32.mrb[0].mxu0
        %v5939 = vadd.f32 0.0, %v5938
        %v5940 = vpop.f32.mrb[0].mxu0
        %v5941 = vpop.f32.mrb[0].mxu0
        %v5942 = vadd.f32 0.0, %v5941
        %v5943 = vpop.f32.mrb[0].mxu0
        %5944 = vmatprep.mubr.bf16.mxu0 0
        %5945 = vmatmul.mubr.bf16.gmra.mrb[0].mxu0 %v5896
        %v5946 = vpop.f32.mrb[0].mxu0
        %v5947 = vadd.f32 0.0, %v5946
        %v5948 = vpop.f32.mrb[0].mxu0
        %v5949 = vpop.f32.mrb[0].mxu0
        %v5950 = vadd.f32 0.0, %v5949
        %v5951 = vpop.f32.mrb[0].mxu0
        %5952 = vmatprep.mubr.bf16.mxu0 0
        %5953 = vmatmul.mubr.bf16.gmra.mrb[0].mxu0 %v5899
        %v5954 = vpop.f32.mrb[0].mxu0
        %v5955 = vadd.f32 0.0, %v5954
        %v5956 = vpop.f32.mrb[0].mxu0
        %v5957 = vpop.f32.mrb[0].mxu0
        %v5958 = vadd.f32 0.0, %v5957
        %v5959 = vpop.f32.mrb[0].mxu0
        %5960 = vmatprep.mubr.bf16.mxu0 0
        %5961 = vmatmul.mubr.bf16.gmra.mrb[0].mxu0 %v5902
        %v5962 = vpop.f32.mrb[0].mxu0
        %v5963 = vadd.f32 0.0, %v5962
        %v5964 = vpop.f32.mrb[0].mxu0
        %v5965 = vpop.f32.mrb[0].mxu0
        %v5966 = vadd.f32 0.0, %v5965
        %v5967 = vpop.f32.mrb[0].mxu0
        %5968 = vdwg.mxu0
        %v5969 = vpack.c.bf16 %v5942, %v5939
        %v5970 = vpack.c.bf16 %v5950, %v5947
        %v5971 = vpack.c.bf16 %v5958, %v5955
        %v5972 = vpack.c.bf16 %v5966, %v5963
        %s5973 = scalar_lea.vmem [#allocation11], 160
        %v5974 = vld [vmem:[%s5973] sm:$0xf]
        %v5975 = vld [vmem:[%s5973 + $0x4] sm:$0xf]
        %v5976 = vld [vmem:[%s5973 + $0x8] sm:$0xf]
        %v5977 = vld [vmem:[%s5973 + $0xc] sm:$0xf]
        %v5978 = vld [vmem:[%s5973 + $0x10] sm:$0xf]
        %v5979 = vld [vmem:[%s5973 + $0x14] sm:$0xf]
        %v5980 = vld [vmem:[%s5973 + $0x18] sm:$0xf]
        %v5981 = vld [vmem:[%s5973 + $0x1c] sm:$0xf]
        %v5990 = vunpack.c.l.b16 %v5974
        %v5991 = vunpack.c.l.b16 %v5975
        %v5992 = vunpack.c.l.b16 %v5976
        %v5993 = vunpack.c.l.b16 %v5977
        %v5994 = vunpack.c.l.b16 %v5978
        %v5995 = vunpack.c.l.b16 %v5979
        %v5996 = vunpack.c.l.b16 %v5980
        %v5997 = vunpack.c.l.b16 %v5981
        %v5998 = vpack.c.b16 %v5991, %v5990
        %v5999 = vpack.c.b16 %v5993, %v5992
        %v6000 = vpack.c.b16 %v5995, %v5994
        %v6001 = vpack.c.b16 %v5997, %v5996
        %v6007 = vsel %vm2707, %v5969, 0
        %v6010 = vsel %vm2707, %v5970, 0
        %v6013 = vsel %vm2707, %v5971, 0
        %v6016 = vsel %vm2707, %v5972, 0
        %6018 = vmatprep.subr.bf16.mxu0 0
        %6019 = vmatpush1.bf16.msra.mxu0 %v5998
        %6020 = vmatprep.subr.bf16.mxu0 0
        %6021 = vmatpush1.bf16.msra.mxu0 %v5999
        %6022 = vmatprep.subr.bf16.mxu0 0
        %6023 = vmatpush1.bf16.msra.mxu0 %v6000
        %6024 = vmatprep.subr.bf16.mxu0 0
        %6025 = vmatpush1.bf16.msra.mxu0 %v6001
        %6026 = vmatprep.subr.bf16.mxu0 0
        %6027 = vmatpush1.bf16.msra.mxu0 0
        %6028 = vmatprep.subr.bf16.mxu0 0
        %6029 = vmatpush1.bf16.msra.mxu0 0
        %6030 = vmatprep.subr.bf16.mxu0 0
        %6031 = vmatpush1.bf16.msra.mxu0 0
        %6032 = vmatprep.subr.bf16.mxu0 0
        %6033 = vmatpush1.bf16.msra.mxu0 0
        %6034 = vmatprep.subr.bf16.mxu0 0
        %6035 = vmatpush1.bf16.msra.mxu0 0
        %6036 = vmatprep.subr.bf16.mxu0 0
        %6037 = vmatpush1.bf16.msra.mxu0 0
        %6038 = vmatprep.subr.bf16.mxu0 0
        %6039 = vmatpush1.bf16.msra.mxu0 0
        %6040 = vmatprep.subr.bf16.mxu0 0
        %6041 = vmatpush1.bf16.msra.mxu0 0
        %6042 = vmatprep.subr.bf16.mxu0 0
        %6043 = vmatpush1.bf16.msra.mxu0 0
        %6044 = vmatprep.subr.bf16.mxu0 0
        %6045 = vmatpush1.bf16.msra.mxu0 0
        %6046 = vmatprep.subr.bf16.mxu0 0
        %6047 = vmatpush1.bf16.msra.mxu0 0
        %6048 = vmatprep.subr.bf16.mxu0 0
        %6049 = vmatpush1.bf16.msra.mxu0 0
        %6050 = vmatprep.mubr.bf16.mxu0 0
        %6051 = vmatmul.mubr.bf16.gmra.mrb[0].mxu0 %v6007
        %v6052 = vpop.f32.mrb[0].mxu0
        %v6053 = vadd.f32 0.0, %v6052
        %v6054 = vpop.f32.mrb[0].mxu0
        %v6055 = vpop.f32.mrb[0].mxu0
        %v6056 = vadd.f32 0.0, %v6055
        %v6057 = vpop.f32.mrb[0].mxu0
        %6058 = vmatprep.mubr.bf16.mxu0 0
        %6059 = vmatmul.mubr.bf16.gmra.mrb[0].mxu0 %v6010
        %v6060 = vpop.f32.mrb[0].mxu0
        %v6061 = vadd.f32 0.0, %v6060
        %v6062 = vpop.f32.mrb[0].mxu0
        %v6063 = vpop.f32.mrb[0].mxu0
        %v6064 = vadd.f32 0.0, %v6063
        %v6065 = vpop.f32.mrb[0].mxu0
        %6066 = vmatprep.mubr.bf16.mxu0 0
        %6067 = vmatmul.mubr.bf16.gmra.mrb[0].mxu0 %v6013
        %v6068 = vpop.f32.mrb[0].mxu0
        %v6069 = vadd.f32 0.0, %v6068
        %v6070 = vpop.f32.mrb[0].mxu0
        %v6071 = vpop.f32.mrb[0].mxu0
        %v6072 = vadd.f32 0.0, %v6071
        %v6073 = vpop.f32.mrb[0].mxu0
        %6074 = vmatprep.mubr.bf16.mxu0 0
        %6075 = vmatmul.mubr.bf16.gmra.mrb[0].mxu0 %v6016
        %v6076 = vpop.f32.mrb[0].mxu0
        %v6077 = vadd.f32 0.0, %v6076
        %v6078 = vpop.f32.mrb[0].mxu0
        %v6079 = vpop.f32.mrb[0].mxu0
        %v6080 = vadd.f32 0.0, %v6079
        %v6081 = vpop.f32.mrb[0].mxu0
        %6082 = vdwg.mxu0
        %v6083 = vadd.f32 %v5855, %v6053
        %v6084 = vadd.f32 %v5856, %v6056
        %v6085 = vadd.f32 %v5857, %v6061
        %v6086 = vadd.f32 %v5858, %v6064
        %v6087 = vadd.f32 %v5859, %v6069
        %v6088 = vadd.f32 %v5860, %v6072
        %v6089 = vadd.f32 %v5861, %v6077
        %v6090 = vadd.f32 %v5862, %v6080
        %s6091 = scalar_lea.vmem [#allocation10], 192
        %v6092 = vld [vmem:[%s6091] sm:$0xf]
        %v6093 = vld [vmem:[%s6091 + $0x4] sm:$0xf]
        %v6094 = vld [vmem:[%s6091 + $0x8] sm:$0xf]
        %v6095 = vld [vmem:[%s6091 + $0xc] sm:$0xf]
        %v6096 = vld [vmem:[%s6091 + $0x10] sm:$0xf]
        %v6097 = vld [vmem:[%s6091 + $0x14] sm:$0xf]
        %v6098 = vld [vmem:[%s6091 + $0x18] sm:$0xf]
        %v6099 = vld [vmem:[%s6091 + $0x1c] sm:$0xf]
        %v6108 = vunpack.c.l.b16 %v6092
        %v6109 = vunpack.c.l.b16 %v6093
        %v6110 = vunpack.c.l.b16 %v6094
        %v6111 = vunpack.c.l.b16 %v6095
        %v6112 = vunpack.c.l.b16 %v6096
        %v6113 = vunpack.c.l.b16 %v6097
        %v6114 = vunpack.c.l.b16 %v6098
        %v6115 = vunpack.c.l.b16 %v6099
        %v6116 = vpack.c.b16 %v6109, %v6108
        %v6117 = vpack.c.b16 %v6111, %v6110
        %v6118 = vpack.c.b16 %v6113, %v6112
        %v6119 = vpack.c.b16 %v6115, %v6114
        %v6121 = vsel %vm2707, %v6116, 0
        %v6124 = vsel %vm2707, %v6117, 0
        %v6127 = vsel %vm2707, %v6118, 0
        %v6130 = vsel %vm2707, %v6119, 0
        %6132 = vmatprep.subr.bf16.mxu0 0
        %6133 = vmatpush1.bf16.msra.mxu0 %v4737
        %6134 = vmatprep.subr.bf16.mxu0 0
        %6135 = vmatpush1.bf16.msra.mxu0 %v4738
        %6136 = vmatprep.subr.bf16.mxu0 0
        %6137 = vmatpush1.bf16.msra.mxu0 %v4739
        %6138 = vmatprep.subr.bf16.mxu0 0
        %6139 = vmatpush1.bf16.msra.mxu0 %v4740
        %6140 = vmatprep.subr.bf16.mxu0 0
        %6141 = vmatpush1.bf16.msra.mxu0 0
        %6142 = vmatprep.subr.bf16.mxu0 0
        %6143 = vmatpush1.bf16.msra.mxu0 0
        %6144 = vmatprep.subr.bf16.mxu0 0
        %6145 = vmatpush1.bf16.msra.mxu0 0
        %6146 = vmatprep.subr.bf16.mxu0 0
        %6147 = vmatpush1.bf16.msra.mxu0 0
        %6148 = vmatprep.subr.bf16.mxu0 0
        %6149 = vmatpush1.bf16.msra.mxu0 0
        %6150 = vmatprep.subr.bf16.mxu0 0
        %6151 = vmatpush1.bf16.msra.mxu0 0
        %6152 = vmatprep.subr.bf16.mxu0 0
        %6153 = vmatpush1.bf16.msra.mxu0 0
        %6154 = vmatprep.subr.bf16.mxu0 0
        %6155 = vmatpush1.bf16.msra.mxu0 0
        %6156 = vmatprep.subr.bf16.mxu0 0
        %6157 = vmatpush1.bf16.msra.mxu0 0
        %6158 = vmatprep.subr.bf16.mxu0 0
        %6159 = vmatpush1.bf16.msra.mxu0 0
        %6160 = vmatprep.subr.bf16.mxu0 0
        %6161 = vmatpush1.bf16.msra.mxu0 0
        %6162 = vmatprep.subr.bf16.mxu0 0
        %6163 = vmatpush1.bf16.msra.mxu0 0
        %6164 = vmatprep.mubr.bf16.mxu0 0
        %6165 = vmatmul.mubr.bf16.gmra.mrb[0].mxu0 %v6121
        %v6166 = vpop.f32.mrb[0].mxu0
        %v6167 = vadd.f32 0.0, %v6166
        %v6168 = vpop.f32.mrb[0].mxu0
        %v6169 = vpop.f32.mrb[0].mxu0
        %v6170 = vadd.f32 0.0, %v6169
        %v6171 = vpop.f32.mrb[0].mxu0
        %6172 = vmatprep.mubr.bf16.mxu0 0
        %6173 = vmatmul.mubr.bf16.gmra.mrb[0].mxu0 %v6124
        %v6174 = vpop.f32.mrb[0].mxu0
        %v6175 = vadd.f32 0.0, %v6174
        %v6176 = vpop.f32.mrb[0].mxu0
        %v6177 = vpop.f32.mrb[0].mxu0
        %v6178 = vadd.f32 0.0, %v6177
        %v6179 = vpop.f32.mrb[0].mxu0
        %6180 = vmatprep.mubr.bf16.mxu0 0
        %6181 = vmatmul.mubr.bf16.gmra.mrb[0].mxu0 %v6127
        %v6182 = vpop.f32.mrb[0].mxu0
        %v6183 = vadd.f32 0.0, %v6182
        %v6184 = vpop.f32.mrb[0].mxu0
        %v6185 = vpop.f32.mrb[0].mxu0
        %v6186 = vadd.f32 0.0, %v6185
        %v6187 = vpop.f32.mrb[0].mxu0
        %6188 = vmatprep.mubr.bf16.mxu0 0
        %6189 = vmatmul.mubr.bf16.gmra.mrb[0].mxu0 %v6130
        %v6190 = vpop.f32.mrb[0].mxu0
        %v6191 = vadd.f32 0.0, %v6190
        %v6192 = vpop.f32.mrb[0].mxu0
        %v6193 = vpop.f32.mrb[0].mxu0
        %v6194 = vadd.f32 0.0, %v6193
        %v6195 = vpop.f32.mrb[0].mxu0
        %6196 = vdwg.mxu0
        %v6197 = vpack.c.bf16 %v6170, %v6167
        %v6198 = vpack.c.bf16 %v6178, %v6175
        %v6199 = vpack.c.bf16 %v6186, %v6183
        %v6200 = vpack.c.bf16 %v6194, %v6191
        %s6201 = scalar_lea.vmem [#allocation11], 192
        %v6202 = vld [vmem:[%s6201] sm:$0xf]
        %v6203 = vld [vmem:[%s6201 + $0x4] sm:$0xf]
        %v6204 = vld [vmem:[%s6201 + $0x8] sm:$0xf]
        %v6205 = vld [vmem:[%s6201 + $0xc] sm:$0xf]
        %v6206 = vld [vmem:[%s6201 + $0x10] sm:$0xf]
        %v6207 = vld [vmem:[%s6201 + $0x14] sm:$0xf]
        %v6208 = vld [vmem:[%s6201 + $0x18] sm:$0xf]
        %v6209 = vld [vmem:[%s6201 + $0x1c] sm:$0xf]
        %v6218 = vunpack.c.l.b16 %v6202
        %v6219 = vunpack.c.l.b16 %v6203
        %v6220 = vunpack.c.l.b16 %v6204
        %v6221 = vunpack.c.l.b16 %v6205
        %v6222 = vunpack.c.l.b16 %v6206
        %v6223 = vunpack.c.l.b16 %v6207
        %v6224 = vunpack.c.l.b16 %v6208
        %v6225 = vunpack.c.l.b16 %v6209
        %v6226 = vpack.c.b16 %v6219, %v6218
        %v6227 = vpack.c.b16 %v6221, %v6220
        %v6228 = vpack.c.b16 %v6223, %v6222
        %v6229 = vpack.c.b16 %v6225, %v6224
        %v6235 = vsel %vm2707, %v6197, 0
        %v6238 = vsel %vm2707, %v6198, 0
        %v6241 = vsel %vm2707, %v6199, 0
        %v6244 = vsel %vm2707, %v6200, 0
        %6246 = vmatprep.subr.bf16.mxu0 0
        %6247 = vmatpush1.bf16.msra.mxu0 %v6226
        %6248 = vmatprep.subr.bf16.mxu0 0
        %6249 = vmatpush1.bf16.msra.mxu0 %v6227
        %6250 = vmatprep.subr.bf16.mxu0 0
        %6251 = vmatpush1.bf16.msra.mxu0 %v6228
        %6252 = vmatprep.subr.bf16.mxu0 0
        %6253 = vmatpush1.bf16.msra.mxu0 %v6229
        %6254 = vmatprep.subr.bf16.mxu0 0
        %6255 = vmatpush1.bf16.msra.mxu0 0
        %6256 = vmatprep.subr.bf16.mxu0 0
        %6257 = vmatpush1.bf16.msra.mxu0 0
        %6258 = vmatprep.subr.bf16.mxu0 0
        %6259 = vmatpush1.bf16.msra.mxu0 0
        %6260 = vmatprep.subr.bf16.mxu0 0
        %6261 = vmatpush1.bf16.msra.mxu0 0
        %6262 = vmatprep.subr.bf16.mxu0 0
        %6263 = vmatpush1.bf16.msra.mxu0 0
        %6264 = vmatprep.subr.bf16.mxu0 0
        %6265 = vmatpush1.bf16.msra.mxu0 0
        %6266 = vmatprep.subr.bf16.mxu0 0
        %6267 = vmatpush1.bf16.msra.mxu0 0
        %6268 = vmatprep.subr.bf16.mxu0 0
        %6269 = vmatpush1.bf16.msra.mxu0 0
        %6270 = vmatprep.subr.bf16.mxu0 0
        %6271 = vmatpush1.bf16.msra.mxu0 0
        %6272 = vmatprep.subr.bf16.mxu0 0
        %6273 = vmatpush1.bf16.msra.mxu0 0
        %6274 = vmatprep.subr.bf16.mxu0 0
        %6275 = vmatpush1.bf16.msra.mxu0 0
        %6276 = vmatprep.subr.bf16.mxu0 0
        %6277 = vmatpush1.bf16.msra.mxu0 0
        %6278 = vmatprep.mubr.bf16.mxu0 0
        %6279 = vmatmul.mubr.bf16.gmra.mrb[0].mxu0 %v6235
        %v6280 = vpop.f32.mrb[0].mxu0
        %v6281 = vadd.f32 0.0, %v6280
        %v6282 = vpop.f32.mrb[0].mxu0
        %v6283 = vpop.f32.mrb[0].mxu0
        %v6284 = vadd.f32 0.0, %v6283
        %v6285 = vpop.f32.mrb[0].mxu0
        %6286 = vmatprep.mubr.bf16.mxu0 0
        %6287 = vmatmul.mubr.bf16.gmra.mrb[0].mxu0 %v6238
        %v6288 = vpop.f32.mrb[0].mxu0
        %v6289 = vadd.f32 0.0, %v6288
        %v6290 = vpop.f32.mrb[0].mxu0
        %v6291 = vpop.f32.mrb[0].mxu0
        %v6292 = vadd.f32 0.0, %v6291
        %v6293 = vpop.f32.mrb[0].mxu0
        %6294 = vmatprep.mubr.bf16.mxu0 0
        %6295 = vmatmul.mubr.bf16.gmra.mrb[0].mxu0 %v6241
        %v6296 = vpop.f32.mrb[0].mxu0
        %v6297 = vadd.f32 0.0, %v6296
        %v6298 = vpop.f32.mrb[0].mxu0
        %v6299 = vpop.f32.mrb[0].mxu0
        %v6300 = vadd.f32 0.0, %v6299
        %v6301 = vpop.f32.mrb[0].mxu0
        %6302 = vmatprep.mubr.bf16.mxu0 0
        %6303 = vmatmul.mubr.bf16.gmra.mrb[0].mxu0 %v6244
        %v6304 = vpop.f32.mrb[0].mxu0
        %v6305 = vadd.f32 0.0, %v6304
        %v6306 = vpop.f32.mrb[0].mxu0
        %v6307 = vpop.f32.mrb[0].mxu0
        %v6308 = vadd.f32 0.0, %v6307
        %v6309 = vpop.f32.mrb[0].mxu0
        %6310 = vdwg.mxu0
        %v6311 = vadd.f32 %v6083, %v6281
        %v6312 = vadd.f32 %v6084, %v6284
        %v6313 = vadd.f32 %v6085, %v6289
        %v6314 = vadd.f32 %v6086, %v6292
        %v6315 = vadd.f32 %v6087, %v6297
        %v6316 = vadd.f32 %v6088, %v6300
        %v6317 = vadd.f32 %v6089, %v6305
        %v6318 = vadd.f32 %v6090, %v6308
        %s6319 = scalar_lea.vmem [#allocation10], 224
        %v6320 = vld [vmem:[%s6319] sm:$0xf]
        %v6321 = vld [vmem:[%s6319 + $0x4] sm:$0xf]
        %v6322 = vld [vmem:[%s6319 + $0x8] sm:$0xf]
        %v6323 = vld [vmem:[%s6319 + $0xc] sm:$0xf]
        %v6324 = vld [vmem:[%s6319 + $0x10] sm:$0xf]
        %v6325 = vld [vmem:[%s6319 + $0x14] sm:$0xf]
        %v6326 = vld [vmem:[%s6319 + $0x18] sm:$0xf]
        %v6327 = vld [vmem:[%s6319 + $0x1c] sm:$0xf]
        %v6336 = vunpack.c.l.b16 %v6320
        %v6337 = vunpack.c.l.b16 %v6321
        %v6338 = vunpack.c.l.b16 %v6322
        %v6339 = vunpack.c.l.b16 %v6323
        %v6340 = vunpack.c.l.b16 %v6324
        %v6341 = vunpack.c.l.b16 %v6325
        %v6342 = vunpack.c.l.b16 %v6326
        %v6343 = vunpack.c.l.b16 %v6327
        %v6344 = vpack.c.b16 %v6337, %v6336
        %v6345 = vpack.c.b16 %v6339, %v6338
        %v6346 = vpack.c.b16 %v6341, %v6340
        %v6347 = vpack.c.b16 %v6343, %v6342
        %v6349 = vsel %vm2707, %v6344, 0
        %v6352 = vsel %vm2707, %v6345, 0
        %v6355 = vsel %vm2707, %v6346, 0
        %v6358 = vsel %vm2707, %v6347, 0
        %6360 = vmatprep.subr.bf16.mxu0 0
        %6361 = vmatpush1.bf16.msra.mxu0 %v4737
        %6362 = vmatprep.subr.bf16.mxu0 0
        %6363 = vmatpush1.bf16.msra.mxu0 %v4738
        %6364 = vmatprep.subr.bf16.mxu0 0
        %6365 = vmatpush1.bf16.msra.mxu0 %v4739
        %6366 = vmatprep.subr.bf16.mxu0 0
        %6367 = vmatpush1.bf16.msra.mxu0 %v4740
        %6368 = vmatprep.subr.bf16.mxu0 0
        %6369 = vmatpush1.bf16.msra.mxu0 0
        %6370 = vmatprep.subr.bf16.mxu0 0
        %6371 = vmatpush1.bf16.msra.mxu0 0
        %6372 = vmatprep.subr.bf16.mxu0 0
        %6373 = vmatpush1.bf16.msra.mxu0 0
        %6374 = vmatprep.subr.bf16.mxu0 0
        %6375 = vmatpush1.bf16.msra.mxu0 0
        %6376 = vmatprep.subr.bf16.mxu0 0
        %6377 = vmatpush1.bf16.msra.mxu0 0
        %6378 = vmatprep.subr.bf16.mxu0 0
        %6379 = vmatpush1.bf16.msra.mxu0 0
        %6380 = vmatprep.subr.bf16.mxu0 0
        %6381 = vmatpush1.bf16.msra.mxu0 0
        %6382 = vmatprep.subr.bf16.mxu0 0
        %6383 = vmatpush1.bf16.msra.mxu0 0
        %6384 = vmatprep.subr.bf16.mxu0 0
        %6385 = vmatpush1.bf16.msra.mxu0 0
        %6386 = vmatprep.subr.bf16.mxu0 0
        %6387 = vmatpush1.bf16.msra.mxu0 0
        %6388 = vmatprep.subr.bf16.mxu0 0
        %6389 = vmatpush1.bf16.msra.mxu0 0
        %6390 = vmatprep.subr.bf16.mxu0 0
        %6391 = vmatpush1.bf16.msra.mxu0 0
        %6392 = vmatprep.mubr.bf16.mxu0 0
        %6393 = vmatmul.mubr.bf16.gmra.mrb[0].mxu0 %v6349
        %v6394 = vpop.f32.mrb[0].mxu0
        %v6395 = vadd.f32 0.0, %v6394
        %v6396 = vpop.f32.mrb[0].mxu0
        %v6397 = vpop.f32.mrb[0].mxu0
        %v6398 = vadd.f32 0.0, %v6397
        %v6399 = vpop.f32.mrb[0].mxu0
        %6400 = vmatprep.mubr.bf16.mxu0 0
        %6401 = vmatmul.mubr.bf16.gmra.mrb[0].mxu0 %v6352
        %v6402 = vpop.f32.mrb[0].mxu0
        %v6403 = vadd.f32 0.0, %v6402
        %v6404 = vpop.f32.mrb[0].mxu0
        %v6405 = vpop.f32.mrb[0].mxu0
        %v6406 = vadd.f32 0.0, %v6405
        %v6407 = vpop.f32.mrb[0].mxu0
        %6408 = vmatprep.mubr.bf16.mxu0 0
        %6409 = vmatmul.mubr.bf16.gmra.mrb[0].mxu0 %v6355
        %v6410 = vpop.f32.mrb[0].mxu0
        %v6411 = vadd.f32 0.0, %v6410
        %v6412 = vpop.f32.mrb[0].mxu0
        %v6413 = vpop.f32.mrb[0].mxu0
        %v6414 = vadd.f32 0.0, %v6413
        %v6415 = vpop.f32.mrb[0].mxu0
        %6416 = vmatprep.mubr.bf16.mxu0 0
        %6417 = vmatmul.mubr.bf16.gmra.mrb[0].mxu0 %v6358
        %v6418 = vpop.f32.mrb[0].mxu0
        %v6419 = vadd.f32 0.0, %v6418
        %v6420 = vpop.f32.mrb[0].mxu0
        %v6421 = vpop.f32.mrb[0].mxu0
        %v6422 = vadd.f32 0.0, %v6421
        %v6423 = vpop.f32.mrb[0].mxu0
        %6424 = vdwg.mxu0
        %v6425 = vpack.c.bf16 %v6398, %v6395
        %v6426 = vpack.c.bf16 %v6406, %v6403
        %v6427 = vpack.c.bf16 %v6414, %v6411
        %v6428 = vpack.c.bf16 %v6422, %v6419
        %s6429 = scalar_lea.vmem [#allocation11], 224
        %v6430 = vld [vmem:[%s6429] sm:$0xf]
        %v6431 = vld [vmem:[%s6429 + $0x4] sm:$0xf]
        %v6432 = vld [vmem:[%s6429 + $0x8] sm:$0xf]
        %v6433 = vld [vmem:[%s6429 + $0xc] sm:$0xf]
        %v6434 = vld [vmem:[%s6429 + $0x10] sm:$0xf]
        %v6435 = vld [vmem:[%s6429 + $0x14] sm:$0xf]
        %v6436 = vld [vmem:[%s6429 + $0x18] sm:$0xf]
        %v6437 = vld [vmem:[%s6429 + $0x1c] sm:$0xf]
        %v6446 = vunpack.c.l.b16 %v6430
        %v6447 = vunpack.c.l.b16 %v6431
        %v6448 = vunpack.c.l.b16 %v6432
        %v6449 = vunpack.c.l.b16 %v6433
        %v6450 = vunpack.c.l.b16 %v6434
        %v6451 = vunpack.c.l.b16 %v6435
        %v6452 = vunpack.c.l.b16 %v6436
        %v6453 = vunpack.c.l.b16 %v6437
        %v6454 = vpack.c.b16 %v6447, %v6446
        %v6455 = vpack.c.b16 %v6449, %v6448
        %v6456 = vpack.c.b16 %v6451, %v6450
        %v6457 = vpack.c.b16 %v6453, %v6452
        %v6463 = vsel %vm2707, %v6425, 0
        %v6466 = vsel %vm2707, %v6426, 0
        %v6469 = vsel %vm2707, %v6427, 0
        %v6472 = vsel %vm2707, %v6428, 0
        %6474 = vmatprep.subr.bf16.mxu0 0
        %6475 = vmatpush1.bf16.msra.mxu0 %v6454
        %6476 = vmatprep.subr.bf16.mxu0 0
        %6477 = vmatpush1.bf16.msra.mxu0 %v6455
        %6478 = vmatprep.subr.bf16.mxu0 0
        %6479 = vmatpush1.bf16.msra.mxu0 %v6456
        %6480 = vmatprep.subr.bf16.mxu0 0
        %6481 = vmatpush1.bf16.msra.mxu0 %v6457
        %6482 = vmatprep.subr.bf16.mxu0 0
        %6483 = vmatpush1.bf16.msra.mxu0 0
        %6484 = vmatprep.subr.bf16.mxu0 0
        %6485 = vmatpush1.bf16.msra.mxu0 0
        %6486 = vmatprep.subr.bf16.mxu0 0
        %6487 = vmatpush1.bf16.msra.mxu0 0
        %6488 = vmatprep.subr.bf16.mxu0 0
        %6489 = vmatpush1.bf16.msra.mxu0 0
        %6490 = vmatprep.subr.bf16.mxu0 0
        %6491 = vmatpush1.bf16.msra.mxu0 0
        %6492 = vmatprep.subr.bf16.mxu0 0
        %6493 = vmatpush1.bf16.msra.mxu0 0
        %6494 = vmatprep.subr.bf16.mxu0 0
        %6495 = vmatpush1.bf16.msra.mxu0 0
        %6496 = vmatprep.subr.bf16.mxu0 0
        %6497 = vmatpush1.bf16.msra.mxu0 0
        %6498 = vmatprep.subr.bf16.mxu0 0
        %6499 = vmatpush1.bf16.msra.mxu0 0
        %6500 = vmatprep.subr.bf16.mxu0 0
        %6501 = vmatpush1.bf16.msra.mxu0 0
        %6502 = vmatprep.subr.bf16.mxu0 0
        %6503 = vmatpush1.bf16.msra.mxu0 0
        %6504 = vmatprep.subr.bf16.mxu0 0
        %6505 = vmatpush1.bf16.msra.mxu0 0
        %6506 = vmatprep.mubr.bf16.mxu0 0
        %6507 = vmatmul.mubr.bf16.gmra.mrb[0].mxu0 %v6463
        %v6508 = vpop.f32.mrb[0].mxu0
        %v6509 = vadd.f32 0.0, %v6508
        %v6510 = vpop.f32.mrb[0].mxu0
        %v6511 = vpop.f32.mrb[0].mxu0
        %v6512 = vadd.f32 0.0, %v6511
        %v6513 = vpop.f32.mrb[0].mxu0
        %6514 = vmatprep.mubr.bf16.mxu0 0
        %6515 = vmatmul.mubr.bf16.gmra.mrb[0].mxu0 %v6466
        %v6516 = vpop.f32.mrb[0].mxu0
        %v6517 = vadd.f32 0.0, %v6516
        %v6518 = vpop.f32.mrb[0].mxu0
        %v6519 = vpop.f32.mrb[0].mxu0
        %v6520 = vadd.f32 0.0, %v6519
        %v6521 = vpop.f32.mrb[0].mxu0
        %6522 = vmatprep.mubr.bf16.mxu0 0
        %6523 = vmatmul.mubr.bf16.gmra.mrb[0].mxu0 %v6469
        %v6524 = vpop.f32.mrb[0].mxu0
        %v6525 = vadd.f32 0.0, %v6524
        %v6526 = vpop.f32.mrb[0].mxu0
        %v6527 = vpop.f32.mrb[0].mxu0
        %v6528 = vadd.f32 0.0, %v6527
        %v6529 = vpop.f32.mrb[0].mxu0
        %6530 = vmatprep.mubr.bf16.mxu0 0
        %6531 = vmatmul.mubr.bf16.gmra.mrb[0].mxu0 %v6472
        %v6532 = vpop.f32.mrb[0].mxu0
        %v6533 = vadd.f32 0.0, %v6532
        %v6534 = vpop.f32.mrb[0].mxu0
        %v6535 = vpop.f32.mrb[0].mxu0
        %v6536 = vadd.f32 0.0, %v6535
        %v6537 = vpop.f32.mrb[0].mxu0
        %6538 = vdwg.mxu0
        %v6539 = vadd.f32 %v6311, %v6509
        %v6540 = vadd.f32 %v6312, %v6512
        %v6541 = vadd.f32 %v6313, %v6517
        %v6542 = vadd.f32 %v6314, %v6520
        %v6543 = vadd.f32 %v6315, %v6525
        %v6544 = vadd.f32 %v6316, %v6528
        %v6545 = vadd.f32 %v6317, %v6533
        %v6546 = vadd.f32 %v6318, %v6536
        %s6547 = scalar_lea.vmem [#allocation10], 256
        %v6548 = vld [vmem:[%s6547] sm:$0xf]
        %v6549 = vld [vmem:[%s6547 + $0x4] sm:$0xf]
        %v6550 = vld [vmem:[%s6547 + $0x8] sm:$0xf]
        %v6551 = vld [vmem:[%s6547 + $0xc] sm:$0xf]
        %v6552 = vld [vmem:[%s6547 + $0x10] sm:$0xf]
        %v6553 = vld [vmem:[%s6547 + $0x14] sm:$0xf]
        %v6554 = vld [vmem:[%s6547 + $0x18] sm:$0xf]
        %v6555 = vld [vmem:[%s6547 + $0x1c] sm:$0xf]
        %v6564 = vunpack.c.l.b16 %v6548
        %v6565 = vunpack.c.l.b16 %v6549
        %v6566 = vunpack.c.l.b16 %v6550
        %v6567 = vunpack.c.l.b16 %v6551
        %v6568 = vunpack.c.l.b16 %v6552
        %v6569 = vunpack.c.l.b16 %v6553
        %v6570 = vunpack.c.l.b16 %v6554
        %v6571 = vunpack.c.l.b16 %v6555
        %v6572 = vpack.c.b16 %v6565, %v6564
        %v6573 = vpack.c.b16 %v6567, %v6566
        %v6574 = vpack.c.b16 %v6569, %v6568
        %v6575 = vpack.c.b16 %v6571, %v6570
        %v6577 = vsel %vm2707, %v6572, 0
        %v6580 = vsel %vm2707, %v6573, 0
        %v6583 = vsel %vm2707, %v6574, 0
        %v6586 = vsel %vm2707, %v6575, 0
        %6588 = vmatprep.subr.bf16.mxu0 0
        %6589 = vmatpush1.bf16.msra.mxu0 %v4737
        %6590 = vmatprep.subr.bf16.mxu0 0
        %6591 = vmatpush1.bf16.msra.mxu0 %v4738
        %6592 = vmatprep.subr.bf16.mxu0 0
        %6593 = vmatpush1.bf16.msra.mxu0 %v4739
        %6594 = vmatprep.subr.bf16.mxu0 0
        %6595 = vmatpush1.bf16.msra.mxu0 %v4740
        %6596 = vmatprep.subr.bf16.mxu0 0
        %6597 = vmatpush1.bf16.msra.mxu0 0
        %6598 = vmatprep.subr.bf16.mxu0 0
        %6599 = vmatpush1.bf16.msra.mxu0 0
        %6600 = vmatprep.subr.bf16.mxu0 0
        %6601 = vmatpush1.bf16.msra.mxu0 0
        %6602 = vmatprep.subr.bf16.mxu0 0
        %6603 = vmatpush1.bf16.msra.mxu0 0
        %6604 = vmatprep.subr.bf16.mxu0 0
        %6605 = vmatpush1.bf16.msra.mxu0 0
        %6606 = vmatprep.subr.bf16.mxu0 0
        %6607 = vmatpush1.bf16.msra.mxu0 0
        %6608 = vmatprep.subr.bf16.mxu0 0
        %6609 = vmatpush1.bf16.msra.mxu0 0
        %6610 = vmatprep.subr.bf16.mxu0 0
        %6611 = vmatpush1.bf16.msra.mxu0 0
        %6612 = vmatprep.subr.bf16.mxu0 0
        %6613 = vmatpush1.bf16.msra.mxu0 0
        %6614 = vmatprep.subr.bf16.mxu0 0
        %6615 = vmatpush1.bf16.msra.mxu0 0
        %6616 = vmatprep.subr.bf16.mxu0 0
        %6617 = vmatpush1.bf16.msra.mxu0 0
        %6618 = vmatprep.subr.bf16.mxu0 0
        %6619 = vmatpush1.bf16.msra.mxu0 0
        %6620 = vmatprep.mubr.bf16.mxu0 0
        %6621 = vmatmul.mubr.bf16.gmra.mrb[0].mxu0 %v6577
        %v6622 = vpop.f32.mrb[0].mxu0
        %v6623 = vadd.f32 0.0, %v6622
        %v6624 = vpop.f32.mrb[0].mxu0
        %v6625 = vpop.f32.mrb[0].mxu0
        %v6626 = vadd.f32 0.0, %v6625
        %v6627 = vpop.f32.mrb[0].mxu0
        %6628 = vmatprep.mubr.bf16.mxu0 0
        %6629 = vmatmul.mubr.bf16.gmra.mrb[0].mxu0 %v6580
        %v6630 = vpop.f32.mrb[0].mxu0
        %v6631 = vadd.f32 0.0, %v6630
        %v6632 = vpop.f32.mrb[0].mxu0
        %v6633 = vpop.f32.mrb[0].mxu0
        %v6634 = vadd.f32 0.0, %v6633
        %v6635 = vpop.f32.mrb[0].mxu0
        %6636 = vmatprep.mubr.bf16.mxu0 0
        %6637 = vmatmul.mubr.bf16.gmra.mrb[0].mxu0 %v6583
        %v6638 = vpop.f32.mrb[0].mxu0
        %v6639 = vadd.f32 0.0, %v6638
        %v6640 = vpop.f32.mrb[0].mxu0
        %v6641 = vpop.f32.mrb[0].mxu0
        %v6642 = vadd.f32 0.0, %v6641
        %v6643 = vpop.f32.mrb[0].mxu0
        %6644 = vmatprep.mubr.bf16.mxu0 0
        %6645 = vmatmul.mubr.bf16.gmra.mrb[0].mxu0 %v6586
        %v6646 = vpop.f32.mrb[0].mxu0
        %v6647 = vadd.f32 0.0, %v6646
        %v6648 = vpop.f32.mrb[0].mxu0
        %v6649 = vpop.f32.mrb[0].mxu0
        %v6650 = vadd.f32 0.0, %v6649
        %v6651 = vpop.f32.mrb[0].mxu0
        %6652 = vdwg.mxu0
        %v6653 = vpack.c.bf16 %v6626, %v6623
        %v6654 = vpack.c.bf16 %v6634, %v6631
        %v6655 = vpack.c.bf16 %v6642, %v6639
        %v6656 = vpack.c.bf16 %v6650, %v6647
        %s6657 = scalar_lea.vmem [#allocation11], 256
        %v6658 = vld [vmem:[%s6657] sm:$0xf]
        %v6659 = vld [vmem:[%s6657 + $0x4] sm:$0xf]
        %v6660 = vld [vmem:[%s6657 + $0x8] sm:$0xf]
        %v6661 = vld [vmem:[%s6657 + $0xc] sm:$0xf]
        %v6662 = vld [vmem:[%s6657 + $0x10] sm:$0xf]
        %v6663 = vld [vmem:[%s6657 + $0x14] sm:$0xf]
        %v6664 = vld [vmem:[%s6657 + $0x18] sm:$0xf]
        %v6665 = vld [vmem:[%s6657 + $0x1c] sm:$0xf]
        %v6674 = vunpack.c.l.b16 %v6658
        %v6675 = vunpack.c.l.b16 %v6659
        %v6676 = vunpack.c.l.b16 %v6660
        %v6677 = vunpack.c.l.b16 %v6661
        %v6678 = vunpack.c.l.b16 %v6662
        %v6679 = vunpack.c.l.b16 %v6663
        %v6680 = vunpack.c.l.b16 %v6664
        %v6681 = vunpack.c.l.b16 %v6665
        %v6682 = vpack.c.b16 %v6675, %v6674
        %v6683 = vpack.c.b16 %v6677, %v6676
        %v6684 = vpack.c.b16 %v6679, %v6678
        %v6685 = vpack.c.b16 %v6681, %v6680
        %v6691 = vsel %vm2707, %v6653, 0
        %v6694 = vsel %vm2707, %v6654, 0
        %v6697 = vsel %vm2707, %v6655, 0
        %v6700 = vsel %vm2707, %v6656, 0
        %6702 = vmatprep.subr.bf16.mxu0 0
        %6703 = vmatpush1.bf16.msra.mxu0 %v6682
        %6704 = vmatprep.subr.bf16.mxu0 0
        %6705 = vmatpush1.bf16.msra.mxu0 %v6683
        %6706 = vmatprep.subr.bf16.mxu0 0
        %6707 = vmatpush1.bf16.msra.mxu0 %v6684
        %6708 = vmatprep.subr.bf16.mxu0 0
        %6709 = vmatpush1.bf16.msra.mxu0 %v6685
        %6710 = vmatprep.subr.bf16.mxu0 0
        %6711 = vmatpush1.bf16.msra.mxu0 0
        %6712 = vmatprep.subr.bf16.mxu0 0
        %6713 = vmatpush1.bf16.msra.mxu0 0
        %6714 = vmatprep.subr.bf16.mxu0 0
        %6715 = vmatpush1.bf16.msra.mxu0 0
        %6716 = vmatprep.subr.bf16.mxu0 0
        %6717 = vmatpush1.bf16.msra.mxu0 0
        %6718 = vmatprep.subr.bf16.mxu0 0
        %6719 = vmatpush1.bf16.msra.mxu0 0
        %6720 = vmatprep.subr.bf16.mxu0 0
        %6721 = vmatpush1.bf16.msra.mxu0 0
        %6722 = vmatprep.subr.bf16.mxu0 0
        %6723 = vmatpush1.bf16.msra.mxu0 0
        %6724 = vmatprep.subr.bf16.mxu0 0
        %6725 = vmatpush1.bf16.msra.mxu0 0
        %6726 = vmatprep.subr.bf16.mxu0 0
        %6727 = vmatpush1.bf16.msra.mxu0 0
        %6728 = vmatprep.subr.bf16.mxu0 0
        %6729 = vmatpush1.bf16.msra.mxu0 0
        %6730 = vmatprep.subr.bf16.mxu0 0
        %6731 = vmatpush1.bf16.msra.mxu0 0
        %6732 = vmatprep.subr.bf16.mxu0 0
        %6733 = vmatpush1.bf16.msra.mxu0 0
        %6734 = vmatprep.mubr.bf16.mxu0 0
        %6735 = vmatmul.mubr.bf16.gmra.mrb[0].mxu0 %v6691
        %v6736 = vpop.f32.mrb[0].mxu0
        %v6737 = vadd.f32 0.0, %v6736
        %v6738 = vpop.f32.mrb[0].mxu0
        %v6739 = vpop.f32.mrb[0].mxu0
        %v6740 = vadd.f32 0.0, %v6739
        %v6741 = vpop.f32.mrb[0].mxu0
        %6742 = vmatprep.mubr.bf16.mxu0 0
        %6743 = vmatmul.mubr.bf16.gmra.mrb[0].mxu0 %v6694
        %v6744 = vpop.f32.mrb[0].mxu0
        %v6745 = vadd.f32 0.0, %v6744
        %v6746 = vpop.f32.mrb[0].mxu0
        %v6747 = vpop.f32.mrb[0].mxu0
        %v6748 = vadd.f32 0.0, %v6747
        %v6749 = vpop.f32.mrb[0].mxu0
        %6750 = vmatprep.mubr.bf16.mxu0 0
        %6751 = vmatmul.mubr.bf16.gmra.mrb[0].mxu0 %v6697
        %v6752 = vpop.f32.mrb[0].mxu0
        %v6753 = vadd.f32 0.0, %v6752
        %v6754 = vpop.f32.mrb[0].mxu0
        %v6755 = vpop.f32.mrb[0].mxu0
        %v6756 = vadd.f32 0.0, %v6755
        %v6757 = vpop.f32.mrb[0].mxu0
        %6758 = vmatprep.mubr.bf16.mxu0 0
        %6759 = vmatmul.mubr.bf16.gmra.mrb[0].mxu0 %v6700
        %v6760 = vpop.f32.mrb[0].mxu0
        %v6761 = vadd.f32 0.0, %v6760
        %v6762 = vpop.f32.mrb[0].mxu0
        %v6763 = vpop.f32.mrb[0].mxu0
        %v6764 = vadd.f32 0.0, %v6763
        %v6765 = vpop.f32.mrb[0].mxu0
        %6766 = vdwg.mxu0
        %v6767 = vadd.f32 %v6539, %v6737
        %v6768 = vadd.f32 %v6540, %v6740
        %v6769 = vadd.f32 %v6541, %v6745
        %v6770 = vadd.f32 %v6542, %v6748
        %v6771 = vadd.f32 %v6543, %v6753
        %v6772 = vadd.f32 %v6544, %v6756
        %v6773 = vadd.f32 %v6545, %v6761
        %v6774 = vadd.f32 %v6546, %v6764
        %v6775 = vld [vmem:[%s9] sm:$0x1]
        %v6777 = vlaneseq
        %v6778 = vshrl.u32 %v6777, 7
        %v6779 = vsub.s32 0, %v6778
        %v6780 = vrot.slane %v6775, %v6779
        %v6782 = vadd.f32 %v6767, %v6780
        %v6783 = vadd.f32 %v6768, %v6780
        %v6784 = vadd.f32 %v6769, %v6780
        %v6785 = vadd.f32 %v6770, %v6780
        %v6786 = vadd.f32 %v6771, %v6780
        %v6787 = vadd.f32 %v6772, %v6780
        %v6788 = vadd.f32 %v6773, %v6780
        %v6789 = vadd.f32 %v6774, %v6780
        %v6790 = vadd.f32 %v6782, %v2667
        %v6791 = vadd.f32 %v6783, %v2668
        %v6792 = vadd.f32 %v6784, %v2669
        %v6793 = vadd.f32 %v6785, %v2670
        %v6794 = vadd.f32 %v6786, %v2671
        %v6795 = vadd.f32 %v6787, %v2672
        %v6796 = vadd.f32 %v6788, %v2673
        %v6797 = vadd.f32 %v6789, %v2674
        %v6798 = vmax.f32 %v6790, 0.0
        %v6799 = vmax.f32 %v6791, 0.0
        %v6800 = vmax.f32 %v6792, 0.0
        %v6801 = vmax.f32 %v6793, 0.0
        %v6802 = vmax.f32 %v6794, 0.0
        %v6803 = vmax.f32 %v6795, 0.0
        %v6804 = vmax.f32 %v6796, 0.0
        %v6805 = vmax.f32 %v6797, 0.0
        %v6806 = vpack.c.bf16 %v6799, %v6798
        %v6807 = vpack.c.bf16 %v6801, %v6800
        %v6808 = vpack.c.bf16 %v6803, %v6802
        %v6809 = vpack.c.bf16 %v6805, %v6804
        %v6810 = vld [vmem:[#allocation13] sm:$0xf]
        %v6811 = vld [vmem:[#allocation13 + $0x4] sm:$0xf]
        %v6814 = vunpack.c.l.b16 %v6810
        %v6815 = vunpack.c.l.b16 %v6811
        %v6816 = vpack.c.b16 %v6815, %v6814
        %v6818 = vsel %vm2707, %v6816, 0
        %6820 = vmatprep.subr.bf16.mxu0 0
        %6821 = vmatpush1.bf16.msra.mxu0 %v6806
        %6822 = vmatprep.subr.bf16.mxu0 0
        %6823 = vmatpush1.bf16.msra.mxu0 %v6807
        %6824 = vmatprep.subr.bf16.mxu0 0
        %6825 = vmatpush1.bf16.msra.mxu0 %v6808
        %6826 = vmatprep.subr.bf16.mxu0 0
        %6827 = vmatpush1.bf16.msra.mxu0 %v6809
        %6828 = vmatprep.subr.bf16.mxu0 0
        %6829 = vmatpush1.bf16.msra.mxu0 0
        %6830 = vmatprep.subr.bf16.mxu0 0
        %6831 = vmatpush1.bf16.msra.mxu0 0
        %6832 = vmatprep.subr.bf16.mxu0 0
        %6833 = vmatpush1.bf16.msra.mxu0 0
        %6834 = vmatprep.subr.bf16.mxu0 0
        %6835 = vmatpush1.bf16.msra.mxu0 0
        %6836 = vmatprep.subr.bf16.mxu0 0
        %6837 = vmatpush1.bf16.msra.mxu0 0
        %6838 = vmatprep.subr.bf16.mxu0 0
        %6839 = vmatpush1.bf16.msra.mxu0 0
        %6840 = vmatprep.subr.bf16.mxu0 0
        %6841 = vmatpush1.bf16.msra.mxu0 0
        %6842 = vmatprep.subr.bf16.mxu0 0
        %6843 = vmatpush1.bf16.msra.mxu0 0
        %6844 = vmatprep.subr.bf16.mxu0 0
        %6845 = vmatpush1.bf16.msra.mxu0 0
        %6846 = vmatprep.subr.bf16.mxu0 0
        %6847 = vmatpush1.bf16.msra.mxu0 0
        %6848 = vmatprep.subr.bf16.mxu0 0
        %6849 = vmatpush1.bf16.msra.mxu0 0
        %6850 = vmatprep.subr.bf16.mxu0 0
        %6851 = vmatpush1.bf16.msra.mxu0 0
        %6852 = vmatprep.mubr.bf16.mxu0 0
        %6853 = vmatmul.mubr.bf16.gmra.mrb[0].mxu0 %v6818
        %v6854 = vpop.f32.mrb[0].mxu0
        %v6855 = vadd.f32 0.0, %v6854
        %v6856 = vpop.f32.mrb[0].mxu0
        %v6857 = vpop.f32.mrb[0].mxu0
        %v6858 = vadd.f32 0.0, %v6857
        %v6859 = vpop.f32.mrb[0].mxu0
        %6860 = vdwg.mxu0
        %v6861 = vpack.c.bf16 %v6858, %v6855
        %v6862 = vld [vmem:[#allocation14] sm:$0xf]
        %v6863 = vld [vmem:[#allocation14 + $0x4] sm:$0xf]
        %v6864 = vld [vmem:[#allocation14 + $0x8] sm:$0xf]
        %v6865 = vld [vmem:[#allocation14 + $0xc] sm:$0xf]
        %v6866 = vld [vmem:[#allocation14 + $0x10] sm:$0xf]
        %v6867 = vld [vmem:[#allocation14 + $0x14] sm:$0xf]
        %v6868 = vld [vmem:[#allocation14 + $0x18] sm:$0xf]
        %v6869 = vld [vmem:[#allocation14 + $0x1c] sm:$0xf]
        %s6870 = scalar_lea.vmem [#allocation13], 8
        %v6871 = vld [vmem:[%s6870] sm:$0xf]
        %v6872 = vld [vmem:[%s6870 + $0x4] sm:$0xf]
        %v6875 = vunpack.c.l.b16 %v6871
        %v6876 = vunpack.c.l.b16 %v6872
        %v6877 = vpack.c.b16 %v6876, %v6875
        %v6879 = vsel %vm2707, %v6877, 0
        %6881 = vmatprep.subr.bf16.mxu0 0
        %6882 = vmatpush1.bf16.msra.mxu0 %v6806
        %6883 = vmatprep.subr.bf16.mxu0 0
        %6884 = vmatpush1.bf16.msra.mxu0 %v6807
        %6885 = vmatprep.subr.bf16.mxu0 0
        %6886 = vmatpush1.bf16.msra.mxu0 %v6808
        %6887 = vmatprep.subr.bf16.mxu0 0
        %6888 = vmatpush1.bf16.msra.mxu0 %v6809
        %6889 = vmatprep.subr.bf16.mxu0 0
        %6890 = vmatpush1.bf16.msra.mxu0 0
        %6891 = vmatprep.subr.bf16.mxu0 0
        %6892 = vmatpush1.bf16.msra.mxu0 0
        %6893 = vmatprep.subr.bf16.mxu0 0
        %6894 = vmatpush1.bf16.msra.mxu0 0
        %6895 = vmatprep.subr.bf16.mxu0 0
        %6896 = vmatpush1.bf16.msra.mxu0 0
        %6897 = vmatprep.subr.bf16.mxu0 0
        %6898 = vmatpush1.bf16.msra.mxu0 0
        %6899 = vmatprep.subr.bf16.mxu0 0
        %6900 = vmatpush1.bf16.msra.mxu0 0
        %6901 = vmatprep.subr.bf16.mxu0 0
        %6902 = vmatpush1.bf16.msra.mxu0 0
        %6903 = vmatprep.subr.bf16.mxu0 0
        %6904 = vmatpush1.bf16.msra.mxu0 0
        %6905 = vmatprep.subr.bf16.mxu0 0
        %6906 = vmatpush1.bf16.msra.mxu0 0
        %6907 = vmatprep.subr.bf16.mxu0 0
        %6908 = vmatpush1.bf16.msra.mxu0 0
        %6909 = vmatprep.subr.bf16.mxu0 0
        %6910 = vmatpush1.bf16.msra.mxu0 0
        %6911 = vmatprep.subr.bf16.mxu0 0
        %6912 = vmatpush1.bf16.msra.mxu0 0
        %6913 = vmatprep.mubr.bf16.mxu0 0
        %6914 = vmatmul.mubr.bf16.gmra.mrb[0].mxu0 %v6879
        %v6915 = vpop.f32.mrb[0].mxu0
        %v6916 = vadd.f32 0.0, %v6915
        %v6917 = vpop.f32.mrb[0].mxu0
        %v6918 = vpop.f32.mrb[0].mxu0
        %v6919 = vadd.f32 0.0, %v6918
        %v6920 = vpop.f32.mrb[0].mxu0
        %6921 = vdwg.mxu0
        %v6922 = vpack.c.bf16 %v6919, %v6916
        %s6923 = scalar_lea.vmem [#allocation14], 32
        %v6924 = vld [vmem:[%s6923] sm:$0xf]
        %v6925 = vld [vmem:[%s6923 + $0x4] sm:$0xf]
        %v6926 = vld [vmem:[%s6923 + $0x8] sm:$0xf]
        %v6927 = vld [vmem:[%s6923 + $0xc] sm:$0xf]
        %v6928 = vld [vmem:[%s6923 + $0x10] sm:$0xf]
        %v6929 = vld [vmem:[%s6923 + $0x14] sm:$0xf]
        %v6930 = vld [vmem:[%s6923 + $0x18] sm:$0xf]
        %v6931 = vld [vmem:[%s6923 + $0x1c] sm:$0xf]
        %v6940 = vunpack.c.l.b16 %v6924
        %v6941 = vunpack.c.l.b16 %v6925
        %v6942 = vunpack.c.l.b16 %v6926
        %v6943 = vunpack.c.l.b16 %v6927
        %v6944 = vunpack.c.l.b16 %v6928
        %v6945 = vunpack.c.l.b16 %v6929
        %v6946 = vunpack.c.l.b16 %v6930
        %v6947 = vunpack.c.l.b16 %v6931
        %v6948 = vpack.c.b16 %v6941, %v6940
        %v6949 = vpack.c.b16 %v6943, %v6942
        %v6950 = vpack.c.b16 %v6945, %v6944
        %v6951 = vpack.c.b16 %v6947, %v6946
        %v6957 = vsel %vm2707, %v6922, 0
        %6959 = vmatprep.subr.bf16.mxu0 0
        %6960 = vmatpush1.bf16.msra.mxu0 %v6948
        %6961 = vmatprep.subr.bf16.mxu0 0
        %6962 = vmatpush1.bf16.msra.mxu0 %v6949
        %6963 = vmatprep.subr.bf16.mxu0 0
        %6964 = vmatpush1.bf16.msra.mxu0 %v6950
        %6965 = vmatprep.subr.bf16.mxu0 0
        %6966 = vmatpush1.bf16.msra.mxu0 %v6951
        %6967 = vmatprep.subr.bf16.mxu0 0
        %6968 = vmatpush1.bf16.msra.mxu0 0
        %6969 = vmatprep.subr.bf16.mxu0 0
        %6970 = vmatpush1.bf16.msra.mxu0 0
        %6971 = vmatprep.subr.bf16.mxu0 0
        %6972 = vmatpush1.bf16.msra.mxu0 0
        %6973 = vmatprep.subr.bf16.mxu0 0
        %6974 = vmatpush1.bf16.msra.mxu0 0
        %6975 = vmatprep.subr.bf16.mxu0 0
        %6976 = vmatpush1.bf16.msra.mxu0 0
        %6977 = vmatprep.subr.bf16.mxu0 0
        %6978 = vmatpush1.bf16.msra.mxu0 0
        %6979 = vmatprep.subr.bf16.mxu0 0
        %6980 = vmatpush1.bf16.msra.mxu0 0
        %6981 = vmatprep.subr.bf16.mxu0 0
        %6982 = vmatpush1.bf16.msra.mxu0 0
        %6983 = vmatprep.subr.bf16.mxu0 0
        %6984 = vmatpush1.bf16.msra.mxu0 0
        %6985 = vmatprep.subr.bf16.mxu0 0
        %6986 = vmatpush1.bf16.msra.mxu0 0
        %6987 = vmatprep.subr.bf16.mxu0 0
        %6988 = vmatpush1.bf16.msra.mxu0 0
        %6989 = vmatprep.subr.bf16.mxu0 0
        %6990 = vmatpush1.bf16.msra.mxu0 0
        %6991 = vmatprep.mubr.bf16.mxu0 0
        %6992 = vmatmul.mubr.bf16.gmra.mrb[0].mxu0 %v6957
        %v6993 = vpop.f32.mrb[0].mxu0
        %v6994 = vadd.f32 0.0, %v6993
        %v6995 = vpop.f32.mrb[0].mxu0
        %v6996 = vpop.f32.mrb[0].mxu0
        %v6997 = vadd.f32 0.0, %v6996
        %v6998 = vpop.f32.mrb[0].mxu0
        %6999 = vdwg.mxu0
        %v7008 = vunpack.c.l.b16 %v6862
        %v7009 = vunpack.c.l.b16 %v6863
        %v7010 = vunpack.c.l.b16 %v6864
        %v7011 = vunpack.c.l.b16 %v6865
        %v7012 = vunpack.c.l.b16 %v6866
        %v7013 = vunpack.c.l.b16 %v6867
        %v7014 = vunpack.c.l.b16 %v6868
        %v7015 = vunpack.c.l.b16 %v6869
        %v7016 = vpack.c.b16 %v7009, %v7008
        %v7017 = vpack.c.b16 %v7011, %v7010
        %v7018 = vpack.c.b16 %v7013, %v7012
        %v7019 = vpack.c.b16 %v7015, %v7014
        %v7025 = vsel %vm2707, %v6861, 0
        %7027 = vmatprep.subr.bf16.mxu0 0
        %7028 = vmatpush1.bf16.msra.mxu0 %v7016
        %7029 = vmatprep.subr.bf16.mxu0 0
        %7030 = vmatpush1.bf16.msra.mxu0 %v7017
        %7031 = vmatprep.subr.bf16.mxu0 0
        %7032 = vmatpush1.bf16.msra.mxu0 %v7018
        %7033 = vmatprep.subr.bf16.mxu0 0
        %7034 = vmatpush1.bf16.msra.mxu0 %v7019
        %7035 = vmatprep.subr.bf16.mxu0 0
        %7036 = vmatpush1.bf16.msra.mxu0 0
        %7037 = vmatprep.subr.bf16.mxu0 0
        %7038 = vmatpush1.bf16.msra.mxu0 0
        %7039 = vmatprep.subr.bf16.mxu0 0
        %7040 = vmatpush1.bf16.msra.mxu0 0
        %7041 = vmatprep.subr.bf16.mxu0 0
        %7042 = vmatpush1.bf16.msra.mxu0 0
        %7043 = vmatprep.subr.bf16.mxu0 0
        %7044 = vmatpush1.bf16.msra.mxu0 0
        %7045 = vmatprep.subr.bf16.mxu0 0
        %7046 = vmatpush1.bf16.msra.mxu0 0
        %7047 = vmatprep.subr.bf16.mxu0 0
        %7048 = vmatpush1.bf16.msra.mxu0 0
        %7049 = vmatprep.subr.bf16.mxu0 0
        %7050 = vmatpush1.bf16.msra.mxu0 0
        %7051 = vmatprep.subr.bf16.mxu0 0
        %7052 = vmatpush1.bf16.msra.mxu0 0
        %7053 = vmatprep.subr.bf16.mxu0 0
        %7054 = vmatpush1.bf16.msra.mxu0 0
        %7055 = vmatprep.subr.bf16.mxu0 0
        %7056 = vmatpush1.bf16.msra.mxu0 0
        %7057 = vmatprep.subr.bf16.mxu0 0
        %7058 = vmatpush1.bf16.msra.mxu0 0
        %7059 = vmatprep.mubr.bf16.mxu0 0
        %7060 = vmatmul.mubr.bf16.gmra.mrb[0].mxu0 %v7025
        %v7061 = vpop.f32.mrb[0].mxu0
        %v7062 = vadd.f32 %v6994, %v7061
        %v7063 = vpop.f32.mrb[0].mxu0
        %v7064 = vpop.f32.mrb[0].mxu0
        %v7065 = vadd.f32 %v6997, %v7064
        %v7066 = vpop.f32.mrb[0].mxu0
        %7067 = vdwg.mxu0
        %s7068 = scalar_lea.vmem [#allocation13], 16
        %v7069 = vld [vmem:[%s7068] sm:$0xf]
        %v7070 = vld [vmem:[%s7068 + $0x4] sm:$0xf]
        %v7073 = vunpack.c.l.b16 %v7069
        %v7074 = vunpack.c.l.b16 %v7070
        %v7075 = vpack.c.b16 %v7074, %v7073
        %v7077 = vsel %vm2707, %v7075, 0
        %7079 = vmatprep.subr.bf16.mxu0 0
        %7080 = vmatpush1.bf16.msra.mxu0 %v6806
        %7081 = vmatprep.subr.bf16.mxu0 0
        %7082 = vmatpush1.bf16.msra.mxu0 %v6807
        %7083 = vmatprep.subr.bf16.mxu0 0
        %7084 = vmatpush1.bf16.msra.mxu0 %v6808
        %7085 = vmatprep.subr.bf16.mxu0 0
        %7086 = vmatpush1.bf16.msra.mxu0 %v6809
        %7087 = vmatprep.subr.bf16.mxu0 0
        %7088 = vmatpush1.bf16.msra.mxu0 0
        %7089 = vmatprep.subr.bf16.mxu0 0
        %7090 = vmatpush1.bf16.msra.mxu0 0
        %7091 = vmatprep.subr.bf16.mxu0 0
        %7092 = vmatpush1.bf16.msra.mxu0 0
        %7093 = vmatprep.subr.bf16.mxu0 0
        %7094 = vmatpush1.bf16.msra.mxu0 0
        %7095 = vmatprep.subr.bf16.mxu0 0
        %7096 = vmatpush1.bf16.msra.mxu0 0
        %7097 = vmatprep.subr.bf16.mxu0 0
        %7098 = vmatpush1.bf16.msra.mxu0 0
        %7099 = vmatprep.subr.bf16.mxu0 0
        %7100 = vmatpush1.bf16.msra.mxu0 0
        %7101 = vmatprep.subr.bf16.mxu0 0
        %7102 = vmatpush1.bf16.msra.mxu0 0
        %7103 = vmatprep.subr.bf16.mxu0 0
        %7104 = vmatpush1.bf16.msra.mxu0 0
        %7105 = vmatprep.subr.bf16.mxu0 0
        %7106 = vmatpush1.bf16.msra.mxu0 0
        %7107 = vmatprep.subr.bf16.mxu0 0
        %7108 = vmatpush1.bf16.msra.mxu0 0
        %7109 = vmatprep.subr.bf16.mxu0 0
        %7110 = vmatpush1.bf16.msra.mxu0 0
        %7111 = vmatprep.mubr.bf16.mxu0 0
        %7112 = vmatmul.mubr.bf16.gmra.mrb[0].mxu0 %v7077
        %v7113 = vpop.f32.mrb[0].mxu0
        %v7114 = vadd.f32 0.0, %v7113
        %v7115 = vpop.f32.mrb[0].mxu0
        %v7116 = vpop.f32.mrb[0].mxu0
        %v7117 = vadd.f32 0.0, %v7116
        %v7118 = vpop.f32.mrb[0].mxu0
        %7119 = vdwg.mxu0
        %v7120 = vpack.c.bf16 %v7117, %v7114
        %s7121 = scalar_lea.vmem [#allocation14], 64
        %v7122 = vld [vmem:[%s7121] sm:$0xf]
        %v7123 = vld [vmem:[%s7121 + $0x4] sm:$0xf]
        %v7124 = vld [vmem:[%s7121 + $0x8] sm:$0xf]
        %v7125 = vld [vmem:[%s7121 + $0xc] sm:$0xf]
        %v7126 = vld [vmem:[%s7121 + $0x10] sm:$0xf]
        %v7127 = vld [vmem:[%s7121 + $0x14] sm:$0xf]
        %v7128 = vld [vmem:[%s7121 + $0x18] sm:$0xf]
        %v7129 = vld [vmem:[%s7121 + $0x1c] sm:$0xf]
        %v7138 = vunpack.c.l.b16 %v7122
        %v7139 = vunpack.c.l.b16 %v7123
        %v7140 = vunpack.c.l.b16 %v7124
        %v7141 = vunpack.c.l.b16 %v7125
        %v7142 = vunpack.c.l.b16 %v7126
        %v7143 = vunpack.c.l.b16 %v7127
        %v7144 = vunpack.c.l.b16 %v7128
        %v7145 = vunpack.c.l.b16 %v7129
        %v7146 = vpack.c.b16 %v7139, %v7138
        %v7147 = vpack.c.b16 %v7141, %v7140
        %v7148 = vpack.c.b16 %v7143, %v7142
        %v7149 = vpack.c.b16 %v7145, %v7144
        %v7155 = vsel %vm2707, %v7120, 0
        %7157 = vmatprep.subr.bf16.mxu0 0
        %7158 = vmatpush1.bf16.msra.mxu0 %v7146
        %7159 = vmatprep.subr.bf16.mxu0 0
        %7160 = vmatpush1.bf16.msra.mxu0 %v7147
        %7161 = vmatprep.subr.bf16.mxu0 0
        %7162 = vmatpush1.bf16.msra.mxu0 %v7148
        %7163 = vmatprep.subr.bf16.mxu0 0
        %7164 = vmatpush1.bf16.msra.mxu0 %v7149
        %7165 = vmatprep.subr.bf16.mxu0 0
        %7166 = vmatpush1.bf16.msra.mxu0 0
        %7167 = vmatprep.subr.bf16.mxu0 0
        %7168 = vmatpush1.bf16.msra.mxu0 0
        %7169 = vmatprep.subr.bf16.mxu0 0
        %7170 = vmatpush1.bf16.msra.mxu0 0
        %7171 = vmatprep.subr.bf16.mxu0 0
        %7172 = vmatpush1.bf16.msra.mxu0 0
        %7173 = vmatprep.subr.bf16.mxu0 0
        %7174 = vmatpush1.bf16.msra.mxu0 0
        %7175 = vmatprep.subr.bf16.mxu0 0
        %7176 = vmatpush1.bf16.msra.mxu0 0
        %7177 = vmatprep.subr.bf16.mxu0 0
        %7178 = vmatpush1.bf16.msra.mxu0 0
        %7179 = vmatprep.subr.bf16.mxu0 0
        %7180 = vmatpush1.bf16.msra.mxu0 0
        %7181 = vmatprep.subr.bf16.mxu0 0
        %7182 = vmatpush1.bf16.msra.mxu0 0
        %7183 = vmatprep.subr.bf16.mxu0 0
        %7184 = vmatpush1.bf16.msra.mxu0 0
        %7185 = vmatprep.subr.bf16.mxu0 0
        %7186 = vmatpush1.bf16.msra.mxu0 0
        %7187 = vmatprep.subr.bf16.mxu0 0
        %7188 = vmatpush1.bf16.msra.mxu0 0
        %7189 = vmatprep.mubr.bf16.mxu0 0
        %7190 = vmatmul.mubr.bf16.gmra.mrb[0].mxu0 %v7155
        %v7191 = vpop.f32.mrb[0].mxu0
        %v7192 = vadd.f32 0.0, %v7191
        %v7193 = vpop.f32.mrb[0].mxu0
        %v7194 = vpop.f32.mrb[0].mxu0
        %v7195 = vadd.f32 0.0, %v7194
        %v7196 = vpop.f32.mrb[0].mxu0
        %7197 = vdwg.mxu0
        %v7198 = vadd.f32 %v7062, %v7192
        %v7199 = vadd.f32 %v7065, %v7195
        %s7200 = scalar_lea.vmem [#allocation13], 24
        %v7201 = vld [vmem:[%s7200] sm:$0xf]
        %v7202 = vld [vmem:[%s7200 + $0x4] sm:$0xf]
        %v7205 = vunpack.c.l.b16 %v7201
        %v7206 = vunpack.c.l.b16 %v7202
        %v7207 = vpack.c.b16 %v7206, %v7205
        %v7209 = vsel %vm2707, %v7207, 0
        %7211 = vmatprep.subr.bf16.mxu0 0
        %7212 = vmatpush1.bf16.msra.mxu0 %v6806
        %7213 = vmatprep.subr.bf16.mxu0 0
        %7214 = vmatpush1.bf16.msra.mxu0 %v6807
        %7215 = vmatprep.subr.bf16.mxu0 0
        %7216 = vmatpush1.bf16.msra.mxu0 %v6808
        %7217 = vmatprep.subr.bf16.mxu0 0
        %7218 = vmatpush1.bf16.msra.mxu0 %v6809
        %7219 = vmatprep.subr.bf16.mxu0 0
        %7220 = vmatpush1.bf16.msra.mxu0 0
        %7221 = vmatprep.subr.bf16.mxu0 0
        %7222 = vmatpush1.bf16.msra.mxu0 0
        %7223 = vmatprep.subr.bf16.mxu0 0
        %7224 = vmatpush1.bf16.msra.mxu0 0
        %7225 = vmatprep.subr.bf16.mxu0 0
        %7226 = vmatpush1.bf16.msra.mxu0 0
        %7227 = vmatprep.subr.bf16.mxu0 0
        %7228 = vmatpush1.bf16.msra.mxu0 0
        %7229 = vmatprep.subr.bf16.mxu0 0
        %7230 = vmatpush1.bf16.msra.mxu0 0
        %7231 = vmatprep.subr.bf16.mxu0 0
        %7232 = vmatpush1.bf16.msra.mxu0 0
        %7233 = vmatprep.subr.bf16.mxu0 0
        %7234 = vmatpush1.bf16.msra.mxu0 0
        %7235 = vmatprep.subr.bf16.mxu0 0
        %7236 = vmatpush1.bf16.msra.mxu0 0
        %7237 = vmatprep.subr.bf16.mxu0 0
        %7238 = vmatpush1.bf16.msra.mxu0 0
        %7239 = vmatprep.subr.bf16.mxu0 0
        %7240 = vmatpush1.bf16.msra.mxu0 0
        %7241 = vmatprep.subr.bf16.mxu0 0
        %7242 = vmatpush1.bf16.msra.mxu0 0
        %7243 = vmatprep.mubr.bf16.mxu0 0
        %7244 = vmatmul.mubr.bf16.gmra.mrb[0].mxu0 %v7209
        %v7245 = vpop.f32.mrb[0].mxu0
        %v7246 = vadd.f32 0.0, %v7245
        %v7247 = vpop.f32.mrb[0].mxu0
        %v7248 = vpop.f32.mrb[0].mxu0
        %v7249 = vadd.f32 0.0, %v7248
        %v7250 = vpop.f32.mrb[0].mxu0
        %7251 = vdwg.mxu0
        %v7252 = vpack.c.bf16 %v7249, %v7246
        %s7253 = scalar_lea.vmem [#allocation14], 96
        %v7254 = vld [vmem:[%s7253] sm:$0xf]
        %v7255 = vld [vmem:[%s7253 + $0x4] sm:$0xf]
        %v7256 = vld [vmem:[%s7253 + $0x8] sm:$0xf]
        %v7257 = vld [vmem:[%s7253 + $0xc] sm:$0xf]
        %v7258 = vld [vmem:[%s7253 + $0x10] sm:$0xf]
        %v7259 = vld [vmem:[%s7253 + $0x14] sm:$0xf]
        %v7260 = vld [vmem:[%s7253 + $0x18] sm:$0xf]
        %v7261 = vld [vmem:[%s7253 + $0x1c] sm:$0xf]
        %v7270 = vunpack.c.l.b16 %v7254
        %v7271 = vunpack.c.l.b16 %v7255
        %v7272 = vunpack.c.l.b16 %v7256
        %v7273 = vunpack.c.l.b16 %v7257
        %v7274 = vunpack.c.l.b16 %v7258
        %v7275 = vunpack.c.l.b16 %v7259
        %v7276 = vunpack.c.l.b16 %v7260
        %v7277 = vunpack.c.l.b16 %v7261
        %v7278 = vpack.c.b16 %v7271, %v7270
        %v7279 = vpack.c.b16 %v7273, %v7272
        %v7280 = vpack.c.b16 %v7275, %v7274
        %v7281 = vpack.c.b16 %v7277, %v7276
        %v7287 = vsel %vm2707, %v7252, 0
        %7289 = vmatprep.subr.bf16.mxu0 0
        %7290 = vmatpush1.bf16.msra.mxu0 %v7278
        %7291 = vmatprep.subr.bf16.mxu0 0
        %7292 = vmatpush1.bf16.msra.mxu0 %v7279
        %7293 = vmatprep.subr.bf16.mxu0 0
        %7294 = vmatpush1.bf16.msra.mxu0 %v7280
        %7295 = vmatprep.subr.bf16.mxu0 0
        %7296 = vmatpush1.bf16.msra.mxu0 %v7281
        %7297 = vmatprep.subr.bf16.mxu0 0
        %7298 = vmatpush1.bf16.msra.mxu0 0
        %7299 = vmatprep.subr.bf16.mxu0 0
        %7300 = vmatpush1.bf16.msra.mxu0 0
        %7301 = vmatprep.subr.bf16.mxu0 0
        %7302 = vmatpush1.bf16.msra.mxu0 0
        %7303 = vmatprep.subr.bf16.mxu0 0
        %7304 = vmatpush1.bf16.msra.mxu0 0
        %7305 = vmatprep.subr.bf16.mxu0 0
        %7306 = vmatpush1.bf16.msra.mxu0 0
        %7307 = vmatprep.subr.bf16.mxu0 0
        %7308 = vmatpush1.bf16.msra.mxu0 0
        %7309 = vmatprep.subr.bf16.mxu0 0
        %7310 = vmatpush1.bf16.msra.mxu0 0
        %7311 = vmatprep.subr.bf16.mxu0 0
        %7312 = vmatpush1.bf16.msra.mxu0 0
        %7313 = vmatprep.subr.bf16.mxu0 0
        %7314 = vmatpush1.bf16.msra.mxu0 0
        %7315 = vmatprep.subr.bf16.mxu0 0
        %7316 = vmatpush1.bf16.msra.mxu0 0
        %7317 = vmatprep.subr.bf16.mxu0 0
        %7318 = vmatpush1.bf16.msra.mxu0 0
        %7319 = vmatprep.subr.bf16.mxu0 0
        %7320 = vmatpush1.bf16.msra.mxu0 0
        %7321 = vmatprep.mubr.bf16.mxu0 0
        %7322 = vmatmul.mubr.bf16.gmra.mrb[0].mxu0 %v7287
        %v7323 = vpop.f32.mrb[0].mxu0
        %v7324 = vadd.f32 0.0, %v7323
        %v7325 = vpop.f32.mrb[0].mxu0
        %v7326 = vpop.f32.mrb[0].mxu0
        %v7327 = vadd.f32 0.0, %v7326
        %v7328 = vpop.f32.mrb[0].mxu0
        %7329 = vdwg.mxu0
        %v7330 = vadd.f32 %v7198, %v7324
        %v7331 = vadd.f32 %v7199, %v7327
        %s7332 = scalar_lea.vmem [#allocation13], 32
        %v7333 = vld [vmem:[%s7332] sm:$0xf]
        %v7334 = vld [vmem:[%s7332 + $0x4] sm:$0xf]
        %v7337 = vunpack.c.l.b16 %v7333
        %v7338 = vunpack.c.l.b16 %v7334
        %v7339 = vpack.c.b16 %v7338, %v7337
        %v7341 = vsel %vm2707, %v7339, 0
        %7343 = vmatprep.subr.bf16.mxu0 0
        %7344 = vmatpush1.bf16.msra.mxu0 %v6806
        %7345 = vmatprep.subr.bf16.mxu0 0
        %7346 = vmatpush1.bf16.msra.mxu0 %v6807
        %7347 = vmatprep.subr.bf16.mxu0 0
        %7348 = vmatpush1.bf16.msra.mxu0 %v6808
        %7349 = vmatprep.subr.bf16.mxu0 0
        %7350 = vmatpush1.bf16.msra.mxu0 %v6809
        %7351 = vmatprep.subr.bf16.mxu0 0
        %7352 = vmatpush1.bf16.msra.mxu0 0
        %7353 = vmatprep.subr.bf16.mxu0 0
        %7354 = vmatpush1.bf16.msra.mxu0 0
        %7355 = vmatprep.subr.bf16.mxu0 0
        %7356 = vmatpush1.bf16.msra.mxu0 0
        %7357 = vmatprep.subr.bf16.mxu0 0
        %7358 = vmatpush1.bf16.msra.mxu0 0
        %7359 = vmatprep.subr.bf16.mxu0 0
        %7360 = vmatpush1.bf16.msra.mxu0 0
        %7361 = vmatprep.subr.bf16.mxu0 0
        %7362 = vmatpush1.bf16.msra.mxu0 0
        %7363 = vmatprep.subr.bf16.mxu0 0
        %7364 = vmatpush1.bf16.msra.mxu0 0
        %7365 = vmatprep.subr.bf16.mxu0 0
        %7366 = vmatpush1.bf16.msra.mxu0 0
        %7367 = vmatprep.subr.bf16.mxu0 0
        %7368 = vmatpush1.bf16.msra.mxu0 0
        %7369 = vmatprep.subr.bf16.mxu0 0
        %7370 = vmatpush1.bf16.msra.mxu0 0
        %7371 = vmatprep.subr.bf16.mxu0 0
        %7372 = vmatpush1.bf16.msra.mxu0 0
        %7373 = vmatprep.subr.bf16.mxu0 0
        %7374 = vmatpush1.bf16.msra.mxu0 0
        %7375 = vmatprep.mubr.bf16.mxu0 0
        %7376 = vmatmul.mubr.bf16.gmra.mrb[0].mxu0 %v7341
        %v7377 = vpop.f32.mrb[0].mxu0
        %v7378 = vadd.f32 0.0, %v7377
        %v7379 = vpop.f32.mrb[0].mxu0
        %v7380 = vpop.f32.mrb[0].mxu0
        %v7381 = vadd.f32 0.0, %v7380
        %v7382 = vpop.f32.mrb[0].mxu0
        %7383 = vdwg.mxu0
        %v7384 = vpack.c.bf16 %v7381, %v7378
        %s7385 = scalar_lea.vmem [#allocation14], 128
        %v7386 = vld [vmem:[%s7385] sm:$0xf]
        %v7387 = vld [vmem:[%s7385 + $0x4] sm:$0xf]
        %v7388 = vld [vmem:[%s7385 + $0x8] sm:$0xf]
        %v7389 = vld [vmem:[%s7385 + $0xc] sm:$0xf]
        %v7390 = vld [vmem:[%s7385 + $0x10] sm:$0xf]
        %v7391 = vld [vmem:[%s7385 + $0x14] sm:$0xf]
        %v7392 = vld [vmem:[%s7385 + $0x18] sm:$0xf]
        %v7393 = vld [vmem:[%s7385 + $0x1c] sm:$0xf]
        %v7402 = vunpack.c.l.b16 %v7386
        %v7403 = vunpack.c.l.b16 %v7387
        %v7404 = vunpack.c.l.b16 %v7388
        %v7405 = vunpack.c.l.b16 %v7389
        %v7406 = vunpack.c.l.b16 %v7390
        %v7407 = vunpack.c.l.b16 %v7391
        %v7408 = vunpack.c.l.b16 %v7392
        %v7409 = vunpack.c.l.b16 %v7393
        %v7410 = vpack.c.b16 %v7403, %v7402
        %v7411 = vpack.c.b16 %v7405, %v7404
        %v7412 = vpack.c.b16 %v7407, %v7406
        %v7413 = vpack.c.b16 %v7409, %v7408
        %v7419 = vsel %vm2707, %v7384, 0
        %7421 = vmatprep.subr.bf16.mxu0 0
        %7422 = vmatpush1.bf16.msra.mxu0 %v7410
        %7423 = vmatprep.subr.bf16.mxu0 0
        %7424 = vmatpush1.bf16.msra.mxu0 %v7411
        %7425 = vmatprep.subr.bf16.mxu0 0
        %7426 = vmatpush1.bf16.msra.mxu0 %v7412
        %7427 = vmatprep.subr.bf16.mxu0 0
        %7428 = vmatpush1.bf16.msra.mxu0 %v7413
        %7429 = vmatprep.subr.bf16.mxu0 0
        %7430 = vmatpush1.bf16.msra.mxu0 0
        %7431 = vmatprep.subr.bf16.mxu0 0
        %7432 = vmatpush1.bf16.msra.mxu0 0
        %7433 = vmatprep.subr.bf16.mxu0 0
        %7434 = vmatpush1.bf16.msra.mxu0 0
        %7435 = vmatprep.subr.bf16.mxu0 0
        %7436 = vmatpush1.bf16.msra.mxu0 0
        %7437 = vmatprep.subr.bf16.mxu0 0
        %7438 = vmatpush1.bf16.msra.mxu0 0
        %7439 = vmatprep.subr.bf16.mxu0 0
        %7440 = vmatpush1.bf16.msra.mxu0 0
        %7441 = vmatprep.subr.bf16.mxu0 0
        %7442 = vmatpush1.bf16.msra.mxu0 0
        %7443 = vmatprep.subr.bf16.mxu0 0
        %7444 = vmatpush1.bf16.msra.mxu0 0
        %7445 = vmatprep.subr.bf16.mxu0 0
        %7446 = vmatpush1.bf16.msra.mxu0 0
        %7447 = vmatprep.subr.bf16.mxu0 0
        %7448 = vmatpush1.bf16.msra.mxu0 0
        %7449 = vmatprep.subr.bf16.mxu0 0
        %7450 = vmatpush1.bf16.msra.mxu0 0
        %7451 = vmatprep.subr.bf16.mxu0 0
        %7452 = vmatpush1.bf16.msra.mxu0 0
        %7453 = vmatprep.mubr.bf16.mxu0 0
        %7454 = vmatmul.mubr.bf16.gmra.mrb[0].mxu0 %v7419
        %v7455 = vpop.f32.mrb[0].mxu0
        %v7456 = vadd.f32 0.0, %v7455
        %v7457 = vpop.f32.mrb[0].mxu0
        %v7458 = vpop.f32.mrb[0].mxu0
        %v7459 = vadd.f32 0.0, %v7458
        %v7460 = vpop.f32.mrb[0].mxu0
        %7461 = vdwg.mxu0
        %v7462 = vadd.f32 %v7330, %v7456
        %v7463 = vadd.f32 %v7331, %v7459
        %s7464 = scalar_lea.vmem [#allocation13], 40
        %v7465 = vld [vmem:[%s7464] sm:$0xf]
        %v7466 = vld [vmem:[%s7464 + $0x4] sm:$0xf]
        %v7469 = vunpack.c.l.b16 %v7465
        %v7470 = vunpack.c.l.b16 %v7466
        %v7471 = vpack.c.b16 %v7470, %v7469
        %v7473 = vsel %vm2707, %v7471, 0
        %7475 = vmatprep.subr.bf16.mxu0 0
        %7476 = vmatpush1.bf16.msra.mxu0 %v6806
        %7477 = vmatprep.subr.bf16.mxu0 0
        %7478 = vmatpush1.bf16.msra.mxu0 %v6807
        %7479 = vmatprep.subr.bf16.mxu0 0
        %7480 = vmatpush1.bf16.msra.mxu0 %v6808
        %7481 = vmatprep.subr.bf16.mxu0 0
        %7482 = vmatpush1.bf16.msra.mxu0 %v6809
        %7483 = vmatprep.subr.bf16.mxu0 0
        %7484 = vmatpush1.bf16.msra.mxu0 0
        %7485 = vmatprep.subr.bf16.mxu0 0
        %7486 = vmatpush1.bf16.msra.mxu0 0
        %7487 = vmatprep.subr.bf16.mxu0 0
        %7488 = vmatpush1.bf16.msra.mxu0 0
        %7489 = vmatprep.subr.bf16.mxu0 0
        %7490 = vmatpush1.bf16.msra.mxu0 0
        %7491 = vmatprep.subr.bf16.mxu0 0
        %7492 = vmatpush1.bf16.msra.mxu0 0
        %7493 = vmatprep.subr.bf16.mxu0 0
        %7494 = vmatpush1.bf16.msra.mxu0 0
        %7495 = vmatprep.subr.bf16.mxu0 0
        %7496 = vmatpush1.bf16.msra.mxu0 0
        %7497 = vmatprep.subr.bf16.mxu0 0
        %7498 = vmatpush1.bf16.msra.mxu0 0
        %7499 = vmatprep.subr.bf16.mxu0 0
        %7500 = vmatpush1.bf16.msra.mxu0 0
        %7501 = vmatprep.subr.bf16.mxu0 0
        %7502 = vmatpush1.bf16.msra.mxu0 0
        %7503 = vmatprep.subr.bf16.mxu0 0
        %7504 = vmatpush1.bf16.msra.mxu0 0
        %7505 = vmatprep.subr.bf16.mxu0 0
        %7506 = vmatpush1.bf16.msra.mxu0 0
        %7507 = vmatprep.mubr.bf16.mxu0 0
        %7508 = vmatmul.mubr.bf16.gmra.mrb[0].mxu0 %v7473
        %v7509 = vpop.f32.mrb[0].mxu0
        %v7510 = vadd.f32 0.0, %v7509
        %v7511 = vpop.f32.mrb[0].mxu0
        %v7512 = vpop.f32.mrb[0].mxu0
        %v7513 = vadd.f32 0.0, %v7512
        %v7514 = vpop.f32.mrb[0].mxu0
        %7515 = vdwg.mxu0
        %v7516 = vpack.c.bf16 %v7513, %v7510
        %s7517 = scalar_lea.vmem [#allocation14], 160
        %v7518 = vld [vmem:[%s7517] sm:$0xf]
        %v7519 = vld [vmem:[%s7517 + $0x4] sm:$0xf]
        %v7520 = vld [vmem:[%s7517 + $0x8] sm:$0xf]
        %v7521 = vld [vmem:[%s7517 + $0xc] sm:$0xf]
        %v7522 = vld [vmem:[%s7517 + $0x10] sm:$0xf]
        %v7523 = vld [vmem:[%s7517 + $0x14] sm:$0xf]
        %v7524 = vld [vmem:[%s7517 + $0x18] sm:$0xf]
        %v7525 = vld [vmem:[%s7517 + $0x1c] sm:$0xf]
        %v7534 = vunpack.c.l.b16 %v7518
        %v7535 = vunpack.c.l.b16 %v7519
        %v7536 = vunpack.c.l.b16 %v7520
        %v7537 = vunpack.c.l.b16 %v7521
        %v7538 = vunpack.c.l.b16 %v7522
        %v7539 = vunpack.c.l.b16 %v7523
        %v7540 = vunpack.c.l.b16 %v7524
        %v7541 = vunpack.c.l.b16 %v7525
        %v7542 = vpack.c.b16 %v7535, %v7534
        %v7543 = vpack.c.b16 %v7537, %v7536
        %v7544 = vpack.c.b16 %v7539, %v7538
        %v7545 = vpack.c.b16 %v7541, %v7540
        %v7551 = vsel %vm2707, %v7516, 0
        %7553 = vmatprep.subr.bf16.mxu0 0
        %7554 = vmatpush1.bf16.msra.mxu0 %v7542
        %7555 = vmatprep.subr.bf16.mxu0 0
        %7556 = vmatpush1.bf16.msra.mxu0 %v7543
        %7557 = vmatprep.subr.bf16.mxu0 0
        %7558 = vmatpush1.bf16.msra.mxu0 %v7544
        %7559 = vmatprep.subr.bf16.mxu0 0
        %7560 = vmatpush1.bf16.msra.mxu0 %v7545
        %7561 = vmatprep.subr.bf16.mxu0 0
        %7562 = vmatpush1.bf16.msra.mxu0 0
        %7563 = vmatprep.subr.bf16.mxu0 0
        %7564 = vmatpush1.bf16.msra.mxu0 0
        %7565 = vmatprep.subr.bf16.mxu0 0
        %7566 = vmatpush1.bf16.msra.mxu0 0
        %7567 = vmatprep.subr.bf16.mxu0 0
        %7568 = vmatpush1.bf16.msra.mxu0 0
        %7569 = vmatprep.subr.bf16.mxu0 0
        %7570 = vmatpush1.bf16.msra.mxu0 0
        %7571 = vmatprep.subr.bf16.mxu0 0
        %7572 = vmatpush1.bf16.msra.mxu0 0
        %7573 = vmatprep.subr.bf16.mxu0 0
        %7574 = vmatpush1.bf16.msra.mxu0 0
        %7575 = vmatprep.subr.bf16.mxu0 0
        %7576 = vmatpush1.bf16.msra.mxu0 0
        %7577 = vmatprep.subr.bf16.mxu0 0
        %7578 = vmatpush1.bf16.msra.mxu0 0
        %7579 = vmatprep.subr.bf16.mxu0 0
        %7580 = vmatpush1.bf16.msra.mxu0 0
        %7581 = vmatprep.subr.bf16.mxu0 0
        %7582 = vmatpush1.bf16.msra.mxu0 0
        %7583 = vmatprep.subr.bf16.mxu0 0
        %7584 = vmatpush1.bf16.msra.mxu0 0
        %7585 = vmatprep.mubr.bf16.mxu0 0
        %7586 = vmatmul.mubr.bf16.gmra.mrb[0].mxu0 %v7551
        %v7587 = vpop.f32.mrb[0].mxu0
        %v7588 = vadd.f32 0.0, %v7587
        %v7589 = vpop.f32.mrb[0].mxu0
        %v7590 = vpop.f32.mrb[0].mxu0
        %v7591 = vadd.f32 0.0, %v7590
        %v7592 = vpop.f32.mrb[0].mxu0
        %7593 = vdwg.mxu0
        %v7594 = vadd.f32 %v7462, %v7588
        %v7595 = vadd.f32 %v7463, %v7591
        %s7596 = scalar_lea.vmem [#allocation13], 48
        %v7597 = vld [vmem:[%s7596] sm:$0xf]
        %v7598 = vld [vmem:[%s7596 + $0x4] sm:$0xf]
        %v7601 = vunpack.c.l.b16 %v7597
        %v7602 = vunpack.c.l.b16 %v7598
        %v7603 = vpack.c.b16 %v7602, %v7601
        %v7605 = vsel %vm2707, %v7603, 0
        %7607 = vmatprep.subr.bf16.mxu0 0
        %7608 = vmatpush1.bf16.msra.mxu0 %v6806
        %7609 = vmatprep.subr.bf16.mxu0 0
        %7610 = vmatpush1.bf16.msra.mxu0 %v6807
        %7611 = vmatprep.subr.bf16.mxu0 0
        %7612 = vmatpush1.bf16.msra.mxu0 %v6808
        %7613 = vmatprep.subr.bf16.mxu0 0
        %7614 = vmatpush1.bf16.msra.mxu0 %v6809
        %7615 = vmatprep.subr.bf16.mxu0 0
        %7616 = vmatpush1.bf16.msra.mxu0 0
        %7617 = vmatprep.subr.bf16.mxu0 0
        %7618 = vmatpush1.bf16.msra.mxu0 0
        %7619 = vmatprep.subr.bf16.mxu0 0
        %7620 = vmatpush1.bf16.msra.mxu0 0
        %7621 = vmatprep.subr.bf16.mxu0 0
        %7622 = vmatpush1.bf16.msra.mxu0 0
        %7623 = vmatprep.subr.bf16.mxu0 0
        %7624 = vmatpush1.bf16.msra.mxu0 0
        %7625 = vmatprep.subr.bf16.mxu0 0
        %7626 = vmatpush1.bf16.msra.mxu0 0
        %7627 = vmatprep.subr.bf16.mxu0 0
        %7628 = vmatpush1.bf16.msra.mxu0 0
        %7629 = vmatprep.subr.bf16.mxu0 0
        %7630 = vmatpush1.bf16.msra.mxu0 0
        %7631 = vmatprep.subr.bf16.mxu0 0
        %7632 = vmatpush1.bf16.msra.mxu0 0
        %7633 = vmatprep.subr.bf16.mxu0 0
        %7634 = vmatpush1.bf16.msra.mxu0 0
        %7635 = vmatprep.subr.bf16.mxu0 0
        %7636 = vmatpush1.bf16.msra.mxu0 0
        %7637 = vmatprep.subr.bf16.mxu0 0
        %7638 = vmatpush1.bf16.msra.mxu0 0
        %7639 = vmatprep.mubr.bf16.mxu0 0
        %7640 = vmatmul.mubr.bf16.gmra.mrb[0].mxu0 %v7605
        %v7641 = vpop.f32.mrb[0].mxu0
        %v7642 = vadd.f32 0.0, %v7641
        %v7643 = vpop.f32.mrb[0].mxu0
        %v7644 = vpop.f32.mrb[0].mxu0
        %v7645 = vadd.f32 0.0, %v7644
        %v7646 = vpop.f32.mrb[0].mxu0
        %7647 = vdwg.mxu0
        %v7648 = vpack.c.bf16 %v7645, %v7642
        %s7649 = scalar_lea.vmem [#allocation14], 192
        %v7650 = vld [vmem:[%s7649] sm:$0xf]
        %v7651 = vld [vmem:[%s7649 + $0x4] sm:$0xf]
        %v7652 = vld [vmem:[%s7649 + $0x8] sm:$0xf]
        %v7653 = vld [vmem:[%s7649 + $0xc] sm:$0xf]
        %v7654 = vld [vmem:[%s7649 + $0x10] sm:$0xf]
        %v7655 = vld [vmem:[%s7649 + $0x14] sm:$0xf]
        %v7656 = vld [vmem:[%s7649 + $0x18] sm:$0xf]
        %v7657 = vld [vmem:[%s7649 + $0x1c] sm:$0xf]
        %v7666 = vunpack.c.l.b16 %v7650
        %v7667 = vunpack.c.l.b16 %v7651
        %v7668 = vunpack.c.l.b16 %v7652
        %v7669 = vunpack.c.l.b16 %v7653
        %v7670 = vunpack.c.l.b16 %v7654
        %v7671 = vunpack.c.l.b16 %v7655
        %v7672 = vunpack.c.l.b16 %v7656
        %v7673 = vunpack.c.l.b16 %v7657
        %v7674 = vpack.c.b16 %v7667, %v7666
        %v7675 = vpack.c.b16 %v7669, %v7668
        %v7676 = vpack.c.b16 %v7671, %v7670
        %v7677 = vpack.c.b16 %v7673, %v7672
        %v7683 = vsel %vm2707, %v7648, 0
        %7685 = vmatprep.subr.bf16.mxu0 0
        %7686 = vmatpush1.bf16.msra.mxu0 %v7674
        %7687 = vmatprep.subr.bf16.mxu0 0
        %7688 = vmatpush1.bf16.msra.mxu0 %v7675
        %7689 = vmatprep.subr.bf16.mxu0 0
        %7690 = vmatpush1.bf16.msra.mxu0 %v7676
        %7691 = vmatprep.subr.bf16.mxu0 0
        %7692 = vmatpush1.bf16.msra.mxu0 %v7677
        %7693 = vmatprep.subr.bf16.mxu0 0
        %7694 = vmatpush1.bf16.msra.mxu0 0
        %7695 = vmatprep.subr.bf16.mxu0 0
        %7696 = vmatpush1.bf16.msra.mxu0 0
        %7697 = vmatprep.subr.bf16.mxu0 0
        %7698 = vmatpush1.bf16.msra.mxu0 0
        %7699 = vmatprep.subr.bf16.mxu0 0
        %7700 = vmatpush1.bf16.msra.mxu0 0
        %7701 = vmatprep.subr.bf16.mxu0 0
        %7702 = vmatpush1.bf16.msra.mxu0 0
        %7703 = vmatprep.subr.bf16.mxu0 0
        %7704 = vmatpush1.bf16.msra.mxu0 0
        %7705 = vmatprep.subr.bf16.mxu0 0
        %7706 = vmatpush1.bf16.msra.mxu0 0
        %7707 = vmatprep.subr.bf16.mxu0 0
        %7708 = vmatpush1.bf16.msra.mxu0 0
        %7709 = vmatprep.subr.bf16.mxu0 0
        %7710 = vmatpush1.bf16.msra.mxu0 0
        %7711 = vmatprep.subr.bf16.mxu0 0
        %7712 = vmatpush1.bf16.msra.mxu0 0
        %7713 = vmatprep.subr.bf16.mxu0 0
        %7714 = vmatpush1.bf16.msra.mxu0 0
        %7715 = vmatprep.subr.bf16.mxu0 0
        %7716 = vmatpush1.bf16.msra.mxu0 0
        %7717 = vmatprep.mubr.bf16.mxu0 0
        %7718 = vmatmul.mubr.bf16.gmra.mrb[0].mxu0 %v7683
        %v7719 = vpop.f32.mrb[0].mxu0
        %v7720 = vadd.f32 0.0, %v7719
        %v7721 = vpop.f32.mrb[0].mxu0
        %v7722 = vpop.f32.mrb[0].mxu0
        %v7723 = vadd.f32 0.0, %v7722
        %v7724 = vpop.f32.mrb[0].mxu0
        %7725 = vdwg.mxu0
        %v7726 = vadd.f32 %v7594, %v7720
        %v7727 = vadd.f32 %v7595, %v7723
        %s7728 = scalar_lea.vmem [#allocation13], 56
        %v7729 = vld [vmem:[%s7728] sm:$0xf]
        %v7730 = vld [vmem:[%s7728 + $0x4] sm:$0xf]
        %v7733 = vunpack.c.l.b16 %v7729
        %v7734 = vunpack.c.l.b16 %v7730
        %v7735 = vpack.c.b16 %v7734, %v7733
        %v7737 = vsel %vm2707, %v7735, 0
        %7739 = vmatprep.subr.bf16.mxu0 0
        %7740 = vmatpush1.bf16.msra.mxu0 %v6806
        %7741 = vmatprep.subr.bf16.mxu0 0
        %7742 = vmatpush1.bf16.msra.mxu0 %v6807
        %7743 = vmatprep.subr.bf16.mxu0 0
        %7744 = vmatpush1.bf16.msra.mxu0 %v6808
        %7745 = vmatprep.subr.bf16.mxu0 0
        %7746 = vmatpush1.bf16.msra.mxu0 %v6809
        %7747 = vmatprep.subr.bf16.mxu0 0
        %7748 = vmatpush1.bf16.msra.mxu0 0
        %7749 = vmatprep.subr.bf16.mxu0 0
        %7750 = vmatpush1.bf16.msra.mxu0 0
        %7751 = vmatprep.subr.bf16.mxu0 0
        %7752 = vmatpush1.bf16.msra.mxu0 0
        %7753 = vmatprep.subr.bf16.mxu0 0
        %7754 = vmatpush1.bf16.msra.mxu0 0
        %7755 = vmatprep.subr.bf16.mxu0 0
        %7756 = vmatpush1.bf16.msra.mxu0 0
        %7757 = vmatprep.subr.bf16.mxu0 0
        %7758 = vmatpush1.bf16.msra.mxu0 0
        %7759 = vmatprep.subr.bf16.mxu0 0
        %7760 = vmatpush1.bf16.msra.mxu0 0
        %7761 = vmatprep.subr.bf16.mxu0 0
        %7762 = vmatpush1.bf16.msra.mxu0 0
        %7763 = vmatprep.subr.bf16.mxu0 0
        %7764 = vmatpush1.bf16.msra.mxu0 0
        %7765 = vmatprep.subr.bf16.mxu0 0
        %7766 = vmatpush1.bf16.msra.mxu0 0
        %7767 = vmatprep.subr.bf16.mxu0 0
        %7768 = vmatpush1.bf16.msra.mxu0 0
        %7769 = vmatprep.subr.bf16.mxu0 0
        %7770 = vmatpush1.bf16.msra.mxu0 0
        %7771 = vmatprep.mubr.bf16.mxu0 0
        %7772 = vmatmul.mubr.bf16.gmra.mrb[0].mxu0 %v7737
        %v7773 = vpop.f32.mrb[0].mxu0
        %v7774 = vadd.f32 0.0, %v7773
        %v7775 = vpop.f32.mrb[0].mxu0
        %v7776 = vpop.f32.mrb[0].mxu0
        %v7777 = vadd.f32 0.0, %v7776
        %v7778 = vpop.f32.mrb[0].mxu0
        %7779 = vdwg.mxu0
        %v7780 = vpack.c.bf16 %v7777, %v7774
        %s7781 = scalar_lea.vmem [#allocation14], 224
        %v7782 = vld [vmem:[%s7781] sm:$0xf]
        %v7783 = vld [vmem:[%s7781 + $0x4] sm:$0xf]
        %v7784 = vld [vmem:[%s7781 + $0x8] sm:$0xf]
        %v7785 = vld [vmem:[%s7781 + $0xc] sm:$0xf]
        %v7786 = vld [vmem:[%s7781 + $0x10] sm:$0xf]
        %v7787 = vld [vmem:[%s7781 + $0x14] sm:$0xf]
        %v7788 = vld [vmem:[%s7781 + $0x18] sm:$0xf]
        %v7789 = vld [vmem:[%s7781 + $0x1c] sm:$0xf]
        %v7798 = vunpack.c.l.b16 %v7782
        %v7799 = vunpack.c.l.b16 %v7783
        %v7800 = vunpack.c.l.b16 %v7784
        %v7801 = vunpack.c.l.b16 %v7785
        %v7802 = vunpack.c.l.b16 %v7786
        %v7803 = vunpack.c.l.b16 %v7787
        %v7804 = vunpack.c.l.b16 %v7788
        %v7805 = vunpack.c.l.b16 %v7789
        %v7806 = vpack.c.b16 %v7799, %v7798
        %v7807 = vpack.c.b16 %v7801, %v7800
        %v7808 = vpack.c.b16 %v7803, %v7802
        %v7809 = vpack.c.b16 %v7805, %v7804
        %v7815 = vsel %vm2707, %v7780, 0
        %7817 = vmatprep.subr.bf16.mxu0 0
        %7818 = vmatpush1.bf16.msra.mxu0 %v7806
        %7819 = vmatprep.subr.bf16.mxu0 0
        %7820 = vmatpush1.bf16.msra.mxu0 %v7807
        %7821 = vmatprep.subr.bf16.mxu0 0
        %7822 = vmatpush1.bf16.msra.mxu0 %v7808
        %7823 = vmatprep.subr.bf16.mxu0 0
        %7824 = vmatpush1.bf16.msra.mxu0 %v7809
        %7825 = vmatprep.subr.bf16.mxu0 0
        %7826 = vmatpush1.bf16.msra.mxu0 0
        %7827 = vmatprep.subr.bf16.mxu0 0
        %7828 = vmatpush1.bf16.msra.mxu0 0
        %7829 = vmatprep.subr.bf16.mxu0 0
        %7830 = vmatpush1.bf16.msra.mxu0 0
        %7831 = vmatprep.subr.bf16.mxu0 0
        %7832 = vmatpush1.bf16.msra.mxu0 0
        %7833 = vmatprep.subr.bf16.mxu0 0
        %7834 = vmatpush1.bf16.msra.mxu0 0
        %7835 = vmatprep.subr.bf16.mxu0 0
        %7836 = vmatpush1.bf16.msra.mxu0 0
        %7837 = vmatprep.subr.bf16.mxu0 0
        %7838 = vmatpush1.bf16.msra.mxu0 0
        %7839 = vmatprep.subr.bf16.mxu0 0
        %7840 = vmatpush1.bf16.msra.mxu0 0
        %7841 = vmatprep.subr.bf16.mxu0 0
        %7842 = vmatpush1.bf16.msra.mxu0 0
        %7843 = vmatprep.subr.bf16.mxu0 0
        %7844 = vmatpush1.bf16.msra.mxu0 0
        %7845 = vmatprep.subr.bf16.mxu0 0
        %7846 = vmatpush1.bf16.msra.mxu0 0
        %7847 = vmatprep.subr.bf16.mxu0 0
        %7848 = vmatpush1.bf16.msra.mxu0 0
        %7849 = vmatprep.mubr.bf16.mxu0 0
        %7850 = vmatmul.mubr.bf16.gmra.mrb[0].mxu0 %v7815
        %v7851 = vpop.f32.mrb[0].mxu0
        %v7852 = vadd.f32 0.0, %v7851
        %v7853 = vpop.f32.mrb[0].mxu0
        %v7854 = vpop.f32.mrb[0].mxu0
        %v7855 = vadd.f32 0.0, %v7854
        %v7856 = vpop.f32.mrb[0].mxu0
        %7857 = vdwg.mxu0
        %v7858 = vadd.f32 %v7726, %v7852
        %v7859 = vadd.f32 %v7727, %v7855
        %s7860 = scalar_lea.vmem [#allocation13], 64
        %v7861 = vld [vmem:[%s7860] sm:$0xf]
        %v7862 = vld [vmem:[%s7860 + $0x4] sm:$0xf]
        %v7865 = vunpack.c.l.b16 %v7861
        %v7866 = vunpack.c.l.b16 %v7862
        %v7867 = vpack.c.b16 %v7866, %v7865
        %v7869 = vsel %vm2707, %v7867, 0
        %7871 = vmatprep.subr.bf16.mxu0 0
        %7872 = vmatpush1.bf16.msra.mxu0 %v6806
        %7873 = vmatprep.subr.bf16.mxu0 0
        %7874 = vmatpush1.bf16.msra.mxu0 %v6807
        %7875 = vmatprep.subr.bf16.mxu0 0
        %7876 = vmatpush1.bf16.msra.mxu0 %v6808
        %7877 = vmatprep.subr.bf16.mxu0 0
        %7878 = vmatpush1.bf16.msra.mxu0 %v6809
        %7879 = vmatprep.subr.bf16.mxu0 0
        %7880 = vmatpush1.bf16.msra.mxu0 0
        %7881 = vmatprep.subr.bf16.mxu0 0
        %7882 = vmatpush1.bf16.msra.mxu0 0
        %7883 = vmatprep.subr.bf16.mxu0 0
        %7884 = vmatpush1.bf16.msra.mxu0 0
        %7885 = vmatprep.subr.bf16.mxu0 0
        %7886 = vmatpush1.bf16.msra.mxu0 0
        %7887 = vmatprep.subr.bf16.mxu0 0
        %7888 = vmatpush1.bf16.msra.mxu0 0
        %7889 = vmatprep.subr.bf16.mxu0 0
        %7890 = vmatpush1.bf16.msra.mxu0 0
        %7891 = vmatprep.subr.bf16.mxu0 0
        %7892 = vmatpush1.bf16.msra.mxu0 0
        %7893 = vmatprep.subr.bf16.mxu0 0
        %7894 = vmatpush1.bf16.msra.mxu0 0
        %7895 = vmatprep.subr.bf16.mxu0 0
        %7896 = vmatpush1.bf16.msra.mxu0 0
        %7897 = vmatprep.subr.bf16.mxu0 0
        %7898 = vmatpush1.bf16.msra.mxu0 0
        %7899 = vmatprep.subr.bf16.mxu0 0
        %7900 = vmatpush1.bf16.msra.mxu0 0
        %7901 = vmatprep.subr.bf16.mxu0 0
        %7902 = vmatpush1.bf16.msra.mxu0 0
        %7903 = vmatprep.mubr.bf16.mxu0 0
        %7904 = vmatmul.mubr.bf16.gmra.mrb[0].mxu0 %v7869
        %v7905 = vpop.f32.mrb[0].mxu0
        %v7906 = vadd.f32 0.0, %v7905
        %v7907 = vpop.f32.mrb[0].mxu0
        %v7908 = vpop.f32.mrb[0].mxu0
        %v7909 = vadd.f32 0.0, %v7908
        %v7910 = vpop.f32.mrb[0].mxu0
        %7911 = vdwg.mxu0
        %v7912 = vpack.c.bf16 %v7909, %v7906
        %s7913 = scalar_lea.vmem [#allocation14], 256
        %v7914 = vld [vmem:[%s7913] sm:$0xf]
        %v7915 = vld [vmem:[%s7913 + $0x4] sm:$0xf]
        %v7916 = vld [vmem:[%s7913 + $0x8] sm:$0xf]
        %v7917 = vld [vmem:[%s7913 + $0xc] sm:$0xf]
        %v7918 = vld [vmem:[%s7913 + $0x10] sm:$0xf]
        %v7919 = vld [vmem:[%s7913 + $0x14] sm:$0xf]
        %v7920 = vld [vmem:[%s7913 + $0x18] sm:$0xf]
        %v7921 = vld [vmem:[%s7913 + $0x1c] sm:$0xf]
        %v7930 = vunpack.c.l.b16 %v7914
        %v7931 = vunpack.c.l.b16 %v7915
        %v7932 = vunpack.c.l.b16 %v7916
        %v7933 = vunpack.c.l.b16 %v7917
        %v7934 = vunpack.c.l.b16 %v7918
        %v7935 = vunpack.c.l.b16 %v7919
        %v7936 = vunpack.c.l.b16 %v7920
        %v7937 = vunpack.c.l.b16 %v7921
        %v7938 = vpack.c.b16 %v7931, %v7930
        %v7939 = vpack.c.b16 %v7933, %v7932
        %v7940 = vpack.c.b16 %v7935, %v7934
        %v7941 = vpack.c.b16 %v7937, %v7936
        %v7947 = vsel %vm2707, %v7912, 0
        %7949 = vmatprep.subr.bf16.mxu0 0
        %7950 = vmatpush1.bf16.msra.mxu0 %v7938
        %7951 = vmatprep.subr.bf16.mxu0 0
        %7952 = vmatpush1.bf16.msra.mxu0 %v7939
        %7953 = vmatprep.subr.bf16.mxu0 0
        %7954 = vmatpush1.bf16.msra.mxu0 %v7940
        %7955 = vmatprep.subr.bf16.mxu0 0
        %7956 = vmatpush1.bf16.msra.mxu0 %v7941
        %7957 = vmatprep.subr.bf16.mxu0 0
        %7958 = vmatpush1.bf16.msra.mxu0 0
        %7959 = vmatprep.subr.bf16.mxu0 0
        %7960 = vmatpush1.bf16.msra.mxu0 0
        %7961 = vmatprep.subr.bf16.mxu0 0
        %7962 = vmatpush1.bf16.msra.mxu0 0
        %7963 = vmatprep.subr.bf16.mxu0 0
        %7964 = vmatpush1.bf16.msra.mxu0 0
        %7965 = vmatprep.subr.bf16.mxu0 0
        %7966 = vmatpush1.bf16.msra.mxu0 0
        %7967 = vmatprep.subr.bf16.mxu0 0
        %7968 = vmatpush1.bf16.msra.mxu0 0
        %7969 = vmatprep.subr.bf16.mxu0 0
        %7970 = vmatpush1.bf16.msra.mxu0 0
        %7971 = vmatprep.subr.bf16.mxu0 0
        %7972 = vmatpush1.bf16.msra.mxu0 0
        %7973 = vmatprep.subr.bf16.mxu0 0
        %7974 = vmatpush1.bf16.msra.mxu0 0
        %7975 = vmatprep.subr.bf16.mxu0 0
        %7976 = vmatpush1.bf16.msra.mxu0 0
        %7977 = vmatprep.subr.bf16.mxu0 0
        %7978 = vmatpush1.bf16.msra.mxu0 0
        %7979 = vmatprep.subr.bf16.mxu0 0
        %7980 = vmatpush1.bf16.msra.mxu0 0
        %7981 = vmatprep.mubr.bf16.mxu0 0
        %7982 = vmatmul.mubr.bf16.gmra.mrb[0].mxu0 %v7947
        %v7983 = vpop.f32.mrb[0].mxu0
        %v7984 = vadd.f32 0.0, %v7983
        %v7985 = vpop.f32.mrb[0].mxu0
        %v7986 = vpop.f32.mrb[0].mxu0
        %v7987 = vadd.f32 0.0, %v7986
        %v7988 = vpop.f32.mrb[0].mxu0
        %7989 = vdwg.mxu0
        %v7990 = vadd.f32 %v7858, %v7984
        %v7991 = vadd.f32 %v7859, %v7987
        %v7992 = vld [vmem:[%s12] sm:$0x1]
        %v7994 = vlaneseq
        %v7995 = vshrl.u32 %v7994, 7
        %v7996 = vsub.s32 0, %v7995
        %v7997 = vrot.slane %v7992, %v7996
        %v7999 = vadd.f32 %v7990, %v7997
        %v8000 = vadd.f32 %v7991, %v7997
        %v8001 = vmax.f32 %v7999, 0.0
        %v8002 = vmax.f32 %v8000, 0.0
        %v8003 = vpack.c.bf16 %v8002, %v8001
        %v8004 = vld [vmem:[%s13] sm:$0xf]
        %v8005 = vld [vmem:[%s13 + $0x4] sm:$0xf]
        %v8008 = vunpack.c.l.b16 %v8004
        %v8009 = vunpack.c.l.b16 %v8005
        %v8010 = vpack.c.b16 %v8009, %v8008
        %v8012 = vsel %vm2707, %v8010, 0
        %8014 = vmatprep.subr.bf16.mxu0 0
        %8015 = vmatpush1.bf16.msra.mxu0 %v6806
        %8016 = vmatprep.subr.bf16.mxu0 0
        %8017 = vmatpush1.bf16.msra.mxu0 %v6807
        %8018 = vmatprep.subr.bf16.mxu0 0
        %8019 = vmatpush1.bf16.msra.mxu0 %v6808
        %8020 = vmatprep.subr.bf16.mxu0 0
        %8021 = vmatpush1.bf16.msra.mxu0 %v6809
        %8022 = vmatprep.subr.bf16.mxu0 0
        %8023 = vmatpush1.bf16.msra.mxu0 0
        %8024 = vmatprep.subr.bf16.mxu0 0
        %8025 = vmatpush1.bf16.msra.mxu0 0
        %8026 = vmatprep.subr.bf16.mxu0 0
        %8027 = vmatpush1.bf16.msra.mxu0 0
        %8028 = vmatprep.subr.bf16.mxu0 0
        %8029 = vmatpush1.bf16.msra.mxu0 0
        %8030 = vmatprep.subr.bf16.mxu0 0
        %8031 = vmatpush1.bf16.msra.mxu0 0
        %8032 = vmatprep.subr.bf16.mxu0 0
        %8033 = vmatpush1.bf16.msra.mxu0 0
        %8034 = vmatprep.subr.bf16.mxu0 0
        %8035 = vmatpush1.bf16.msra.mxu0 0
        %8036 = vmatprep.subr.bf16.mxu0 0
        %8037 = vmatpush1.bf16.msra.mxu0 0
        %8038 = vmatprep.subr.bf16.mxu0 0
        %8039 = vmatpush1.bf16.msra.mxu0 0
        %8040 = vmatprep.subr.bf16.mxu0 0
        %8041 = vmatpush1.bf16.msra.mxu0 0
        %8042 = vmatprep.subr.bf16.mxu0 0
        %8043 = vmatpush1.bf16.msra.mxu0 0
        %8044 = vmatprep.subr.bf16.mxu0 0
        %8045 = vmatpush1.bf16.msra.mxu0 0
        %8046 = vmatprep.mubr.bf16.mxu0 0
        %8047 = vmatmul.mubr.bf16.gmra.mrb[0].mxu0 %v8012
        %v8048 = vpop.f32.mrb[0].mxu0
        %v8049 = vadd.f32 0.0, %v8048
        %v8050 = vpop.f32.mrb[0].mxu0
        %v8051 = vpop.f32.mrb[0].mxu0
        %v8052 = vadd.f32 0.0, %v8051
        %v8053 = vpop.f32.mrb[0].mxu0
        %8054 = vdwg.mxu0
        %v8055 = vpack.c.bf16 %v8052, %v8049
        %v8056 = vld [vmem:[#allocation16] sm:$0xf]
        %v8057 = vld [vmem:[#allocation16 + $0x4] sm:$0xf]
        %v8058 = vld [vmem:[#allocation16 + $0x8] sm:$0xf]
        %v8059 = vld [vmem:[#allocation16 + $0xc] sm:$0xf]
        %v8060 = vld [vmem:[#allocation16 + $0x10] sm:$0xf]
        %v8061 = vld [vmem:[#allocation16 + $0x14] sm:$0xf]
        %v8062 = vld [vmem:[#allocation16 + $0x18] sm:$0xf]
        %v8063 = vld [vmem:[#allocation16 + $0x1c] sm:$0xf]
        %v8064 = vld [vmem:[%s15] sm:$0x1]
        %v8066 = vlaneseq
        %v8067 = vshrl.u32 %v8066, 7
        %v8068 = vsub.s32 0, %v8067
        %v8069 = vrot.slane %v8064, %v8068
        %v8079 = vunpack.c.l.b16 %v8056
        %v8080 = vunpack.c.l.b16 %v8057
        %v8081 = vunpack.c.l.b16 %v8058
        %v8082 = vunpack.c.l.b16 %v8059
        %v8083 = vunpack.c.l.b16 %v8060
        %v8084 = vunpack.c.l.b16 %v8061
        %v8085 = vunpack.c.l.b16 %v8062
        %v8086 = vunpack.c.l.b16 %v8063
        %v8087 = vpack.c.b16 %v8080, %v8079
        %v8088 = vpack.c.b16 %v8082, %v8081
        %v8089 = vpack.c.b16 %v8084, %v8083
        %v8090 = vpack.c.b16 %v8086, %v8085
        %v8096 = vsel %vm2707, %v8055, 0
        %8098 = vmatprep.subr.bf16.mxu0 0
        %8099 = vmatpush1.bf16.msra.mxu0 %v8087
        %8100 = vmatprep.subr.bf16.mxu0 0
        %8101 = vmatpush1.bf16.msra.mxu0 %v8088
        %8102 = vmatprep.subr.bf16.mxu0 0
        %8103 = vmatpush1.bf16.msra.mxu0 %v8089
        %8104 = vmatprep.subr.bf16.mxu0 0
        %8105 = vmatpush1.bf16.msra.mxu0 %v8090
        %8106 = vmatprep.subr.bf16.mxu0 0
        %8107 = vmatpush1.bf16.msra.mxu0 0
        %8108 = vmatprep.subr.bf16.mxu0 0
        %8109 = vmatpush1.bf16.msra.mxu0 0
        %8110 = vmatprep.subr.bf16.mxu0 0
        %8111 = vmatpush1.bf16.msra.mxu0 0
        %8112 = vmatprep.subr.bf16.mxu0 0
        %8113 = vmatpush1.bf16.msra.mxu0 0
        %8114 = vmatprep.subr.bf16.mxu0 0
        %8115 = vmatpush1.bf16.msra.mxu0 0
        %8116 = vmatprep.subr.bf16.mxu0 0
        %8117 = vmatpush1.bf16.msra.mxu0 0
        %8118 = vmatprep.subr.bf16.mxu0 0
        %8119 = vmatpush1.bf16.msra.mxu0 0
        %8120 = vmatprep.subr.bf16.mxu0 0
        %8121 = vmatpush1.bf16.msra.mxu0 0
        %8122 = vmatprep.subr.bf16.mxu0 0
        %8123 = vmatpush1.bf16.msra.mxu0 0
        %8124 = vmatprep.subr.bf16.mxu0 0
        %8125 = vmatpush1.bf16.msra.mxu0 0
        %8126 = vmatprep.subr.bf16.mxu0 0
        %8127 = vmatpush1.bf16.msra.mxu0 0
        %8128 = vmatprep.subr.bf16.mxu0 0
        %8129 = vmatpush1.bf16.msra.mxu0 0
        %8130 = vmatprep.mubr.bf16.mxu0 0
        %8131 = vmatmul.mubr.bf16.gmra.mrb[0].mxu0 %v8096
        %v8132 = vpop.f32.mrb[0].mxu0
        %v8133 = vadd.f32 %v8069, %v8132
        %v8134 = vpop.f32.mrb[0].mxu0
        %v8135 = vpop.f32.mrb[0].mxu0
        %v8136 = vadd.f32 %v8069, %v8135
        %v8137 = vpop.f32.mrb[0].mxu0
        %8138 = vdwg.mxu0
        %v8139 = vld [vmem:[#allocation17] sm:$0xf]
        %v8140 = vld [vmem:[#allocation17 + $0x4] sm:$0xf]
        %v8143 = vunpack.c.l.b16 %v8139
        %v8144 = vunpack.c.l.b16 %v8140
        %v8145 = vpack.c.b16 %v8144, %v8143
        %vm8146 = vcmask 130048
        %v8148 = vsel %vm8146, %v8145, 0
        %8150 = vmatprep.subr.bf16.mxu0 0
        %8151 = vmatpush1.bf16.msra.mxu0 %v8003
        %8152 = vmatprep.subr.bf16.mxu0 0
        %8153 = vmatpush1.bf16.msra.mxu0 0
        %8154 = vmatprep.subr.bf16.mxu0 0
        %8155 = vmatpush1.bf16.msra.mxu0 0
        %8156 = vmatprep.subr.bf16.mxu0 0
        %8157 = vmatpush1.bf16.msra.mxu0 0
        %8158 = vmatprep.subr.bf16.mxu0 0
        %8159 = vmatpush1.bf16.msra.mxu0 0
        %8160 = vmatprep.subr.bf16.mxu0 0
        %8161 = vmatpush1.bf16.msra.mxu0 0
        %8162 = vmatprep.subr.bf16.mxu0 0
        %8163 = vmatpush1.bf16.msra.mxu0 0
        %8164 = vmatprep.subr.bf16.mxu0 0
        %8165 = vmatpush1.bf16.msra.mxu0 0
        %8166 = vmatprep.subr.bf16.mxu0 0
        %8167 = vmatpush1.bf16.msra.mxu0 0
        %8168 = vmatprep.subr.bf16.mxu0 0
        %8169 = vmatpush1.bf16.msra.mxu0 0
        %8170 = vmatprep.subr.bf16.mxu0 0
        %8171 = vmatpush1.bf16.msra.mxu0 0
        %8172 = vmatprep.subr.bf16.mxu0 0
        %8173 = vmatpush1.bf16.msra.mxu0 0
        %8174 = vmatprep.subr.bf16.mxu0 0
        %8175 = vmatpush1.bf16.msra.mxu0 0
        %8176 = vmatprep.subr.bf16.mxu0 0
        %8177 = vmatpush1.bf16.msra.mxu0 0
        %8178 = vmatprep.subr.bf16.mxu0 0
        %8179 = vmatpush1.bf16.msra.mxu0 0
        %8180 = vmatprep.subr.bf16.mxu0 0
        %8181 = vmatpush1.bf16.msra.mxu0 0
        %8182 = vmatprep.mubr.bf16.mxu0 0
        %8183 = vmatmul.mubr.bf16.gmra.mrb[0].mxu0 %v8148
        %v8184 = vpop.f32.mrb[0].mxu0
        %v8185 = vadd.f32 0.0, %v8184
        %v8186 = vpop.f32.mrb[0].mxu0
        %v8187 = vpop.f32.mrb[0].mxu0
        %v8188 = vadd.f32 0.0, %v8187
        %v8189 = vpop.f32.mrb[0].mxu0
        %8190 = vdwg.mxu0
        %v8191 = vpack.c.bf16 %v8188, %v8185
        %v8192 = vld [vmem:[%s17] sm:$0xf]
        %v8193 = vld [vmem:[%s17 + $0x4] sm:$0xf]
        %v8194 = vld [vmem:[%s17 + $0x8] sm:$0xf]
        %v8195 = vld [vmem:[%s17 + $0xc] sm:$0xf]
        %v8196 = vld [vmem:[%s17 + $0x10] sm:$0xf]
        %v8197 = vld [vmem:[%s17 + $0x14] sm:$0xf]
        %v8198 = vld [vmem:[%s17 + $0x18] sm:$0xf]
        %v8199 = vld [vmem:[%s17 + $0x1c] sm:$0xf]
        %v8200 = vld [vmem:[%s17 + $0x20] sm:$0xf]
        %v8201 = vld [vmem:[%s17 + $0x24] sm:$0xf]
        %v8202 = vld [vmem:[%s17 + $0x28] sm:$0xf]
        %v8203 = vld [vmem:[%s17 + $0x2c] sm:$0xf]
        %v8204 = vld [vmem:[%s17 + $0x30] sm:$0xf]
        %v8205 = vld [vmem:[%s17 + $0x34] sm:$0xf]
        %v8206 = vld [vmem:[%s17 + $0x38] sm:$0xf]
        %v8207 = vld [vmem:[%s17 + $0x3c] sm:$0xf]
        %s8208 = scalar_lea.vmem [#allocation17], 8
        %v8209 = vld [vmem:[%s8208] sm:$0xf]
        %v8210 = vld [vmem:[%s8208 + $0x4] sm:$0xf]
        %v8213 = vunpack.c.l.b16 %v8209
        %v8214 = vunpack.c.l.b16 %v8210
        %v8215 = vpack.c.b16 %v8214, %v8213
        %v8217 = vsel %vm8146, %v8215, 0
        %8219 = vmatprep.subr.bf16.mxu0 0
        %8220 = vmatpush1.bf16.msra.mxu0 %v8003
        %8221 = vmatprep.subr.bf16.mxu0 0
        %8222 = vmatpush1.bf16.msra.mxu0 0
        %8223 = vmatprep.subr.bf16.mxu0 0
        %8224 = vmatpush1.bf16.msra.mxu0 0
        %8225 = vmatprep.subr.bf16.mxu0 0
        %8226 = vmatpush1.bf16.msra.mxu0 0
        %8227 = vmatprep.subr.bf16.mxu0 0
        %8228 = vmatpush1.bf16.msra.mxu0 0
        %8229 = vmatprep.subr.bf16.mxu0 0
        %8230 = vmatpush1.bf16.msra.mxu0 0
        %8231 = vmatprep.subr.bf16.mxu0 0
        %8232 = vmatpush1.bf16.msra.mxu0 0
        %8233 = vmatprep.subr.bf16.mxu0 0
        %8234 = vmatpush1.bf16.msra.mxu0 0
        %8235 = vmatprep.subr.bf16.mxu0 0
        %8236 = vmatpush1.bf16.msra.mxu0 0
        %8237 = vmatprep.subr.bf16.mxu0 0
        %8238 = vmatpush1.bf16.msra.mxu0 0
        %8239 = vmatprep.subr.bf16.mxu0 0
        %8240 = vmatpush1.bf16.msra.mxu0 0
        %8241 = vmatprep.subr.bf16.mxu0 0
        %8242 = vmatpush1.bf16.msra.mxu0 0
        %8243 = vmatprep.subr.bf16.mxu0 0
        %8244 = vmatpush1.bf16.msra.mxu0 0
        %8245 = vmatprep.subr.bf16.mxu0 0
        %8246 = vmatpush1.bf16.msra.mxu0 0
        %8247 = vmatprep.subr.bf16.mxu0 0
        %8248 = vmatpush1.bf16.msra.mxu0 0
        %8249 = vmatprep.subr.bf16.mxu0 0
        %8250 = vmatpush1.bf16.msra.mxu0 0
        %8251 = vmatprep.mubr.bf16.mxu0 0
        %8252 = vmatmul.mubr.bf16.gmra.mrb[0].mxu0 %v8217
        %v8253 = vpop.f32.mrb[0].mxu0
        %v8254 = vadd.f32 0.0, %v8253
        %v8255 = vpop.f32.mrb[0].mxu0
        %v8256 = vpop.f32.mrb[0].mxu0
        %v8257 = vadd.f32 0.0, %v8256
        %v8258 = vpop.f32.mrb[0].mxu0
        %8259 = vdwg.mxu0
        %v8260 = vpack.c.bf16 %v8257, %v8254
        %s8261 = scalar_lea.vmem %s17, 64
        %v8262 = vld [vmem:[%s8261] sm:$0xf]
        %v8263 = vld [vmem:[%s8261 + $0x4] sm:$0xf]
        %v8264 = vld [vmem:[%s8261 + $0x8] sm:$0xf]
        %v8265 = vld [vmem:[%s8261 + $0xc] sm:$0xf]
        %v8266 = vld [vmem:[%s8261 + $0x10] sm:$0xf]
        %v8267 = vld [vmem:[%s8261 + $0x14] sm:$0xf]
        %v8268 = vld [vmem:[%s8261 + $0x18] sm:$0xf]
        %v8269 = vld [vmem:[%s8261 + $0x1c] sm:$0xf]
        %v8270 = vld [vmem:[%s8261 + $0x20] sm:$0xf]
        %v8271 = vld [vmem:[%s8261 + $0x24] sm:$0xf]
        %v8272 = vld [vmem:[%s8261 + $0x28] sm:$0xf]
        %v8273 = vld [vmem:[%s8261 + $0x2c] sm:$0xf]
        %v8274 = vld [vmem:[%s8261 + $0x30] sm:$0xf]
        %v8275 = vld [vmem:[%s8261 + $0x34] sm:$0xf]
        %v8276 = vld [vmem:[%s8261 + $0x38] sm:$0xf]
        %v8277 = vld [vmem:[%s8261 + $0x3c] sm:$0xf]
        %v8294 = vunpack.c.l.b16 %v8262
        %v8295 = vunpack.c.l.b16 %v8263
        %v8296 = vunpack.c.l.b16 %v8264
        %v8297 = vunpack.c.l.b16 %v8265
        %v8298 = vunpack.c.l.b16 %v8266
        %v8299 = vunpack.c.l.b16 %v8267
        %v8300 = vunpack.c.l.b16 %v8268
        %v8301 = vunpack.c.l.b16 %v8269
        %v8302 = vunpack.c.l.b16 %v8270
        %v8303 = vunpack.c.l.b16 %v8271
        %v8304 = vunpack.c.l.b16 %v8272
        %v8305 = vunpack.c.l.b16 %v8273
        %v8306 = vunpack.c.l.b16 %v8274
        %v8307 = vunpack.c.l.b16 %v8275
        %v8308 = vunpack.c.l.b16 %v8276
        %v8309 = vunpack.c.l.b16 %v8277
        %v8310 = vpack.c.b16 %v8295, %v8294
        %v8311 = vpack.c.b16 %v8297, %v8296
        %v8312 = vpack.c.b16 %v8299, %v8298
        %v8313 = vpack.c.b16 %v8301, %v8300
        %v8314 = vpack.c.b16 %v8303, %v8302
        %v8315 = vpack.c.b16 %v8305, %v8304
        %v8316 = vpack.c.b16 %v8307, %v8306
        %v8317 = vpack.c.b16 %v8309, %v8308
        %8326 = vmatprep.subr.bf16.mxu0 0
        %8327 = vmatpush1.bf16.msra.mxu0 %v8310
        %8328 = vmatprep.subr.bf16.mxu0 0
        %8329 = vmatpush1.bf16.msra.mxu0 %v8311
        %8330 = vmatprep.subr.bf16.mxu0 0
        %8331 = vmatpush1.bf16.msra.mxu0 %v8312
        %8332 = vmatprep.subr.bf16.mxu0 0
        %8333 = vmatpush1.bf16.msra.mxu0 %v8313
        %8334 = vmatprep.subr.bf16.mxu0 0
        %8335 = vmatpush1.bf16.msra.mxu0 %v8314
        %8336 = vmatprep.subr.bf16.mxu0 0
        %8337 = vmatpush1.bf16.msra.mxu0 %v8315
        %8338 = vmatprep.subr.bf16.mxu0 0
        %8339 = vmatpush1.bf16.msra.mxu0 %v8316
        %8340 = vmatprep.subr.bf16.mxu0 0
        %8341 = vmatpush1.bf16.msra.mxu0 %v8317
        %8342 = vmatprep.subr.bf16.mxu0 0
        %8343 = vmatpush1.bf16.msra.mxu0 0
        %8344 = vmatprep.subr.bf16.mxu0 0
        %8345 = vmatpush1.bf16.msra.mxu0 0
        %8346 = vmatprep.subr.bf16.mxu0 0
        %8347 = vmatpush1.bf16.msra.mxu0 0
        %8348 = vmatprep.subr.bf16.mxu0 0
        %8349 = vmatpush1.bf16.msra.mxu0 0
        %8350 = vmatprep.subr.bf16.mxu0 0
        %8351 = vmatpush1.bf16.msra.mxu0 0
        %8352 = vmatprep.subr.bf16.mxu0 0
        %8353 = vmatpush1.bf16.msra.mxu0 0
        %8354 = vmatprep.subr.bf16.mxu0 0
        %8355 = vmatpush1.bf16.msra.mxu0 0
        %8356 = vmatprep.subr.bf16.mxu0 0
        %8357 = vmatpush1.bf16.msra.mxu0 0
        %8358 = vmatprep.mubr.bf16.mxu0 0
        %8359 = vmatmul.mubr.bf16.gmra.mrb[0].mxu0 %v8260
        %v8360 = vpop.f32.mrb[0].mxu0
        %v8361 = vadd.f32 0.0, %v8360
        %v8362 = vpop.f32.mrb[0].mxu0
        %v8363 = vpop.f32.mrb[0].mxu0
        %v8364 = vadd.f32 0.0, %v8363
        %v8365 = vpop.f32.mrb[0].mxu0
        %8366 = vdwg.mxu0
        %v8383 = vunpack.c.l.b16 %v8192
        %v8384 = vunpack.c.l.b16 %v8193
        %v8385 = vunpack.c.l.b16 %v8194
        %v8386 = vunpack.c.l.b16 %v8195
        %v8387 = vunpack.c.l.b16 %v8196
        %v8388 = vunpack.c.l.b16 %v8197
        %v8389 = vunpack.c.l.b16 %v8198
        %v8390 = vunpack.c.l.b16 %v8199
        %v8391 = vunpack.c.l.b16 %v8200
        %v8392 = vunpack.c.l.b16 %v8201
        %v8393 = vunpack.c.l.b16 %v8202
        %v8394 = vunpack.c.l.b16 %v8203
        %v8395 = vunpack.c.l.b16 %v8204
        %v8396 = vunpack.c.l.b16 %v8205
        %v8397 = vunpack.c.l.b16 %v8206
        %v8398 = vunpack.c.l.b16 %v8207
        %v8399 = vpack.c.b16 %v8384, %v8383
        %v8400 = vpack.c.b16 %v8386, %v8385
        %v8401 = vpack.c.b16 %v8388, %v8387
        %v8402 = vpack.c.b16 %v8390, %v8389
        %v8403 = vpack.c.b16 %v8392, %v8391
        %v8404 = vpack.c.b16 %v8394, %v8393
        %v8405 = vpack.c.b16 %v8396, %v8395
        %v8406 = vpack.c.b16 %v8398, %v8397
        %8415 = vmatprep.subr.bf16.mxu0 0
        %8416 = vmatpush1.bf16.msra.mxu0 %v8399
        %8417 = vmatprep.subr.bf16.mxu0 0
        %8418 = vmatpush1.bf16.msra.mxu0 %v8400
        %8419 = vmatprep.subr.bf16.mxu0 0
        %8420 = vmatpush1.bf16.msra.mxu0 %v8401
        %8421 = vmatprep.subr.bf16.mxu0 0
        %8422 = vmatpush1.bf16.msra.mxu0 %v8402
        %8423 = vmatprep.subr.bf16.mxu0 0
        %8424 = vmatpush1.bf16.msra.mxu0 %v8403
        %8425 = vmatprep.subr.bf16.mxu0 0
        %8426 = vmatpush1.bf16.msra.mxu0 %v8404
        %8427 = vmatprep.subr.bf16.mxu0 0
        %8428 = vmatpush1.bf16.msra.mxu0 %v8405
        %8429 = vmatprep.subr.bf16.mxu0 0
        %8430 = vmatpush1.bf16.msra.mxu0 %v8406
        %8431 = vmatprep.subr.bf16.mxu0 0
        %8432 = vmatpush1.bf16.msra.mxu0 0
        %8433 = vmatprep.subr.bf16.mxu0 0
        %8434 = vmatpush1.bf16.msra.mxu0 0
        %8435 = vmatprep.subr.bf16.mxu0 0
        %8436 = vmatpush1.bf16.msra.mxu0 0
        %8437 = vmatprep.subr.bf16.mxu0 0
        %8438 = vmatpush1.bf16.msra.mxu0 0
        %8439 = vmatprep.subr.bf16.mxu0 0
        %8440 = vmatpush1.bf16.msra.mxu0 0
        %8441 = vmatprep.subr.bf16.mxu0 0
        %8442 = vmatpush1.bf16.msra.mxu0 0
        %8443 = vmatprep.subr.bf16.mxu0 0
        %8444 = vmatpush1.bf16.msra.mxu0 0
        %8445 = vmatprep.subr.bf16.mxu0 0
        %8446 = vmatpush1.bf16.msra.mxu0 0
        %8447 = vmatprep.mubr.bf16.mxu0 0
        %8448 = vmatmul.mubr.bf16.gmra.mrb[0].mxu0 %v8191
        %v8449 = vpop.f32.mrb[0].mxu0
        %v8450 = vadd.f32 %v8361, %v8449
        %v8451 = vpop.f32.mrb[0].mxu0
        %v8452 = vpop.f32.mrb[0].mxu0
        %v8453 = vadd.f32 %v8364, %v8452
        %v8454 = vpop.f32.mrb[0].mxu0
        %8455 = vdwg.mxu0
        %s8456 = scalar_lea.vmem [#allocation17], 16
        %v8457 = vld [vmem:[%s8456] sm:$0xf]
        %v8458 = vld [vmem:[%s8456 + $0x4] sm:$0xf]
        %v8461 = vunpack.c.l.b16 %v8457
        %v8462 = vunpack.c.l.b16 %v8458
        %v8463 = vpack.c.b16 %v8462, %v8461
        %v8465 = vsel %vm8146, %v8463, 0
        %8467 = vmatprep.subr.bf16.mxu0 0
        %8468 = vmatpush1.bf16.msra.mxu0 %v8003
        %8469 = vmatprep.subr.bf16.mxu0 0
        %8470 = vmatpush1.bf16.msra.mxu0 0
        %8471 = vmatprep.subr.bf16.mxu0 0
        %8472 = vmatpush1.bf16.msra.mxu0 0
        %8473 = vmatprep.subr.bf16.mxu0 0
        %8474 = vmatpush1.bf16.msra.mxu0 0
        %8475 = vmatprep.subr.bf16.mxu0 0
        %8476 = vmatpush1.bf16.msra.mxu0 0
        %8477 = vmatprep.subr.bf16.mxu0 0
        %8478 = vmatpush1.bf16.msra.mxu0 0
        %8479 = vmatprep.subr.bf16.mxu0 0
        %8480 = vmatpush1.bf16.msra.mxu0 0
        %8481 = vmatprep.subr.bf16.mxu0 0
        %8482 = vmatpush1.bf16.msra.mxu0 0
        %8483 = vmatprep.subr.bf16.mxu0 0
        %8484 = vmatpush1.bf16.msra.mxu0 0
        %8485 = vmatprep.subr.bf16.mxu0 0
        %8486 = vmatpush1.bf16.msra.mxu0 0
        %8487 = vmatprep.subr.bf16.mxu0 0
        %8488 = vmatpush1.bf16.msra.mxu0 0
        %8489 = vmatprep.subr.bf16.mxu0 0
        %8490 = vmatpush1.bf16.msra.mxu0 0
        %8491 = vmatprep.subr.bf16.mxu0 0
        %8492 = vmatpush1.bf16.msra.mxu0 0
        %8493 = vmatprep.subr.bf16.mxu0 0
        %8494 = vmatpush1.bf16.msra.mxu0 0
        %8495 = vmatprep.subr.bf16.mxu0 0
        %8496 = vmatpush1.bf16.msra.mxu0 0
        %8497 = vmatprep.subr.bf16.mxu0 0
        %8498 = vmatpush1.bf16.msra.mxu0 0
        %8499 = vmatprep.mubr.bf16.mxu0 0
        %8500 = vmatmul.mubr.bf16.gmra.mrb[0].mxu0 %v8465
        %v8501 = vpop.f32.mrb[0].mxu0
        %v8502 = vadd.f32 0.0, %v8501
        %v8503 = vpop.f32.mrb[0].mxu0
        %v8504 = vpop.f32.mrb[0].mxu0
        %v8505 = vadd.f32 0.0, %v8504
        %v8506 = vpop.f32.mrb[0].mxu0
        %8507 = vdwg.mxu0
        %v8508 = vpack.c.bf16 %v8505, %v8502
        %s8509 = scalar_lea.vmem %s17, 128
        %v8510 = vld [vmem:[%s8509] sm:$0xf]
        %v8511 = vld [vmem:[%s8509 + $0x4] sm:$0xf]
        %v8512 = vld [vmem:[%s8509 + $0x8] sm:$0xf]
        %v8513 = vld [vmem:[%s8509 + $0xc] sm:$0xf]
        %v8514 = vld [vmem:[%s8509 + $0x10] sm:$0xf]
        %v8515 = vld [vmem:[%s8509 + $0x14] sm:$0xf]
        %v8516 = vld [vmem:[%s8509 + $0x18] sm:$0xf]
        %v8517 = vld [vmem:[%s8509 + $0x1c] sm:$0xf]
        %v8518 = vld [vmem:[%s8509 + $0x20] sm:$0xf]
        %v8519 = vld [vmem:[%s8509 + $0x24] sm:$0xf]
        %v8520 = vld [vmem:[%s8509 + $0x28] sm:$0xf]
        %v8521 = vld [vmem:[%s8509 + $0x2c] sm:$0xf]
        %v8522 = vld [vmem:[%s8509 + $0x30] sm:$0xf]
        %v8523 = vld [vmem:[%s8509 + $0x34] sm:$0xf]
        %v8524 = vld [vmem:[%s8509 + $0x38] sm:$0xf]
        %v8525 = vld [vmem:[%s8509 + $0x3c] sm:$0xf]
        %v8542 = vunpack.c.l.b16 %v8510
        %v8543 = vunpack.c.l.b16 %v8511
        %v8544 = vunpack.c.l.b16 %v8512
        %v8545 = vunpack.c.l.b16 %v8513
        %v8546 = vunpack.c.l.b16 %v8514
        %v8547 = vunpack.c.l.b16 %v8515
        %v8548 = vunpack.c.l.b16 %v8516
        %v8549 = vunpack.c.l.b16 %v8517
        %v8550 = vunpack.c.l.b16 %v8518
        %v8551 = vunpack.c.l.b16 %v8519
        %v8552 = vunpack.c.l.b16 %v8520
        %v8553 = vunpack.c.l.b16 %v8521
        %v8554 = vunpack.c.l.b16 %v8522
        %v8555 = vunpack.c.l.b16 %v8523
        %v8556 = vunpack.c.l.b16 %v8524
        %v8557 = vunpack.c.l.b16 %v8525
        %v8558 = vpack.c.b16 %v8543, %v8542
        %v8559 = vpack.c.b16 %v8545, %v8544
        %v8560 = vpack.c.b16 %v8547, %v8546
        %v8561 = vpack.c.b16 %v8549, %v8548
        %v8562 = vpack.c.b16 %v8551, %v8550
        %v8563 = vpack.c.b16 %v8553, %v8552
        %v8564 = vpack.c.b16 %v8555, %v8554
        %v8565 = vpack.c.b16 %v8557, %v8556
        %8574 = vmatprep.subr.bf16.mxu0 0
        %8575 = vmatpush1.bf16.msra.mxu0 %v8558
        %8576 = vmatprep.subr.bf16.mxu0 0
        %8577 = vmatpush1.bf16.msra.mxu0 %v8559
        %8578 = vmatprep.subr.bf16.mxu0 0
        %8579 = vmatpush1.bf16.msra.mxu0 %v8560
        %8580 = vmatprep.subr.bf16.mxu0 0
        %8581 = vmatpush1.bf16.msra.mxu0 %v8561
        %8582 = vmatprep.subr.bf16.mxu0 0
        %8583 = vmatpush1.bf16.msra.mxu0 %v8562
        %8584 = vmatprep.subr.bf16.mxu0 0
        %8585 = vmatpush1.bf16.msra.mxu0 %v8563
        %8586 = vmatprep.subr.bf16.mxu0 0
        %8587 = vmatpush1.bf16.msra.mxu0 %v8564
        %8588 = vmatprep.subr.bf16.mxu0 0
        %8589 = vmatpush1.bf16.msra.mxu0 %v8565
        %8590 = vmatprep.subr.bf16.mxu0 0
        %8591 = vmatpush1.bf16.msra.mxu0 0
        %8592 = vmatprep.subr.bf16.mxu0 0
        %8593 = vmatpush1.bf16.msra.mxu0 0
        %8594 = vmatprep.subr.bf16.mxu0 0
        %8595 = vmatpush1.bf16.msra.mxu0 0
        %8596 = vmatprep.subr.bf16.mxu0 0
        %8597 = vmatpush1.bf16.msra.mxu0 0
        %8598 = vmatprep.subr.bf16.mxu0 0
        %8599 = vmatpush1.bf16.msra.mxu0 0
        %8600 = vmatprep.subr.bf16.mxu0 0
        %8601 = vmatpush1.bf16.msra.mxu0 0
        %8602 = vmatprep.subr.bf16.mxu0 0
        %8603 = vmatpush1.bf16.msra.mxu0 0
        %8604 = vmatprep.subr.bf16.mxu0 0
        %8605 = vmatpush1.bf16.msra.mxu0 0
        %8606 = vmatprep.mubr.bf16.mxu0 0
        %8607 = vmatmul.mubr.bf16.gmra.mrb[0].mxu0 %v8508
        %v8608 = vpop.f32.mrb[0].mxu0
        %v8609 = vadd.f32 0.0, %v8608
        %v8610 = vpop.f32.mrb[0].mxu0
        %v8611 = vpop.f32.mrb[0].mxu0
        %v8612 = vadd.f32 0.0, %v8611
        %v8613 = vpop.f32.mrb[0].mxu0
        %8614 = vdwg.mxu0
        %v8615 = vadd.f32 %v8450, %v8609
        %v8616 = vadd.f32 %v8453, %v8612
        %s8617 = scalar_lea.vmem [#allocation17], 24
        %v8618 = vld [vmem:[%s8617] sm:$0xf]
        %v8619 = vld [vmem:[%s8617 + $0x4] sm:$0xf]
        %v8622 = vunpack.c.l.b16 %v8618
        %v8623 = vunpack.c.l.b16 %v8619
        %v8624 = vpack.c.b16 %v8623, %v8622
        %v8626 = vsel %vm8146, %v8624, 0
        %8628 = vmatprep.subr.bf16.mxu0 0
        %8629 = vmatpush1.bf16.msra.mxu0 %v8003
        %8630 = vmatprep.subr.bf16.mxu0 0
        %8631 = vmatpush1.bf16.msra.mxu0 0
        %8632 = vmatprep.subr.bf16.mxu0 0
        %8633 = vmatpush1.bf16.msra.mxu0 0
        %8634 = vmatprep.subr.bf16.mxu0 0
        %8635 = vmatpush1.bf16.msra.mxu0 0
        %8636 = vmatprep.subr.bf16.mxu0 0
        %8637 = vmatpush1.bf16.msra.mxu0 0
        %8638 = vmatprep.subr.bf16.mxu0 0
        %8639 = vmatpush1.bf16.msra.mxu0 0
        %8640 = vmatprep.subr.bf16.mxu0 0
        %8641 = vmatpush1.bf16.msra.mxu0 0
        %8642 = vmatprep.subr.bf16.mxu0 0
        %8643 = vmatpush1.bf16.msra.mxu0 0
        %8644 = vmatprep.subr.bf16.mxu0 0
        %8645 = vmatpush1.bf16.msra.mxu0 0
        %8646 = vmatprep.subr.bf16.mxu0 0
        %8647 = vmatpush1.bf16.msra.mxu0 0
        %8648 = vmatprep.subr.bf16.mxu0 0
        %8649 = vmatpush1.bf16.msra.mxu0 0
        %8650 = vmatprep.subr.bf16.mxu0 0
        %8651 = vmatpush1.bf16.msra.mxu0 0
        %8652 = vmatprep.subr.bf16.mxu0 0
        %8653 = vmatpush1.bf16.msra.mxu0 0
        %8654 = vmatprep.subr.bf16.mxu0 0
        %8655 = vmatpush1.bf16.msra.mxu0 0
        %8656 = vmatprep.subr.bf16.mxu0 0
        %8657 = vmatpush1.bf16.msra.mxu0 0
        %8658 = vmatprep.subr.bf16.mxu0 0
        %8659 = vmatpush1.bf16.msra.mxu0 0
        %8660 = vmatprep.mubr.bf16.mxu0 0
        %8661 = vmatmul.mubr.bf16.gmra.mrb[0].mxu0 %v8626
        %v8662 = vpop.f32.mrb[0].mxu0
        %v8663 = vadd.f32 0.0, %v8662
        %v8664 = vpop.f32.mrb[0].mxu0
        %v8665 = vpop.f32.mrb[0].mxu0
        %v8666 = vadd.f32 0.0, %v8665
        %v8667 = vpop.f32.mrb[0].mxu0
        %8668 = vdwg.mxu0
        %v8669 = vpack.c.bf16 %v8666, %v8663
        %s8670 = scalar_lea.vmem %s17, 192
        %v8671 = vld [vmem:[%s8670] sm:$0xf]
        %v8672 = vld [vmem:[%s8670 + $0x4] sm:$0xf]
        %v8673 = vld [vmem:[%s8670 + $0x8] sm:$0xf]
        %v8674 = vld [vmem:[%s8670 + $0xc] sm:$0xf]
        %v8675 = vld [vmem:[%s8670 + $0x10] sm:$0xf]
        %v8676 = vld [vmem:[%s8670 + $0x14] sm:$0xf]
        %v8677 = vld [vmem:[%s8670 + $0x18] sm:$0xf]
        %v8678 = vld [vmem:[%s8670 + $0x1c] sm:$0xf]
        %v8679 = vld [vmem:[%s8670 + $0x20] sm:$0xf]
        %v8680 = vld [vmem:[%s8670 + $0x24] sm:$0xf]
        %v8681 = vld [vmem:[%s8670 + $0x28] sm:$0xf]
        %v8682 = vld [vmem:[%s8670 + $0x2c] sm:$0xf]
        %v8683 = vld [vmem:[%s8670 + $0x30] sm:$0xf]
        %v8684 = vld [vmem:[%s8670 + $0x34] sm:$0xf]
        %v8685 = vld [vmem:[%s8670 + $0x38] sm:$0xf]
        %v8686 = vld [vmem:[%s8670 + $0x3c] sm:$0xf]
        %v8703 = vunpack.c.l.b16 %v8671
        %v8704 = vunpack.c.l.b16 %v8672
        %v8705 = vunpack.c.l.b16 %v8673
        %v8706 = vunpack.c.l.b16 %v8674
        %v8707 = vunpack.c.l.b16 %v8675
        %v8708 = vunpack.c.l.b16 %v8676
        %v8709 = vunpack.c.l.b16 %v8677
        %v8710 = vunpack.c.l.b16 %v8678
        %v8711 = vunpack.c.l.b16 %v8679
        %v8712 = vunpack.c.l.b16 %v8680
        %v8713 = vunpack.c.l.b16 %v8681
        %v8714 = vunpack.c.l.b16 %v8682
        %v8715 = vunpack.c.l.b16 %v8683
        %v8716 = vunpack.c.l.b16 %v8684
        %v8717 = vunpack.c.l.b16 %v8685
        %v8718 = vunpack.c.l.b16 %v8686
        %v8719 = vpack.c.b16 %v8704, %v8703
        %v8720 = vpack.c.b16 %v8706, %v8705
        %v8721 = vpack.c.b16 %v8708, %v8707
        %v8722 = vpack.c.b16 %v8710, %v8709
        %v8723 = vpack.c.b16 %v8712, %v8711
        %v8724 = vpack.c.b16 %v8714, %v8713
        %v8725 = vpack.c.b16 %v8716, %v8715
        %v8726 = vpack.c.b16 %v8718, %v8717
        %8735 = vmatprep.subr.bf16.mxu0 0
        %8736 = vmatpush1.bf16.msra.mxu0 %v8719
        %8737 = vmatprep.subr.bf16.mxu0 0
        %8738 = vmatpush1.bf16.msra.mxu0 %v8720
        %8739 = vmatprep.subr.bf16.mxu0 0
        %8740 = vmatpush1.bf16.msra.mxu0 %v8721
        %8741 = vmatprep.subr.bf16.mxu0 0
        %8742 = vmatpush1.bf16.msra.mxu0 %v8722
        %8743 = vmatprep.subr.bf16.mxu0 0
        %8744 = vmatpush1.bf16.msra.mxu0 %v8723
        %8745 = vmatprep.subr.bf16.mxu0 0
        %8746 = vmatpush1.bf16.msra.mxu0 %v8724
        %8747 = vmatprep.subr.bf16.mxu0 0
        %8748 = vmatpush1.bf16.msra.mxu0 %v8725
        %8749 = vmatprep.subr.bf16.mxu0 0
        %8750 = vmatpush1.bf16.msra.mxu0 %v8726
        %8751 = vmatprep.subr.bf16.mxu0 0
        %8752 = vmatpush1.bf16.msra.mxu0 0
        %8753 = vmatprep.subr.bf16.mxu0 0
        %8754 = vmatpush1.bf16.msra.mxu0 0
        %8755 = vmatprep.subr.bf16.mxu0 0
        %8756 = vmatpush1.bf16.msra.mxu0 0
        %8757 = vmatprep.subr.bf16.mxu0 0
        %8758 = vmatpush1.bf16.msra.mxu0 0
        %8759 = vmatprep.subr.bf16.mxu0 0
        %8760 = vmatpush1.bf16.msra.mxu0 0
        %8761 = vmatprep.subr.bf16.mxu0 0
        %8762 = vmatpush1.bf16.msra.mxu0 0
        %8763 = vmatprep.subr.bf16.mxu0 0
        %8764 = vmatpush1.bf16.msra.mxu0 0
        %8765 = vmatprep.subr.bf16.mxu0 0
        %8766 = vmatpush1.bf16.msra.mxu0 0
        %8767 = vmatprep.mubr.bf16.mxu0 0
        %8768 = vmatmul.mubr.bf16.gmra.mrb[0].mxu0 %v8669
        %v8769 = vpop.f32.mrb[0].mxu0
        %v8770 = vadd.f32 0.0, %v8769
        %v8771 = vpop.f32.mrb[0].mxu0
        %v8772 = vpop.f32.mrb[0].mxu0
        %v8773 = vadd.f32 0.0, %v8772
        %v8774 = vpop.f32.mrb[0].mxu0
        %8775 = vdwg.mxu0
        %v8776 = vadd.f32 %v8615, %v8770
        %v8777 = vadd.f32 %v8616, %v8773
        %s8778 = scalar_lea.vmem [#allocation17], 32
        %v8779 = vld [vmem:[%s8778] sm:$0xf]
        %v8780 = vld [vmem:[%s8778 + $0x4] sm:$0xf]
        %v8783 = vunpack.c.l.b16 %v8779
        %v8784 = vunpack.c.l.b16 %v8780
        %v8785 = vpack.c.b16 %v8784, %v8783
        %v8787 = vsel %vm8146, %v8785, 0
        %8789 = vmatprep.subr.bf16.mxu0 0
        %8790 = vmatpush1.bf16.msra.mxu0 %v8003
        %8791 = vmatprep.subr.bf16.mxu0 0
        %8792 = vmatpush1.bf16.msra.mxu0 0
        %8793 = vmatprep.subr.bf16.mxu0 0
        %8794 = vmatpush1.bf16.msra.mxu0 0
        %8795 = vmatprep.subr.bf16.mxu0 0
        %8796 = vmatpush1.bf16.msra.mxu0 0
        %8797 = vmatprep.subr.bf16.mxu0 0
        %8798 = vmatpush1.bf16.msra.mxu0 0
        %8799 = vmatprep.subr.bf16.mxu0 0
        %8800 = vmatpush1.bf16.msra.mxu0 0
        %8801 = vmatprep.subr.bf16.mxu0 0
        %8802 = vmatpush1.bf16.msra.mxu0 0
        %8803 = vmatprep.subr.bf16.mxu0 0
        %8804 = vmatpush1.bf16.msra.mxu0 0
        %8805 = vmatprep.subr.bf16.mxu0 0
        %8806 = vmatpush1.bf16.msra.mxu0 0
        %8807 = vmatprep.subr.bf16.mxu0 0
        %8808 = vmatpush1.bf16.msra.mxu0 0
        %8809 = vmatprep.subr.bf16.mxu0 0
        %8810 = vmatpush1.bf16.msra.mxu0 0
        %8811 = vmatprep.subr.bf16.mxu0 0
        %8812 = vmatpush1.bf16.msra.mxu0 0
        %8813 = vmatprep.subr.bf16.mxu0 0
        %8814 = vmatpush1.bf16.msra.mxu0 0
        %8815 = vmatprep.subr.bf16.mxu0 0
        %8816 = vmatpush1.bf16.msra.mxu0 0
        %8817 = vmatprep.subr.bf16.mxu0 0
        %8818 = vmatpush1.bf16.msra.mxu0 0
        %8819 = vmatprep.subr.bf16.mxu0 0
        %8820 = vmatpush1.bf16.msra.mxu0 0
        %8821 = vmatprep.mubr.bf16.mxu0 0
        %8822 = vmatmul.mubr.bf16.gmra.mrb[0].mxu0 %v8787
        %v8823 = vpop.f32.mrb[0].mxu0
        %v8824 = vadd.f32 0.0, %v8823
        %v8825 = vpop.f32.mrb[0].mxu0
        %v8826 = vpop.f32.mrb[0].mxu0
        %v8827 = vadd.f32 0.0, %v8826
        %v8828 = vpop.f32.mrb[0].mxu0
        %8829 = vdwg.mxu0
        %v8830 = vpack.c.bf16 %v8827, %v8824
        %s8831 = scalar_lea.vmem %s17, 256
        %v8832 = vld [vmem:[%s8831] sm:$0xf]
        %v8833 = vld [vmem:[%s8831 + $0x4] sm:$0xf]
        %v8834 = vld [vmem:[%s8831 + $0x8] sm:$0xf]
        %v8835 = vld [vmem:[%s8831 + $0xc] sm:$0xf]
        %v8836 = vld [vmem:[%s8831 + $0x10] sm:$0xf]
        %v8837 = vld [vmem:[%s8831 + $0x14] sm:$0xf]
        %v8838 = vld [vmem:[%s8831 + $0x18] sm:$0xf]
        %v8839 = vld [vmem:[%s8831 + $0x1c] sm:$0xf]
        %v8840 = vld [vmem:[%s8831 + $0x20] sm:$0xf]
        %v8841 = vld [vmem:[%s8831 + $0x24] sm:$0xf]
        %v8842 = vld [vmem:[%s8831 + $0x28] sm:$0xf]
        %v8843 = vld [vmem:[%s8831 + $0x2c] sm:$0xf]
        %v8844 = vld [vmem:[%s8831 + $0x30] sm:$0xf]
        %v8845 = vld [vmem:[%s8831 + $0x34] sm:$0xf]
        %v8846 = vld [vmem:[%s8831 + $0x38] sm:$0xf]
        %v8847 = vld [vmem:[%s8831 + $0x3c] sm:$0xf]
        %v8864 = vunpack.c.l.b16 %v8832
        %v8865 = vunpack.c.l.b16 %v8833
        %v8866 = vunpack.c.l.b16 %v8834
        %v8867 = vunpack.c.l.b16 %v8835
        %v8868 = vunpack.c.l.b16 %v8836
        %v8869 = vunpack.c.l.b16 %v8837
        %v8870 = vunpack.c.l.b16 %v8838
        %v8871 = vunpack.c.l.b16 %v8839
        %v8872 = vunpack.c.l.b16 %v8840
        %v8873 = vunpack.c.l.b16 %v8841
        %v8874 = vunpack.c.l.b16 %v8842
        %v8875 = vunpack.c.l.b16 %v8843
        %v8876 = vunpack.c.l.b16 %v8844
        %v8877 = vunpack.c.l.b16 %v8845
        %v8878 = vunpack.c.l.b16 %v8846
        %v8879 = vunpack.c.l.b16 %v8847
        %v8880 = vpack.c.b16 %v8865, %v8864
        %v8881 = vpack.c.b16 %v8867, %v8866
        %v8882 = vpack.c.b16 %v8869, %v8868
        %v8883 = vpack.c.b16 %v8871, %v8870
        %v8884 = vpack.c.b16 %v8873, %v8872
        %v8885 = vpack.c.b16 %v8875, %v8874
        %v8886 = vpack.c.b16 %v8877, %v8876
        %v8887 = vpack.c.b16 %v8879, %v8878
        %8896 = vmatprep.subr.bf16.mxu0 0
        %8897 = vmatpush1.bf16.msra.mxu0 %v8880
        %8898 = vmatprep.subr.bf16.mxu0 0
        %8899 = vmatpush1.bf16.msra.mxu0 %v8881
        %8900 = vmatprep.subr.bf16.mxu0 0
        %8901 = vmatpush1.bf16.msra.mxu0 %v8882
        %8902 = vmatprep.subr.bf16.mxu0 0
        %8903 = vmatpush1.bf16.msra.mxu0 %v8883
        %8904 = vmatprep.subr.bf16.mxu0 0
        %8905 = vmatpush1.bf16.msra.mxu0 %v8884
        %8906 = vmatprep.subr.bf16.mxu0 0
        %8907 = vmatpush1.bf16.msra.mxu0 %v8885
        %8908 = vmatprep.subr.bf16.mxu0 0
        %8909 = vmatpush1.bf16.msra.mxu0 %v8886
        %8910 = vmatprep.subr.bf16.mxu0 0
        %8911 = vmatpush1.bf16.msra.mxu0 %v8887
        %8912 = vmatprep.subr.bf16.mxu0 0
        %8913 = vmatpush1.bf16.msra.mxu0 0
        %8914 = vmatprep.subr.bf16.mxu0 0
        %8915 = vmatpush1.bf16.msra.mxu0 0
        %8916 = vmatprep.subr.bf16.mxu0 0
        %8917 = vmatpush1.bf16.msra.mxu0 0
        %8918 = vmatprep.subr.bf16.mxu0 0
        %8919 = vmatpush1.bf16.msra.mxu0 0
        %8920 = vmatprep.subr.bf16.mxu0 0
        %8921 = vmatpush1.bf16.msra.mxu0 0
        %8922 = vmatprep.subr.bf16.mxu0 0
        %8923 = vmatpush1.bf16.msra.mxu0 0
        %8924 = vmatprep.subr.bf16.mxu0 0
        %8925 = vmatpush1.bf16.msra.mxu0 0
        %8926 = vmatprep.subr.bf16.mxu0 0
        %8927 = vmatpush1.bf16.msra.mxu0 0
        %8928 = vmatprep.mubr.bf16.mxu0 0
        %8929 = vmatmul.mubr.bf16.gmra.mrb[0].mxu0 %v8830
        %v8930 = vpop.f32.mrb[0].mxu0
        %v8931 = vadd.f32 0.0, %v8930
        %v8932 = vpop.f32.mrb[0].mxu0
        %v8933 = vpop.f32.mrb[0].mxu0
        %v8934 = vadd.f32 0.0, %v8933
        %v8935 = vpop.f32.mrb[0].mxu0
        %8936 = vdwg.mxu0
        %v8937 = vadd.f32 %v8776, %v8931
        %v8938 = vadd.f32 %v8777, %v8934
        %s8939 = scalar_lea.vmem [#allocation17], 40
        %v8940 = vld [vmem:[%s8939] sm:$0xf]
        %v8941 = vld [vmem:[%s8939 + $0x4] sm:$0xf]
        %v8944 = vunpack.c.l.b16 %v8940
        %v8945 = vunpack.c.l.b16 %v8941
        %v8946 = vpack.c.b16 %v8945, %v8944
        %v8948 = vsel %vm8146, %v8946, 0
        %8950 = vmatprep.subr.bf16.mxu0 0
        %8951 = vmatpush1.bf16.msra.mxu0 %v8003
        %8952 = vmatprep.subr.bf16.mxu0 0
        %8953 = vmatpush1.bf16.msra.mxu0 0
        %8954 = vmatprep.subr.bf16.mxu0 0
        %8955 = vmatpush1.bf16.msra.mxu0 0
        %8956 = vmatprep.subr.bf16.mxu0 0
        %8957 = vmatpush1.bf16.msra.mxu0 0
        %8958 = vmatprep.subr.bf16.mxu0 0
        %8959 = vmatpush1.bf16.msra.mxu0 0
        %8960 = vmatprep.subr.bf16.mxu0 0
        %8961 = vmatpush1.bf16.msra.mxu0 0
        %8962 = vmatprep.subr.bf16.mxu0 0
        %8963 = vmatpush1.bf16.msra.mxu0 0
        %8964 = vmatprep.subr.bf16.mxu0 0
        %8965 = vmatpush1.bf16.msra.mxu0 0
        %8966 = vmatprep.subr.bf16.mxu0 0
        %8967 = vmatpush1.bf16.msra.mxu0 0
        %8968 = vmatprep.subr.bf16.mxu0 0
        %8969 = vmatpush1.bf16.msra.mxu0 0
        %8970 = vmatprep.subr.bf16.mxu0 0
        %8971 = vmatpush1.bf16.msra.mxu0 0
        %8972 = vmatprep.subr.bf16.mxu0 0
        %8973 = vmatpush1.bf16.msra.mxu0 0
        %8974 = vmatprep.subr.bf16.mxu0 0
        %8975 = vmatpush1.bf16.msra.mxu0 0
        %8976 = vmatprep.subr.bf16.mxu0 0
        %8977 = vmatpush1.bf16.msra.mxu0 0
        %8978 = vmatprep.subr.bf16.mxu0 0
        %8979 = vmatpush1.bf16.msra.mxu0 0
        %8980 = vmatprep.subr.bf16.mxu0 0
        %8981 = vmatpush1.bf16.msra.mxu0 0
        %8982 = vmatprep.mubr.bf16.mxu0 0
        %8983 = vmatmul.mubr.bf16.gmra.mrb[0].mxu0 %v8948
        %v8984 = vpop.f32.mrb[0].mxu0
        %v8985 = vadd.f32 0.0, %v8984
        %v8986 = vpop.f32.mrb[0].mxu0
        %v8987 = vpop.f32.mrb[0].mxu0
        %v8988 = vadd.f32 0.0, %v8987
        %v8989 = vpop.f32.mrb[0].mxu0
        %8990 = vdwg.mxu0
        %v8991 = vpack.c.bf16 %v8988, %v8985
        %s8992 = scalar_lea.vmem %s17, 320
        %v8993 = vld [vmem:[%s8992] sm:$0xf]
        %v8994 = vld [vmem:[%s8992 + $0x4] sm:$0xf]
        %v8995 = vld [vmem:[%s8992 + $0x8] sm:$0xf]
        %v8996 = vld [vmem:[%s8992 + $0xc] sm:$0xf]
        %v8997 = vld [vmem:[%s8992 + $0x10] sm:$0xf]
        %v8998 = vld [vmem:[%s8992 + $0x14] sm:$0xf]
        %v8999 = vld [vmem:[%s8992 + $0x18] sm:$0xf]
        %v9000 = vld [vmem:[%s8992 + $0x1c] sm:$0xf]
        %v9001 = vld [vmem:[%s8992 + $0x20] sm:$0xf]
        %v9002 = vld [vmem:[%s8992 + $0x24] sm:$0xf]
        %v9003 = vld [vmem:[%s8992 + $0x28] sm:$0xf]
        %v9004 = vld [vmem:[%s8992 + $0x2c] sm:$0xf]
        %v9005 = vld [vmem:[%s8992 + $0x30] sm:$0xf]
        %v9006 = vld [vmem:[%s8992 + $0x34] sm:$0xf]
        %v9007 = vld [vmem:[%s8992 + $0x38] sm:$0xf]
        %v9008 = vld [vmem:[%s8992 + $0x3c] sm:$0xf]
        %v9025 = vunpack.c.l.b16 %v8993
        %v9026 = vunpack.c.l.b16 %v8994
        %v9027 = vunpack.c.l.b16 %v8995
        %v9028 = vunpack.c.l.b16 %v8996
        %v9029 = vunpack.c.l.b16 %v8997
        %v9030 = vunpack.c.l.b16 %v8998
        %v9031 = vunpack.c.l.b16 %v8999
        %v9032 = vunpack.c.l.b16 %v9000
        %v9033 = vunpack.c.l.b16 %v9001
        %v9034 = vunpack.c.l.b16 %v9002
        %v9035 = vunpack.c.l.b16 %v9003
        %v9036 = vunpack.c.l.b16 %v9004
        %v9037 = vunpack.c.l.b16 %v9005
        %v9038 = vunpack.c.l.b16 %v9006
        %v9039 = vunpack.c.l.b16 %v9007
        %v9040 = vunpack.c.l.b16 %v9008
        %v9041 = vpack.c.b16 %v9026, %v9025
        %v9042 = vpack.c.b16 %v9028, %v9027
        %v9043 = vpack.c.b16 %v9030, %v9029
        %v9044 = vpack.c.b16 %v9032, %v9031
        %v9045 = vpack.c.b16 %v9034, %v9033
        %v9046 = vpack.c.b16 %v9036, %v9035
        %v9047 = vpack.c.b16 %v9038, %v9037
        %v9048 = vpack.c.b16 %v9040, %v9039
        %9057 = vmatprep.subr.bf16.mxu0 0
        %9058 = vmatpush1.bf16.msra.mxu0 %v9041
        %9059 = vmatprep.subr.bf16.mxu0 0
        %9060 = vmatpush1.bf16.msra.mxu0 %v9042
        %9061 = vmatprep.subr.bf16.mxu0 0
        %9062 = vmatpush1.bf16.msra.mxu0 %v9043
        %9063 = vmatprep.subr.bf16.mxu0 0
        %9064 = vmatpush1.bf16.msra.mxu0 %v9044
        %9065 = vmatprep.subr.bf16.mxu0 0
        %9066 = vmatpush1.bf16.msra.mxu0 %v9045
        %9067 = vmatprep.subr.bf16.mxu0 0
        %9068 = vmatpush1.bf16.msra.mxu0 %v9046
        %9069 = vmatprep.subr.bf16.mxu0 0
        %9070 = vmatpush1.bf16.msra.mxu0 %v9047
        %9071 = vmatprep.subr.bf16.mxu0 0
        %9072 = vmatpush1.bf16.msra.mxu0 %v9048
        %9073 = vmatprep.subr.bf16.mxu0 0
        %9074 = vmatpush1.bf16.msra.mxu0 0
        %9075 = vmatprep.subr.bf16.mxu0 0
        %9076 = vmatpush1.bf16.msra.mxu0 0
        %9077 = vmatprep.subr.bf16.mxu0 0
        %9078 = vmatpush1.bf16.msra.mxu0 0
        %9079 = vmatprep.subr.bf16.mxu0 0
        %9080 = vmatpush1.bf16.msra.mxu0 0
        %9081 = vmatprep.subr.bf16.mxu0 0
        %9082 = vmatpush1.bf16.msra.mxu0 0
        %9083 = vmatprep.subr.bf16.mxu0 0
        %9084 = vmatpush1.bf16.msra.mxu0 0
        %9085 = vmatprep.subr.bf16.mxu0 0
        %9086 = vmatpush1.bf16.msra.mxu0 0
        %9087 = vmatprep.subr.bf16.mxu0 0
        %9088 = vmatpush1.bf16.msra.mxu0 0
        %9089 = vmatprep.mubr.bf16.mxu0 0
        %9090 = vmatmul.mubr.bf16.gmra.mrb[0].mxu0 %v8991
        %v9091 = vpop.f32.mrb[0].mxu0
        %v9092 = vadd.f32 0.0, %v9091
        %v9093 = vpop.f32.mrb[0].mxu0
        %v9094 = vpop.f32.mrb[0].mxu0
        %v9095 = vadd.f32 0.0, %v9094
        %v9096 = vpop.f32.mrb[0].mxu0
        %9097 = vdwg.mxu0
        %v9098 = vadd.f32 %v8937, %v9092
        %v9099 = vadd.f32 %v8938, %v9095
        %s9100 = scalar_lea.vmem [#allocation17], 48
        %v9101 = vld [vmem:[%s9100] sm:$0xf]
        %v9102 = vld [vmem:[%s9100 + $0x4] sm:$0xf]
        %v9105 = vunpack.c.l.b16 %v9101
        %v9106 = vunpack.c.l.b16 %v9102
        %v9107 = vpack.c.b16 %v9106, %v9105
        %v9109 = vsel %vm8146, %v9107, 0
        %9111 = vmatprep.subr.bf16.mxu0 0
        %9112 = vmatpush1.bf16.msra.mxu0 %v8003
        %9113 = vmatprep.subr.bf16.mxu0 0
        %9114 = vmatpush1.bf16.msra.mxu0 0
        %9115 = vmatprep.subr.bf16.mxu0 0
        %9116 = vmatpush1.bf16.msra.mxu0 0
        %9117 = vmatprep.subr.bf16.mxu0 0
        %9118 = vmatpush1.bf16.msra.mxu0 0
        %9119 = vmatprep.subr.bf16.mxu0 0
        %9120 = vmatpush1.bf16.msra.mxu0 0
        %9121 = vmatprep.subr.bf16.mxu0 0
        %9122 = vmatpush1.bf16.msra.mxu0 0
        %9123 = vmatprep.subr.bf16.mxu0 0
        %9124 = vmatpush1.bf16.msra.mxu0 0
        %9125 = vmatprep.subr.bf16.mxu0 0
        %9126 = vmatpush1.bf16.msra.mxu0 0
        %9127 = vmatprep.subr.bf16.mxu0 0
        %9128 = vmatpush1.bf16.msra.mxu0 0
        %9129 = vmatprep.subr.bf16.mxu0 0
        %9130 = vmatpush1.bf16.msra.mxu0 0
        %9131 = vmatprep.subr.bf16.mxu0 0
        %9132 = vmatpush1.bf16.msra.mxu0 0
        %9133 = vmatprep.subr.bf16.mxu0 0
        %9134 = vmatpush1.bf16.msra.mxu0 0
        %9135 = vmatprep.subr.bf16.mxu0 0
        %9136 = vmatpush1.bf16.msra.mxu0 0
        %9137 = vmatprep.subr.bf16.mxu0 0
        %9138 = vmatpush1.bf16.msra.mxu0 0
        %9139 = vmatprep.subr.bf16.mxu0 0
        %9140 = vmatpush1.bf16.msra.mxu0 0
        %9141 = vmatprep.subr.bf16.mxu0 0
        %9142 = vmatpush1.bf16.msra.mxu0 0
        %9143 = vmatprep.mubr.bf16.mxu0 0
        %9144 = vmatmul.mubr.bf16.gmra.mrb[0].mxu0 %v9109
        %v9145 = vpop.f32.mrb[0].mxu0
        %v9146 = vadd.f32 0.0, %v9145
        %v9147 = vpop.f32.mrb[0].mxu0
        %v9148 = vpop.f32.mrb[0].mxu0
        %v9149 = vadd.f32 0.0, %v9148
        %v9150 = vpop.f32.mrb[0].mxu0
        %9151 = vdwg.mxu0
        %v9152 = vpack.c.bf16 %v9149, %v9146
        %s9153 = scalar_lea.vmem %s17, 384
        %v9154 = vld [vmem:[%s9153] sm:$0xf]
        %v9155 = vld [vmem:[%s9153 + $0x4] sm:$0xf]
        %v9156 = vld [vmem:[%s9153 + $0x8] sm:$0xf]
        %v9157 = vld [vmem:[%s9153 + $0xc] sm:$0xf]
        %v9158 = vld [vmem:[%s9153 + $0x10] sm:$0xf]
        %v9159 = vld [vmem:[%s9153 + $0x14] sm:$0xf]
        %v9160 = vld [vmem:[%s9153 + $0x18] sm:$0xf]
        %v9161 = vld [vmem:[%s9153 + $0x1c] sm:$0xf]
        %v9162 = vld [vmem:[%s9153 + $0x20] sm:$0xf]
        %v9163 = vld [vmem:[%s9153 + $0x24] sm:$0xf]
        %v9164 = vld [vmem:[%s9153 + $0x28] sm:$0xf]
        %v9165 = vld [vmem:[%s9153 + $0x2c] sm:$0xf]
        %v9166 = vld [vmem:[%s9153 + $0x30] sm:$0xf]
        %v9167 = vld [vmem:[%s9153 + $0x34] sm:$0xf]
        %v9168 = vld [vmem:[%s9153 + $0x38] sm:$0xf]
        %v9169 = vld [vmem:[%s9153 + $0x3c] sm:$0xf]
        %v9186 = vunpack.c.l.b16 %v9154
        %v9187 = vunpack.c.l.b16 %v9155
        %v9188 = vunpack.c.l.b16 %v9156
        %v9189 = vunpack.c.l.b16 %v9157
        %v9190 = vunpack.c.l.b16 %v9158
        %v9191 = vunpack.c.l.b16 %v9159
        %v9192 = vunpack.c.l.b16 %v9160
        %v9193 = vunpack.c.l.b16 %v9161
        %v9194 = vunpack.c.l.b16 %v9162
        %v9195 = vunpack.c.l.b16 %v9163
        %v9196 = vunpack.c.l.b16 %v9164
        %v9197 = vunpack.c.l.b16 %v9165
        %v9198 = vunpack.c.l.b16 %v9166
        %v9199 = vunpack.c.l.b16 %v9167
        %v9200 = vunpack.c.l.b16 %v9168
        %v9201 = vunpack.c.l.b16 %v9169
        %v9202 = vpack.c.b16 %v9187, %v9186
        %v9203 = vpack.c.b16 %v9189, %v9188
        %v9204 = vpack.c.b16 %v9191, %v9190
        %v9205 = vpack.c.b16 %v9193, %v9192
        %v9206 = vpack.c.b16 %v9195, %v9194
        %v9207 = vpack.c.b16 %v9197, %v9196
        %v9208 = vpack.c.b16 %v9199, %v9198
        %v9209 = vpack.c.b16 %v9201, %v9200
        %9218 = vmatprep.subr.bf16.mxu0 0
        %9219 = vmatpush1.bf16.msra.mxu0 %v9202
        %9220 = vmatprep.subr.bf16.mxu0 0
        %9221 = vmatpush1.bf16.msra.mxu0 %v9203
        %9222 = vmatprep.subr.bf16.mxu0 0
        %9223 = vmatpush1.bf16.msra.mxu0 %v9204
        %9224 = vmatprep.subr.bf16.mxu0 0
        %9225 = vmatpush1.bf16.msra.mxu0 %v9205
        %9226 = vmatprep.subr.bf16.mxu0 0
        %9227 = vmatpush1.bf16.msra.mxu0 %v9206
        %9228 = vmatprep.subr.bf16.mxu0 0
        %9229 = vmatpush1.bf16.msra.mxu0 %v9207
        %9230 = vmatprep.subr.bf16.mxu0 0
        %9231 = vmatpush1.bf16.msra.mxu0 %v9208
        %9232 = vmatprep.subr.bf16.mxu0 0
        %9233 = vmatpush1.bf16.msra.mxu0 %v9209
        %9234 = vmatprep.subr.bf16.mxu0 0
        %9235 = vmatpush1.bf16.msra.mxu0 0
        %9236 = vmatprep.subr.bf16.mxu0 0
        %9237 = vmatpush1.bf16.msra.mxu0 0
        %9238 = vmatprep.subr.bf16.mxu0 0
        %9239 = vmatpush1.bf16.msra.mxu0 0
        %9240 = vmatprep.subr.bf16.mxu0 0
        %9241 = vmatpush1.bf16.msra.mxu0 0
        %9242 = vmatprep.subr.bf16.mxu0 0
        %9243 = vmatpush1.bf16.msra.mxu0 0
        %9244 = vmatprep.subr.bf16.mxu0 0
        %9245 = vmatpush1.bf16.msra.mxu0 0
        %9246 = vmatprep.subr.bf16.mxu0 0
        %9247 = vmatpush1.bf16.msra.mxu0 0
        %9248 = vmatprep.subr.bf16.mxu0 0
        %9249 = vmatpush1.bf16.msra.mxu0 0
        %9250 = vmatprep.mubr.bf16.mxu0 0
        %9251 = vmatmul.mubr.bf16.gmra.mrb[0].mxu0 %v9152
        %v9252 = vpop.f32.mrb[0].mxu0
        %v9253 = vadd.f32 0.0, %v9252
        %v9254 = vpop.f32.mrb[0].mxu0
        %v9255 = vpop.f32.mrb[0].mxu0
        %v9256 = vadd.f32 0.0, %v9255
        %v9257 = vpop.f32.mrb[0].mxu0
        %9258 = vdwg.mxu0
        %v9259 = vadd.f32 %v9098, %v9253
        %v9260 = vadd.f32 %v9099, %v9256
        %s9261 = scalar_lea.vmem [#allocation17], 56
        %v9262 = vld [vmem:[%s9261] sm:$0xf]
        %v9263 = vld [vmem:[%s9261 + $0x4] sm:$0xf]
        %v9266 = vunpack.c.l.b16 %v9262
        %v9267 = vunpack.c.l.b16 %v9263
        %v9268 = vpack.c.b16 %v9267, %v9266
        %v9270 = vsel %vm8146, %v9268, 0
        %9272 = vmatprep.subr.bf16.mxu0 0
        %9273 = vmatpush1.bf16.msra.mxu0 %v8003
        %9274 = vmatprep.subr.bf16.mxu0 0
        %9275 = vmatpush1.bf16.msra.mxu0 0
        %9276 = vmatprep.subr.bf16.mxu0 0
        %9277 = vmatpush1.bf16.msra.mxu0 0
        %9278 = vmatprep.subr.bf16.mxu0 0
        %9279 = vmatpush1.bf16.msra.mxu0 0
        %9280 = vmatprep.subr.bf16.mxu0 0
        %9281 = vmatpush1.bf16.msra.mxu0 0
        %9282 = vmatprep.subr.bf16.mxu0 0
        %9283 = vmatpush1.bf16.msra.mxu0 0
        %9284 = vmatprep.subr.bf16.mxu0 0
        %9285 = vmatpush1.bf16.msra.mxu0 0
        %9286 = vmatprep.subr.bf16.mxu0 0
        %9287 = vmatpush1.bf16.msra.mxu0 0
        %9288 = vmatprep.subr.bf16.mxu0 0
        %9289 = vmatpush1.bf16.msra.mxu0 0
        %9290 = vmatprep.subr.bf16.mxu0 0
        %9291 = vmatpush1.bf16.msra.mxu0 0
        %9292 = vmatprep.subr.bf16.mxu0 0
        %9293 = vmatpush1.bf16.msra.mxu0 0
        %9294 = vmatprep.subr.bf16.mxu0 0
        %9295 = vmatpush1.bf16.msra.mxu0 0
        %9296 = vmatprep.subr.bf16.mxu0 0
        %9297 = vmatpush1.bf16.msra.mxu0 0
        %9298 = vmatprep.subr.bf16.mxu0 0
        %9299 = vmatpush1.bf16.msra.mxu0 0
        %9300 = vmatprep.subr.bf16.mxu0 0
        %9301 = vmatpush1.bf16.msra.mxu0 0
        %9302 = vmatprep.subr.bf16.mxu0 0
        %9303 = vmatpush1.bf16.msra.mxu0 0
        %9304 = vmatprep.mubr.bf16.mxu0 0
        %9305 = vmatmul.mubr.bf16.gmra.mrb[0].mxu0 %v9270
        %v9306 = vpop.f32.mrb[0].mxu0
        %v9307 = vadd.f32 0.0, %v9306
        %v9308 = vpop.f32.mrb[0].mxu0
        %v9309 = vpop.f32.mrb[0].mxu0
        %v9310 = vadd.f32 0.0, %v9309
        %v9311 = vpop.f32.mrb[0].mxu0
        %9312 = vdwg.mxu0
        %v9313 = vpack.c.bf16 %v9310, %v9307
        %s9314 = scalar_lea.vmem %s17, 448
        %v9315 = vld [vmem:[%s9314] sm:$0xf]
        %v9316 = vld [vmem:[%s9314 + $0x4] sm:$0xf]
        %v9317 = vld [vmem:[%s9314 + $0x8] sm:$0xf]
        %v9318 = vld [vmem:[%s9314 + $0xc] sm:$0xf]
        %v9319 = vld [vmem:[%s9314 + $0x10] sm:$0xf]
        %v9320 = vld [vmem:[%s9314 + $0x14] sm:$0xf]
        %v9321 = vld [vmem:[%s9314 + $0x18] sm:$0xf]
        %v9322 = vld [vmem:[%s9314 + $0x1c] sm:$0xf]
        %v9323 = vld [vmem:[%s9314 + $0x20] sm:$0xf]
        %v9324 = vld [vmem:[%s9314 + $0x24] sm:$0xf]
        %v9325 = vld [vmem:[%s9314 + $0x28] sm:$0xf]
        %v9326 = vld [vmem:[%s9314 + $0x2c] sm:$0xf]
        %v9327 = vld [vmem:[%s9314 + $0x30] sm:$0xf]
        %v9328 = vld [vmem:[%s9314 + $0x34] sm:$0xf]
        %v9329 = vld [vmem:[%s9314 + $0x38] sm:$0xf]
        %v9330 = vld [vmem:[%s9314 + $0x3c] sm:$0xf]
        %v9347 = vunpack.c.l.b16 %v9315
        %v9348 = vunpack.c.l.b16 %v9316
        %v9349 = vunpack.c.l.b16 %v9317
        %v9350 = vunpack.c.l.b16 %v9318
        %v9351 = vunpack.c.l.b16 %v9319
        %v9352 = vunpack.c.l.b16 %v9320
        %v9353 = vunpack.c.l.b16 %v9321
        %v9354 = vunpack.c.l.b16 %v9322
        %v9355 = vunpack.c.l.b16 %v9323
        %v9356 = vunpack.c.l.b16 %v9324
        %v9357 = vunpack.c.l.b16 %v9325
        %v9358 = vunpack.c.l.b16 %v9326
        %v9359 = vunpack.c.l.b16 %v9327
        %v9360 = vunpack.c.l.b16 %v9328
        %v9361 = vunpack.c.l.b16 %v9329
        %v9362 = vunpack.c.l.b16 %v9330
        %v9363 = vpack.c.b16 %v9348, %v9347
        %v9364 = vpack.c.b16 %v9350, %v9349
        %v9365 = vpack.c.b16 %v9352, %v9351
        %v9366 = vpack.c.b16 %v9354, %v9353
        %v9367 = vpack.c.b16 %v9356, %v9355
        %v9368 = vpack.c.b16 %v9358, %v9357
        %v9369 = vpack.c.b16 %v9360, %v9359
        %v9370 = vpack.c.b16 %v9362, %v9361
        %9379 = vmatprep.subr.bf16.mxu0 0
        %9380 = vmatpush1.bf16.msra.mxu0 %v9363
        %9381 = vmatprep.subr.bf16.mxu0 0
        %9382 = vmatpush1.bf16.msra.mxu0 %v9364
        %9383 = vmatprep.subr.bf16.mxu0 0
        %9384 = vmatpush1.bf16.msra.mxu0 %v9365
        %9385 = vmatprep.subr.bf16.mxu0 0
        %9386 = vmatpush1.bf16.msra.mxu0 %v9366
        %9387 = vmatprep.subr.bf16.mxu0 0
        %9388 = vmatpush1.bf16.msra.mxu0 %v9367
        %9389 = vmatprep.subr.bf16.mxu0 0
        %9390 = vmatpush1.bf16.msra.mxu0 %v9368
        %9391 = vmatprep.subr.bf16.mxu0 0
        %9392 = vmatpush1.bf16.msra.mxu0 %v9369
        %9393 = vmatprep.subr.bf16.mxu0 0
        %9394 = vmatpush1.bf16.msra.mxu0 %v9370
        %9395 = vmatprep.subr.bf16.mxu0 0
        %9396 = vmatpush1.bf16.msra.mxu0 0
        %9397 = vmatprep.subr.bf16.mxu0 0
        %9398 = vmatpush1.bf16.msra.mxu0 0
        %9399 = vmatprep.subr.bf16.mxu0 0
        %9400 = vmatpush1.bf16.msra.mxu0 0
        %9401 = vmatprep.subr.bf16.mxu0 0
        %9402 = vmatpush1.bf16.msra.mxu0 0
        %9403 = vmatprep.subr.bf16.mxu0 0
        %9404 = vmatpush1.bf16.msra.mxu0 0
        %9405 = vmatprep.subr.bf16.mxu0 0
        %9406 = vmatpush1.bf16.msra.mxu0 0
        %9407 = vmatprep.subr.bf16.mxu0 0
        %9408 = vmatpush1.bf16.msra.mxu0 0
        %9409 = vmatprep.subr.bf16.mxu0 0
        %9410 = vmatpush1.bf16.msra.mxu0 0
        %9411 = vmatprep.mubr.bf16.mxu0 0
        %9412 = vmatmul.mubr.bf16.gmra.mrb[0].mxu0 %v9313
        %v9413 = vpop.f32.mrb[0].mxu0
        %v9414 = vadd.f32 0.0, %v9413
        %v9415 = vpop.f32.mrb[0].mxu0
        %v9416 = vpop.f32.mrb[0].mxu0
        %v9417 = vadd.f32 0.0, %v9416
        %v9418 = vpop.f32.mrb[0].mxu0
        %9419 = vdwg.mxu0
        %v9420 = vadd.f32 %v9259, %v9414
        %v9421 = vadd.f32 %v9260, %v9417
        %s9422 = scalar_lea.vmem [#allocation17], 64
        %v9423 = vld [vmem:[%s9422] sm:$0xf]
        %v9424 = vld [vmem:[%s9422 + $0x4] sm:$0xf]
        %v9427 = vunpack.c.l.b16 %v9423
        %v9428 = vunpack.c.l.b16 %v9424
        %v9429 = vpack.c.b16 %v9428, %v9427
        %v9431 = vsel %vm8146, %v9429, 0
        %9433 = vmatprep.subr.bf16.mxu0 0
        %9434 = vmatpush1.bf16.msra.mxu0 %v8003
        %9435 = vmatprep.subr.bf16.mxu0 0
        %9436 = vmatpush1.bf16.msra.mxu0 0
        %9437 = vmatprep.subr.bf16.mxu0 0
        %9438 = vmatpush1.bf16.msra.mxu0 0
        %9439 = vmatprep.subr.bf16.mxu0 0
        %9440 = vmatpush1.bf16.msra.mxu0 0
        %9441 = vmatprep.subr.bf16.mxu0 0
        %9442 = vmatpush1.bf16.msra.mxu0 0
        %9443 = vmatprep.subr.bf16.mxu0 0
        %9444 = vmatpush1.bf16.msra.mxu0 0
        %9445 = vmatprep.subr.bf16.mxu0 0
        %9446 = vmatpush1.bf16.msra.mxu0 0
        %9447 = vmatprep.subr.bf16.mxu0 0
        %9448 = vmatpush1.bf16.msra.mxu0 0
        %9449 = vmatprep.subr.bf16.mxu0 0
        %9450 = vmatpush1.bf16.msra.mxu0 0
        %9451 = vmatprep.subr.bf16.mxu0 0
        %9452 = vmatpush1.bf16.msra.mxu0 0
        %9453 = vmatprep.subr.bf16.mxu0 0
        %9454 = vmatpush1.bf16.msra.mxu0 0
        %9455 = vmatprep.subr.bf16.mxu0 0
        %9456 = vmatpush1.bf16.msra.mxu0 0
        %9457 = vmatprep.subr.bf16.mxu0 0
        %9458 = vmatpush1.bf16.msra.mxu0 0
        %9459 = vmatprep.subr.bf16.mxu0 0
        %9460 = vmatpush1.bf16.msra.mxu0 0
        %9461 = vmatprep.subr.bf16.mxu0 0
        %9462 = vmatpush1.bf16.msra.mxu0 0
        %9463 = vmatprep.subr.bf16.mxu0 0
        %9464 = vmatpush1.bf16.msra.mxu0 0
        %9465 = vmatprep.mubr.bf16.mxu0 0
        %9466 = vmatmul.mubr.bf16.gmra.mrb[0].mxu0 %v9431
        %v9467 = vpop.f32.mrb[0].mxu0
        %v9468 = vadd.f32 0.0, %v9467
        %v9469 = vpop.f32.mrb[0].mxu0
        %v9470 = vpop.f32.mrb[0].mxu0
        %v9471 = vadd.f32 0.0, %v9470
        %v9472 = vpop.f32.mrb[0].mxu0
        %9473 = vdwg.mxu0
        %v9474 = vpack.c.bf16 %v9471, %v9468
        %s9475 = scalar_lea.vmem %s17, 512
        %v9476 = vld [vmem:[%s9475] sm:$0xf]
        %v9477 = vld [vmem:[%s9475 + $0x4] sm:$0xf]
        %v9478 = vld [vmem:[%s9475 + $0x8] sm:$0xf]
        %v9479 = vld [vmem:[%s9475 + $0xc] sm:$0xf]
        %v9480 = vld [vmem:[%s9475 + $0x10] sm:$0xf]
        %v9481 = vld [vmem:[%s9475 + $0x14] sm:$0xf]
        %v9482 = vld [vmem:[%s9475 + $0x18] sm:$0xf]
        %v9483 = vld [vmem:[%s9475 + $0x1c] sm:$0xf]
        %v9484 = vld [vmem:[%s9475 + $0x20] sm:$0xf]
        %v9485 = vld [vmem:[%s9475 + $0x24] sm:$0xf]
        %v9486 = vld [vmem:[%s9475 + $0x28] sm:$0xf]
        %v9487 = vld [vmem:[%s9475 + $0x2c] sm:$0xf]
        %v9488 = vld [vmem:[%s9475 + $0x30] sm:$0xf]
        %v9489 = vld [vmem:[%s9475 + $0x34] sm:$0xf]
        %v9490 = vld [vmem:[%s9475 + $0x38] sm:$0xf]
        %v9491 = vld [vmem:[%s9475 + $0x3c] sm:$0xf]
        %v9508 = vunpack.c.l.b16 %v9476
        %v9509 = vunpack.c.l.b16 %v9477
        %v9510 = vunpack.c.l.b16 %v9478
        %v9511 = vunpack.c.l.b16 %v9479
        %v9512 = vunpack.c.l.b16 %v9480
        %v9513 = vunpack.c.l.b16 %v9481
        %v9514 = vunpack.c.l.b16 %v9482
        %v9515 = vunpack.c.l.b16 %v9483
        %v9516 = vunpack.c.l.b16 %v9484
        %v9517 = vunpack.c.l.b16 %v9485
        %v9518 = vunpack.c.l.b16 %v9486
        %v9519 = vunpack.c.l.b16 %v9487
        %v9520 = vunpack.c.l.b16 %v9488
        %v9521 = vunpack.c.l.b16 %v9489
        %v9522 = vunpack.c.l.b16 %v9490
        %v9523 = vunpack.c.l.b16 %v9491
        %v9524 = vpack.c.b16 %v9509, %v9508
        %v9525 = vpack.c.b16 %v9511, %v9510
        %v9526 = vpack.c.b16 %v9513, %v9512
        %v9527 = vpack.c.b16 %v9515, %v9514
        %v9528 = vpack.c.b16 %v9517, %v9516
        %v9529 = vpack.c.b16 %v9519, %v9518
        %v9530 = vpack.c.b16 %v9521, %v9520
        %v9531 = vpack.c.b16 %v9523, %v9522
        %9540 = vmatprep.subr.bf16.mxu0 0
        %9541 = vmatpush1.bf16.msra.mxu0 %v9524
        %9542 = vmatprep.subr.bf16.mxu0 0
        %9543 = vmatpush1.bf16.msra.mxu0 %v9525
        %9544 = vmatprep.subr.bf16.mxu0 0
        %9545 = vmatpush1.bf16.msra.mxu0 %v9526
        %9546 = vmatprep.subr.bf16.mxu0 0
        %9547 = vmatpush1.bf16.msra.mxu0 %v9527
        %9548 = vmatprep.subr.bf16.mxu0 0
        %9549 = vmatpush1.bf16.msra.mxu0 %v9528
        %9550 = vmatprep.subr.bf16.mxu0 0
        %9551 = vmatpush1.bf16.msra.mxu0 %v9529
        %9552 = vmatprep.subr.bf16.mxu0 0
        %9553 = vmatpush1.bf16.msra.mxu0 %v9530
        %9554 = vmatprep.subr.bf16.mxu0 0
        %9555 = vmatpush1.bf16.msra.mxu0 %v9531
        %9556 = vmatprep.subr.bf16.mxu0 0
        %9557 = vmatpush1.bf16.msra.mxu0 0
        %9558 = vmatprep.subr.bf16.mxu0 0
        %9559 = vmatpush1.bf16.msra.mxu0 0
        %9560 = vmatprep.subr.bf16.mxu0 0
        %9561 = vmatpush1.bf16.msra.mxu0 0
        %9562 = vmatprep.subr.bf16.mxu0 0
        %9563 = vmatpush1.bf16.msra.mxu0 0
        %9564 = vmatprep.subr.bf16.mxu0 0
        %9565 = vmatpush1.bf16.msra.mxu0 0
        %9566 = vmatprep.subr.bf16.mxu0 0
        %9567 = vmatpush1.bf16.msra.mxu0 0
        %9568 = vmatprep.subr.bf16.mxu0 0
        %9569 = vmatpush1.bf16.msra.mxu0 0
        %9570 = vmatprep.subr.bf16.mxu0 0
        %9571 = vmatpush1.bf16.msra.mxu0 0
        %9572 = vmatprep.mubr.bf16.mxu0 0
        %9573 = vmatmul.mubr.bf16.gmra.mrb[0].mxu0 %v9474
        %v9574 = vpop.f32.mrb[0].mxu0
        %v9575 = vadd.f32 0.0, %v9574
        %v9576 = vpop.f32.mrb[0].mxu0
        %v9577 = vpop.f32.mrb[0].mxu0
        %v9578 = vadd.f32 0.0, %v9577
        %v9579 = vpop.f32.mrb[0].mxu0
        %9580 = vdwg.mxu0
        %v9581 = vadd.f32 %v9420, %v9575
        %v9582 = vadd.f32 %v9421, %v9578
        %v9583 = vld [vmem:[%s18] sm:$0x1]
        %v9585 = vlaneseq
        %v9586 = vshrl.u32 %v9585, 7
        %v9587 = vsub.s32 0, %v9586
        %v9588 = vrot.slane %v9583, %v9587
        %v9590 = vadd.f32 %v9581, %v9588
        %v9591 = vadd.f32 %v9582, %v9588
        %v9592 = vadd.f32 %v9590, %v8133
        %v9593 = vadd.f32 %v9591, %v8136
        %v9594 = vmax.f32 %v9592, 0.0
        %v9595 = vmax.f32 %v9593, 0.0
        %9596 = vst [vmem:[%s741] sm:$0xff] %v9594
        %9597 = vst [vmem:[%s741 + $0x8] sm:$0xff] %v9595
        %s9598 = sand.u32 %s451, 1
        %s9599 = scalar_lea.sflag [#allocation4], %s9598
        %s9600 = sand.u32 %s451, 1
        %s9601 = smul.addr %s9600, 16
        %s9602 = scalar_lea.vmem [#allocation19], %s9601
        // Predicated region
        $region137: #{tpu_custom_call.1} parent=95 // pred_check
          %p9603 = pneg %p461
        $region138: #{tpu_custom_call.1} parent=95 // pred_check_branch
          %9605 = sbr.rel (%p9603) target = $region140
        $region139: #{tpu_custom_call.1} parent=95 // pred_region
          %s9607 = ssub.s32 256, 256
          %9608 = vsyncadd %s9599, %s9607
          %s9609 = smul.addr %s39, 2
          %s9610 = smul.addr %s9609, 128
          %s9611 = scalar_lea.hbm %s19, %s9610
          %s9612 = sshll.u32 %s9602, 4
          %s9613 = int_to_ptr.vmem [resolvable:$true] %s9612
          %9618 = dma.vmem_to_hbm [thread:$0]  %s9613, 256, %s9611, %s9599, 128, 128, 8
        $region140: #{tpu_custom_call.1} parent=95 // pred_fallthru
          _
      $region96: #{tpu_custom_call.1} parent=5 // pred_fallthru
        _
      %p9619 = scmp.le.s32.totalorder 2, %s34
      // Predicated region
      $region141: #{tpu_custom_call.1} parent=5 // pred_check
        %p9620 = pneg %p9619
      $region142: #{tpu_custom_call.1} parent=5 // pred_check_branch
        %9622 = sbr.rel (%p9620) target = $region144
      $region143: #{tpu_custom_call.1} parent=5 // pred_region
        %s9623 = ssub.s32 %s34, 2
        // Predicated region
        $region145: #{tpu_custom_call.1} parent=143 // pred_check
          %p9624 = pneg %p467
        $region146: #{tpu_custom_call.1} parent=143 // pred_check_branch
          %9626 = sbr.rel (%p9624) target = $region148
        $region147: #{tpu_custom_call.1} parent=143 // pred_region
          %s9627 = sand.u32 %s452, 1
          %s9628 = scalar_lea.sflag [#allocation4], %s9627
          %s9629 = sand.u32 %s452, 1
          %s9630 = smul.addr %s9629, 16
          %s9631 = scalar_lea.vmem [#allocation19], %s9630
          %9632 = dma.done %s9628, 256
        $region148: #{tpu_custom_call.1} parent=143 // pred_fallthru
          _
      $region144: #{tpu_custom_call.1} parent=5 // pred_fallthru
        _
    $region6: #{tpu_custom_call.1} parent=1 // loop_footer
      %s38 = sadd.s32 1, %s34
    $region7: #{tpu_custom_call.1} parent=1 // loop_footer_branch
      %33 = sbr.rel target = $region3
    $region8: #{tpu_custom_call.1} parent=1 // loop_exit
      _
    %9633 = vsyncpa [#allocation3], 1
    %s9634 = scalar_lea.sflag [#allocation3], 1
    %9635 = vsyncpa %s9634, 1
    %9636 = vsyncpa [#allocation6], 1
    %9637 = vsyncpa [#allocation9], 1
    %9638 = vsyncpa [#allocation12], 1
    %9639 = vsyncpa [#allocation15], 1
    %9640 = vsyncpa [#allocation18], 1
    %9641 = vsyncpa [#allocation4], 1
    %s9642 = scalar_lea.sflag [#allocation4], 1
    %9643 = vsyncpa %s9642, 1

</llo_original>
